<compile_context>
chip_gen: v7x
topology: tpu7x:2x2x1
jax: 0.10.0
libtpu: 0.0.40
codegen_flags: <defaults>
</compile_context>

<pallas_src>
import jax
import jax.numpy as jnp
from jax import lax
from jax.experimental import pallas as pl
from jax.experimental.pallas import tpu as pltpu

C1, C2, C3, K = 32, 64, 96, 4   # channel widths / kernel size from single_modal_layers
C3P = 128                        # C3 padded to 128 so the output store is lane-dense


def _fused_encoder_kernel(x_ref, w1_ref, b1_ref, w2_ref, b2_ref, w3_ref, b3_ref,
                          out_ref):
    """One grid step == one available modality.

    x_ref : [B, L]       f32   (in_channels = 1, squeezed)
    w1_ref: [C1, K]      f32   Conv1d(1, 32, 4) weight (in_ch dim squeezed)
    b1_ref: [1, C1]      f32
    w2_ref: [C2, K*C1]   bf16  Conv1d(32, 64, 4) weight, taps folded (im2col)
    b2_ref: [1, C2]      f32
    w3_ref: [C3P, K*C2]  bf16  Conv1d(64, 96, 4) weight, out-ch zero-padded to 128
    b3_ref: [1, C3P]     f32
    out_ref:[B, C3P]     f32   lane-dense output; wrapper slices [:, :C3]
    """
    x = x_ref[...].astype(jnp.float32)                 # [B, L]
    B, L = x.shape
    L1 = L - (K - 1)
    L2 = L - 2 * (K - 1)
    L3 = L - 3 * (K - 1)

    # ---- Conv1 (in_ch = 1) + ReLU on the VPU (contraction length 4 is too
    # small for the MXU).  Dropout == identity in eval mode.
    w1 = w1_ref[...]                                   # [C1, K]
    acc1 = jnp.zeros((C1, B, L1), jnp.float32)
    for k in range(K):
        acc1 = acc1 + w1[:, k][:, None, None] * x[None, :, k:k + L1]
    y1 = jnp.maximum(acc1 + b1_ref[0, :][:, None, None], 0.0)       # [C1, B, L1]

    # ---- Conv2 + ReLU as ONE im2col matmul: [C2, 128] x [128, B, L2] ----
    y1b = y1.astype(jnp.bfloat16)
    y1_im = jnp.concatenate([y1b[:, :, k:k + L2] for k in range(K)],
                            axis=0)                                  # [K*C1, B, L2]
    y2 = lax.dot_general(w2_ref[...], y1_im,
                         dimension_numbers=(((1,), (0,)), ((), ())),
                         preferred_element_type=jnp.float32)         # [C2, B, L2]
    y2 = jnp.maximum(y2 + b2_ref[0, :][:, None, None], 0.0)

    # ---- Conv3 + ReLU as ONE im2col matmul: [C3P, 256] x [256, B, L3] ----
    y2b = y2.astype(jnp.bfloat16)
    y2_im = jnp.concatenate([y2b[:, :, k:k + L3] for k in range(K)],
                            axis=0)                                  # [K*C2, B, L3]
    y3 = lax.dot_general(w3_ref[...], y2_im,
                         dimension_numbers=(((1,), (0,)), ((), ())),
                         preferred_element_type=jnp.float32)         # [C3P, B, L3]
    y3 = jnp.maximum(y3 + b3_ref[0, :][:, None, None], 0.0)

    # ---- AdaptiveMaxPool1d(1) + flatten -> lane-dense [B, 128] store ----
    pooled = jnp.max(y3, axis=-1)                                    # [C3P, B]
    out_ref[...] = pooled.T.astype(out_ref.dtype)                    # [B, C3P]


@jax.jit
def _fused_forward(x_sel, w1_s, b1_s, w2_s, b2_s, w3_s, b3_s):
    """x_sel: [Ma, B, L]; weights stacked with a leading modality axis in raw
    PyTorch shapes.  Returns [Ma, B, C3] (float32)."""
    Ma, B, L = x_sel.shape
    assert L > 3 * (K - 1), "sequence too short for three valid k=4 convolutions"

    # Hoisted weight preprocessing: reshape / pad / bf16 cast once, outside
    # the kernel (not per grid step).
    w1p = w1_s.reshape(Ma, C1, K).astype(jnp.float32)                 # squeeze in_ch=1
    b1p = b1_s.reshape(Ma, 1, C1).astype(jnp.float32)
    w2p = jnp.transpose(w2_s, (0, 1, 3, 2)).reshape(Ma, C2, K * C1).astype(jnp.bfloat16)
    b2p = b2_s.reshape(Ma, 1, C2).astype(jnp.float32)
    w3pad = jnp.pad(w3_s, ((0, 0), (0, C3P - C3), (0, 0), (0, 0)))
    w3p = jnp.transpose(w3pad, (0, 1, 3, 2)).reshape(Ma, C3P, K * C2).astype(jnp.bfloat16)
    b3p = jnp.pad(b3_s, ((0, 0), (0, C3P - C3))).reshape(Ma, 1, C3P).astype(jnp.float32)

    # TODO(synk): for large B/L add a batch grid axis with BlockSpec tiling
    # sized against v7x's 64 MiB VMEM; at these shapes everything fits easily.
    out = pl.pallas_call(
        _fused_encoder_kernel,
        out_shape=jax.ShapeDtypeStruct((Ma, B, C3P), jnp.float32),
        grid=(Ma,),
        in_specs=[
            pl.BlockSpec((None, B, L), lambda m: (m, 0, 0)),          # x
            pl.BlockSpec((None, C1, K), lambda m: (m, 0, 0)),         # w1
            pl.BlockSpec((None, 1, C1), lambda m: (m, 0, 0)),         # b1
            pl.BlockSpec((None, C2, K * C1), lambda m: (m, 0, 0)),    # w2 (im2col)
            pl.BlockSpec((None, 1, C2), lambda m: (m, 0, 0)),         # b2
            pl.BlockSpec((None, C3P, K * C2), lambda m: (m, 0, 0)),   # w3 (im2col, padded)
            pl.BlockSpec((None, 1, C3P), lambda m: (m, 0, 0)),        # b3 (padded)
        ],
        out_specs=pl.BlockSpec((None, B, C3P), lambda m: (m, 0, 0)),
        compiler_params=pltpu.CompilerParams(
            dimension_semantics=("parallel",)),
    )(x_sel, w1p, b1p, w2p, b2p, w3p, b3p)

    return out[:, :, :C3]


def init_modality_params(key):
    """Deterministic init mimicking PyTorch Conv1d default (uniform +/- 1/sqrt(fan_in)).
    Weights kept in raw PyTorch shapes [C_out, C_in, K]."""
    ks = jax.random.split(key, 6)

    def u(k, shape, fan_in):
        bound = 1.0 / jnp.sqrt(float(fan_in))
        return jax.random.uniform(k, shape, jnp.float32, -bound, bound)

    w1 = u(ks[0], (C1, 1, K), 1 * K)       # Conv1d(1, 32, 4)
    b1 = u(ks[1], (C1,), 1 * K)
    w2 = u(ks[2], (C2, C1, K), C1 * K)     # Conv1d(32, 64, 4)
    b2 = u(ks[3], (C2,), C1 * K)
    w3 = u(ks[4], (C3, C2, K), C2 * K)     # Conv1d(64, 96, 4)
    b3 = u(ks[5], (C3,), C2 * K)
    return w1, b1, w2, b2, w3, b3


def dynamic_encoder_forward(x, modality_indices, params_per_modality):
    """x: [B, M, L].  Returns a list of [B, C3] arrays, one per available modality,
    in modality-index order (matching the PyTorch module's output_list)."""
    avail = [i for i, a in enumerate(modality_indices) if a]
    if not avail:
        return []
    x_sel = jnp.stack([x[:, i, :] for i in avail], axis=0)            # [Ma, B, L]

    def stack(j):
        return jnp.stack([params_per_modality[i][j] for i in avail], axis=0)

    out = _fused_forward(x_sel, stack(0), stack(1), stack(2), stack(3),
                         stack(4), stack(5))                          # [Ma, B, C3]
    return [out[j] for j in range(len(avail))]


def _reference_single_modal(x_m, w1, b1, w2, b2, w3, b3):
    """Pure-JAX f32 reference (cross-correlation, same as torch Conv1d, eval mode)."""
    def conv1d(a, w, b):
        y = lax.conv_general_dilated(
            a, w, window_strides=(1,), padding="VALID",
            dimension_numbers=("NCH", "OIH", "NCH"))
        return jnp.maximum(y + b[None, :, None], 0.0)

    a = x_m[:, None, :]                                               # [B, 1, L]
    a = conv1d(a, w1, b1)
    a = conv1d(a, w2, b2)
    a = conv1d(a, w3, b3)
    return jnp.max(a, axis=-1)                                        # [B, C3]


if __name__ == "__main__":
    B, M, L = 2, 4, 32
    modality_indices = [True, False, True, True]       # 3 of 4 modalities available

    root = jax.random.PRNGKey(0)
    kx, kp = jax.random.split(root)
    x = jax.random.normal(kx, (B, M, L), jnp.float32)

    param_keys = jax.random.split(kp, M)
    params_per_modality = [
        init_modality_params(param_keys[i]) if modality_indices[i] else None
        for i in range(M)
    ]

    outs = dynamic_encoder_forward(x, modality_indices, params_per_modality)
    outs = [jax.block_until_ready(o) for o in outs]

    # Sanity check against a pure-JAX f32 reference of the PyTorch forward.
    # Tolerance accounts for the bf16 MXU inputs (f32 accumulation).
    j = 0
    for idx, avail in enumerate(modality_indices):
        if not avail:
            continue
        ref = _reference_single_modal(x[:, idx, :], *params_per_modality[idx])
        assert outs[j].shape == (B, C3)
        assert jnp.allclose(outs[j], ref, atol=3e-2, rtol=3e-2), f"mismatch modality {idx}"
        j += 1

    print("KERNEL_OK")
</pallas_src>

<mosaic_0001>
module attributes {stable_mosaic.version = 11 : i64} {
  func.func @_fused_encoder_kernel(%arg0: i32, %arg1: memref<1x2x32xf32, #tpu.memory_space<vmem>>, %arg2: memref<1x32x4xf32, #tpu.memory_space<vmem>>, %arg3: memref<1x1x32xf32, #tpu.memory_space<vmem>>, %arg4: memref<1x64x128xbf16, #tpu.memory_space<vmem>>, %arg5: memref<1x1x64xf32, #tpu.memory_space<vmem>>, %arg6: memref<1x128x256xbf16, #tpu.memory_space<vmem>>, %arg7: memref<1x1x128xf32, #tpu.memory_space<vmem>>, %arg8: memref<1x2x128xf32, #tpu.memory_space<vmem>>) attributes {dimension_semantics = [#tpu.dimension_semantics<parallel>], iteration_bounds = array<i64: 3>, scalar_prefetch = 0 : i64, scratch_operands = 0 : i64, tpu.core_type = #tpu.core_type<tc>, window_params = [{transform_indices = @transform_0, window_bounds = array<i64: 1, 2, 32>}, {transform_indices = @transform_1, window_bounds = array<i64: 1, 32, 4>}, {transform_indices = @transform_2, window_bounds = array<i64: 1, 1, 32>}, {transform_indices = @transform_3, window_bounds = array<i64: 1, 64, 128>}, {transform_indices = @transform_4, window_bounds = array<i64: 1, 1, 64>}, {transform_indices = @transform_5, window_bounds = array<i64: 1, 128, 256>}, {transform_indices = @transform_6, window_bounds = array<i64: 1, 1, 128>}, {transform_indices = @transform_7, window_bounds = array<i64: 1, 2, 128>}]} {
    %c0 = arith.constant 0 : index
    %c0_0 = arith.constant 0 : index
    %c0_1 = arith.constant 0 : index
    %0 = vector.load %arg1[%c0, %c0_0, %c0_1] : memref<1x2x32xf32, #tpu.memory_space<vmem>>, vector<1x2x32xf32>
    %1 = vector.shape_cast %0 : vector<1x2x32xf32> to vector<2x32xf32>
    %c0_2 = arith.constant 0 : index
    %c0_3 = arith.constant 0 : index
    %c0_4 = arith.constant 0 : index
    %2 = vector.load %arg2[%c0_2, %c0_3, %c0_4] : memref<1x32x4xf32, #tpu.memory_space<vmem>>, vector<1x32x4xf32>
    %3 = vector.shape_cast %2 : vector<1x32x4xf32> to vector<32x4xf32>
    %cst = arith.constant 0.000000e+00 : f32
    %4 = vector.broadcast %cst : f32 to vector<32x2x29xf32>
    %5 = vector.extract_strided_slice %3 {offsets = [0, 0], sizes = [32, 1], strides = [1, 1]} : vector<32x4xf32> to vector<32x1xf32>
    %6 = vector.shape_cast %5 : vector<32x1xf32> to vector<32xf32>
    %7 = vector.shape_cast %6 : vector<32xf32> to vector<32x1x1xf32>
    %8 = vector.extract_strided_slice %1 {offsets = [0, 0], sizes = [2, 29], strides = [1, 1]} : vector<2x32xf32> to vector<2x29xf32>
    %9 = vector.shape_cast %8 : vector<2x29xf32> to vector<1x2x29xf32>
    %10 = vector.broadcast %7 : vector<32x1x1xf32> to vector<32x2x29xf32>
    %11 = vector.broadcast %9 : vector<1x2x29xf32> to vector<32x2x29xf32>
    %12 = arith.mulf %10, %11 : vector<32x2x29xf32>
    %13 = arith.addf %4, %12 : vector<32x2x29xf32>
    %14 = vector.extract_strided_slice %3 {offsets = [0, 1], sizes = [32, 1], strides = [1, 1]} : vector<32x4xf32> to vector<32x1xf32>
    %15 = vector.shape_cast %14 : vector<32x1xf32> to vector<32xf32>
    %16 = vector.shape_cast %15 : vector<32xf32> to vector<32x1x1xf32>
    %17 = vector.extract_strided_slice %1 {offsets = [0, 1], sizes = [2, 29], strides = [1, 1]} : vector<2x32xf32> to vector<2x29xf32>
    %18 = vector.shape_cast %17 : vector<2x29xf32> to vector<1x2x29xf32>
    %19 = vector.broadcast %16 : vector<32x1x1xf32> to vector<32x2x29xf32>
    %20 = vector.broadcast %18 : vector<1x2x29xf32> to vector<32x2x29xf32>
    %21 = arith.mulf %19, %20 : vector<32x2x29xf32>
    %22 = arith.addf %13, %21 : vector<32x2x29xf32>
    %23 = vector.extract_strided_slice %3 {offsets = [0, 2], sizes = [32, 1], strides = [1, 1]} : vector<32x4xf32> to vector<32x1xf32>
    %24 = vector.shape_cast %23 : vector<32x1xf32> to vector<32xf32>
    %25 = vector.shape_cast %24 : vector<32xf32> to vector<32x1x1xf32>
    %26 = vector.extract_strided_slice %1 {offsets = [0, 2], sizes = [2, 29], strides = [1, 1]} : vector<2x32xf32> to vector<2x29xf32>
    %27 = vector.shape_cast %26 : vector<2x29xf32> to vector<1x2x29xf32>
    %28 = vector.broadcast %25 : vector<32x1x1xf32> to vector<32x2x29xf32>
    %29 = vector.broadcast %27 : vector<1x2x29xf32> to vector<32x2x29xf32>
    %30 = arith.mulf %28, %29 : vector<32x2x29xf32>
    %31 = arith.addf %22, %30 : vector<32x2x29xf32>
    %32 = vector.extract_strided_slice %3 {offsets = [0, 3], sizes = [32, 1], strides = [1, 1]} : vector<32x4xf32> to vector<32x1xf32>
    %33 = vector.shape_cast %32 : vector<32x1xf32> to vector<32xf32>
    %34 = vector.shape_cast %33 : vector<32xf32> to vector<32x1x1xf32>
    %35 = vector.extract_strided_slice %1 {offsets = [0, 3], sizes = [2, 29], strides = [1, 1]} : vector<2x32xf32> to vector<2x29xf32>
    %36 = vector.shape_cast %35 : vector<2x29xf32> to vector<1x2x29xf32>
    %37 = vector.broadcast %34 : vector<32x1x1xf32> to vector<32x2x29xf32>
    %38 = vector.broadcast %36 : vector<1x2x29xf32> to vector<32x2x29xf32>
    %39 = arith.mulf %37, %38 : vector<32x2x29xf32>
    %40 = arith.addf %31, %39 : vector<32x2x29xf32>
    %c0_5 = arith.constant 0 : index
    %c0_6 = arith.constant 0 : index
    %c0_7 = arith.constant 0 : index
    %41 = vector.load %arg3[%c0_5, %c0_6, %c0_7] : memref<1x1x32xf32, #tpu.memory_space<vmem>>, vector<1x1x32xf32>
    %42 = vector.shape_cast %41 : vector<1x1x32xf32> to vector<32xf32>
    %43 = vector.shape_cast %42 : vector<32xf32> to vector<32x1x1xf32>
    %44 = vector.broadcast %43 : vector<32x1x1xf32> to vector<32x2x29xf32>
    %45 = arith.addf %40, %44 : vector<32x2x29xf32>
    %cst_8 = arith.constant 0.000000e+00 : f32
    %46 = vector.broadcast %cst_8 : f32 to vector<32x2x29xf32>
    %47 = arith.maximumf %45, %46 : vector<32x2x29xf32>
    %48 = arith.truncf %47 : vector<32x2x29xf32> to vector<32x2x29xbf16>
    %49 = vector.extract_strided_slice %48 {offsets = [0, 0, 0], sizes = [32, 2, 26], strides = [1, 1, 1]} : vector<32x2x29xbf16> to vector<32x2x26xbf16>
    %50 = vector.extract_strided_slice %48 {offsets = [0, 0, 1], sizes = [32, 2, 26], strides = [1, 1, 1]} : vector<32x2x29xbf16> to vector<32x2x26xbf16>
    %51 = vector.extract_strided_slice %48 {offsets = [0, 0, 2], sizes = [32, 2, 26], strides = [1, 1, 1]} : vector<32x2x29xbf16> to vector<32x2x26xbf16>
    %52 = vector.extract_strided_slice %48 {offsets = [0, 0, 3], sizes = [32, 2, 26], strides = [1, 1, 1]} : vector<32x2x29xbf16> to vector<32x2x26xbf16>
    %53 = tpu.concatenate %49, %50, %51, %52 in 0 : vector<32x2x26xbf16>, vector<32x2x26xbf16>, vector<32x2x26xbf16>, vector<32x2x26xbf16> -> vector<128x2x26xbf16>
    %c0_9 = arith.constant 0 : index
    %c0_10 = arith.constant 0 : index
    %c0_11 = arith.constant 0 : index
    %54 = vector.load %arg4[%c0_9, %c0_10, %c0_11] : memref<1x64x128xbf16, #tpu.memory_space<vmem>>, vector<1x64x128xbf16>
    %55 = vector.shape_cast %54 : vector<1x64x128xbf16> to vector<64x128xbf16>
    %cst_12 = arith.constant dense<0.000000e+00> : vector<64x2x26xf32>
    %56 = tpu.matmul %55, %53, %cst_12 {dimension_numbers = #tpu.dot_dimension_numbers<[1], [0], [0], [1, 2], [0, 0, 1, 1, 1, 2], [], []>} : vector<64x128xbf16>, vector<128x2x26xbf16>, vector<64x2x26xf32> -> vector<64x2x26xf32>
    %c0_13 = arith.constant 0 : index
    %c0_14 = arith.constant 0 : index
    %c0_15 = arith.constant 0 : index
    %57 = vector.load %arg5[%c0_13, %c0_14, %c0_15] : memref<1x1x64xf32, #tpu.memory_space<vmem>>, vector<1x1x64xf32>
    %58 = vector.shape_cast %57 : vector<1x1x64xf32> to vector<64xf32>
    %59 = vector.shape_cast %58 : vector<64xf32> to vector<64x1x1xf32>
    %60 = vector.broadcast %59 : vector<64x1x1xf32> to vector<64x2x26xf32>
    %61 = arith.addf %56, %60 : vector<64x2x26xf32>
    %cst_16 = arith.constant 0.000000e+00 : f32
    %62 = vector.broadcast %cst_16 : f32 to vector<64x2x26xf32>
    %63 = arith.maximumf %61, %62 : vector<64x2x26xf32>
    %64 = arith.truncf %63 : vector<64x2x26xf32> to vector<64x2x26xbf16>
    %65 = vector.extract_strided_slice %64 {offsets = [0, 0, 0], sizes = [64, 2, 23], strides = [1, 1, 1]} : vector<64x2x26xbf16> to vector<64x2x23xbf16>
    %66 = vector.extract_strided_slice %64 {offsets = [0, 0, 1], sizes = [64, 2, 23], strides = [1, 1, 1]} : vector<64x2x26xbf16> to vector<64x2x23xbf16>
    %67 = vector.extract_strided_slice %64 {offsets = [0, 0, 2], sizes = [64, 2, 23], strides = [1, 1, 1]} : vector<64x2x26xbf16> to vector<64x2x23xbf16>
    %68 = vector.extract_strided_slice %64 {offsets = [0, 0, 3], sizes = [64, 2, 23], strides = [1, 1, 1]} : vector<64x2x26xbf16> to vector<64x2x23xbf16>
    %69 = tpu.concatenate %65, %66, %67, %68 in 0 : vector<64x2x23xbf16>, vector<64x2x23xbf16>, vector<64x2x23xbf16>, vector<64x2x23xbf16> -> vector<256x2x23xbf16>
    %c0_17 = arith.constant 0 : index
    %c0_18 = arith.constant 0 : index
    %c0_19 = arith.constant 0 : index
    %70 = vector.load %arg6[%c0_17, %c0_18, %c0_19] : memref<1x128x256xbf16, #tpu.memory_space<vmem>>, vector<1x128x256xbf16>
    %71 = vector.shape_cast %70 : vector<1x128x256xbf16> to vector<128x256xbf16>
    %cst_20 = arith.constant dense<0.000000e+00> : vector<128x2x23xf32>
    %72 = tpu.matmul %71, %69, %cst_20 {dimension_numbers = #tpu.dot_dimension_numbers<[1], [0], [0], [1, 2], [0, 0, 1, 1, 1, 2], [], []>} : vector<128x256xbf16>, vector<256x2x23xbf16>, vector<128x2x23xf32> -> vector<128x2x23xf32>
    %c0_21 = arith.constant 0 : index
    %c0_22 = arith.constant 0 : index
    %c0_23 = arith.constant 0 : index
    %73 = vector.load %arg7[%c0_21, %c0_22, %c0_23] : memref<1x1x128xf32, #tpu.memory_space<vmem>>, vector<1x1x128xf32>
    %74 = vector.shape_cast %73 : vector<1x1x128xf32> to vector<128xf32>
    %75 = vector.shape_cast %74 : vector<128xf32> to vector<128x1x1xf32>
    %76 = vector.broadcast %75 : vector<128x1x1xf32> to vector<128x2x23xf32>
    %77 = arith.addf %72, %76 : vector<128x2x23xf32>
    %cst_24 = arith.constant 0.000000e+00 : f32
    %78 = vector.broadcast %cst_24 : f32 to vector<128x2x23xf32>
    %79 = arith.maximumf %77, %78 : vector<128x2x23xf32>
    %cst_25 = arith.constant dense<0xFF800000> : vector<128x2xf32>
    %80 = vector.multi_reduction <maximumf>, %79, %cst_25 [2] : vector<128x2x23xf32> to vector<128x2xf32>
    %81 = tpu.transpose %80, [1, 0] : vector<128x2xf32> -> vector<2x128xf32>
    %c0_26 = arith.constant 0 : index
    %c0_27 = arith.constant 0 : index
    %c0_28 = arith.constant 0 : index
    %82 = vector.load %arg8[%c0_26, %c0_27, %c0_28] : memref<1x2x128xf32, #tpu.memory_space<vmem>>, vector<1x2x128xf32>
    %83 = vector.shape_cast %82 : vector<1x2x128xf32> to vector<2x128xf32>
    %84 = vector.shape_cast %81 : vector<2x128xf32> to vector<1x2x128xf32>
    tpu.vector_store %arg8[%c0_26, %c0_27, %c0_28], %84 {strides = array<i32>} : memref<1x2x128xf32, #tpu.memory_space<vmem>>, vector<1x2x128xf32>,
    return
  }
  func.func @transform_0(%arg0: i32) -> (i32, i32, i32) {
    %c0_i32 = arith.constant 0 : i32
    %c0_i32_0 = arith.constant 0 : i32
    %c0_i32_1 = arith.constant 0 : i32
    return %arg0, %c0_i32, %c0_i32_0 : i32, i32, i32
  }
  func.func @transform_1(%arg0: i32) -> (i32, i32, i32) {
    %c0_i32 = arith.constant 0 : i32
    %c0_i32_0 = arith.constant 0 : i32
    %c0_i32_1 = arith.constant 0 : i32
    return %arg0, %c0_i32, %c0_i32_0 : i32, i32, i32
  }
  func.func @transform_2(%arg0: i32) -> (i32, i32, i32) {
    %c0_i32 = arith.constant 0 : i32
    %c0_i32_0 = arith.constant 0 : i32
    %c0_i32_1 = arith.constant 0 : i32
    return %arg0, %c0_i32, %c0_i32_0 : i32, i32, i32
  }
  func.func @transform_3(%arg0: i32) -> (i32, i32, i32) {
    %c0_i32 = arith.constant 0 : i32
    %c0_i32_0 = arith.constant 0 : i32
    %c0_i32_1 = arith.constant 0 : i32
    return %arg0, %c0_i32, %c0_i32_0 : i32, i32, i32
  }
  func.func @transform_4(%arg0: i32) -> (i32, i32, i32) {
    %c0_i32 = arith.constant 0 : i32
    %c0_i32_0 = arith.constant 0 : i32
    %c0_i32_1 = arith.constant 0 : i32
    return %arg0, %c0_i32, %c0_i32_0 : i32, i32, i32
  }
  func.func @transform_5(%arg0: i32) -> (i32, i32, i32) {
    %c0_i32 = arith.constant 0 : i32
    %c0_i32_0 = arith.constant 0 : i32
    %c0_i32_1 = arith.constant 0 : i32
    return %arg0, %c0_i32, %c0_i32_0 : i32, i32, i32
  }
  func.func @transform_6(%arg0: i32) -> (i32, i32, i32) {
    %c0_i32 = arith.constant 0 : i32
    %c0_i32_0 = arith.constant 0 : i32
    %c0_i32_1 = arith.constant 0 : i32
    return %arg0, %c0_i32, %c0_i32_0 : i32, i32, i32
  }
  func.func @transform_7(%arg0: i32) -> (i32, i32, i32) {
    %c0_i32 = arith.constant 0 : i32
    %c0_i32_0 = arith.constant 0 : i32
    %c0_i32_1 = arith.constant 0 : i32
    return %arg0, %c0_i32, %c0_i32_0 : i32, i32, i32
  }
}

</mosaic_0001>

<llo_original>
// kernel: _fused_forward.1
$region0: #{_fused_forward.1}
  #allocation0 [shape = 'u32[]', space=smem, size = 0x4, offset = 0x4, fixed_abs, tag = 'smem constant byte address 0x4 - core index']
  #allocation1 [shape = 'u32[144,128]{1,0:T(1,128)}', space=vmem, size = 0x12000, scoped, tag = 'internal scratch']
  %s0 = inlined_call_operand.vmem [shape: f32[3,2,32], index: 0, kind: input, shape index: {}]
  %s1 = inlined_call_operand.vmem [shape: f32[3,32,4], index: 1, kind: input, shape index: {}]
  %s2 = inlined_call_operand.vmem [shape: f32[3,1,32], index: 2, kind: input, shape index: {}]
  %s3 = inlined_call_operand.vmem [shape: bf16[3,64,128], index: 3, kind: input, shape index: {}]
  %s4 = inlined_call_operand.vmem [shape: f32[3,1,64], index: 4, kind: input, shape index: {}]
  %s5 = inlined_call_operand.vmem [shape: bf16[3,128,256], index: 5, kind: input, shape index: {}]
  %s6 = inlined_call_operand.vmem [shape: f32[3,1,128], index: 6, kind: input, shape index: {}]
  %s7 = inlined_call_operand.hbm [shape: f32[3,2,128], index: 7, kind: output, shape index: {}]
  %s8 = sld [smem:[#allocation0]]
  $region61: #{_fused_forward.1} parent=0
    _
  %s10 = ssub.s32 1, %s8
  %s11 = scalar_select 0, %s10, %s8
  $region1: #{_fused_forward.1} parent=0
    #allocation2 [shape = 'u8[2048]{0}', space=vmem, size = 0x800, scoped, tag = 'output window, operand 0']
    #allocation3 [shape = 's32[2]{0}', space=sflag, size = 0x8, scoped, tag = 'scoped memory for _fused_forward.1']
    %12 = vsyncpa [#allocation3], 0
    %s13 = scalar_lea.sflag [#allocation3], 1
    %14 = vsyncpa %s13, 0
    loop: start=0, step=1, limit=5
    $region2: #{_fused_forward.1} parent=1 // loop_pre_header
      _
    $region3: #{_fused_forward.1} parent=1 // loop_header
      %s16 = sphi 0, %s20
      %p17 = scmp.ge.s32.totalorder %s16, 5
      %s26 = sphi 0, %s28
      %s29 = sphi 0, %s26
      %s30 = sphi 0, %s29
      %s46 = sphi 0, %s30
      %s52 = sphi 0, %s54
      %s55 = sphi 0, %s52
      %s56 = sphi 0, %s55
      %s72 = sphi 0, %s56
      %s78 = sphi 0, %s80
      %s81 = sphi 0, %s78
      %s82 = sphi 0, %s81
      %s98 = sphi 0, %s82
      %s104 = sphi 0, %s106
      %s107 = sphi 0, %s104
      %s108 = sphi 0, %s107
      %s124 = sphi 0, %s108
      %s130 = sphi 0, %s132
      %s133 = sphi 0, %s130
      %s134 = sphi 0, %s133
      %s150 = sphi 0, %s134
      %s156 = sphi 0, %s158
      %s159 = sphi 0, %s156
      %s160 = sphi 0, %s159
      %s176 = sphi 0, %s160
      %s182 = sphi 0, %s184
      %s185 = sphi 0, %s182
      %s186 = sphi 0, %s185
      %s202 = sphi 0, %s186
      %s208 = sphi 0, %s210
      %s211 = sphi 0, %s208
      %s212 = sphi 0, %s211
      %s228 = sphi 0, %s212
    $region4: #{_fused_forward.1} parent=1 // loop_header_branch
      %19 = sbr.rel (%p17) target = $region8
    $region5: #{_fused_forward.1} parent=1 // loop_body
      %s21 = ssub.s32 %s16, 1
      %s22 = ssub.s32 %s16, 2
      %s23 = sadd.s32 %s16, 1
      %s24 = ssub.s32 %s16, %s23
      %p25 = scmp.eq.s32.totalorder %s24, 0
      %s27 = sadd.s32 %s26, 1
      %s28 = scalar_select %p25, %s26, %s27
      %p31 = pneg %p25
      %p32 = scmp.eq.s32.totalorder %s16, 2
      %p33 = por %p31, %p32
      %p34 = scmp.ne.s32.totalorder %s26, %s29
      %p35 = scmp.eq.s32.totalorder %s16, 0
      %p36 = por %p34, %p35
      %p37 = scmp.ne.s32.totalorder %s26, %s29
      %p38 = scmp.eq.s32.totalorder %s21, 2
      %p39 = por %p37, %p38
      %p40 = scmp.ne.s32.totalorder %s29, %s30
      %p41 = scmp.eq.s32.totalorder %s21, 0
      %p42 = por %p40, %p41
      %p43 = scmp.ne.s32.totalorder %s29, %s30
      %p44 = scmp.eq.s32.totalorder %s22, 2
      %p45 = por %p43, %p44
      %p47 = scmp.ne.s32.totalorder %s30, %s46
      %p48 = scmp.eq.s32.totalorder %s22, 0
      %p49 = por %p47, %p48
      %s50 = ssub.s32 %s16, %s23
      %p51 = scmp.eq.s32.totalorder %s50, 0
      %s53 = sadd.s32 %s52, 1
      %s54 = scalar_select %p51, %s52, %s53
      %p57 = pneg %p51
      %p58 = scmp.eq.s32.totalorder %s16, 2
      %p59 = por %p57, %p58
      %p60 = scmp.ne.s32.totalorder %s52, %s55
      %p61 = scmp.eq.s32.totalorder %s16, 0
      %p62 = por %p60, %p61
      %p63 = scmp.ne.s32.totalorder %s52, %s55
      %p64 = scmp.eq.s32.totalorder %s21, 2
      %p65 = por %p63, %p64
      %p66 = scmp.ne.s32.totalorder %s55, %s56
      %p67 = scmp.eq.s32.totalorder %s21, 0
      %p68 = por %p66, %p67
      %p69 = scmp.ne.s32.totalorder %s55, %s56
      %p70 = scmp.eq.s32.totalorder %s22, 2
      %p71 = por %p69, %p70
      %p73 = scmp.ne.s32.totalorder %s56, %s72
      %p74 = scmp.eq.s32.totalorder %s22, 0
      %p75 = por %p73, %p74
      %s76 = ssub.s32 %s16, %s23
      %p77 = scmp.eq.s32.totalorder %s76, 0
      %s79 = sadd.s32 %s78, 1
      %s80 = scalar_select %p77, %s78, %s79
      %p83 = pneg %p77
      %p84 = scmp.eq.s32.totalorder %s16, 2
      %p85 = por %p83, %p84
      %p86 = scmp.ne.s32.totalorder %s78, %s81
      %p87 = scmp.eq.s32.totalorder %s16, 0
      %p88 = por %p86, %p87
      %p89 = scmp.ne.s32.totalorder %s78, %s81
      %p90 = scmp.eq.s32.totalorder %s21, 2
      %p91 = por %p89, %p90
      %p92 = scmp.ne.s32.totalorder %s81, %s82
      %p93 = scmp.eq.s32.totalorder %s21, 0
      %p94 = por %p92, %p93
      %p95 = scmp.ne.s32.totalorder %s81, %s82
      %p96 = scmp.eq.s32.totalorder %s22, 2
      %p97 = por %p95, %p96
      %p99 = scmp.ne.s32.totalorder %s82, %s98
      %p100 = scmp.eq.s32.totalorder %s22, 0
      %p101 = por %p99, %p100
      %s102 = ssub.s32 %s16, %s23
      %p103 = scmp.eq.s32.totalorder %s102, 0
      %s105 = sadd.s32 %s104, 1
      %s106 = scalar_select %p103, %s104, %s105
      %p109 = pneg %p103
      %p110 = scmp.eq.s32.totalorder %s16, 2
      %p111 = por %p109, %p110
      %p112 = scmp.ne.s32.totalorder %s104, %s107
      %p113 = scmp.eq.s32.totalorder %s16, 0
      %p114 = por %p112, %p113
      %p115 = scmp.ne.s32.totalorder %s104, %s107
      %p116 = scmp.eq.s32.totalorder %s21, 2
      %p117 = por %p115, %p116
      %p118 = scmp.ne.s32.totalorder %s107, %s108
      %p119 = scmp.eq.s32.totalorder %s21, 0
      %p120 = por %p118, %p119
      %p121 = scmp.ne.s32.totalorder %s107, %s108
      %p122 = scmp.eq.s32.totalorder %s22, 2
      %p123 = por %p121, %p122
      %p125 = scmp.ne.s32.totalorder %s108, %s124
      %p126 = scmp.eq.s32.totalorder %s22, 0
      %p127 = por %p125, %p126
      %s128 = ssub.s32 %s16, %s23
      %p129 = scmp.eq.s32.totalorder %s128, 0
      %s131 = sadd.s32 %s130, 1
      %s132 = scalar_select %p129, %s130, %s131
      %p135 = pneg %p129
      %p136 = scmp.eq.s32.totalorder %s16, 2
      %p137 = por %p135, %p136
      %p138 = scmp.ne.s32.totalorder %s130, %s133
      %p139 = scmp.eq.s32.totalorder %s16, 0
      %p140 = por %p138, %p139
      %p141 = scmp.ne.s32.totalorder %s130, %s133
      %p142 = scmp.eq.s32.totalorder %s21, 2
      %p143 = por %p141, %p142
      %p144 = scmp.ne.s32.totalorder %s133, %s134
      %p145 = scmp.eq.s32.totalorder %s21, 0
      %p146 = por %p144, %p145
      %p147 = scmp.ne.s32.totalorder %s133, %s134
      %p148 = scmp.eq.s32.totalorder %s22, 2
      %p149 = por %p147, %p148
      %p151 = scmp.ne.s32.totalorder %s134, %s150
      %p152 = scmp.eq.s32.totalorder %s22, 0
      %p153 = por %p151, %p152
      %s154 = ssub.s32 %s16, %s23
      %p155 = scmp.eq.s32.totalorder %s154, 0
      %s157 = sadd.s32 %s156, 1
      %s158 = scalar_select %p155, %s156, %s157
      %p161 = pneg %p155
      %p162 = scmp.eq.s32.totalorder %s16, 2
      %p163 = por %p161, %p162
      %p164 = scmp.ne.s32.totalorder %s156, %s159
      %p165 = scmp.eq.s32.totalorder %s16, 0
      %p166 = por %p164, %p165
      %p167 = scmp.ne.s32.totalorder %s156, %s159
      %p168 = scmp.eq.s32.totalorder %s21, 2
      %p169 = por %p167, %p168
      %p170 = scmp.ne.s32.totalorder %s159, %s160
      %p171 = scmp.eq.s32.totalorder %s21, 0
      %p172 = por %p170, %p171
      %p173 = scmp.ne.s32.totalorder %s159, %s160
      %p174 = scmp.eq.s32.totalorder %s22, 2
      %p175 = por %p173, %p174
      %p177 = scmp.ne.s32.totalorder %s160, %s176
      %p178 = scmp.eq.s32.totalorder %s22, 0
      %p179 = por %p177, %p178
      %s180 = ssub.s32 %s16, %s23
      %p181 = scmp.eq.s32.totalorder %s180, 0
      %s183 = sadd.s32 %s182, 1
      %s184 = scalar_select %p181, %s182, %s183
      %p187 = pneg %p181
      %p188 = scmp.eq.s32.totalorder %s16, 2
      %p189 = por %p187, %p188
      %p190 = scmp.ne.s32.totalorder %s182, %s185
      %p191 = scmp.eq.s32.totalorder %s16, 0
      %p192 = por %p190, %p191
      %p193 = scmp.ne.s32.totalorder %s182, %s185
      %p194 = scmp.eq.s32.totalorder %s21, 2
      %p195 = por %p193, %p194
      %p196 = scmp.ne.s32.totalorder %s185, %s186
      %p197 = scmp.eq.s32.totalorder %s21, 0
      %p198 = por %p196, %p197
      %p199 = scmp.ne.s32.totalorder %s185, %s186
      %p200 = scmp.eq.s32.totalorder %s22, 2
      %p201 = por %p199, %p200
      %p203 = scmp.ne.s32.totalorder %s186, %s202
      %p204 = scmp.eq.s32.totalorder %s22, 0
      %p205 = por %p203, %p204
      %s206 = ssub.s32 %s16, %s23
      %p207 = scmp.eq.s32.totalorder %s206, 0
      %s209 = sadd.s32 %s208, 1
      %s210 = scalar_select %p207, %s208, %s209
      %p213 = pneg %p207
      %p214 = scmp.eq.s32.totalorder %s16, 2
      %p215 = por %p213, %p214
      %p216 = scmp.ne.s32.totalorder %s208, %s211
      %p217 = scmp.eq.s32.totalorder %s16, 0
      %p218 = por %p216, %p217
      %p219 = scmp.ne.s32.totalorder %s208, %s211
      %p220 = scmp.eq.s32.totalorder %s21, 2
      %p221 = por %p219, %p220
      %p222 = scmp.ne.s32.totalorder %s211, %s212
      %p223 = scmp.eq.s32.totalorder %s21, 0
      %p224 = por %p222, %p223
      %p225 = scmp.ne.s32.totalorder %s211, %s212
      %p226 = scmp.eq.s32.totalorder %s22, 2
      %p227 = por %p225, %p226
      %p229 = scmp.ne.s32.totalorder %s212, %s228
      %p230 = scmp.eq.s32.totalorder %s22, 0
      %p231 = por %p229, %p230
      %p232 = scmp.le.s32.totalorder 1, %s16
      %p233 = scmp.lt.s32.totalorder %s16, 4
      %p234 = pnand %p232, %p233
      %p235 = pneg %p234
      // Predicated region
      $region9: #{_fused_forward.1} parent=5 // pred_check
        _
      $region10: #{_fused_forward.1} parent=5 // pred_check_branch
        %237 = sbr.rel (%p234) target = $region12
      $region11: #{_fused_forward.1} parent=5 // pred_region
        %s238 = ssub.s32 %s16, 1
      $region12: #{_fused_forward.1} parent=5 // pred_fallthru
        _
      %p239 = scmp.lt.s32.totalorder %s16, 3
      // Predicated region
      $region13: #{_fused_forward.1} parent=5 // pred_check
        %p240 = pneg %p239
      $region14: #{_fused_forward.1} parent=5 // pred_check_branch
        %242 = sbr.rel (%p240) target = $region16
      $region15: #{_fused_forward.1} parent=5 // pred_region
        // Predicated region
        $region17: #{_fused_forward.1} parent=15 // pred_check
          %p243 = pneg %p36
        $region18: #{_fused_forward.1} parent=15 // pred_check_branch
          %245 = sbr.rel (%p243) target = $region20
        $region19: #{_fused_forward.1} parent=15 // pred_region
          %p246 = scmp.lt.s32.totalorder %s16, 2
          %s247 = scalar_select %p246, %s16, 2
          %s248 = smul.addr %s247, 2
          %s249 = scalar_lea.vmem %s0, %s248
        $region20: #{_fused_forward.1} parent=15 // pred_fallthru
          _
        // Predicated region
        $region21: #{_fused_forward.1} parent=15 // pred_check
          %p250 = pneg %p62
        $region22: #{_fused_forward.1} parent=15 // pred_check_branch
          %252 = sbr.rel (%p250) target = $region24
        $region23: #{_fused_forward.1} parent=15 // pred_region
          %p253 = scmp.lt.s32.totalorder %s16, 2
          %s254 = scalar_select %p253, %s16, 2
          %s255 = smul.addr %s254, 4
          %s256 = smul.addr %s255, 8
          %s257 = scalar_lea.vmem %s1, %s256
        $region24: #{_fused_forward.1} parent=15 // pred_fallthru
          _
        // Predicated region
        $region25: #{_fused_forward.1} parent=15 // pred_check
          %p258 = pneg %p88
        $region26: #{_fused_forward.1} parent=15 // pred_check_branch
          %260 = sbr.rel (%p258) target = $region28
        $region27: #{_fused_forward.1} parent=15 // pred_region
          %p261 = scmp.lt.s32.totalorder %s16, 2
          %s262 = scalar_select %p261, %s16, 2
          %s263 = scalar_lea.vmem %s2, %s262
        $region28: #{_fused_forward.1} parent=15 // pred_fallthru
          _
        // Predicated region
        $region29: #{_fused_forward.1} parent=15 // pred_check
          %p264 = pneg %p114
        $region30: #{_fused_forward.1} parent=15 // pred_check_branch
          %266 = sbr.rel (%p264) target = $region32
        $region31: #{_fused_forward.1} parent=15 // pred_region
          %p267 = scmp.lt.s32.totalorder %s16, 2
          %s268 = scalar_select %p267, %s16, 2
          %s269 = smul.addr %s268, 8
          %s270 = smul.addr %s269, 4
          %s271 = scalar_lea.vmem %s3, %s270
        $region32: #{_fused_forward.1} parent=15 // pred_fallthru
          _
        // Predicated region
        $region33: #{_fused_forward.1} parent=15 // pred_check
          %p272 = pneg %p140
        $region34: #{_fused_forward.1} parent=15 // pred_check_branch
          %274 = sbr.rel (%p272) target = $region36
        $region35: #{_fused_forward.1} parent=15 // pred_region
          %p275 = scmp.lt.s32.totalorder %s16, 2
          %s276 = scalar_select %p275, %s16, 2
          %s277 = scalar_lea.vmem %s4, %s276
        $region36: #{_fused_forward.1} parent=15 // pred_fallthru
          _
        // Predicated region
        $region37: #{_fused_forward.1} parent=15 // pred_check
          %p278 = pneg %p166
        $region38: #{_fused_forward.1} parent=15 // pred_check_branch
          %280 = sbr.rel (%p278) target = $region40
        $region39: #{_fused_forward.1} parent=15 // pred_region
          %p281 = scmp.lt.s32.totalorder %s16, 2
          %s282 = scalar_select %p281, %s16, 2
          %s283 = smul.addr %s282, 32
          %s284 = smul.addr %s283, 4
          %s285 = scalar_lea.vmem %s5, %s284
        $region40: #{_fused_forward.1} parent=15 // pred_fallthru
          _
        // Predicated region
        $region41: #{_fused_forward.1} parent=15 // pred_check
          %p286 = pneg %p192
        $region42: #{_fused_forward.1} parent=15 // pred_check_branch
          %288 = sbr.rel (%p286) target = $region44
        $region43: #{_fused_forward.1} parent=15 // pred_region
          %p289 = scmp.lt.s32.totalorder %s16, 2
          %s290 = scalar_select %p289, %s16, 2
          %s291 = scalar_lea.vmem %s6, %s290
        $region44: #{_fused_forward.1} parent=15 // pred_fallthru
          _
      $region16: #{_fused_forward.1} parent=5 // pred_fallthru
        _
      %p292 = scmp.le.s32.totalorder 1, %s16
      %p293 = scmp.lt.s32.totalorder %s16, 4
      %p294 = pnand %p292, %p293
      %p295 = pneg %p294
      // Predicated region
      $region45: #{_fused_forward.1} parent=5 // pred_check
        _
      $region46: #{_fused_forward.1} parent=5 // pred_check_branch
        %297 = sbr.rel (%p294) target = $region48
      $region47: #{_fused_forward.1} parent=5 // pred_region
        %s298 = ssub.s32 %s16, 1
        %p299 = scmp.lt.s32.totalorder %s21, 2
        %s300 = scalar_select %p299, %s21, 2
        %s301 = smul.addr %s300, 2
        %s302 = scalar_lea.vmem %s0, %s301
        %p303 = pneg %p42
        %p304 = pneg %p39
        %p305 = scmp.lt.s32.totalorder %s21, 2
        %s306 = scalar_select %p305, %s21, 2
        %s307 = smul.addr %s306, 4
        %s308 = smul.addr %s307, 8
        %s309 = scalar_lea.vmem %s1, %s308
        %p310 = pneg %p68
        %p311 = pneg %p65
        %p312 = scmp.lt.s32.totalorder %s21, 2
        %s313 = scalar_select %p312, %s21, 2
        %s314 = scalar_lea.vmem %s2, %s313
        %p315 = pneg %p94
        %p316 = pneg %p91
        %p317 = scmp.lt.s32.totalorder %s21, 2
        %s318 = scalar_select %p317, %s21, 2
        %s319 = smul.addr %s318, 8
        %s320 = smul.addr %s319, 4
        %s321 = scalar_lea.vmem %s3, %s320
        %p322 = pneg %p120
        %p323 = pneg %p117
        %p324 = scmp.lt.s32.totalorder %s21, 2
        %s325 = scalar_select %p324, %s21, 2
        %s326 = scalar_lea.vmem %s4, %s325
        %p327 = pneg %p146
        %p328 = pneg %p143
        %p329 = scmp.lt.s32.totalorder %s21, 2
        %s330 = scalar_select %p329, %s21, 2
        %s331 = smul.addr %s330, 32
        %s332 = smul.addr %s331, 4
        %s333 = scalar_lea.vmem %s5, %s332
        %p334 = pneg %p172
        %p335 = pneg %p169
        %p336 = scmp.lt.s32.totalorder %s21, 2
        %s337 = scalar_select %p336, %s21, 2
        %s338 = scalar_lea.vmem %s6, %s337
        %p339 = pneg %p198
        %p340 = pneg %p195
        %p341 = pneg %p224
        %p342 = pneg %p221
        %s343 = sand.u32 %s211, 1
        %s344 = scalar_lea.sflag [#allocation3], %s343
        %s345 = sand.u32 %s211, 1
        %s346 = smul.addr %s345, 2
        %s347 = scalar_lea.vmem [#allocation2], %s346
        %p348 = scmp.lt.s32.totalorder %s21, 2
        %s349 = scalar_select %p348, %s21, 2
        %s350 = smul.addr %s349, 2
        %s351 = scalar_lea.vmem %s0, %s350
        %p352 = scmp.lt.s32.totalorder %s21, 2
        %s353 = scalar_select %p352, %s21, 2
        %s354 = smul.addr %s353, 4
        %s355 = smul.addr %s354, 8
        %s356 = scalar_lea.vmem %s1, %s355
        %p357 = scmp.lt.s32.totalorder %s21, 2
        %s358 = scalar_select %p357, %s21, 2
        %s359 = scalar_lea.vmem %s2, %s358
        %p360 = scmp.lt.s32.totalorder %s21, 2
        %s361 = scalar_select %p360, %s21, 2
        %s362 = smul.addr %s361, 8
        %s363 = smul.addr %s362, 4
        %s364 = scalar_lea.vmem %s3, %s363
        %p365 = scmp.lt.s32.totalorder %s21, 2
        %s366 = scalar_select %p365, %s21, 2
        %s367 = scalar_lea.vmem %s4, %s366
        %p368 = scmp.lt.s32.totalorder %s21, 2
        %s369 = scalar_select %p368, %s21, 2
        %s370 = smul.addr %s369, 32
        %s371 = smul.addr %s370, 4
        %s372 = scalar_lea.vmem %s5, %s371
        %p373 = scmp.lt.s32.totalorder %s21, 2
        %s374 = scalar_select %p373, %s21, 2
        %s375 = scalar_lea.vmem %s6, %s374
        %v377 = vld [vmem:[%s351] sm:$0x3]
        %v378 = vld [vmem:[%s356] sm:$0xff]
        %v379 = vld [vmem:[%s356 + $0x8] sm:$0xff]
        %v380 = vld [vmem:[%s356 + $0x10] sm:$0xff]
        %v381 = vld [vmem:[%s356 + $0x18] sm:$0xff]
        %v386 = vcombine.high %v378, %v378
        %v388 = vunpack.c.l.s4 1966171168
        %v389 = vunpack.c.0.s8 %v388
        %v390 = vlaneseq
        %v391 = vshrl.u32 %v390, 7
        %v392 = vsub.s32 %v389, %v391
        %v393 = vrot.slane %v378, %v392
        %v395 = vunpack.c.l.s4 1966171168
        %v396 = vunpack.c.0.s8 %v395
        %v397 = vlaneseq
        %v398 = vshrl.u32 %v397, 7
        %v399 = vsub.s32 %v396, %v398
        %v400 = vrot.slane %v386, %v399
        %v401 = vcombine.high %v393, %v393
        %v402 = vcombine.high %v400, %v400
        %v404 = vunpack.c.l.s4 1966171168
        %v405 = vunpack.c.0.s8 %v404
        %v406 = vlaneseq
        %v407 = vshrl.u32 %v406, 7
        %v408 = vsub.s32 %v405, %v407
        %v409 = vrot.slane %v393, %v408
        %v411 = vunpack.c.l.s4 1966171168
        %v412 = vunpack.c.0.s8 %v411
        %v413 = vlaneseq
        %v414 = vshrl.u32 %v413, 7
        %v415 = vsub.s32 %v412, %v414
        %v416 = vrot.slane %v400, %v415
        %v418 = vunpack.c.l.s4 1966171168
        %v419 = vunpack.c.0.s8 %v418
        %v420 = vlaneseq
        %v421 = vshrl.u32 %v420, 7
        %v422 = vsub.s32 %v419, %v421
        %v423 = vrot.slane %v401, %v422
        %v425 = vunpack.c.l.s4 1966171168
        %v426 = vunpack.c.0.s8 %v425
        %v427 = vlaneseq
        %v428 = vshrl.u32 %v427, 7
        %v429 = vsub.s32 %v426, %v428
        %v430 = vrot.slane %v402, %v429
        %v431 = vcombine.high %v409, %v409
        %v432 = vcombine.high %v416, %v416
        %v433 = vcombine.high %v423, %v423
        %v434 = vcombine.high %v430, %v430
        %v435 = vcombine.high %v379, %v379
        %v437 = vunpack.c.l.s4 1966171168
        %v438 = vunpack.c.0.s8 %v437
        %v439 = vlaneseq
        %v440 = vshrl.u32 %v439, 7
        %v441 = vsub.s32 %v438, %v440
        %v442 = vrot.slane %v379, %v441
        %v444 = vunpack.c.l.s4 1966171168
        %v445 = vunpack.c.0.s8 %v444
        %v446 = vlaneseq
        %v447 = vshrl.u32 %v446, 7
        %v448 = vsub.s32 %v445, %v447
        %v449 = vrot.slane %v435, %v448
        %v450 = vcombine.high %v442, %v442
        %v451 = vcombine.high %v449, %v449
        %v453 = vunpack.c.l.s4 1966171168
        %v454 = vunpack.c.0.s8 %v453
        %v455 = vlaneseq
        %v456 = vshrl.u32 %v455, 7
        %v457 = vsub.s32 %v454, %v456
        %v458 = vrot.slane %v442, %v457
        %v460 = vunpack.c.l.s4 1966171168
        %v461 = vunpack.c.0.s8 %v460
        %v462 = vlaneseq
        %v463 = vshrl.u32 %v462, 7
        %v464 = vsub.s32 %v461, %v463
        %v465 = vrot.slane %v449, %v464
        %v467 = vunpack.c.l.s4 1966171168
        %v468 = vunpack.c.0.s8 %v467
        %v469 = vlaneseq
        %v470 = vshrl.u32 %v469, 7
        %v471 = vsub.s32 %v468, %v470
        %v472 = vrot.slane %v450, %v471
        %v474 = vunpack.c.l.s4 1966171168
        %v475 = vunpack.c.0.s8 %v474
        %v476 = vlaneseq
        %v477 = vshrl.u32 %v476, 7
        %v478 = vsub.s32 %v475, %v477
        %v479 = vrot.slane %v451, %v478
        %v480 = vcombine.high %v458, %v458
        %v481 = vcombine.high %v465, %v465
        %v482 = vcombine.high %v472, %v472
        %v483 = vcombine.high %v479, %v479
        %v484 = vcombine.high %v380, %v380
        %v486 = vunpack.c.l.s4 1966171168
        %v487 = vunpack.c.0.s8 %v486
        %v488 = vlaneseq
        %v489 = vshrl.u32 %v488, 7
        %v490 = vsub.s32 %v487, %v489
        %v491 = vrot.slane %v380, %v490
        %v493 = vunpack.c.l.s4 1966171168
        %v494 = vunpack.c.0.s8 %v493
        %v495 = vlaneseq
        %v496 = vshrl.u32 %v495, 7
        %v497 = vsub.s32 %v494, %v496
        %v498 = vrot.slane %v484, %v497
        %v499 = vcombine.high %v491, %v491
        %v500 = vcombine.high %v498, %v498
        %v502 = vunpack.c.l.s4 1966171168
        %v503 = vunpack.c.0.s8 %v502
        %v504 = vlaneseq
        %v505 = vshrl.u32 %v504, 7
        %v506 = vsub.s32 %v503, %v505
        %v507 = vrot.slane %v491, %v506
        %v509 = vunpack.c.l.s4 1966171168
        %v510 = vunpack.c.0.s8 %v509
        %v511 = vlaneseq
        %v512 = vshrl.u32 %v511, 7
        %v513 = vsub.s32 %v510, %v512
        %v514 = vrot.slane %v498, %v513
        %v516 = vunpack.c.l.s4 1966171168
        %v517 = vunpack.c.0.s8 %v516
        %v518 = vlaneseq
        %v519 = vshrl.u32 %v518, 7
        %v520 = vsub.s32 %v517, %v519
        %v521 = vrot.slane %v499, %v520
        %v523 = vunpack.c.l.s4 1966171168
        %v524 = vunpack.c.0.s8 %v523
        %v525 = vlaneseq
        %v526 = vshrl.u32 %v525, 7
        %v527 = vsub.s32 %v524, %v526
        %v528 = vrot.slane %v500, %v527
        %v529 = vcombine.high %v507, %v507
        %v530 = vcombine.high %v514, %v514
        %v531 = vcombine.high %v521, %v521
        %v532 = vcombine.high %v528, %v528
        %v533 = vcombine.high %v381, %v381
        %v535 = vunpack.c.l.s4 1966171168
        %v536 = vunpack.c.0.s8 %v535
        %v537 = vlaneseq
        %v538 = vshrl.u32 %v537, 7
        %v539 = vsub.s32 %v536, %v538
        %v540 = vrot.slane %v381, %v539
        %v542 = vunpack.c.l.s4 1966171168
        %v543 = vunpack.c.0.s8 %v542
        %v544 = vlaneseq
        %v545 = vshrl.u32 %v544, 7
        %v546 = vsub.s32 %v543, %v545
        %v547 = vrot.slane %v533, %v546
        %v548 = vcombine.high %v540, %v540
        %v549 = vcombine.high %v547, %v547
        %v551 = vunpack.c.l.s4 1966171168
        %v552 = vunpack.c.0.s8 %v551
        %v553 = vlaneseq
        %v554 = vshrl.u32 %v553, 7
        %v555 = vsub.s32 %v552, %v554
        %v556 = vrot.slane %v540, %v555
        %v558 = vunpack.c.l.s4 1966171168
        %v559 = vunpack.c.0.s8 %v558
        %v560 = vlaneseq
        %v561 = vshrl.u32 %v560, 7
        %v562 = vsub.s32 %v559, %v561
        %v563 = vrot.slane %v547, %v562
        %v565 = vunpack.c.l.s4 1966171168
        %v566 = vunpack.c.0.s8 %v565
        %v567 = vlaneseq
        %v568 = vshrl.u32 %v567, 7
        %v569 = vsub.s32 %v566, %v568
        %v570 = vrot.slane %v548, %v569
        %v572 = vunpack.c.l.s4 1966171168
        %v573 = vunpack.c.0.s8 %v572
        %v574 = vlaneseq
        %v575 = vshrl.u32 %v574, 7
        %v576 = vsub.s32 %v573, %v575
        %v577 = vrot.slane %v549, %v576
        %v578 = vcombine.high %v556, %v556
        %v579 = vcombine.high %v563, %v563
        %v580 = vcombine.high %v570, %v570
        %v581 = vcombine.high %v577, %v577
        %v582 = vlaneseq
        %v583 = vshrl.u32 %v582, 7
        %v584 = vsub.s32 0, %v583
        %v585 = vrot.slane %v409, %v584
        %v586 = vlaneseq
        %v587 = vshrl.u32 %v586, 7
        %v588 = vsub.s32 0, %v587
        %v589 = vrot.slane %v423, %v588
        %v590 = vlaneseq
        %v591 = vshrl.u32 %v590, 7
        %v592 = vsub.s32 0, %v591
        %v593 = vrot.slane %v431, %v592
        %v594 = vlaneseq
        %v595 = vshrl.u32 %v594, 7
        %v596 = vsub.s32 0, %v595
        %v597 = vrot.slane %v433, %v596
        %v598 = vlaneseq
        %v599 = vshrl.u32 %v598, 7
        %v600 = vsub.s32 0, %v599
        %v601 = vrot.slane %v416, %v600
        %v602 = vlaneseq
        %v603 = vshrl.u32 %v602, 7
        %v604 = vsub.s32 0, %v603
        %v605 = vrot.slane %v430, %v604
        %v606 = vlaneseq
        %v607 = vshrl.u32 %v606, 7
        %v608 = vsub.s32 0, %v607
        %v609 = vrot.slane %v432, %v608
        %v610 = vlaneseq
        %v611 = vshrl.u32 %v610, 7
        %v612 = vsub.s32 0, %v611
        %v613 = vrot.slane %v434, %v612
        %v614 = vlaneseq
        %v615 = vshrl.u32 %v614, 7
        %v616 = vsub.s32 0, %v615
        %v617 = vrot.slane %v458, %v616
        %v618 = vlaneseq
        %v619 = vshrl.u32 %v618, 7
        %v620 = vsub.s32 0, %v619
        %v621 = vrot.slane %v472, %v620
        %v622 = vlaneseq
        %v623 = vshrl.u32 %v622, 7
        %v624 = vsub.s32 0, %v623
        %v625 = vrot.slane %v480, %v624
        %v626 = vlaneseq
        %v627 = vshrl.u32 %v626, 7
        %v628 = vsub.s32 0, %v627
        %v629 = vrot.slane %v482, %v628
        %v630 = vlaneseq
        %v631 = vshrl.u32 %v630, 7
        %v632 = vsub.s32 0, %v631
        %v633 = vrot.slane %v465, %v632
        %v634 = vlaneseq
        %v635 = vshrl.u32 %v634, 7
        %v636 = vsub.s32 0, %v635
        %v637 = vrot.slane %v479, %v636
        %v638 = vlaneseq
        %v639 = vshrl.u32 %v638, 7
        %v640 = vsub.s32 0, %v639
        %v641 = vrot.slane %v481, %v640
        %v642 = vlaneseq
        %v643 = vshrl.u32 %v642, 7
        %v644 = vsub.s32 0, %v643
        %v645 = vrot.slane %v483, %v644
        %v646 = vlaneseq
        %v647 = vshrl.u32 %v646, 7
        %v648 = vsub.s32 0, %v647
        %v649 = vrot.slane %v507, %v648
        %v650 = vlaneseq
        %v651 = vshrl.u32 %v650, 7
        %v652 = vsub.s32 0, %v651
        %v653 = vrot.slane %v521, %v652
        %v654 = vlaneseq
        %v655 = vshrl.u32 %v654, 7
        %v656 = vsub.s32 0, %v655
        %v657 = vrot.slane %v529, %v656
        %v658 = vlaneseq
        %v659 = vshrl.u32 %v658, 7
        %v660 = vsub.s32 0, %v659
        %v661 = vrot.slane %v531, %v660
        %v662 = vlaneseq
        %v663 = vshrl.u32 %v662, 7
        %v664 = vsub.s32 0, %v663
        %v665 = vrot.slane %v514, %v664
        %v666 = vlaneseq
        %v667 = vshrl.u32 %v666, 7
        %v668 = vsub.s32 0, %v667
        %v669 = vrot.slane %v528, %v668
        %v670 = vlaneseq
        %v671 = vshrl.u32 %v670, 7
        %v672 = vsub.s32 0, %v671
        %v673 = vrot.slane %v530, %v672
        %v674 = vlaneseq
        %v675 = vshrl.u32 %v674, 7
        %v676 = vsub.s32 0, %v675
        %v677 = vrot.slane %v532, %v676
        %v678 = vlaneseq
        %v679 = vshrl.u32 %v678, 7
        %v680 = vsub.s32 0, %v679
        %v681 = vrot.slane %v556, %v680
        %v682 = vlaneseq
        %v683 = vshrl.u32 %v682, 7
        %v684 = vsub.s32 0, %v683
        %v685 = vrot.slane %v570, %v684
        %v686 = vlaneseq
        %v687 = vshrl.u32 %v686, 7
        %v688 = vsub.s32 0, %v687
        %v689 = vrot.slane %v578, %v688
        %v690 = vlaneseq
        %v691 = vshrl.u32 %v690, 7
        %v692 = vsub.s32 0, %v691
        %v693 = vrot.slane %v580, %v692
        %v694 = vlaneseq
        %v695 = vshrl.u32 %v694, 7
        %v696 = vsub.s32 0, %v695
        %v697 = vrot.slane %v563, %v696
        %v698 = vlaneseq
        %v699 = vshrl.u32 %v698, 7
        %v700 = vsub.s32 0, %v699
        %v701 = vrot.slane %v577, %v700
        %v702 = vlaneseq
        %v703 = vshrl.u32 %v702, 7
        %v704 = vsub.s32 0, %v703
        %v705 = vrot.slane %v579, %v704
        %v706 = vlaneseq
        %v707 = vshrl.u32 %v706, 7
        %v708 = vsub.s32 0, %v707
        %v709 = vrot.slane %v581, %v708
        %710 = vset.pattern.permute.xlu0 0
        %711 = vperm.xlu0 %710, %v585
        %v712 = vpop.permute.xlu0 %711
        %714 = vset.pattern.permute.xlu0 0
        %715 = vperm.xlu0 %714, %v589
        %v716 = vpop.permute.xlu0 %715
        %718 = vset.pattern.permute.xlu0 0
        %719 = vperm.xlu0 %718, %v593
        %v720 = vpop.permute.xlu0 %719
        %722 = vset.pattern.permute.xlu0 0
        %723 = vperm.xlu0 %722, %v597
        %v724 = vpop.permute.xlu0 %723
        %726 = vset.pattern.permute.xlu0 0
        %727 = vperm.xlu0 %726, %v601
        %v728 = vpop.permute.xlu0 %727
        %730 = vset.pattern.permute.xlu0 0
        %731 = vperm.xlu0 %730, %v605
        %v732 = vpop.permute.xlu0 %731
        %734 = vset.pattern.permute.xlu0 0
        %735 = vperm.xlu0 %734, %v609
        %v736 = vpop.permute.xlu0 %735
        %738 = vset.pattern.permute.xlu0 0
        %739 = vperm.xlu0 %738, %v613
        %v740 = vpop.permute.xlu0 %739
        %742 = vset.pattern.permute.xlu0 0
        %743 = vperm.xlu0 %742, %v617
        %v744 = vpop.permute.xlu0 %743
        %746 = vset.pattern.permute.xlu0 0
        %747 = vperm.xlu0 %746, %v621
        %v748 = vpop.permute.xlu0 %747
        %750 = vset.pattern.permute.xlu0 0
        %751 = vperm.xlu0 %750, %v625
        %v752 = vpop.permute.xlu0 %751
        %754 = vset.pattern.permute.xlu0 0
        %755 = vperm.xlu0 %754, %v629
        %v756 = vpop.permute.xlu0 %755
        %758 = vset.pattern.permute.xlu0 0
        %759 = vperm.xlu0 %758, %v633
        %v760 = vpop.permute.xlu0 %759
        %762 = vset.pattern.permute.xlu0 0
        %763 = vperm.xlu0 %762, %v637
        %v764 = vpop.permute.xlu0 %763
        %766 = vset.pattern.permute.xlu0 0
        %767 = vperm.xlu0 %766, %v641
        %v768 = vpop.permute.xlu0 %767
        %770 = vset.pattern.permute.xlu0 0
        %771 = vperm.xlu0 %770, %v645
        %v772 = vpop.permute.xlu0 %771
        %774 = vset.pattern.permute.xlu0 0
        %775 = vperm.xlu0 %774, %v649
        %v776 = vpop.permute.xlu0 %775
        %778 = vset.pattern.permute.xlu0 0
        %779 = vperm.xlu0 %778, %v653
        %v780 = vpop.permute.xlu0 %779
        %782 = vset.pattern.permute.xlu0 0
        %783 = vperm.xlu0 %782, %v657
        %v784 = vpop.permute.xlu0 %783
        %786 = vset.pattern.permute.xlu0 0
        %787 = vperm.xlu0 %786, %v661
        %v788 = vpop.permute.xlu0 %787
        %790 = vset.pattern.permute.xlu0 0
        %791 = vperm.xlu0 %790, %v665
        %v792 = vpop.permute.xlu0 %791
        %794 = vset.pattern.permute.xlu0 0
        %795 = vperm.xlu0 %794, %v669
        %v796 = vpop.permute.xlu0 %795
        %798 = vset.pattern.permute.xlu0 0
        %799 = vperm.xlu0 %798, %v673
        %v800 = vpop.permute.xlu0 %799
        %802 = vset.pattern.permute.xlu0 0
        %803 = vperm.xlu0 %802, %v677
        %v804 = vpop.permute.xlu0 %803
        %806 = vset.pattern.permute.xlu0 0
        %807 = vperm.xlu0 %806, %v681
        %v808 = vpop.permute.xlu0 %807
        %810 = vset.pattern.permute.xlu0 0
        %811 = vperm.xlu0 %810, %v685
        %v812 = vpop.permute.xlu0 %811
        %814 = vset.pattern.permute.xlu0 0
        %815 = vperm.xlu0 %814, %v689
        %v816 = vpop.permute.xlu0 %815
        %818 = vset.pattern.permute.xlu0 0
        %819 = vperm.xlu0 %818, %v693
        %v820 = vpop.permute.xlu0 %819
        %822 = vset.pattern.permute.xlu0 0
        %823 = vperm.xlu0 %822, %v697
        %v824 = vpop.permute.xlu0 %823
        %826 = vset.pattern.permute.xlu0 0
        %827 = vperm.xlu0 %826, %v701
        %v828 = vpop.permute.xlu0 %827
        %830 = vset.pattern.permute.xlu0 0
        %831 = vperm.xlu0 %830, %v705
        %v832 = vpop.permute.xlu0 %831
        %834 = vset.pattern.permute.xlu0 0
        %835 = vperm.xlu0 %834, %v709
        %v836 = vpop.permute.xlu0 %835
        %v838 = vmul.f32 %v712, %v377
        %v839 = vmul.f32 %v716, %v377
        %v840 = vmul.f32 %v720, %v377
        %v841 = vmul.f32 %v724, %v377
        %v842 = vmul.f32 %v728, %v377
        %v843 = vmul.f32 %v732, %v377
        %v844 = vmul.f32 %v736, %v377
        %v845 = vmul.f32 %v740, %v377
        %v846 = vmul.f32 %v744, %v377
        %v847 = vmul.f32 %v748, %v377
        %v848 = vmul.f32 %v752, %v377
        %v849 = vmul.f32 %v756, %v377
        %v850 = vmul.f32 %v760, %v377
        %v851 = vmul.f32 %v764, %v377
        %v852 = vmul.f32 %v768, %v377
        %v853 = vmul.f32 %v772, %v377
        %v854 = vmul.f32 %v776, %v377
        %v855 = vmul.f32 %v780, %v377
        %v856 = vmul.f32 %v784, %v377
        %v857 = vmul.f32 %v788, %v377
        %v858 = vmul.f32 %v792, %v377
        %v859 = vmul.f32 %v796, %v377
        %v860 = vmul.f32 %v800, %v377
        %v861 = vmul.f32 %v804, %v377
        %v862 = vmul.f32 %v808, %v377
        %v863 = vmul.f32 %v812, %v377
        %v864 = vmul.f32 %v816, %v377
        %v865 = vmul.f32 %v820, %v377
        %v866 = vmul.f32 %v824, %v377
        %v867 = vmul.f32 %v828, %v377
        %v868 = vmul.f32 %v832, %v377
        %v869 = vmul.f32 %v836, %v377
        %v870 = vadd.f32 %v838, 0.0
        %v871 = vadd.f32 %v839, 0.0
        %v872 = vadd.f32 %v840, 0.0
        %v873 = vadd.f32 %v841, 0.0
        %v874 = vadd.f32 %v842, 0.0
        %v875 = vadd.f32 %v843, 0.0
        %v876 = vadd.f32 %v844, 0.0
        %v877 = vadd.f32 %v845, 0.0
        %v878 = vadd.f32 %v846, 0.0
        %v879 = vadd.f32 %v847, 0.0
        %v880 = vadd.f32 %v848, 0.0
        %v881 = vadd.f32 %v849, 0.0
        %v882 = vadd.f32 %v850, 0.0
        %v883 = vadd.f32 %v851, 0.0
        %v884 = vadd.f32 %v852, 0.0
        %v885 = vadd.f32 %v853, 0.0
        %v886 = vadd.f32 %v854, 0.0
        %v887 = vadd.f32 %v855, 0.0
        %v888 = vadd.f32 %v856, 0.0
        %v889 = vadd.f32 %v857, 0.0
        %v890 = vadd.f32 %v858, 0.0
        %v891 = vadd.f32 %v859, 0.0
        %v892 = vadd.f32 %v860, 0.0
        %v893 = vadd.f32 %v861, 0.0
        %v894 = vadd.f32 %v862, 0.0
        %v895 = vadd.f32 %v863, 0.0
        %v896 = vadd.f32 %v864, 0.0
        %v897 = vadd.f32 %v865, 0.0
        %v898 = vadd.f32 %v866, 0.0
        %v899 = vadd.f32 %v867, 0.0
        %v900 = vadd.f32 %v868, 0.0
        %v901 = vadd.f32 %v869, 0.0
        %902 = vset.pattern.permute.xlu0 1
        %903 = vperm.xlu0 %902, %v585
        %v904 = vpop.permute.xlu0 %903
        %906 = vset.pattern.permute.xlu0 1
        %907 = vperm.xlu0 %906, %v589
        %v908 = vpop.permute.xlu0 %907
        %910 = vset.pattern.permute.xlu0 1
        %911 = vperm.xlu0 %910, %v593
        %v912 = vpop.permute.xlu0 %911
        %914 = vset.pattern.permute.xlu0 1
        %915 = vperm.xlu0 %914, %v597
        %v916 = vpop.permute.xlu0 %915
        %918 = vset.pattern.permute.xlu0 1
        %919 = vperm.xlu0 %918, %v601
        %v920 = vpop.permute.xlu0 %919
        %922 = vset.pattern.permute.xlu0 1
        %923 = vperm.xlu0 %922, %v605
        %v924 = vpop.permute.xlu0 %923
        %926 = vset.pattern.permute.xlu0 1
        %927 = vperm.xlu0 %926, %v609
        %v928 = vpop.permute.xlu0 %927
        %930 = vset.pattern.permute.xlu0 1
        %931 = vperm.xlu0 %930, %v613
        %v932 = vpop.permute.xlu0 %931
        %934 = vset.pattern.permute.xlu0 1
        %935 = vperm.xlu0 %934, %v617
        %v936 = vpop.permute.xlu0 %935
        %938 = vset.pattern.permute.xlu0 1
        %939 = vperm.xlu0 %938, %v621
        %v940 = vpop.permute.xlu0 %939
        %942 = vset.pattern.permute.xlu0 1
        %943 = vperm.xlu0 %942, %v625
        %v944 = vpop.permute.xlu0 %943
        %946 = vset.pattern.permute.xlu0 1
        %947 = vperm.xlu0 %946, %v629
        %v948 = vpop.permute.xlu0 %947
        %950 = vset.pattern.permute.xlu0 1
        %951 = vperm.xlu0 %950, %v633
        %v952 = vpop.permute.xlu0 %951
        %954 = vset.pattern.permute.xlu0 1
        %955 = vperm.xlu0 %954, %v637
        %v956 = vpop.permute.xlu0 %955
        %958 = vset.pattern.permute.xlu0 1
        %959 = vperm.xlu0 %958, %v641
        %v960 = vpop.permute.xlu0 %959
        %962 = vset.pattern.permute.xlu0 1
        %963 = vperm.xlu0 %962, %v645
        %v964 = vpop.permute.xlu0 %963
        %966 = vset.pattern.permute.xlu0 1
        %967 = vperm.xlu0 %966, %v649
        %v968 = vpop.permute.xlu0 %967
        %970 = vset.pattern.permute.xlu0 1
        %971 = vperm.xlu0 %970, %v653
        %v972 = vpop.permute.xlu0 %971
        %974 = vset.pattern.permute.xlu0 1
        %975 = vperm.xlu0 %974, %v657
        %v976 = vpop.permute.xlu0 %975
        %978 = vset.pattern.permute.xlu0 1
        %979 = vperm.xlu0 %978, %v661
        %v980 = vpop.permute.xlu0 %979
        %982 = vset.pattern.permute.xlu0 1
        %983 = vperm.xlu0 %982, %v665
        %v984 = vpop.permute.xlu0 %983
        %986 = vset.pattern.permute.xlu0 1
        %987 = vperm.xlu0 %986, %v669
        %v988 = vpop.permute.xlu0 %987
        %990 = vset.pattern.permute.xlu0 1
        %991 = vperm.xlu0 %990, %v673
        %v992 = vpop.permute.xlu0 %991
        %994 = vset.pattern.permute.xlu0 1
        %995 = vperm.xlu0 %994, %v677
        %v996 = vpop.permute.xlu0 %995
        %998 = vset.pattern.permute.xlu0 1
        %999 = vperm.xlu0 %998, %v681
        %v1000 = vpop.permute.xlu0 %999
        %1002 = vset.pattern.permute.xlu0 1
        %1003 = vperm.xlu0 %1002, %v685
        %v1004 = vpop.permute.xlu0 %1003
        %1006 = vset.pattern.permute.xlu0 1
        %1007 = vperm.xlu0 %1006, %v689
        %v1008 = vpop.permute.xlu0 %1007
        %1010 = vset.pattern.permute.xlu0 1
        %1011 = vperm.xlu0 %1010, %v693
        %v1012 = vpop.permute.xlu0 %1011
        %1014 = vset.pattern.permute.xlu0 1
        %1015 = vperm.xlu0 %1014, %v697
        %v1016 = vpop.permute.xlu0 %1015
        %1018 = vset.pattern.permute.xlu0 1
        %1019 = vperm.xlu0 %1018, %v701
        %v1020 = vpop.permute.xlu0 %1019
        %1022 = vset.pattern.permute.xlu0 1
        %1023 = vperm.xlu0 %1022, %v705
        %v1024 = vpop.permute.xlu0 %1023
        %1026 = vset.pattern.permute.xlu0 1
        %1027 = vperm.xlu0 %1026, %v709
        %v1028 = vpop.permute.xlu0 %1027
        %v1030 = vmul.f32 %v904, %v377
        %v1031 = vmul.f32 %v908, %v377
        %v1032 = vmul.f32 %v912, %v377
        %v1033 = vmul.f32 %v916, %v377
        %v1034 = vmul.f32 %v920, %v377
        %v1035 = vmul.f32 %v924, %v377
        %v1036 = vmul.f32 %v928, %v377
        %v1037 = vmul.f32 %v932, %v377
        %v1038 = vmul.f32 %v936, %v377
        %v1039 = vmul.f32 %v940, %v377
        %v1040 = vmul.f32 %v944, %v377
        %v1041 = vmul.f32 %v948, %v377
        %v1042 = vmul.f32 %v952, %v377
        %v1043 = vmul.f32 %v956, %v377
        %v1044 = vmul.f32 %v960, %v377
        %v1045 = vmul.f32 %v964, %v377
        %v1046 = vmul.f32 %v968, %v377
        %v1047 = vmul.f32 %v972, %v377
        %v1048 = vmul.f32 %v976, %v377
        %v1049 = vmul.f32 %v980, %v377
        %v1050 = vmul.f32 %v984, %v377
        %v1051 = vmul.f32 %v988, %v377
        %v1052 = vmul.f32 %v992, %v377
        %v1053 = vmul.f32 %v996, %v377
        %v1054 = vmul.f32 %v1000, %v377
        %v1055 = vmul.f32 %v1004, %v377
        %v1056 = vmul.f32 %v1008, %v377
        %v1057 = vmul.f32 %v1012, %v377
        %v1058 = vmul.f32 %v1016, %v377
        %v1059 = vmul.f32 %v1020, %v377
        %v1060 = vmul.f32 %v1024, %v377
        %v1061 = vmul.f32 %v1028, %v377
        %1094 = vrot.lane.b32.xlu0 %v1030, 127
        %v1095 = vpop.permute.xlu0 %1094
        %1096 = vrot.lane.b32.xlu0 %v1031, 127
        %v1097 = vpop.permute.xlu0 %1096
        %1098 = vrot.lane.b32.xlu0 %v1032, 127
        %v1099 = vpop.permute.xlu0 %1098
        %1100 = vrot.lane.b32.xlu0 %v1033, 127
        %v1101 = vpop.permute.xlu0 %1100
        %1102 = vrot.lane.b32.xlu0 %v1034, 127
        %v1103 = vpop.permute.xlu0 %1102
        %1104 = vrot.lane.b32.xlu0 %v1035, 127
        %v1105 = vpop.permute.xlu0 %1104
        %1106 = vrot.lane.b32.xlu0 %v1036, 127
        %v1107 = vpop.permute.xlu0 %1106
        %1108 = vrot.lane.b32.xlu0 %v1037, 127
        %v1109 = vpop.permute.xlu0 %1108
        %1110 = vrot.lane.b32.xlu0 %v1038, 127
        %v1111 = vpop.permute.xlu0 %1110
        %1112 = vrot.lane.b32.xlu0 %v1039, 127
        %v1113 = vpop.permute.xlu0 %1112
        %1114 = vrot.lane.b32.xlu0 %v1040, 127
        %v1115 = vpop.permute.xlu0 %1114
        %1116 = vrot.lane.b32.xlu0 %v1041, 127
        %v1117 = vpop.permute.xlu0 %1116
        %1118 = vrot.lane.b32.xlu0 %v1042, 127
        %v1119 = vpop.permute.xlu0 %1118
        %1120 = vrot.lane.b32.xlu0 %v1043, 127
        %v1121 = vpop.permute.xlu0 %1120
        %1122 = vrot.lane.b32.xlu0 %v1044, 127
        %v1123 = vpop.permute.xlu0 %1122
        %1124 = vrot.lane.b32.xlu0 %v1045, 127
        %v1125 = vpop.permute.xlu0 %1124
        %1126 = vrot.lane.b32.xlu0 %v1046, 127
        %v1127 = vpop.permute.xlu0 %1126
        %1128 = vrot.lane.b32.xlu0 %v1047, 127
        %v1129 = vpop.permute.xlu0 %1128
        %1130 = vrot.lane.b32.xlu0 %v1048, 127
        %v1131 = vpop.permute.xlu0 %1130
        %1132 = vrot.lane.b32.xlu0 %v1049, 127
        %v1133 = vpop.permute.xlu0 %1132
        %1134 = vrot.lane.b32.xlu0 %v1050, 127
        %v1135 = vpop.permute.xlu0 %1134
        %1136 = vrot.lane.b32.xlu0 %v1051, 127
        %v1137 = vpop.permute.xlu0 %1136
        %1138 = vrot.lane.b32.xlu0 %v1052, 127
        %v1139 = vpop.permute.xlu0 %1138
        %1140 = vrot.lane.b32.xlu0 %v1053, 127
        %v1141 = vpop.permute.xlu0 %1140
        %1142 = vrot.lane.b32.xlu0 %v1054, 127
        %v1143 = vpop.permute.xlu0 %1142
        %1144 = vrot.lane.b32.xlu0 %v1055, 127
        %v1145 = vpop.permute.xlu0 %1144
        %1146 = vrot.lane.b32.xlu0 %v1056, 127
        %v1147 = vpop.permute.xlu0 %1146
        %1148 = vrot.lane.b32.xlu0 %v1057, 127
        %v1149 = vpop.permute.xlu0 %1148
        %1150 = vrot.lane.b32.xlu0 %v1058, 127
        %v1151 = vpop.permute.xlu0 %1150
        %1152 = vrot.lane.b32.xlu0 %v1059, 127
        %v1153 = vpop.permute.xlu0 %1152
        %1154 = vrot.lane.b32.xlu0 %v1060, 127
        %v1155 = vpop.permute.xlu0 %1154
        %1156 = vrot.lane.b32.xlu0 %v1061, 127
        %v1157 = vpop.permute.xlu0 %1156
        %v1190 = vadd.f32 %v870, %v1095
        %v1191 = vadd.f32 %v871, %v1097
        %v1192 = vadd.f32 %v872, %v1099
        %v1193 = vadd.f32 %v873, %v1101
        %v1194 = vadd.f32 %v874, %v1103
        %v1195 = vadd.f32 %v875, %v1105
        %v1196 = vadd.f32 %v876, %v1107
        %v1197 = vadd.f32 %v877, %v1109
        %v1198 = vadd.f32 %v878, %v1111
        %v1199 = vadd.f32 %v879, %v1113
        %v1200 = vadd.f32 %v880, %v1115
        %v1201 = vadd.f32 %v881, %v1117
        %v1202 = vadd.f32 %v882, %v1119
        %v1203 = vadd.f32 %v883, %v1121
        %v1204 = vadd.f32 %v884, %v1123
        %v1205 = vadd.f32 %v885, %v1125
        %v1206 = vadd.f32 %v886, %v1127
        %v1207 = vadd.f32 %v887, %v1129
        %v1208 = vadd.f32 %v888, %v1131
        %v1209 = vadd.f32 %v889, %v1133
        %v1210 = vadd.f32 %v890, %v1135
        %v1211 = vadd.f32 %v891, %v1137
        %v1212 = vadd.f32 %v892, %v1139
        %v1213 = vadd.f32 %v893, %v1141
        %v1214 = vadd.f32 %v894, %v1143
        %v1215 = vadd.f32 %v895, %v1145
        %v1216 = vadd.f32 %v896, %v1147
        %v1217 = vadd.f32 %v897, %v1149
        %v1218 = vadd.f32 %v898, %v1151
        %v1219 = vadd.f32 %v899, %v1153
        %v1220 = vadd.f32 %v900, %v1155
        %v1221 = vadd.f32 %v901, %v1157
        %1222 = vset.pattern.permute.xlu0 2
        %1223 = vperm.xlu0 %1222, %v585
        %v1224 = vpop.permute.xlu0 %1223
        %1226 = vset.pattern.permute.xlu0 2
        %1227 = vperm.xlu0 %1226, %v589
        %v1228 = vpop.permute.xlu0 %1227
        %1230 = vset.pattern.permute.xlu0 2
        %1231 = vperm.xlu0 %1230, %v593
        %v1232 = vpop.permute.xlu0 %1231
        %1234 = vset.pattern.permute.xlu0 2
        %1235 = vperm.xlu0 %1234, %v597
        %v1236 = vpop.permute.xlu0 %1235
        %1238 = vset.pattern.permute.xlu0 2
        %1239 = vperm.xlu0 %1238, %v601
        %v1240 = vpop.permute.xlu0 %1239
        %1242 = vset.pattern.permute.xlu0 2
        %1243 = vperm.xlu0 %1242, %v605
        %v1244 = vpop.permute.xlu0 %1243
        %1246 = vset.pattern.permute.xlu0 2
        %1247 = vperm.xlu0 %1246, %v609
        %v1248 = vpop.permute.xlu0 %1247
        %1250 = vset.pattern.permute.xlu0 2
        %1251 = vperm.xlu0 %1250, %v613
        %v1252 = vpop.permute.xlu0 %1251
        %1254 = vset.pattern.permute.xlu0 2
        %1255 = vperm.xlu0 %1254, %v617
        %v1256 = vpop.permute.xlu0 %1255
        %1258 = vset.pattern.permute.xlu0 2
        %1259 = vperm.xlu0 %1258, %v621
        %v1260 = vpop.permute.xlu0 %1259
        %1262 = vset.pattern.permute.xlu0 2
        %1263 = vperm.xlu0 %1262, %v625
        %v1264 = vpop.permute.xlu0 %1263
        %1266 = vset.pattern.permute.xlu0 2
        %1267 = vperm.xlu0 %1266, %v629
        %v1268 = vpop.permute.xlu0 %1267
        %1270 = vset.pattern.permute.xlu0 2
        %1271 = vperm.xlu0 %1270, %v633
        %v1272 = vpop.permute.xlu0 %1271
        %1274 = vset.pattern.permute.xlu0 2
        %1275 = vperm.xlu0 %1274, %v637
        %v1276 = vpop.permute.xlu0 %1275
        %1278 = vset.pattern.permute.xlu0 2
        %1279 = vperm.xlu0 %1278, %v641
        %v1280 = vpop.permute.xlu0 %1279
        %1282 = vset.pattern.permute.xlu0 2
        %1283 = vperm.xlu0 %1282, %v645
        %v1284 = vpop.permute.xlu0 %1283
        %1286 = vset.pattern.permute.xlu0 2
        %1287 = vperm.xlu0 %1286, %v649
        %v1288 = vpop.permute.xlu0 %1287
        %1290 = vset.pattern.permute.xlu0 2
        %1291 = vperm.xlu0 %1290, %v653
        %v1292 = vpop.permute.xlu0 %1291
        %1294 = vset.pattern.permute.xlu0 2
        %1295 = vperm.xlu0 %1294, %v657
        %v1296 = vpop.permute.xlu0 %1295
        %1298 = vset.pattern.permute.xlu0 2
        %1299 = vperm.xlu0 %1298, %v661
        %v1300 = vpop.permute.xlu0 %1299
        %1302 = vset.pattern.permute.xlu0 2
        %1303 = vperm.xlu0 %1302, %v665
        %v1304 = vpop.permute.xlu0 %1303
        %1306 = vset.pattern.permute.xlu0 2
        %1307 = vperm.xlu0 %1306, %v669
        %v1308 = vpop.permute.xlu0 %1307
        %1310 = vset.pattern.permute.xlu0 2
        %1311 = vperm.xlu0 %1310, %v673
        %v1312 = vpop.permute.xlu0 %1311
        %1314 = vset.pattern.permute.xlu0 2
        %1315 = vperm.xlu0 %1314, %v677
        %v1316 = vpop.permute.xlu0 %1315
        %1318 = vset.pattern.permute.xlu0 2
        %1319 = vperm.xlu0 %1318, %v681
        %v1320 = vpop.permute.xlu0 %1319
        %1322 = vset.pattern.permute.xlu0 2
        %1323 = vperm.xlu0 %1322, %v685
        %v1324 = vpop.permute.xlu0 %1323
        %1326 = vset.pattern.permute.xlu0 2
        %1327 = vperm.xlu0 %1326, %v689
        %v1328 = vpop.permute.xlu0 %1327
        %1330 = vset.pattern.permute.xlu0 2
        %1331 = vperm.xlu0 %1330, %v693
        %v1332 = vpop.permute.xlu0 %1331
        %1334 = vset.pattern.permute.xlu0 2
        %1335 = vperm.xlu0 %1334, %v697
        %v1336 = vpop.permute.xlu0 %1335
        %1338 = vset.pattern.permute.xlu0 2
        %1339 = vperm.xlu0 %1338, %v701
        %v1340 = vpop.permute.xlu0 %1339
        %1342 = vset.pattern.permute.xlu0 2
        %1343 = vperm.xlu0 %1342, %v705
        %v1344 = vpop.permute.xlu0 %1343
        %1346 = vset.pattern.permute.xlu0 2
        %1347 = vperm.xlu0 %1346, %v709
        %v1348 = vpop.permute.xlu0 %1347
        %v1350 = vmul.f32 %v1224, %v377
        %v1351 = vmul.f32 %v1228, %v377
        %v1352 = vmul.f32 %v1232, %v377
        %v1353 = vmul.f32 %v1236, %v377
        %v1354 = vmul.f32 %v1240, %v377
        %v1355 = vmul.f32 %v1244, %v377
        %v1356 = vmul.f32 %v1248, %v377
        %v1357 = vmul.f32 %v1252, %v377
        %v1358 = vmul.f32 %v1256, %v377
        %v1359 = vmul.f32 %v1260, %v377
        %v1360 = vmul.f32 %v1264, %v377
        %v1361 = vmul.f32 %v1268, %v377
        %v1362 = vmul.f32 %v1272, %v377
        %v1363 = vmul.f32 %v1276, %v377
        %v1364 = vmul.f32 %v1280, %v377
        %v1365 = vmul.f32 %v1284, %v377
        %v1366 = vmul.f32 %v1288, %v377
        %v1367 = vmul.f32 %v1292, %v377
        %v1368 = vmul.f32 %v1296, %v377
        %v1369 = vmul.f32 %v1300, %v377
        %v1370 = vmul.f32 %v1304, %v377
        %v1371 = vmul.f32 %v1308, %v377
        %v1372 = vmul.f32 %v1312, %v377
        %v1373 = vmul.f32 %v1316, %v377
        %v1374 = vmul.f32 %v1320, %v377
        %v1375 = vmul.f32 %v1324, %v377
        %v1376 = vmul.f32 %v1328, %v377
        %v1377 = vmul.f32 %v1332, %v377
        %v1378 = vmul.f32 %v1336, %v377
        %v1379 = vmul.f32 %v1340, %v377
        %v1380 = vmul.f32 %v1344, %v377
        %v1381 = vmul.f32 %v1348, %v377
        %1414 = vrot.lane.b32.xlu0 %v1350, 126
        %v1415 = vpop.permute.xlu0 %1414
        %1416 = vrot.lane.b32.xlu0 %v1351, 126
        %v1417 = vpop.permute.xlu0 %1416
        %1418 = vrot.lane.b32.xlu0 %v1352, 126
        %v1419 = vpop.permute.xlu0 %1418
        %1420 = vrot.lane.b32.xlu0 %v1353, 126
        %v1421 = vpop.permute.xlu0 %1420
        %1422 = vrot.lane.b32.xlu0 %v1354, 126
        %v1423 = vpop.permute.xlu0 %1422
        %1424 = vrot.lane.b32.xlu0 %v1355, 126
        %v1425 = vpop.permute.xlu0 %1424
        %1426 = vrot.lane.b32.xlu0 %v1356, 126
        %v1427 = vpop.permute.xlu0 %1426
        %1428 = vrot.lane.b32.xlu0 %v1357, 126
        %v1429 = vpop.permute.xlu0 %1428
        %1430 = vrot.lane.b32.xlu0 %v1358, 126
        %v1431 = vpop.permute.xlu0 %1430
        %1432 = vrot.lane.b32.xlu0 %v1359, 126
        %v1433 = vpop.permute.xlu0 %1432
        %1434 = vrot.lane.b32.xlu0 %v1360, 126
        %v1435 = vpop.permute.xlu0 %1434
        %1436 = vrot.lane.b32.xlu0 %v1361, 126
        %v1437 = vpop.permute.xlu0 %1436
        %1438 = vrot.lane.b32.xlu0 %v1362, 126
        %v1439 = vpop.permute.xlu0 %1438
        %1440 = vrot.lane.b32.xlu0 %v1363, 126
        %v1441 = vpop.permute.xlu0 %1440
        %1442 = vrot.lane.b32.xlu0 %v1364, 126
        %v1443 = vpop.permute.xlu0 %1442
        %1444 = vrot.lane.b32.xlu0 %v1365, 126
        %v1445 = vpop.permute.xlu0 %1444
        %1446 = vrot.lane.b32.xlu0 %v1366, 126
        %v1447 = vpop.permute.xlu0 %1446
        %1448 = vrot.lane.b32.xlu0 %v1367, 126
        %v1449 = vpop.permute.xlu0 %1448
        %1450 = vrot.lane.b32.xlu0 %v1368, 126
        %v1451 = vpop.permute.xlu0 %1450
        %1452 = vrot.lane.b32.xlu0 %v1369, 126
        %v1453 = vpop.permute.xlu0 %1452
        %1454 = vrot.lane.b32.xlu0 %v1370, 126
        %v1455 = vpop.permute.xlu0 %1454
        %1456 = vrot.lane.b32.xlu0 %v1371, 126
        %v1457 = vpop.permute.xlu0 %1456
        %1458 = vrot.lane.b32.xlu0 %v1372, 126
        %v1459 = vpop.permute.xlu0 %1458
        %1460 = vrot.lane.b32.xlu0 %v1373, 126
        %v1461 = vpop.permute.xlu0 %1460
        %1462 = vrot.lane.b32.xlu0 %v1374, 126
        %v1463 = vpop.permute.xlu0 %1462
        %1464 = vrot.lane.b32.xlu0 %v1375, 126
        %v1465 = vpop.permute.xlu0 %1464
        %1466 = vrot.lane.b32.xlu0 %v1376, 126
        %v1467 = vpop.permute.xlu0 %1466
        %1468 = vrot.lane.b32.xlu0 %v1377, 126
        %v1469 = vpop.permute.xlu0 %1468
        %1470 = vrot.lane.b32.xlu0 %v1378, 126
        %v1471 = vpop.permute.xlu0 %1470
        %1472 = vrot.lane.b32.xlu0 %v1379, 126
        %v1473 = vpop.permute.xlu0 %1472
        %1474 = vrot.lane.b32.xlu0 %v1380, 126
        %v1475 = vpop.permute.xlu0 %1474
        %1476 = vrot.lane.b32.xlu0 %v1381, 126
        %v1477 = vpop.permute.xlu0 %1476
        %v1510 = vadd.f32 %v1190, %v1415
        %v1511 = vadd.f32 %v1191, %v1417
        %v1512 = vadd.f32 %v1192, %v1419
        %v1513 = vadd.f32 %v1193, %v1421
        %v1514 = vadd.f32 %v1194, %v1423
        %v1515 = vadd.f32 %v1195, %v1425
        %v1516 = vadd.f32 %v1196, %v1427
        %v1517 = vadd.f32 %v1197, %v1429
        %v1518 = vadd.f32 %v1198, %v1431
        %v1519 = vadd.f32 %v1199, %v1433
        %v1520 = vadd.f32 %v1200, %v1435
        %v1521 = vadd.f32 %v1201, %v1437
        %v1522 = vadd.f32 %v1202, %v1439
        %v1523 = vadd.f32 %v1203, %v1441
        %v1524 = vadd.f32 %v1204, %v1443
        %v1525 = vadd.f32 %v1205, %v1445
        %v1526 = vadd.f32 %v1206, %v1447
        %v1527 = vadd.f32 %v1207, %v1449
        %v1528 = vadd.f32 %v1208, %v1451
        %v1529 = vadd.f32 %v1209, %v1453
        %v1530 = vadd.f32 %v1210, %v1455
        %v1531 = vadd.f32 %v1211, %v1457
        %v1532 = vadd.f32 %v1212, %v1459
        %v1533 = vadd.f32 %v1213, %v1461
        %v1534 = vadd.f32 %v1214, %v1463
        %v1535 = vadd.f32 %v1215, %v1465
        %v1536 = vadd.f32 %v1216, %v1467
        %v1537 = vadd.f32 %v1217, %v1469
        %v1538 = vadd.f32 %v1218, %v1471
        %v1539 = vadd.f32 %v1219, %v1473
        %v1540 = vadd.f32 %v1220, %v1475
        %v1541 = vadd.f32 %v1221, %v1477
        %1542 = vset.pattern.permute.xlu0 3
        %1543 = vperm.xlu0 %1542, %v585
        %v1544 = vpop.permute.xlu0 %1543
        %1546 = vset.pattern.permute.xlu0 3
        %1547 = vperm.xlu0 %1546, %v589
        %v1548 = vpop.permute.xlu0 %1547
        %1550 = vset.pattern.permute.xlu0 3
        %1551 = vperm.xlu0 %1550, %v593
        %v1552 = vpop.permute.xlu0 %1551
        %1554 = vset.pattern.permute.xlu0 3
        %1555 = vperm.xlu0 %1554, %v597
        %v1556 = vpop.permute.xlu0 %1555
        %1558 = vset.pattern.permute.xlu0 3
        %1559 = vperm.xlu0 %1558, %v601
        %v1560 = vpop.permute.xlu0 %1559
        %1562 = vset.pattern.permute.xlu0 3
        %1563 = vperm.xlu0 %1562, %v605
        %v1564 = vpop.permute.xlu0 %1563
        %1566 = vset.pattern.permute.xlu0 3
        %1567 = vperm.xlu0 %1566, %v609
        %v1568 = vpop.permute.xlu0 %1567
        %1570 = vset.pattern.permute.xlu0 3
        %1571 = vperm.xlu0 %1570, %v613
        %v1572 = vpop.permute.xlu0 %1571
        %1574 = vset.pattern.permute.xlu0 3
        %1575 = vperm.xlu0 %1574, %v617
        %v1576 = vpop.permute.xlu0 %1575
        %1578 = vset.pattern.permute.xlu0 3
        %1579 = vperm.xlu0 %1578, %v621
        %v1580 = vpop.permute.xlu0 %1579
        %1582 = vset.pattern.permute.xlu0 3
        %1583 = vperm.xlu0 %1582, %v625
        %v1584 = vpop.permute.xlu0 %1583
        %1586 = vset.pattern.permute.xlu0 3
        %1587 = vperm.xlu0 %1586, %v629
        %v1588 = vpop.permute.xlu0 %1587
        %1590 = vset.pattern.permute.xlu0 3
        %1591 = vperm.xlu0 %1590, %v633
        %v1592 = vpop.permute.xlu0 %1591
        %1594 = vset.pattern.permute.xlu0 3
        %1595 = vperm.xlu0 %1594, %v637
        %v1596 = vpop.permute.xlu0 %1595
        %1598 = vset.pattern.permute.xlu0 3
        %1599 = vperm.xlu0 %1598, %v641
        %v1600 = vpop.permute.xlu0 %1599
        %1602 = vset.pattern.permute.xlu0 3
        %1603 = vperm.xlu0 %1602, %v645
        %v1604 = vpop.permute.xlu0 %1603
        %1606 = vset.pattern.permute.xlu0 3
        %1607 = vperm.xlu0 %1606, %v649
        %v1608 = vpop.permute.xlu0 %1607
        %1610 = vset.pattern.permute.xlu0 3
        %1611 = vperm.xlu0 %1610, %v653
        %v1612 = vpop.permute.xlu0 %1611
        %1614 = vset.pattern.permute.xlu0 3
        %1615 = vperm.xlu0 %1614, %v657
        %v1616 = vpop.permute.xlu0 %1615
        %1618 = vset.pattern.permute.xlu0 3
        %1619 = vperm.xlu0 %1618, %v661
        %v1620 = vpop.permute.xlu0 %1619
        %1622 = vset.pattern.permute.xlu0 3
        %1623 = vperm.xlu0 %1622, %v665
        %v1624 = vpop.permute.xlu0 %1623
        %1626 = vset.pattern.permute.xlu0 3
        %1627 = vperm.xlu0 %1626, %v669
        %v1628 = vpop.permute.xlu0 %1627
        %1630 = vset.pattern.permute.xlu0 3
        %1631 = vperm.xlu0 %1630, %v673
        %v1632 = vpop.permute.xlu0 %1631
        %1634 = vset.pattern.permute.xlu0 3
        %1635 = vperm.xlu0 %1634, %v677
        %v1636 = vpop.permute.xlu0 %1635
        %1638 = vset.pattern.permute.xlu0 3
        %1639 = vperm.xlu0 %1638, %v681
        %v1640 = vpop.permute.xlu0 %1639
        %1642 = vset.pattern.permute.xlu0 3
        %1643 = vperm.xlu0 %1642, %v685
        %v1644 = vpop.permute.xlu0 %1643
        %1646 = vset.pattern.permute.xlu0 3
        %1647 = vperm.xlu0 %1646, %v689
        %v1648 = vpop.permute.xlu0 %1647
        %1650 = vset.pattern.permute.xlu0 3
        %1651 = vperm.xlu0 %1650, %v693
        %v1652 = vpop.permute.xlu0 %1651
        %1654 = vset.pattern.permute.xlu0 3
        %1655 = vperm.xlu0 %1654, %v697
        %v1656 = vpop.permute.xlu0 %1655
        %1658 = vset.pattern.permute.xlu0 3
        %1659 = vperm.xlu0 %1658, %v701
        %v1660 = vpop.permute.xlu0 %1659
        %1662 = vset.pattern.permute.xlu0 3
        %1663 = vperm.xlu0 %1662, %v705
        %v1664 = vpop.permute.xlu0 %1663
        %1666 = vset.pattern.permute.xlu0 3
        %1667 = vperm.xlu0 %1666, %v709
        %v1668 = vpop.permute.xlu0 %1667
        %v1670 = vmul.f32 %v1544, %v377
        %v1671 = vmul.f32 %v1548, %v377
        %v1672 = vmul.f32 %v1552, %v377
        %v1673 = vmul.f32 %v1556, %v377
        %v1674 = vmul.f32 %v1560, %v377
        %v1675 = vmul.f32 %v1564, %v377
        %v1676 = vmul.f32 %v1568, %v377
        %v1677 = vmul.f32 %v1572, %v377
        %v1678 = vmul.f32 %v1576, %v377
        %v1679 = vmul.f32 %v1580, %v377
        %v1680 = vmul.f32 %v1584, %v377
        %v1681 = vmul.f32 %v1588, %v377
        %v1682 = vmul.f32 %v1592, %v377
        %v1683 = vmul.f32 %v1596, %v377
        %v1684 = vmul.f32 %v1600, %v377
        %v1685 = vmul.f32 %v1604, %v377
        %v1686 = vmul.f32 %v1608, %v377
        %v1687 = vmul.f32 %v1612, %v377
        %v1688 = vmul.f32 %v1616, %v377
        %v1689 = vmul.f32 %v1620, %v377
        %v1690 = vmul.f32 %v1624, %v377
        %v1691 = vmul.f32 %v1628, %v377
        %v1692 = vmul.f32 %v1632, %v377
        %v1693 = vmul.f32 %v1636, %v377
        %v1694 = vmul.f32 %v1640, %v377
        %v1695 = vmul.f32 %v1644, %v377
        %v1696 = vmul.f32 %v1648, %v377
        %v1697 = vmul.f32 %v1652, %v377
        %v1698 = vmul.f32 %v1656, %v377
        %v1699 = vmul.f32 %v1660, %v377
        %v1700 = vmul.f32 %v1664, %v377
        %v1701 = vmul.f32 %v1668, %v377
        %1734 = vrot.lane.b32.xlu0 %v1670, 125
        %v1735 = vpop.permute.xlu0 %1734
        %1736 = vrot.lane.b32.xlu0 %v1671, 125
        %v1737 = vpop.permute.xlu0 %1736
        %1738 = vrot.lane.b32.xlu0 %v1672, 125
        %v1739 = vpop.permute.xlu0 %1738
        %1740 = vrot.lane.b32.xlu0 %v1673, 125
        %v1741 = vpop.permute.xlu0 %1740
        %1742 = vrot.lane.b32.xlu0 %v1674, 125
        %v1743 = vpop.permute.xlu0 %1742
        %1744 = vrot.lane.b32.xlu0 %v1675, 125
        %v1745 = vpop.permute.xlu0 %1744
        %1746 = vrot.lane.b32.xlu0 %v1676, 125
        %v1747 = vpop.permute.xlu0 %1746
        %1748 = vrot.lane.b32.xlu0 %v1677, 125
        %v1749 = vpop.permute.xlu0 %1748
        %1750 = vrot.lane.b32.xlu0 %v1678, 125
        %v1751 = vpop.permute.xlu0 %1750
        %1752 = vrot.lane.b32.xlu0 %v1679, 125
        %v1753 = vpop.permute.xlu0 %1752
        %1754 = vrot.lane.b32.xlu0 %v1680, 125
        %v1755 = vpop.permute.xlu0 %1754
        %1756 = vrot.lane.b32.xlu0 %v1681, 125
        %v1757 = vpop.permute.xlu0 %1756
        %1758 = vrot.lane.b32.xlu0 %v1682, 125
        %v1759 = vpop.permute.xlu0 %1758
        %1760 = vrot.lane.b32.xlu0 %v1683, 125
        %v1761 = vpop.permute.xlu0 %1760
        %1762 = vrot.lane.b32.xlu0 %v1684, 125
        %v1763 = vpop.permute.xlu0 %1762
        %1764 = vrot.lane.b32.xlu0 %v1685, 125
        %v1765 = vpop.permute.xlu0 %1764
        %1766 = vrot.lane.b32.xlu0 %v1686, 125
        %v1767 = vpop.permute.xlu0 %1766
        %1768 = vrot.lane.b32.xlu0 %v1687, 125
        %v1769 = vpop.permute.xlu0 %1768
        %1770 = vrot.lane.b32.xlu0 %v1688, 125
        %v1771 = vpop.permute.xlu0 %1770
        %1772 = vrot.lane.b32.xlu0 %v1689, 125
        %v1773 = vpop.permute.xlu0 %1772
        %1774 = vrot.lane.b32.xlu0 %v1690, 125
        %v1775 = vpop.permute.xlu0 %1774
        %1776 = vrot.lane.b32.xlu0 %v1691, 125
        %v1777 = vpop.permute.xlu0 %1776
        %1778 = vrot.lane.b32.xlu0 %v1692, 125
        %v1779 = vpop.permute.xlu0 %1778
        %1780 = vrot.lane.b32.xlu0 %v1693, 125
        %v1781 = vpop.permute.xlu0 %1780
        %1782 = vrot.lane.b32.xlu0 %v1694, 125
        %v1783 = vpop.permute.xlu0 %1782
        %1784 = vrot.lane.b32.xlu0 %v1695, 125
        %v1785 = vpop.permute.xlu0 %1784
        %1786 = vrot.lane.b32.xlu0 %v1696, 125
        %v1787 = vpop.permute.xlu0 %1786
        %1788 = vrot.lane.b32.xlu0 %v1697, 125
        %v1789 = vpop.permute.xlu0 %1788
        %1790 = vrot.lane.b32.xlu0 %v1698, 125
        %v1791 = vpop.permute.xlu0 %1790
        %1792 = vrot.lane.b32.xlu0 %v1699, 125
        %v1793 = vpop.permute.xlu0 %1792
        %1794 = vrot.lane.b32.xlu0 %v1700, 125
        %v1795 = vpop.permute.xlu0 %1794
        %1796 = vrot.lane.b32.xlu0 %v1701, 125
        %v1797 = vpop.permute.xlu0 %1796
        %v1830 = vadd.f32 %v1510, %v1735
        %v1831 = vadd.f32 %v1511, %v1737
        %v1832 = vadd.f32 %v1512, %v1739
        %v1833 = vadd.f32 %v1513, %v1741
        %v1834 = vadd.f32 %v1514, %v1743
        %v1835 = vadd.f32 %v1515, %v1745
        %v1836 = vadd.f32 %v1516, %v1747
        %v1837 = vadd.f32 %v1517, %v1749
        %v1838 = vadd.f32 %v1518, %v1751
        %v1839 = vadd.f32 %v1519, %v1753
        %v1840 = vadd.f32 %v1520, %v1755
        %v1841 = vadd.f32 %v1521, %v1757
        %v1842 = vadd.f32 %v1522, %v1759
        %v1843 = vadd.f32 %v1523, %v1761
        %v1844 = vadd.f32 %v1524, %v1763
        %v1845 = vadd.f32 %v1525, %v1765
        %v1846 = vadd.f32 %v1526, %v1767
        %v1847 = vadd.f32 %v1527, %v1769
        %v1848 = vadd.f32 %v1528, %v1771
        %v1849 = vadd.f32 %v1529, %v1773
        %v1850 = vadd.f32 %v1530, %v1775
        %v1851 = vadd.f32 %v1531, %v1777
        %v1852 = vadd.f32 %v1532, %v1779
        %v1853 = vadd.f32 %v1533, %v1781
        %v1854 = vadd.f32 %v1534, %v1783
        %v1855 = vadd.f32 %v1535, %v1785
        %v1856 = vadd.f32 %v1536, %v1787
        %v1857 = vadd.f32 %v1537, %v1789
        %v1858 = vadd.f32 %v1538, %v1791
        %v1859 = vadd.f32 %v1539, %v1793
        %v1860 = vadd.f32 %v1540, %v1795
        %v1861 = vadd.f32 %v1541, %v1797
        %v1862 = vld [vmem:[%s359] sm:$0x1]
        %v1863 = vlaneseq
        %v1864 = vshrl.u32 %v1863, 7
        %v1865 = vsub.s32 0, %v1864
        %v1866 = vrot.slane %v1862, %v1865
        %1868 = vbcast.lane.b32.xlu0 %v1866, 256
        %v1869 = vpop.permute.xlu0 %1868
        %s1871 = sor.u32 256, 8
        %1872 = vbcast.lane.b32.xlu0 %v1866, %s1871
        %v1873 = vpop.permute.xlu0 %1872
        %s1875 = sor.u32 256, 16
        %1876 = vbcast.lane.b32.xlu0 %v1866, %s1875
        %v1877 = vpop.permute.xlu0 %1876
        %s1879 = sor.u32 256, 24
        %1880 = vbcast.lane.b32.xlu0 %v1866, %s1879
        %v1881 = vpop.permute.xlu0 %1880
        %v1882 = vlaneseq
        %v1883 = vshrl.u32 %v1882, 7
        %v1884 = vsub.s32 0, %v1883
        %v1885 = vrot.slane %v1869, %v1884
        %v1886 = vlaneseq
        %v1887 = vshrl.u32 %v1886, 7
        %v1888 = vsub.s32 1, %v1887
        %v1889 = vrot.slane %v1869, %v1888
        %v1890 = vlaneseq
        %v1891 = vshrl.u32 %v1890, 7
        %v1892 = vsub.s32 2, %v1891
        %v1893 = vrot.slane %v1869, %v1892
        %v1894 = vlaneseq
        %v1895 = vshrl.u32 %v1894, 7
        %v1896 = vsub.s32 3, %v1895
        %v1897 = vrot.slane %v1869, %v1896
        %v1898 = vlaneseq
        %v1899 = vshrl.u32 %v1898, 7
        %v1900 = vsub.s32 4, %v1899
        %v1901 = vrot.slane %v1869, %v1900
        %v1902 = vlaneseq
        %v1903 = vshrl.u32 %v1902, 7
        %v1904 = vsub.s32 5, %v1903
        %v1905 = vrot.slane %v1869, %v1904
        %v1906 = vlaneseq
        %v1907 = vshrl.u32 %v1906, 7
        %v1908 = vsub.s32 6, %v1907
        %v1909 = vrot.slane %v1869, %v1908
        %v1910 = vlaneseq
        %v1911 = vshrl.u32 %v1910, 7
        %v1912 = vsub.s32 7, %v1911
        %v1913 = vrot.slane %v1869, %v1912
        %v1914 = vlaneseq
        %v1915 = vshrl.u32 %v1914, 7
        %v1916 = vsub.s32 0, %v1915
        %v1917 = vrot.slane %v1873, %v1916
        %v1918 = vlaneseq
        %v1919 = vshrl.u32 %v1918, 7
        %v1920 = vsub.s32 1, %v1919
        %v1921 = vrot.slane %v1873, %v1920
        %v1922 = vlaneseq
        %v1923 = vshrl.u32 %v1922, 7
        %v1924 = vsub.s32 2, %v1923
        %v1925 = vrot.slane %v1873, %v1924
        %v1926 = vlaneseq
        %v1927 = vshrl.u32 %v1926, 7
        %v1928 = vsub.s32 3, %v1927
        %v1929 = vrot.slane %v1873, %v1928
        %v1930 = vlaneseq
        %v1931 = vshrl.u32 %v1930, 7
        %v1932 = vsub.s32 4, %v1931
        %v1933 = vrot.slane %v1873, %v1932
        %v1934 = vlaneseq
        %v1935 = vshrl.u32 %v1934, 7
        %v1936 = vsub.s32 5, %v1935
        %v1937 = vrot.slane %v1873, %v1936
        %v1938 = vlaneseq
        %v1939 = vshrl.u32 %v1938, 7
        %v1940 = vsub.s32 6, %v1939
        %v1941 = vrot.slane %v1873, %v1940
        %v1942 = vlaneseq
        %v1943 = vshrl.u32 %v1942, 7
        %v1944 = vsub.s32 7, %v1943
        %v1945 = vrot.slane %v1873, %v1944
        %v1946 = vlaneseq
        %v1947 = vshrl.u32 %v1946, 7
        %v1948 = vsub.s32 0, %v1947
        %v1949 = vrot.slane %v1877, %v1948
        %v1950 = vlaneseq
        %v1951 = vshrl.u32 %v1950, 7
        %v1952 = vsub.s32 1, %v1951
        %v1953 = vrot.slane %v1877, %v1952
        %v1954 = vlaneseq
        %v1955 = vshrl.u32 %v1954, 7
        %v1956 = vsub.s32 2, %v1955
        %v1957 = vrot.slane %v1877, %v1956
        %v1958 = vlaneseq
        %v1959 = vshrl.u32 %v1958, 7
        %v1960 = vsub.s32 3, %v1959
        %v1961 = vrot.slane %v1877, %v1960
        %v1962 = vlaneseq
        %v1963 = vshrl.u32 %v1962, 7
        %v1964 = vsub.s32 4, %v1963
        %v1965 = vrot.slane %v1877, %v1964
        %v1966 = vlaneseq
        %v1967 = vshrl.u32 %v1966, 7
        %v1968 = vsub.s32 5, %v1967
        %v1969 = vrot.slane %v1877, %v1968
        %v1970 = vlaneseq
        %v1971 = vshrl.u32 %v1970, 7
        %v1972 = vsub.s32 6, %v1971
        %v1973 = vrot.slane %v1877, %v1972
        %v1974 = vlaneseq
        %v1975 = vshrl.u32 %v1974, 7
        %v1976 = vsub.s32 7, %v1975
        %v1977 = vrot.slane %v1877, %v1976
        %v1978 = vlaneseq
        %v1979 = vshrl.u32 %v1978, 7
        %v1980 = vsub.s32 0, %v1979
        %v1981 = vrot.slane %v1881, %v1980
        %v1982 = vlaneseq
        %v1983 = vshrl.u32 %v1982, 7
        %v1984 = vsub.s32 1, %v1983
        %v1985 = vrot.slane %v1881, %v1984
        %v1986 = vlaneseq
        %v1987 = vshrl.u32 %v1986, 7
        %v1988 = vsub.s32 2, %v1987
        %v1989 = vrot.slane %v1881, %v1988
        %v1990 = vlaneseq
        %v1991 = vshrl.u32 %v1990, 7
        %v1992 = vsub.s32 3, %v1991
        %v1993 = vrot.slane %v1881, %v1992
        %v1994 = vlaneseq
        %v1995 = vshrl.u32 %v1994, 7
        %v1996 = vsub.s32 4, %v1995
        %v1997 = vrot.slane %v1881, %v1996
        %v1998 = vlaneseq
        %v1999 = vshrl.u32 %v1998, 7
        %v2000 = vsub.s32 5, %v1999
        %v2001 = vrot.slane %v1881, %v2000
        %v2002 = vlaneseq
        %v2003 = vshrl.u32 %v2002, 7
        %v2004 = vsub.s32 6, %v2003
        %v2005 = vrot.slane %v1881, %v2004
        %v2006 = vlaneseq
        %v2007 = vshrl.u32 %v2006, 7
        %v2008 = vsub.s32 7, %v2007
        %v2009 = vrot.slane %v1881, %v2008
        %v2010 = vadd.f32 %v1830, %v1885
        %v2011 = vadd.f32 %v1831, %v1889
        %v2012 = vadd.f32 %v1832, %v1893
        %v2013 = vadd.f32 %v1833, %v1897
        %v2014 = vadd.f32 %v1834, %v1901
        %v2015 = vadd.f32 %v1835, %v1905
        %v2016 = vadd.f32 %v1836, %v1909
        %v2017 = vadd.f32 %v1837, %v1913
        %v2018 = vadd.f32 %v1838, %v1917
        %v2019 = vadd.f32 %v1839, %v1921
        %v2020 = vadd.f32 %v1840, %v1925
        %v2021 = vadd.f32 %v1841, %v1929
        %v2022 = vadd.f32 %v1842, %v1933
        %v2023 = vadd.f32 %v1843, %v1937
        %v2024 = vadd.f32 %v1844, %v1941
        %v2025 = vadd.f32 %v1845, %v1945
        %v2026 = vadd.f32 %v1846, %v1949
        %v2027 = vadd.f32 %v1847, %v1953
        %v2028 = vadd.f32 %v1848, %v1957
        %v2029 = vadd.f32 %v1849, %v1961
        %v2030 = vadd.f32 %v1850, %v1965
        %v2031 = vadd.f32 %v1851, %v1969
        %v2032 = vadd.f32 %v1852, %v1973
        %v2033 = vadd.f32 %v1853, %v1977
        %v2034 = vadd.f32 %v1854, %v1981
        %v2035 = vadd.f32 %v1855, %v1985
        %v2036 = vadd.f32 %v1856, %v1989
        %v2037 = vadd.f32 %v1857, %v1993
        %v2038 = vadd.f32 %v1858, %v1997
        %v2039 = vadd.f32 %v1859, %v2001
        %v2040 = vadd.f32 %v1860, %v2005
        %v2041 = vadd.f32 %v1861, %v2009
        %v2042 = vmax.f32 %v2010, 0.0
        %v2043 = vmax.f32 %v2011, 0.0
        %v2044 = vmax.f32 %v2012, 0.0
        %v2045 = vmax.f32 %v2013, 0.0
        %v2046 = vmax.f32 %v2014, 0.0
        %v2047 = vmax.f32 %v2015, 0.0
        %v2048 = vmax.f32 %v2016, 0.0
        %v2049 = vmax.f32 %v2017, 0.0
        %v2050 = vmax.f32 %v2018, 0.0
        %v2051 = vmax.f32 %v2019, 0.0
        %v2052 = vmax.f32 %v2020, 0.0
        %v2053 = vmax.f32 %v2021, 0.0
        %v2054 = vmax.f32 %v2022, 0.0
        %v2055 = vmax.f32 %v2023, 0.0
        %v2056 = vmax.f32 %v2024, 0.0
        %v2057 = vmax.f32 %v2025, 0.0
        %v2058 = vmax.f32 %v2026, 0.0
        %v2059 = vmax.f32 %v2027, 0.0
        %v2060 = vmax.f32 %v2028, 0.0
        %v2061 = vmax.f32 %v2029, 0.0
        %v2062 = vmax.f32 %v2030, 0.0
        %v2063 = vmax.f32 %v2031, 0.0
        %v2064 = vmax.f32 %v2032, 0.0
        %v2065 = vmax.f32 %v2033, 0.0
        %v2066 = vmax.f32 %v2034, 0.0
        %v2067 = vmax.f32 %v2035, 0.0
        %v2068 = vmax.f32 %v2036, 0.0
        %v2069 = vmax.f32 %v2037, 0.0
        %v2070 = vmax.f32 %v2038, 0.0
        %v2071 = vmax.f32 %v2039, 0.0
        %v2072 = vmax.f32 %v2040, 0.0
        %v2073 = vmax.f32 %v2041, 0.0
        %v2074 = vpack.c.bf16 %v2042, %v2042
        %v2075 = vpack.c.bf16 %v2043, %v2043
        %v2076 = vpack.c.bf16 %v2044, %v2044
        %v2077 = vpack.c.bf16 %v2045, %v2045
        %v2078 = vpack.c.bf16 %v2046, %v2046
        %v2079 = vpack.c.bf16 %v2047, %v2047
        %v2080 = vpack.c.bf16 %v2048, %v2048
        %v2081 = vpack.c.bf16 %v2049, %v2049
        %v2082 = vpack.c.bf16 %v2050, %v2050
        %v2083 = vpack.c.bf16 %v2051, %v2051
        %v2084 = vpack.c.bf16 %v2052, %v2052
        %v2085 = vpack.c.bf16 %v2053, %v2053
        %v2086 = vpack.c.bf16 %v2054, %v2054
        %v2087 = vpack.c.bf16 %v2055, %v2055
        %v2088 = vpack.c.bf16 %v2056, %v2056
        %v2089 = vpack.c.bf16 %v2057, %v2057
        %v2090 = vpack.c.bf16 %v2058, %v2058
        %v2091 = vpack.c.bf16 %v2059, %v2059
        %v2092 = vpack.c.bf16 %v2060, %v2060
        %v2093 = vpack.c.bf16 %v2061, %v2061
        %v2094 = vpack.c.bf16 %v2062, %v2062
        %v2095 = vpack.c.bf16 %v2063, %v2063
        %v2096 = vpack.c.bf16 %v2064, %v2064
        %v2097 = vpack.c.bf16 %v2065, %v2065
        %v2098 = vpack.c.bf16 %v2066, %v2066
        %v2099 = vpack.c.bf16 %v2067, %v2067
        %v2100 = vpack.c.bf16 %v2068, %v2068
        %v2101 = vpack.c.bf16 %v2069, %v2069
        %v2102 = vpack.c.bf16 %v2070, %v2070
        %v2103 = vpack.c.bf16 %v2071, %v2071
        %v2104 = vpack.c.bf16 %v2072, %v2072
        %v2105 = vpack.c.bf16 %v2073, %v2073
        %2138 = vrot.lane.b32.xlu0 %v2074, 127
        %v2139 = vpop.permute.xlu0 %2138
        %2140 = vrot.lane.b32.xlu0 %v2075, 127
        %v2141 = vpop.permute.xlu0 %2140
        %2142 = vrot.lane.b32.xlu0 %v2076, 127
        %v2143 = vpop.permute.xlu0 %2142
        %2144 = vrot.lane.b32.xlu0 %v2077, 127
        %v2145 = vpop.permute.xlu0 %2144
        %2146 = vrot.lane.b32.xlu0 %v2078, 127
        %v2147 = vpop.permute.xlu0 %2146
        %2148 = vrot.lane.b32.xlu0 %v2079, 127
        %v2149 = vpop.permute.xlu0 %2148
        %2150 = vrot.lane.b32.xlu0 %v2080, 127
        %v2151 = vpop.permute.xlu0 %2150
        %2152 = vrot.lane.b32.xlu0 %v2081, 127
        %v2153 = vpop.permute.xlu0 %2152
        %2154 = vrot.lane.b32.xlu0 %v2082, 127
        %v2155 = vpop.permute.xlu0 %2154
        %2156 = vrot.lane.b32.xlu0 %v2083, 127
        %v2157 = vpop.permute.xlu0 %2156
        %2158 = vrot.lane.b32.xlu0 %v2084, 127
        %v2159 = vpop.permute.xlu0 %2158
        %2160 = vrot.lane.b32.xlu0 %v2085, 127
        %v2161 = vpop.permute.xlu0 %2160
        %2162 = vrot.lane.b32.xlu0 %v2086, 127
        %v2163 = vpop.permute.xlu0 %2162
        %2164 = vrot.lane.b32.xlu0 %v2087, 127
        %v2165 = vpop.permute.xlu0 %2164
        %2166 = vrot.lane.b32.xlu0 %v2088, 127
        %v2167 = vpop.permute.xlu0 %2166
        %2168 = vrot.lane.b32.xlu0 %v2089, 127
        %v2169 = vpop.permute.xlu0 %2168
        %2170 = vrot.lane.b32.xlu0 %v2090, 127
        %v2171 = vpop.permute.xlu0 %2170
        %2172 = vrot.lane.b32.xlu0 %v2091, 127
        %v2173 = vpop.permute.xlu0 %2172
        %2174 = vrot.lane.b32.xlu0 %v2092, 127
        %v2175 = vpop.permute.xlu0 %2174
        %2176 = vrot.lane.b32.xlu0 %v2093, 127
        %v2177 = vpop.permute.xlu0 %2176
        %2178 = vrot.lane.b32.xlu0 %v2094, 127
        %v2179 = vpop.permute.xlu0 %2178
        %2180 = vrot.lane.b32.xlu0 %v2095, 127
        %v2181 = vpop.permute.xlu0 %2180
        %2182 = vrot.lane.b32.xlu0 %v2096, 127
        %v2183 = vpop.permute.xlu0 %2182
        %2184 = vrot.lane.b32.xlu0 %v2097, 127
        %v2185 = vpop.permute.xlu0 %2184
        %2186 = vrot.lane.b32.xlu0 %v2098, 127
        %v2187 = vpop.permute.xlu0 %2186
        %2188 = vrot.lane.b32.xlu0 %v2099, 127
        %v2189 = vpop.permute.xlu0 %2188
        %2190 = vrot.lane.b32.xlu0 %v2100, 127
        %v2191 = vpop.permute.xlu0 %2190
        %2192 = vrot.lane.b32.xlu0 %v2101, 127
        %v2193 = vpop.permute.xlu0 %2192
        %2194 = vrot.lane.b32.xlu0 %v2102, 127
        %v2195 = vpop.permute.xlu0 %2194
        %2196 = vrot.lane.b32.xlu0 %v2103, 127
        %v2197 = vpop.permute.xlu0 %2196
        %2198 = vrot.lane.b32.xlu0 %v2104, 127
        %v2199 = vpop.permute.xlu0 %2198
        %2200 = vrot.lane.b32.xlu0 %v2105, 127
        %v2201 = vpop.permute.xlu0 %2200
        %2234 = vrot.lane.b32.xlu0 %v2074, 126
        %v2235 = vpop.permute.xlu0 %2234
        %2236 = vrot.lane.b32.xlu0 %v2075, 126
        %v2237 = vpop.permute.xlu0 %2236
        %2238 = vrot.lane.b32.xlu0 %v2076, 126
        %v2239 = vpop.permute.xlu0 %2238
        %2240 = vrot.lane.b32.xlu0 %v2077, 126
        %v2241 = vpop.permute.xlu0 %2240
        %2242 = vrot.lane.b32.xlu0 %v2078, 126
        %v2243 = vpop.permute.xlu0 %2242
        %2244 = vrot.lane.b32.xlu0 %v2079, 126
        %v2245 = vpop.permute.xlu0 %2244
        %2246 = vrot.lane.b32.xlu0 %v2080, 126
        %v2247 = vpop.permute.xlu0 %2246
        %2248 = vrot.lane.b32.xlu0 %v2081, 126
        %v2249 = vpop.permute.xlu0 %2248
        %2250 = vrot.lane.b32.xlu0 %v2082, 126
        %v2251 = vpop.permute.xlu0 %2250
        %2252 = vrot.lane.b32.xlu0 %v2083, 126
        %v2253 = vpop.permute.xlu0 %2252
        %2254 = vrot.lane.b32.xlu0 %v2084, 126
        %v2255 = vpop.permute.xlu0 %2254
        %2256 = vrot.lane.b32.xlu0 %v2085, 126
        %v2257 = vpop.permute.xlu0 %2256
        %2258 = vrot.lane.b32.xlu0 %v2086, 126
        %v2259 = vpop.permute.xlu0 %2258
        %2260 = vrot.lane.b32.xlu0 %v2087, 126
        %v2261 = vpop.permute.xlu0 %2260
        %2262 = vrot.lane.b32.xlu0 %v2088, 126
        %v2263 = vpop.permute.xlu0 %2262
        %2264 = vrot.lane.b32.xlu0 %v2089, 126
        %v2265 = vpop.permute.xlu0 %2264
        %2266 = vrot.lane.b32.xlu0 %v2090, 126
        %v2267 = vpop.permute.xlu0 %2266
        %2268 = vrot.lane.b32.xlu0 %v2091, 126
        %v2269 = vpop.permute.xlu0 %2268
        %2270 = vrot.lane.b32.xlu0 %v2092, 126
        %v2271 = vpop.permute.xlu0 %2270
        %2272 = vrot.lane.b32.xlu0 %v2093, 126
        %v2273 = vpop.permute.xlu0 %2272
        %2274 = vrot.lane.b32.xlu0 %v2094, 126
        %v2275 = vpop.permute.xlu0 %2274
        %2276 = vrot.lane.b32.xlu0 %v2095, 126
        %v2277 = vpop.permute.xlu0 %2276
        %2278 = vrot.lane.b32.xlu0 %v2096, 126
        %v2279 = vpop.permute.xlu0 %2278
        %2280 = vrot.lane.b32.xlu0 %v2097, 126
        %v2281 = vpop.permute.xlu0 %2280
        %2282 = vrot.lane.b32.xlu0 %v2098, 126
        %v2283 = vpop.permute.xlu0 %2282
        %2284 = vrot.lane.b32.xlu0 %v2099, 126
        %v2285 = vpop.permute.xlu0 %2284
        %2286 = vrot.lane.b32.xlu0 %v2100, 126
        %v2287 = vpop.permute.xlu0 %2286
        %2288 = vrot.lane.b32.xlu0 %v2101, 126
        %v2289 = vpop.permute.xlu0 %2288
        %2290 = vrot.lane.b32.xlu0 %v2102, 126
        %v2291 = vpop.permute.xlu0 %2290
        %2292 = vrot.lane.b32.xlu0 %v2103, 126
        %v2293 = vpop.permute.xlu0 %2292
        %2294 = vrot.lane.b32.xlu0 %v2104, 126
        %v2295 = vpop.permute.xlu0 %2294
        %2296 = vrot.lane.b32.xlu0 %v2105, 126
        %v2297 = vpop.permute.xlu0 %2296
        %2330 = vrot.lane.b32.xlu0 %v2074, 125
        %v2331 = vpop.permute.xlu0 %2330
        %2332 = vrot.lane.b32.xlu0 %v2075, 125
        %v2333 = vpop.permute.xlu0 %2332
        %2334 = vrot.lane.b32.xlu0 %v2076, 125
        %v2335 = vpop.permute.xlu0 %2334
        %2336 = vrot.lane.b32.xlu0 %v2077, 125
        %v2337 = vpop.permute.xlu0 %2336
        %2338 = vrot.lane.b32.xlu0 %v2078, 125
        %v2339 = vpop.permute.xlu0 %2338
        %2340 = vrot.lane.b32.xlu0 %v2079, 125
        %v2341 = vpop.permute.xlu0 %2340
        %2342 = vrot.lane.b32.xlu0 %v2080, 125
        %v2343 = vpop.permute.xlu0 %2342
        %2344 = vrot.lane.b32.xlu0 %v2081, 125
        %v2345 = vpop.permute.xlu0 %2344
        %2346 = vrot.lane.b32.xlu0 %v2082, 125
        %v2347 = vpop.permute.xlu0 %2346
        %2348 = vrot.lane.b32.xlu0 %v2083, 125
        %v2349 = vpop.permute.xlu0 %2348
        %2350 = vrot.lane.b32.xlu0 %v2084, 125
        %v2351 = vpop.permute.xlu0 %2350
        %2352 = vrot.lane.b32.xlu0 %v2085, 125
        %v2353 = vpop.permute.xlu0 %2352
        %2354 = vrot.lane.b32.xlu0 %v2086, 125
        %v2355 = vpop.permute.xlu0 %2354
        %2356 = vrot.lane.b32.xlu0 %v2087, 125
        %v2357 = vpop.permute.xlu0 %2356
        %2358 = vrot.lane.b32.xlu0 %v2088, 125
        %v2359 = vpop.permute.xlu0 %2358
        %2360 = vrot.lane.b32.xlu0 %v2089, 125
        %v2361 = vpop.permute.xlu0 %2360
        %2362 = vrot.lane.b32.xlu0 %v2090, 125
        %v2363 = vpop.permute.xlu0 %2362
        %2364 = vrot.lane.b32.xlu0 %v2091, 125
        %v2365 = vpop.permute.xlu0 %2364
        %2366 = vrot.lane.b32.xlu0 %v2092, 125
        %v2367 = vpop.permute.xlu0 %2366
        %2368 = vrot.lane.b32.xlu0 %v2093, 125
        %v2369 = vpop.permute.xlu0 %2368
        %2370 = vrot.lane.b32.xlu0 %v2094, 125
        %v2371 = vpop.permute.xlu0 %2370
        %2372 = vrot.lane.b32.xlu0 %v2095, 125
        %v2373 = vpop.permute.xlu0 %2372
        %2374 = vrot.lane.b32.xlu0 %v2096, 125
        %v2375 = vpop.permute.xlu0 %2374
        %2376 = vrot.lane.b32.xlu0 %v2097, 125
        %v2377 = vpop.permute.xlu0 %2376
        %2378 = vrot.lane.b32.xlu0 %v2098, 125
        %v2379 = vpop.permute.xlu0 %2378
        %2380 = vrot.lane.b32.xlu0 %v2099, 125
        %v2381 = vpop.permute.xlu0 %2380
        %2382 = vrot.lane.b32.xlu0 %v2100, 125
        %v2383 = vpop.permute.xlu0 %2382
        %2384 = vrot.lane.b32.xlu0 %v2101, 125
        %v2385 = vpop.permute.xlu0 %2384
        %2386 = vrot.lane.b32.xlu0 %v2102, 125
        %v2387 = vpop.permute.xlu0 %2386
        %2388 = vrot.lane.b32.xlu0 %v2103, 125
        %v2389 = vpop.permute.xlu0 %2388
        %2390 = vrot.lane.b32.xlu0 %v2104, 125
        %v2391 = vpop.permute.xlu0 %2390
        %2392 = vrot.lane.b32.xlu0 %v2105, 125
        %v2393 = vpop.permute.xlu0 %2392
        %v2426 = vld [vmem:[%s364] sm:$0xf]
        %v2427 = vld [vmem:[%s364 + $0x4] sm:$0xf]
        %v2428 = vld [vmem:[%s364 + $0x8] sm:$0xf]
        %v2429 = vld [vmem:[%s364 + $0xc] sm:$0xf]
        %v2430 = vld [vmem:[%s364 + $0x10] sm:$0xf]
        %v2431 = vld [vmem:[%s364 + $0x14] sm:$0xf]
        %v2432 = vld [vmem:[%s364 + $0x18] sm:$0xf]
        %v2433 = vld [vmem:[%s364 + $0x1c] sm:$0xf]
        %v2434 = vld [vmem:[%s367] sm:$0x1]
        %v2435 = vlaneseq
        %v2436 = vshrl.u32 %v2435, 7
        %v2437 = vsub.s32 0, %v2436
        %v2438 = vrot.slane %v2434, %v2437
        %2440 = vbcast.lane.b32.xlu0 %v2438, 256
        %v2441 = vpop.permute.xlu0 %2440
        %s2443 = sor.u32 256, 8
        %2444 = vbcast.lane.b32.xlu0 %v2438, %s2443
        %v2445 = vpop.permute.xlu0 %2444
        %s2447 = sor.u32 256, 16
        %2448 = vbcast.lane.b32.xlu0 %v2438, %s2447
        %v2449 = vpop.permute.xlu0 %2448
        %s2451 = sor.u32 256, 24
        %2452 = vbcast.lane.b32.xlu0 %v2438, %s2451
        %v2453 = vpop.permute.xlu0 %2452
        %s2455 = sor.u32 256, 32
        %2456 = vbcast.lane.b32.xlu0 %v2438, %s2455
        %v2457 = vpop.permute.xlu0 %2456
        %s2459 = sor.u32 256, 40
        %2460 = vbcast.lane.b32.xlu0 %v2438, %s2459
        %v2461 = vpop.permute.xlu0 %2460
        %s2463 = sor.u32 256, 48
        %2464 = vbcast.lane.b32.xlu0 %v2438, %s2463
        %v2465 = vpop.permute.xlu0 %2464
        %s2467 = sor.u32 256, 56
        %2468 = vbcast.lane.b32.xlu0 %v2438, %s2467
        %v2469 = vpop.permute.xlu0 %2468
        %v2470 = vlaneseq
        %v2471 = vshrl.u32 %v2470, 7
        %v2472 = vsub.s32 0, %v2471
        %v2473 = vrot.slane %v2441, %v2472
        %v2474 = vlaneseq
        %v2475 = vshrl.u32 %v2474, 7
        %v2476 = vsub.s32 1, %v2475
        %v2477 = vrot.slane %v2441, %v2476
        %v2478 = vlaneseq
        %v2479 = vshrl.u32 %v2478, 7
        %v2480 = vsub.s32 2, %v2479
        %v2481 = vrot.slane %v2441, %v2480
        %v2482 = vlaneseq
        %v2483 = vshrl.u32 %v2482, 7
        %v2484 = vsub.s32 3, %v2483
        %v2485 = vrot.slane %v2441, %v2484
        %v2486 = vlaneseq
        %v2487 = vshrl.u32 %v2486, 7
        %v2488 = vsub.s32 4, %v2487
        %v2489 = vrot.slane %v2441, %v2488
        %v2490 = vlaneseq
        %v2491 = vshrl.u32 %v2490, 7
        %v2492 = vsub.s32 5, %v2491
        %v2493 = vrot.slane %v2441, %v2492
        %v2494 = vlaneseq
        %v2495 = vshrl.u32 %v2494, 7
        %v2496 = vsub.s32 6, %v2495
        %v2497 = vrot.slane %v2441, %v2496
        %v2498 = vlaneseq
        %v2499 = vshrl.u32 %v2498, 7
        %v2500 = vsub.s32 7, %v2499
        %v2501 = vrot.slane %v2441, %v2500
        %v2502 = vlaneseq
        %v2503 = vshrl.u32 %v2502, 7
        %v2504 = vsub.s32 0, %v2503
        %v2505 = vrot.slane %v2445, %v2504
        %v2506 = vlaneseq
        %v2507 = vshrl.u32 %v2506, 7
        %v2508 = vsub.s32 1, %v2507
        %v2509 = vrot.slane %v2445, %v2508
        %v2510 = vlaneseq
        %v2511 = vshrl.u32 %v2510, 7
        %v2512 = vsub.s32 2, %v2511
        %v2513 = vrot.slane %v2445, %v2512
        %v2514 = vlaneseq
        %v2515 = vshrl.u32 %v2514, 7
        %v2516 = vsub.s32 3, %v2515
        %v2517 = vrot.slane %v2445, %v2516
        %v2518 = vlaneseq
        %v2519 = vshrl.u32 %v2518, 7
        %v2520 = vsub.s32 4, %v2519
        %v2521 = vrot.slane %v2445, %v2520
        %v2522 = vlaneseq
        %v2523 = vshrl.u32 %v2522, 7
        %v2524 = vsub.s32 5, %v2523
        %v2525 = vrot.slane %v2445, %v2524
        %v2526 = vlaneseq
        %v2527 = vshrl.u32 %v2526, 7
        %v2528 = vsub.s32 6, %v2527
        %v2529 = vrot.slane %v2445, %v2528
        %v2530 = vlaneseq
        %v2531 = vshrl.u32 %v2530, 7
        %v2532 = vsub.s32 7, %v2531
        %v2533 = vrot.slane %v2445, %v2532
        %v2534 = vlaneseq
        %v2535 = vshrl.u32 %v2534, 7
        %v2536 = vsub.s32 0, %v2535
        %v2537 = vrot.slane %v2449, %v2536
        %v2538 = vlaneseq
        %v2539 = vshrl.u32 %v2538, 7
        %v2540 = vsub.s32 1, %v2539
        %v2541 = vrot.slane %v2449, %v2540
        %v2542 = vlaneseq
        %v2543 = vshrl.u32 %v2542, 7
        %v2544 = vsub.s32 2, %v2543
        %v2545 = vrot.slane %v2449, %v2544
        %v2546 = vlaneseq
        %v2547 = vshrl.u32 %v2546, 7
        %v2548 = vsub.s32 3, %v2547
        %v2549 = vrot.slane %v2449, %v2548
        %v2550 = vlaneseq
        %v2551 = vshrl.u32 %v2550, 7
        %v2552 = vsub.s32 4, %v2551
        %v2553 = vrot.slane %v2449, %v2552
        %v2554 = vlaneseq
        %v2555 = vshrl.u32 %v2554, 7
        %v2556 = vsub.s32 5, %v2555
        %v2557 = vrot.slane %v2449, %v2556
        %v2558 = vlaneseq
        %v2559 = vshrl.u32 %v2558, 7
        %v2560 = vsub.s32 6, %v2559
        %v2561 = vrot.slane %v2449, %v2560
        %v2562 = vlaneseq
        %v2563 = vshrl.u32 %v2562, 7
        %v2564 = vsub.s32 7, %v2563
        %v2565 = vrot.slane %v2449, %v2564
        %v2566 = vlaneseq
        %v2567 = vshrl.u32 %v2566, 7
        %v2568 = vsub.s32 0, %v2567
        %v2569 = vrot.slane %v2453, %v2568
        %v2570 = vlaneseq
        %v2571 = vshrl.u32 %v2570, 7
        %v2572 = vsub.s32 1, %v2571
        %v2573 = vrot.slane %v2453, %v2572
        %v2574 = vlaneseq
        %v2575 = vshrl.u32 %v2574, 7
        %v2576 = vsub.s32 2, %v2575
        %v2577 = vrot.slane %v2453, %v2576
        %v2578 = vlaneseq
        %v2579 = vshrl.u32 %v2578, 7
        %v2580 = vsub.s32 3, %v2579
        %v2581 = vrot.slane %v2453, %v2580
        %v2582 = vlaneseq
        %v2583 = vshrl.u32 %v2582, 7
        %v2584 = vsub.s32 4, %v2583
        %v2585 = vrot.slane %v2453, %v2584
        %v2586 = vlaneseq
        %v2587 = vshrl.u32 %v2586, 7
        %v2588 = vsub.s32 5, %v2587
        %v2589 = vrot.slane %v2453, %v2588
        %v2590 = vlaneseq
        %v2591 = vshrl.u32 %v2590, 7
        %v2592 = vsub.s32 6, %v2591
        %v2593 = vrot.slane %v2453, %v2592
        %v2594 = vlaneseq
        %v2595 = vshrl.u32 %v2594, 7
        %v2596 = vsub.s32 7, %v2595
        %v2597 = vrot.slane %v2453, %v2596
        %v2598 = vlaneseq
        %v2599 = vshrl.u32 %v2598, 7
        %v2600 = vsub.s32 0, %v2599
        %v2601 = vrot.slane %v2457, %v2600
        %v2602 = vlaneseq
        %v2603 = vshrl.u32 %v2602, 7
        %v2604 = vsub.s32 1, %v2603
        %v2605 = vrot.slane %v2457, %v2604
        %v2606 = vlaneseq
        %v2607 = vshrl.u32 %v2606, 7
        %v2608 = vsub.s32 2, %v2607
        %v2609 = vrot.slane %v2457, %v2608
        %v2610 = vlaneseq
        %v2611 = vshrl.u32 %v2610, 7
        %v2612 = vsub.s32 3, %v2611
        %v2613 = vrot.slane %v2457, %v2612
        %v2614 = vlaneseq
        %v2615 = vshrl.u32 %v2614, 7
        %v2616 = vsub.s32 4, %v2615
        %v2617 = vrot.slane %v2457, %v2616
        %v2618 = vlaneseq
        %v2619 = vshrl.u32 %v2618, 7
        %v2620 = vsub.s32 5, %v2619
        %v2621 = vrot.slane %v2457, %v2620
        %v2622 = vlaneseq
        %v2623 = vshrl.u32 %v2622, 7
        %v2624 = vsub.s32 6, %v2623
        %v2625 = vrot.slane %v2457, %v2624
        %v2626 = vlaneseq
        %v2627 = vshrl.u32 %v2626, 7
        %v2628 = vsub.s32 7, %v2627
        %v2629 = vrot.slane %v2457, %v2628
        %v2630 = vlaneseq
        %v2631 = vshrl.u32 %v2630, 7
        %v2632 = vsub.s32 0, %v2631
        %v2633 = vrot.slane %v2461, %v2632
        %v2634 = vlaneseq
        %v2635 = vshrl.u32 %v2634, 7
        %v2636 = vsub.s32 1, %v2635
        %v2637 = vrot.slane %v2461, %v2636
        %v2638 = vlaneseq
        %v2639 = vshrl.u32 %v2638, 7
        %v2640 = vsub.s32 2, %v2639
        %v2641 = vrot.slane %v2461, %v2640
        %v2642 = vlaneseq
        %v2643 = vshrl.u32 %v2642, 7
        %v2644 = vsub.s32 3, %v2643
        %v2645 = vrot.slane %v2461, %v2644
        %v2646 = vlaneseq
        %v2647 = vshrl.u32 %v2646, 7
        %v2648 = vsub.s32 4, %v2647
        %v2649 = vrot.slane %v2461, %v2648
        %v2650 = vlaneseq
        %v2651 = vshrl.u32 %v2650, 7
        %v2652 = vsub.s32 5, %v2651
        %v2653 = vrot.slane %v2461, %v2652
        %v2654 = vlaneseq
        %v2655 = vshrl.u32 %v2654, 7
        %v2656 = vsub.s32 6, %v2655
        %v2657 = vrot.slane %v2461, %v2656
        %v2658 = vlaneseq
        %v2659 = vshrl.u32 %v2658, 7
        %v2660 = vsub.s32 7, %v2659
        %v2661 = vrot.slane %v2461, %v2660
        %v2662 = vlaneseq
        %v2663 = vshrl.u32 %v2662, 7
        %v2664 = vsub.s32 0, %v2663
        %v2665 = vrot.slane %v2465, %v2664
        %v2666 = vlaneseq
        %v2667 = vshrl.u32 %v2666, 7
        %v2668 = vsub.s32 1, %v2667
        %v2669 = vrot.slane %v2465, %v2668
        %v2670 = vlaneseq
        %v2671 = vshrl.u32 %v2670, 7
        %v2672 = vsub.s32 2, %v2671
        %v2673 = vrot.slane %v2465, %v2672
        %v2674 = vlaneseq
        %v2675 = vshrl.u32 %v2674, 7
        %v2676 = vsub.s32 3, %v2675
        %v2677 = vrot.slane %v2465, %v2676
        %v2678 = vlaneseq
        %v2679 = vshrl.u32 %v2678, 7
        %v2680 = vsub.s32 4, %v2679
        %v2681 = vrot.slane %v2465, %v2680
        %v2682 = vlaneseq
        %v2683 = vshrl.u32 %v2682, 7
        %v2684 = vsub.s32 5, %v2683
        %v2685 = vrot.slane %v2465, %v2684
        %v2686 = vlaneseq
        %v2687 = vshrl.u32 %v2686, 7
        %v2688 = vsub.s32 6, %v2687
        %v2689 = vrot.slane %v2465, %v2688
        %v2690 = vlaneseq
        %v2691 = vshrl.u32 %v2690, 7
        %v2692 = vsub.s32 7, %v2691
        %v2693 = vrot.slane %v2465, %v2692
        %v2694 = vlaneseq
        %v2695 = vshrl.u32 %v2694, 7
        %v2696 = vsub.s32 0, %v2695
        %v2697 = vrot.slane %v2469, %v2696
        %v2698 = vlaneseq
        %v2699 = vshrl.u32 %v2698, 7
        %v2700 = vsub.s32 1, %v2699
        %v2701 = vrot.slane %v2469, %v2700
        %v2702 = vlaneseq
        %v2703 = vshrl.u32 %v2702, 7
        %v2704 = vsub.s32 2, %v2703
        %v2705 = vrot.slane %v2469, %v2704
        %v2706 = vlaneseq
        %v2707 = vshrl.u32 %v2706, 7
        %v2708 = vsub.s32 3, %v2707
        %v2709 = vrot.slane %v2469, %v2708
        %v2710 = vlaneseq
        %v2711 = vshrl.u32 %v2710, 7
        %v2712 = vsub.s32 4, %v2711
        %v2713 = vrot.slane %v2469, %v2712
        %v2714 = vlaneseq
        %v2715 = vshrl.u32 %v2714, 7
        %v2716 = vsub.s32 5, %v2715
        %v2717 = vrot.slane %v2469, %v2716
        %v2718 = vlaneseq
        %v2719 = vshrl.u32 %v2718, 7
        %v2720 = vsub.s32 6, %v2719
        %v2721 = vrot.slane %v2469, %v2720
        %v2722 = vlaneseq
        %v2723 = vshrl.u32 %v2722, 7
        %v2724 = vsub.s32 7, %v2723
        %v2725 = vrot.slane %v2469, %v2724
        %v2726 = vcombine.low %v2074, %v2078
        %v2728 = vunpack.c.l.s4 1983009808
        %v2729 = vunpack.c.0.s8 %v2728
        %v2730 = vlaneseq
        %v2731 = vshrl.u32 %v2730, 7
        %v2732 = vsub.s32 %v2729, %v2731
        %v2733 = vrot.slane %v2726, %v2732
        %v2734 = vcombine.low %v2076, %v2080
        %v2736 = vunpack.c.l.s4 1983009808
        %v2737 = vunpack.c.0.s8 %v2736
        %v2738 = vlaneseq
        %v2739 = vshrl.u32 %v2738, 7
        %v2740 = vsub.s32 %v2737, %v2739
        %v2741 = vrot.slane %v2734, %v2740
        %v2742 = vcombine.low %v2082, %v2086
        %v2744 = vunpack.c.l.s4 1983009808
        %v2745 = vunpack.c.0.s8 %v2744
        %v2746 = vlaneseq
        %v2747 = vshrl.u32 %v2746, 7
        %v2748 = vsub.s32 %v2745, %v2747
        %v2749 = vrot.slane %v2742, %v2748
        %v2750 = vcombine.low %v2084, %v2088
        %v2752 = vunpack.c.l.s4 1983009808
        %v2753 = vunpack.c.0.s8 %v2752
        %v2754 = vlaneseq
        %v2755 = vshrl.u32 %v2754, 7
        %v2756 = vsub.s32 %v2753, %v2755
        %v2757 = vrot.slane %v2750, %v2756
        %v2758 = vcombine.low %v2733, %v2741
        %v2760 = vunpack.c.l.s4 1934713408
        %v2761 = vunpack.c.0.s8 %v2760
        %v2762 = vlaneseq
        %v2763 = vshrl.u32 %v2762, 7
        %v2764 = vsub.s32 %v2761, %v2763
        %v2765 = vrot.slane %v2758, %v2764
        %v2766 = vcombine.low %v2749, %v2757
        %v2768 = vunpack.c.l.s4 1934713408
        %v2769 = vunpack.c.0.s8 %v2768
        %v2770 = vlaneseq
        %v2771 = vshrl.u32 %v2770, 7
        %v2772 = vsub.s32 %v2769, %v2771
        %v2773 = vrot.slane %v2766, %v2772
        %v2774 = vcombine.low %v2765, %v2773
        %v2775 = vcombine.low %v2075, %v2079
        %v2777 = vunpack.c.l.s4 1983009808
        %v2778 = vunpack.c.0.s8 %v2777
        %v2779 = vlaneseq
        %v2780 = vshrl.u32 %v2779, 7
        %v2781 = vsub.s32 %v2778, %v2780
        %v2782 = vrot.slane %v2775, %v2781
        %v2783 = vcombine.low %v2077, %v2081
        %v2785 = vunpack.c.l.s4 1983009808
        %v2786 = vunpack.c.0.s8 %v2785
        %v2787 = vlaneseq
        %v2788 = vshrl.u32 %v2787, 7
        %v2789 = vsub.s32 %v2786, %v2788
        %v2790 = vrot.slane %v2783, %v2789
        %v2791 = vcombine.low %v2083, %v2087
        %v2793 = vunpack.c.l.s4 1983009808
        %v2794 = vunpack.c.0.s8 %v2793
        %v2795 = vlaneseq
        %v2796 = vshrl.u32 %v2795, 7
        %v2797 = vsub.s32 %v2794, %v2796
        %v2798 = vrot.slane %v2791, %v2797
        %v2799 = vcombine.low %v2085, %v2089
        %v2801 = vunpack.c.l.s4 1983009808
        %v2802 = vunpack.c.0.s8 %v2801
        %v2803 = vlaneseq
        %v2804 = vshrl.u32 %v2803, 7
        %v2805 = vsub.s32 %v2802, %v2804
        %v2806 = vrot.slane %v2799, %v2805
        %v2807 = vcombine.low %v2782, %v2790
        %v2809 = vunpack.c.l.s4 1934713408
        %v2810 = vunpack.c.0.s8 %v2809
        %v2811 = vlaneseq
        %v2812 = vshrl.u32 %v2811, 7
        %v2813 = vsub.s32 %v2810, %v2812
        %v2814 = vrot.slane %v2807, %v2813
        %v2815 = vcombine.low %v2798, %v2806
        %v2817 = vunpack.c.l.s4 1934713408
        %v2818 = vunpack.c.0.s8 %v2817
        %v2819 = vlaneseq
        %v2820 = vshrl.u32 %v2819, 7
        %v2821 = vsub.s32 %v2818, %v2820
        %v2822 = vrot.slane %v2815, %v2821
        %v2823 = vcombine.low %v2814, %v2822
        %v2824 = vcombine.low %v2090, %v2094
        %v2826 = vunpack.c.l.s4 1983009808
        %v2827 = vunpack.c.0.s8 %v2826
        %v2828 = vlaneseq
        %v2829 = vshrl.u32 %v2828, 7
        %v2830 = vsub.s32 %v2827, %v2829
        %v2831 = vrot.slane %v2824, %v2830
        %v2832 = vcombine.low %v2092, %v2096
        %v2834 = vunpack.c.l.s4 1983009808
        %v2835 = vunpack.c.0.s8 %v2834
        %v2836 = vlaneseq
        %v2837 = vshrl.u32 %v2836, 7
        %v2838 = vsub.s32 %v2835, %v2837
        %v2839 = vrot.slane %v2832, %v2838
        %v2840 = vcombine.low %v2098, %v2102
        %v2842 = vunpack.c.l.s4 1983009808
        %v2843 = vunpack.c.0.s8 %v2842
        %v2844 = vlaneseq
        %v2845 = vshrl.u32 %v2844, 7
        %v2846 = vsub.s32 %v2843, %v2845
        %v2847 = vrot.slane %v2840, %v2846
        %v2848 = vcombine.low %v2100, %v2104
        %v2850 = vunpack.c.l.s4 1983009808
        %v2851 = vunpack.c.0.s8 %v2850
        %v2852 = vlaneseq
        %v2853 = vshrl.u32 %v2852, 7
        %v2854 = vsub.s32 %v2851, %v2853
        %v2855 = vrot.slane %v2848, %v2854
        %v2856 = vcombine.low %v2831, %v2839
        %v2858 = vunpack.c.l.s4 1934713408
        %v2859 = vunpack.c.0.s8 %v2858
        %v2860 = vlaneseq
        %v2861 = vshrl.u32 %v2860, 7
        %v2862 = vsub.s32 %v2859, %v2861
        %v2863 = vrot.slane %v2856, %v2862
        %v2864 = vcombine.low %v2847, %v2855
        %v2866 = vunpack.c.l.s4 1934713408
        %v2867 = vunpack.c.0.s8 %v2866
        %v2868 = vlaneseq
        %v2869 = vshrl.u32 %v2868, 7
        %v2870 = vsub.s32 %v2867, %v2869
        %v2871 = vrot.slane %v2864, %v2870
        %v2872 = vcombine.low %v2863, %v2871
        %v2873 = vcombine.low %v2091, %v2095
        %v2875 = vunpack.c.l.s4 1983009808
        %v2876 = vunpack.c.0.s8 %v2875
        %v2877 = vlaneseq
        %v2878 = vshrl.u32 %v2877, 7
        %v2879 = vsub.s32 %v2876, %v2878
        %v2880 = vrot.slane %v2873, %v2879
        %v2881 = vcombine.low %v2093, %v2097
        %v2883 = vunpack.c.l.s4 1983009808
        %v2884 = vunpack.c.0.s8 %v2883
        %v2885 = vlaneseq
        %v2886 = vshrl.u32 %v2885, 7
        %v2887 = vsub.s32 %v2884, %v2886
        %v2888 = vrot.slane %v2881, %v2887
        %v2889 = vcombine.low %v2099, %v2103
        %v2891 = vunpack.c.l.s4 1983009808
        %v2892 = vunpack.c.0.s8 %v2891
        %v2893 = vlaneseq
        %v2894 = vshrl.u32 %v2893, 7
        %v2895 = vsub.s32 %v2892, %v2894
        %v2896 = vrot.slane %v2889, %v2895
        %v2897 = vcombine.low %v2101, %v2105
        %v2899 = vunpack.c.l.s4 1983009808
        %v2900 = vunpack.c.0.s8 %v2899
        %v2901 = vlaneseq
        %v2902 = vshrl.u32 %v2901, 7
        %v2903 = vsub.s32 %v2900, %v2902
        %v2904 = vrot.slane %v2897, %v2903
        %v2905 = vcombine.low %v2880, %v2888
        %v2907 = vunpack.c.l.s4 1934713408
        %v2908 = vunpack.c.0.s8 %v2907
        %v2909 = vlaneseq
        %v2910 = vshrl.u32 %v2909, 7
        %v2911 = vsub.s32 %v2908, %v2910
        %v2912 = vrot.slane %v2905, %v2911
        %v2913 = vcombine.low %v2896, %v2904
        %v2915 = vunpack.c.l.s4 1934713408
        %v2916 = vunpack.c.0.s8 %v2915
        %v2917 = vlaneseq
        %v2918 = vshrl.u32 %v2917, 7
        %v2919 = vsub.s32 %v2916, %v2918
        %v2920 = vrot.slane %v2913, %v2919
        %v2921 = vcombine.low %v2912, %v2920
        %v2922 = vcombine.low %v2139, %v2147
        %v2924 = vunpack.c.l.s4 1983009808
        %v2925 = vunpack.c.0.s8 %v2924
        %v2926 = vlaneseq
        %v2927 = vshrl.u32 %v2926, 7
        %v2928 = vsub.s32 %v2925, %v2927
        %v2929 = vrot.slane %v2922, %v2928
        %v2930 = vcombine.low %v2143, %v2151
        %v2932 = vunpack.c.l.s4 1983009808
        %v2933 = vunpack.c.0.s8 %v2932
        %v2934 = vlaneseq
        %v2935 = vshrl.u32 %v2934, 7
        %v2936 = vsub.s32 %v2933, %v2935
        %v2937 = vrot.slane %v2930, %v2936
        %v2938 = vcombine.low %v2155, %v2163
        %v2940 = vunpack.c.l.s4 1983009808
        %v2941 = vunpack.c.0.s8 %v2940
        %v2942 = vlaneseq
        %v2943 = vshrl.u32 %v2942, 7
        %v2944 = vsub.s32 %v2941, %v2943
        %v2945 = vrot.slane %v2938, %v2944
        %v2946 = vcombine.low %v2159, %v2167
        %v2948 = vunpack.c.l.s4 1983009808
        %v2949 = vunpack.c.0.s8 %v2948
        %v2950 = vlaneseq
        %v2951 = vshrl.u32 %v2950, 7
        %v2952 = vsub.s32 %v2949, %v2951
        %v2953 = vrot.slane %v2946, %v2952
        %v2954 = vcombine.low %v2929, %v2937
        %v2956 = vunpack.c.l.s4 1934713408
        %v2957 = vunpack.c.0.s8 %v2956
        %v2958 = vlaneseq
        %v2959 = vshrl.u32 %v2958, 7
        %v2960 = vsub.s32 %v2957, %v2959
        %v2961 = vrot.slane %v2954, %v2960
        %v2962 = vcombine.low %v2945, %v2953
        %v2964 = vunpack.c.l.s4 1934713408
        %v2965 = vunpack.c.0.s8 %v2964
        %v2966 = vlaneseq
        %v2967 = vshrl.u32 %v2966, 7
        %v2968 = vsub.s32 %v2965, %v2967
        %v2969 = vrot.slane %v2962, %v2968
        %v2970 = vcombine.low %v2961, %v2969
        %v2971 = vcombine.low %v2141, %v2149
        %v2973 = vunpack.c.l.s4 1983009808
        %v2974 = vunpack.c.0.s8 %v2973
        %v2975 = vlaneseq
        %v2976 = vshrl.u32 %v2975, 7
        %v2977 = vsub.s32 %v2974, %v2976
        %v2978 = vrot.slane %v2971, %v2977
        %v2979 = vcombine.low %v2145, %v2153
        %v2981 = vunpack.c.l.s4 1983009808
        %v2982 = vunpack.c.0.s8 %v2981
        %v2983 = vlaneseq
        %v2984 = vshrl.u32 %v2983, 7
        %v2985 = vsub.s32 %v2982, %v2984
        %v2986 = vrot.slane %v2979, %v2985
        %v2987 = vcombine.low %v2157, %v2165
        %v2989 = vunpack.c.l.s4 1983009808
        %v2990 = vunpack.c.0.s8 %v2989
        %v2991 = vlaneseq
        %v2992 = vshrl.u32 %v2991, 7
        %v2993 = vsub.s32 %v2990, %v2992
        %v2994 = vrot.slane %v2987, %v2993
        %v2995 = vcombine.low %v2161, %v2169
        %v2997 = vunpack.c.l.s4 1983009808
        %v2998 = vunpack.c.0.s8 %v2997
        %v2999 = vlaneseq
        %v3000 = vshrl.u32 %v2999, 7
        %v3001 = vsub.s32 %v2998, %v3000
        %v3002 = vrot.slane %v2995, %v3001
        %v3003 = vcombine.low %v2978, %v2986
        %v3005 = vunpack.c.l.s4 1934713408
        %v3006 = vunpack.c.0.s8 %v3005
        %v3007 = vlaneseq
        %v3008 = vshrl.u32 %v3007, 7
        %v3009 = vsub.s32 %v3006, %v3008
        %v3010 = vrot.slane %v3003, %v3009
        %v3011 = vcombine.low %v2994, %v3002
        %v3013 = vunpack.c.l.s4 1934713408
        %v3014 = vunpack.c.0.s8 %v3013
        %v3015 = vlaneseq
        %v3016 = vshrl.u32 %v3015, 7
        %v3017 = vsub.s32 %v3014, %v3016
        %v3018 = vrot.slane %v3011, %v3017
        %v3019 = vcombine.low %v3010, %v3018
        %v3020 = vcombine.low %v2171, %v2179
        %v3022 = vunpack.c.l.s4 1983009808
        %v3023 = vunpack.c.0.s8 %v3022
        %v3024 = vlaneseq
        %v3025 = vshrl.u32 %v3024, 7
        %v3026 = vsub.s32 %v3023, %v3025
        %v3027 = vrot.slane %v3020, %v3026
        %v3028 = vcombine.low %v2175, %v2183
        %v3030 = vunpack.c.l.s4 1983009808
        %v3031 = vunpack.c.0.s8 %v3030
        %v3032 = vlaneseq
        %v3033 = vshrl.u32 %v3032, 7
        %v3034 = vsub.s32 %v3031, %v3033
        %v3035 = vrot.slane %v3028, %v3034
        %v3036 = vcombine.low %v2187, %v2195
        %v3038 = vunpack.c.l.s4 1983009808
        %v3039 = vunpack.c.0.s8 %v3038
        %v3040 = vlaneseq
        %v3041 = vshrl.u32 %v3040, 7
        %v3042 = vsub.s32 %v3039, %v3041
        %v3043 = vrot.slane %v3036, %v3042
        %v3044 = vcombine.low %v2191, %v2199
        %v3046 = vunpack.c.l.s4 1983009808
        %v3047 = vunpack.c.0.s8 %v3046
        %v3048 = vlaneseq
        %v3049 = vshrl.u32 %v3048, 7
        %v3050 = vsub.s32 %v3047, %v3049
        %v3051 = vrot.slane %v3044, %v3050
        %v3052 = vcombine.low %v3027, %v3035
        %v3054 = vunpack.c.l.s4 1934713408
        %v3055 = vunpack.c.0.s8 %v3054
        %v3056 = vlaneseq
        %v3057 = vshrl.u32 %v3056, 7
        %v3058 = vsub.s32 %v3055, %v3057
        %v3059 = vrot.slane %v3052, %v3058
        %v3060 = vcombine.low %v3043, %v3051
        %v3062 = vunpack.c.l.s4 1934713408
        %v3063 = vunpack.c.0.s8 %v3062
        %v3064 = vlaneseq
        %v3065 = vshrl.u32 %v3064, 7
        %v3066 = vsub.s32 %v3063, %v3065
        %v3067 = vrot.slane %v3060, %v3066
        %v3068 = vcombine.low %v3059, %v3067
        %v3069 = vcombine.low %v2173, %v2181
        %v3071 = vunpack.c.l.s4 1983009808
        %v3072 = vunpack.c.0.s8 %v3071
        %v3073 = vlaneseq
        %v3074 = vshrl.u32 %v3073, 7
        %v3075 = vsub.s32 %v3072, %v3074
        %v3076 = vrot.slane %v3069, %v3075
        %v3077 = vcombine.low %v2177, %v2185
        %v3079 = vunpack.c.l.s4 1983009808
        %v3080 = vunpack.c.0.s8 %v3079
        %v3081 = vlaneseq
        %v3082 = vshrl.u32 %v3081, 7
        %v3083 = vsub.s32 %v3080, %v3082
        %v3084 = vrot.slane %v3077, %v3083
        %v3085 = vcombine.low %v2189, %v2197
        %v3087 = vunpack.c.l.s4 1983009808
        %v3088 = vunpack.c.0.s8 %v3087
        %v3089 = vlaneseq
        %v3090 = vshrl.u32 %v3089, 7
        %v3091 = vsub.s32 %v3088, %v3090
        %v3092 = vrot.slane %v3085, %v3091
        %v3093 = vcombine.low %v2193, %v2201
        %v3095 = vunpack.c.l.s4 1983009808
        %v3096 = vunpack.c.0.s8 %v3095
        %v3097 = vlaneseq
        %v3098 = vshrl.u32 %v3097, 7
        %v3099 = vsub.s32 %v3096, %v3098
        %v3100 = vrot.slane %v3093, %v3099
        %v3101 = vcombine.low %v3076, %v3084
        %v3103 = vunpack.c.l.s4 1934713408
        %v3104 = vunpack.c.0.s8 %v3103
        %v3105 = vlaneseq
        %v3106 = vshrl.u32 %v3105, 7
        %v3107 = vsub.s32 %v3104, %v3106
        %v3108 = vrot.slane %v3101, %v3107
        %v3109 = vcombine.low %v3092, %v3100
        %v3111 = vunpack.c.l.s4 1934713408
        %v3112 = vunpack.c.0.s8 %v3111
        %v3113 = vlaneseq
        %v3114 = vshrl.u32 %v3113, 7
        %v3115 = vsub.s32 %v3112, %v3114
        %v3116 = vrot.slane %v3109, %v3115
        %v3117 = vcombine.low %v3108, %v3116
        %v3118 = vcombine.low %v2235, %v2243
        %v3120 = vunpack.c.l.s4 1983009808
        %v3121 = vunpack.c.0.s8 %v3120
        %v3122 = vlaneseq
        %v3123 = vshrl.u32 %v3122, 7
        %v3124 = vsub.s32 %v3121, %v3123
        %v3125 = vrot.slane %v3118, %v3124
        %v3126 = vcombine.low %v2239, %v2247
        %v3128 = vunpack.c.l.s4 1983009808
        %v3129 = vunpack.c.0.s8 %v3128
        %v3130 = vlaneseq
        %v3131 = vshrl.u32 %v3130, 7
        %v3132 = vsub.s32 %v3129, %v3131
        %v3133 = vrot.slane %v3126, %v3132
        %v3134 = vcombine.low %v2251, %v2259
        %v3136 = vunpack.c.l.s4 1983009808
        %v3137 = vunpack.c.0.s8 %v3136
        %v3138 = vlaneseq
        %v3139 = vshrl.u32 %v3138, 7
        %v3140 = vsub.s32 %v3137, %v3139
        %v3141 = vrot.slane %v3134, %v3140
        %v3142 = vcombine.low %v2255, %v2263
        %v3144 = vunpack.c.l.s4 1983009808
        %v3145 = vunpack.c.0.s8 %v3144
        %v3146 = vlaneseq
        %v3147 = vshrl.u32 %v3146, 7
        %v3148 = vsub.s32 %v3145, %v3147
        %v3149 = vrot.slane %v3142, %v3148
        %v3150 = vcombine.low %v3125, %v3133
        %v3152 = vunpack.c.l.s4 1934713408
        %v3153 = vunpack.c.0.s8 %v3152
        %v3154 = vlaneseq
        %v3155 = vshrl.u32 %v3154, 7
        %v3156 = vsub.s32 %v3153, %v3155
        %v3157 = vrot.slane %v3150, %v3156
        %v3158 = vcombine.low %v3141, %v3149
        %v3160 = vunpack.c.l.s4 1934713408
        %v3161 = vunpack.c.0.s8 %v3160
        %v3162 = vlaneseq
        %v3163 = vshrl.u32 %v3162, 7
        %v3164 = vsub.s32 %v3161, %v3163
        %v3165 = vrot.slane %v3158, %v3164
        %v3166 = vcombine.low %v3157, %v3165
        %v3167 = vcombine.low %v2237, %v2245
        %v3169 = vunpack.c.l.s4 1983009808
        %v3170 = vunpack.c.0.s8 %v3169
        %v3171 = vlaneseq
        %v3172 = vshrl.u32 %v3171, 7
        %v3173 = vsub.s32 %v3170, %v3172
        %v3174 = vrot.slane %v3167, %v3173
        %v3175 = vcombine.low %v2241, %v2249
        %v3177 = vunpack.c.l.s4 1983009808
        %v3178 = vunpack.c.0.s8 %v3177
        %v3179 = vlaneseq
        %v3180 = vshrl.u32 %v3179, 7
        %v3181 = vsub.s32 %v3178, %v3180
        %v3182 = vrot.slane %v3175, %v3181
        %v3183 = vcombine.low %v2253, %v2261
        %v3185 = vunpack.c.l.s4 1983009808
        %v3186 = vunpack.c.0.s8 %v3185
        %v3187 = vlaneseq
        %v3188 = vshrl.u32 %v3187, 7
        %v3189 = vsub.s32 %v3186, %v3188
        %v3190 = vrot.slane %v3183, %v3189
        %v3191 = vcombine.low %v2257, %v2265
        %v3193 = vunpack.c.l.s4 1983009808
        %v3194 = vunpack.c.0.s8 %v3193
        %v3195 = vlaneseq
        %v3196 = vshrl.u32 %v3195, 7
        %v3197 = vsub.s32 %v3194, %v3196
        %v3198 = vrot.slane %v3191, %v3197
        %v3199 = vcombine.low %v3174, %v3182
        %v3201 = vunpack.c.l.s4 1934713408
        %v3202 = vunpack.c.0.s8 %v3201
        %v3203 = vlaneseq
        %v3204 = vshrl.u32 %v3203, 7
        %v3205 = vsub.s32 %v3202, %v3204
        %v3206 = vrot.slane %v3199, %v3205
        %v3207 = vcombine.low %v3190, %v3198
        %v3209 = vunpack.c.l.s4 1934713408
        %v3210 = vunpack.c.0.s8 %v3209
        %v3211 = vlaneseq
        %v3212 = vshrl.u32 %v3211, 7
        %v3213 = vsub.s32 %v3210, %v3212
        %v3214 = vrot.slane %v3207, %v3213
        %v3215 = vcombine.low %v3206, %v3214
        %v3216 = vcombine.low %v2267, %v2275
        %v3218 = vunpack.c.l.s4 1983009808
        %v3219 = vunpack.c.0.s8 %v3218
        %v3220 = vlaneseq
        %v3221 = vshrl.u32 %v3220, 7
        %v3222 = vsub.s32 %v3219, %v3221
        %v3223 = vrot.slane %v3216, %v3222
        %v3224 = vcombine.low %v2271, %v2279
        %v3226 = vunpack.c.l.s4 1983009808
        %v3227 = vunpack.c.0.s8 %v3226
        %v3228 = vlaneseq
        %v3229 = vshrl.u32 %v3228, 7
        %v3230 = vsub.s32 %v3227, %v3229
        %v3231 = vrot.slane %v3224, %v3230
        %v3232 = vcombine.low %v2283, %v2291
        %v3234 = vunpack.c.l.s4 1983009808
        %v3235 = vunpack.c.0.s8 %v3234
        %v3236 = vlaneseq
        %v3237 = vshrl.u32 %v3236, 7
        %v3238 = vsub.s32 %v3235, %v3237
        %v3239 = vrot.slane %v3232, %v3238
        %v3240 = vcombine.low %v2287, %v2295
        %v3242 = vunpack.c.l.s4 1983009808
        %v3243 = vunpack.c.0.s8 %v3242
        %v3244 = vlaneseq
        %v3245 = vshrl.u32 %v3244, 7
        %v3246 = vsub.s32 %v3243, %v3245
        %v3247 = vrot.slane %v3240, %v3246
        %v3248 = vcombine.low %v3223, %v3231
        %v3250 = vunpack.c.l.s4 1934713408
        %v3251 = vunpack.c.0.s8 %v3250
        %v3252 = vlaneseq
        %v3253 = vshrl.u32 %v3252, 7
        %v3254 = vsub.s32 %v3251, %v3253
        %v3255 = vrot.slane %v3248, %v3254
        %v3256 = vcombine.low %v3239, %v3247
        %v3258 = vunpack.c.l.s4 1934713408
        %v3259 = vunpack.c.0.s8 %v3258
        %v3260 = vlaneseq
        %v3261 = vshrl.u32 %v3260, 7
        %v3262 = vsub.s32 %v3259, %v3261
        %v3263 = vrot.slane %v3256, %v3262
        %v3264 = vcombine.low %v3255, %v3263
        %v3265 = vcombine.low %v2269, %v2277
        %v3267 = vunpack.c.l.s4 1983009808
        %v3268 = vunpack.c.0.s8 %v3267
        %v3269 = vlaneseq
        %v3270 = vshrl.u32 %v3269, 7
        %v3271 = vsub.s32 %v3268, %v3270
        %v3272 = vrot.slane %v3265, %v3271
        %v3273 = vcombine.low %v2273, %v2281
        %v3275 = vunpack.c.l.s4 1983009808
        %v3276 = vunpack.c.0.s8 %v3275
        %v3277 = vlaneseq
        %v3278 = vshrl.u32 %v3277, 7
        %v3279 = vsub.s32 %v3276, %v3278
        %v3280 = vrot.slane %v3273, %v3279
        %v3281 = vcombine.low %v2285, %v2293
        %v3283 = vunpack.c.l.s4 1983009808
        %v3284 = vunpack.c.0.s8 %v3283
        %v3285 = vlaneseq
        %v3286 = vshrl.u32 %v3285, 7
        %v3287 = vsub.s32 %v3284, %v3286
        %v3288 = vrot.slane %v3281, %v3287
        %v3289 = vcombine.low %v2289, %v2297
        %v3291 = vunpack.c.l.s4 1983009808
        %v3292 = vunpack.c.0.s8 %v3291
        %v3293 = vlaneseq
        %v3294 = vshrl.u32 %v3293, 7
        %v3295 = vsub.s32 %v3292, %v3294
        %v3296 = vrot.slane %v3289, %v3295
        %v3297 = vcombine.low %v3272, %v3280
        %v3299 = vunpack.c.l.s4 1934713408
        %v3300 = vunpack.c.0.s8 %v3299
        %v3301 = vlaneseq
        %v3302 = vshrl.u32 %v3301, 7
        %v3303 = vsub.s32 %v3300, %v3302
        %v3304 = vrot.slane %v3297, %v3303
        %v3305 = vcombine.low %v3288, %v3296
        %v3307 = vunpack.c.l.s4 1934713408
        %v3308 = vunpack.c.0.s8 %v3307
        %v3309 = vlaneseq
        %v3310 = vshrl.u32 %v3309, 7
        %v3311 = vsub.s32 %v3308, %v3310
        %v3312 = vrot.slane %v3305, %v3311
        %v3313 = vcombine.low %v3304, %v3312
        %v3314 = vcombine.low %v2331, %v2339
        %v3316 = vunpack.c.l.s4 1983009808
        %v3317 = vunpack.c.0.s8 %v3316
        %v3318 = vlaneseq
        %v3319 = vshrl.u32 %v3318, 7
        %v3320 = vsub.s32 %v3317, %v3319
        %v3321 = vrot.slane %v3314, %v3320
        %v3322 = vcombine.low %v2335, %v2343
        %v3324 = vunpack.c.l.s4 1983009808
        %v3325 = vunpack.c.0.s8 %v3324
        %v3326 = vlaneseq
        %v3327 = vshrl.u32 %v3326, 7
        %v3328 = vsub.s32 %v3325, %v3327
        %v3329 = vrot.slane %v3322, %v3328
        %v3330 = vcombine.low %v2347, %v2355
        %v3332 = vunpack.c.l.s4 1983009808
        %v3333 = vunpack.c.0.s8 %v3332
        %v3334 = vlaneseq
        %v3335 = vshrl.u32 %v3334, 7
        %v3336 = vsub.s32 %v3333, %v3335
        %v3337 = vrot.slane %v3330, %v3336
        %v3338 = vcombine.low %v2351, %v2359
        %v3340 = vunpack.c.l.s4 1983009808
        %v3341 = vunpack.c.0.s8 %v3340
        %v3342 = vlaneseq
        %v3343 = vshrl.u32 %v3342, 7
        %v3344 = vsub.s32 %v3341, %v3343
        %v3345 = vrot.slane %v3338, %v3344
        %v3346 = vcombine.low %v3321, %v3329
        %v3348 = vunpack.c.l.s4 1934713408
        %v3349 = vunpack.c.0.s8 %v3348
        %v3350 = vlaneseq
        %v3351 = vshrl.u32 %v3350, 7
        %v3352 = vsub.s32 %v3349, %v3351
        %v3353 = vrot.slane %v3346, %v3352
        %v3354 = vcombine.low %v3337, %v3345
        %v3356 = vunpack.c.l.s4 1934713408
        %v3357 = vunpack.c.0.s8 %v3356
        %v3358 = vlaneseq
        %v3359 = vshrl.u32 %v3358, 7
        %v3360 = vsub.s32 %v3357, %v3359
        %v3361 = vrot.slane %v3354, %v3360
        %v3362 = vcombine.low %v3353, %v3361
        %v3363 = vcombine.low %v2333, %v2341
        %v3365 = vunpack.c.l.s4 1983009808
        %v3366 = vunpack.c.0.s8 %v3365
        %v3367 = vlaneseq
        %v3368 = vshrl.u32 %v3367, 7
        %v3369 = vsub.s32 %v3366, %v3368
        %v3370 = vrot.slane %v3363, %v3369
        %v3371 = vcombine.low %v2337, %v2345
        %v3373 = vunpack.c.l.s4 1983009808
        %v3374 = vunpack.c.0.s8 %v3373
        %v3375 = vlaneseq
        %v3376 = vshrl.u32 %v3375, 7
        %v3377 = vsub.s32 %v3374, %v3376
        %v3378 = vrot.slane %v3371, %v3377
        %v3379 = vcombine.low %v2349, %v2357
        %v3381 = vunpack.c.l.s4 1983009808
        %v3382 = vunpack.c.0.s8 %v3381
        %v3383 = vlaneseq
        %v3384 = vshrl.u32 %v3383, 7
        %v3385 = vsub.s32 %v3382, %v3384
        %v3386 = vrot.slane %v3379, %v3385
        %v3387 = vcombine.low %v2353, %v2361
        %v3389 = vunpack.c.l.s4 1983009808
        %v3390 = vunpack.c.0.s8 %v3389
        %v3391 = vlaneseq
        %v3392 = vshrl.u32 %v3391, 7
        %v3393 = vsub.s32 %v3390, %v3392
        %v3394 = vrot.slane %v3387, %v3393
        %v3395 = vcombine.low %v3370, %v3378
        %v3397 = vunpack.c.l.s4 1934713408
        %v3398 = vunpack.c.0.s8 %v3397
        %v3399 = vlaneseq
        %v3400 = vshrl.u32 %v3399, 7
        %v3401 = vsub.s32 %v3398, %v3400
        %v3402 = vrot.slane %v3395, %v3401
        %v3403 = vcombine.low %v3386, %v3394
        %v3405 = vunpack.c.l.s4 1934713408
        %v3406 = vunpack.c.0.s8 %v3405
        %v3407 = vlaneseq
        %v3408 = vshrl.u32 %v3407, 7
        %v3409 = vsub.s32 %v3406, %v3408
        %v3410 = vrot.slane %v3403, %v3409
        %v3411 = vcombine.low %v3402, %v3410
        %v3412 = vcombine.low %v2363, %v2371
        %v3414 = vunpack.c.l.s4 1983009808
        %v3415 = vunpack.c.0.s8 %v3414
        %v3416 = vlaneseq
        %v3417 = vshrl.u32 %v3416, 7
        %v3418 = vsub.s32 %v3415, %v3417
        %v3419 = vrot.slane %v3412, %v3418
        %v3420 = vcombine.low %v2367, %v2375
        %v3422 = vunpack.c.l.s4 1983009808
        %v3423 = vunpack.c.0.s8 %v3422
        %v3424 = vlaneseq
        %v3425 = vshrl.u32 %v3424, 7
        %v3426 = vsub.s32 %v3423, %v3425
        %v3427 = vrot.slane %v3420, %v3426
        %v3428 = vcombine.low %v2379, %v2387
        %v3430 = vunpack.c.l.s4 1983009808
        %v3431 = vunpack.c.0.s8 %v3430
        %v3432 = vlaneseq
        %v3433 = vshrl.u32 %v3432, 7
        %v3434 = vsub.s32 %v3431, %v3433
        %v3435 = vrot.slane %v3428, %v3434
        %v3436 = vcombine.low %v2383, %v2391
        %v3438 = vunpack.c.l.s4 1983009808
        %v3439 = vunpack.c.0.s8 %v3438
        %v3440 = vlaneseq
        %v3441 = vshrl.u32 %v3440, 7
        %v3442 = vsub.s32 %v3439, %v3441
        %v3443 = vrot.slane %v3436, %v3442
        %v3444 = vcombine.low %v3419, %v3427
        %v3446 = vunpack.c.l.s4 1934713408
        %v3447 = vunpack.c.0.s8 %v3446
        %v3448 = vlaneseq
        %v3449 = vshrl.u32 %v3448, 7
        %v3450 = vsub.s32 %v3447, %v3449
        %v3451 = vrot.slane %v3444, %v3450
        %v3452 = vcombine.low %v3435, %v3443
        %v3454 = vunpack.c.l.s4 1934713408
        %v3455 = vunpack.c.0.s8 %v3454
        %v3456 = vlaneseq
        %v3457 = vshrl.u32 %v3456, 7
        %v3458 = vsub.s32 %v3455, %v3457
        %v3459 = vrot.slane %v3452, %v3458
        %v3460 = vcombine.low %v3451, %v3459
        %v3461 = vcombine.low %v2365, %v2373
        %v3463 = vunpack.c.l.s4 1983009808
        %v3464 = vunpack.c.0.s8 %v3463
        %v3465 = vlaneseq
        %v3466 = vshrl.u32 %v3465, 7
        %v3467 = vsub.s32 %v3464, %v3466
        %v3468 = vrot.slane %v3461, %v3467
        %v3469 = vcombine.low %v2369, %v2377
        %v3471 = vunpack.c.l.s4 1983009808
        %v3472 = vunpack.c.0.s8 %v3471
        %v3473 = vlaneseq
        %v3474 = vshrl.u32 %v3473, 7
        %v3475 = vsub.s32 %v3472, %v3474
        %v3476 = vrot.slane %v3469, %v3475
        %v3477 = vcombine.low %v2381, %v2389
        %v3479 = vunpack.c.l.s4 1983009808
        %v3480 = vunpack.c.0.s8 %v3479
        %v3481 = vlaneseq
        %v3482 = vshrl.u32 %v3481, 7
        %v3483 = vsub.s32 %v3480, %v3482
        %v3484 = vrot.slane %v3477, %v3483
        %v3485 = vcombine.low %v2385, %v2393
        %v3487 = vunpack.c.l.s4 1983009808
        %v3488 = vunpack.c.0.s8 %v3487
        %v3489 = vlaneseq
        %v3490 = vshrl.u32 %v3489, 7
        %v3491 = vsub.s32 %v3488, %v3490
        %v3492 = vrot.slane %v3485, %v3491
        %v3493 = vcombine.low %v3468, %v3476
        %v3495 = vunpack.c.l.s4 1934713408
        %v3496 = vunpack.c.0.s8 %v3495
        %v3497 = vlaneseq
        %v3498 = vshrl.u32 %v3497, 7
        %v3499 = vsub.s32 %v3496, %v3498
        %v3500 = vrot.slane %v3493, %v3499
        %v3501 = vcombine.low %v3484, %v3492
        %v3503 = vunpack.c.l.s4 1934713408
        %v3504 = vunpack.c.0.s8 %v3503
        %v3505 = vlaneseq
        %v3506 = vshrl.u32 %v3505, 7
        %v3507 = vsub.s32 %v3504, %v3506
        %v3508 = vrot.slane %v3501, %v3507
        %v3509 = vcombine.low %v3500, %v3508
        %v3512 = vpack.i.b16 %v2823, %v2774
        %v3513 = vshrl.u32 %v2774, 16
        %v3514 = vshrl.u32 %v2823, 16
        %v3515 = vpack.i.b16 %v3514, %v3513
        %v3518 = vpack.i.b16 %v2921, %v2872
        %v3519 = vshrl.u32 %v2872, 16
        %v3520 = vshrl.u32 %v2921, 16
        %v3521 = vpack.i.b16 %v3520, %v3519
        %v3524 = vpack.i.b16 %v3019, %v2970
        %v3525 = vshrl.u32 %v2970, 16
        %v3526 = vshrl.u32 %v3019, 16
        %v3527 = vpack.i.b16 %v3526, %v3525
        %v3530 = vpack.i.b16 %v3117, %v3068
        %v3531 = vshrl.u32 %v3068, 16
        %v3532 = vshrl.u32 %v3117, 16
        %v3533 = vpack.i.b16 %v3532, %v3531
        %v3536 = vpack.i.b16 %v3215, %v3166
        %v3537 = vshrl.u32 %v3166, 16
        %v3538 = vshrl.u32 %v3215, 16
        %v3539 = vpack.i.b16 %v3538, %v3537
        %v3542 = vpack.i.b16 %v3313, %v3264
        %v3543 = vshrl.u32 %v3264, 16
        %v3544 = vshrl.u32 %v3313, 16
        %v3545 = vpack.i.b16 %v3544, %v3543
        %v3548 = vpack.i.b16 %v3411, %v3362
        %v3549 = vshrl.u32 %v3362, 16
        %v3550 = vshrl.u32 %v3411, 16
        %v3551 = vpack.i.b16 %v3550, %v3549
        %v3554 = vpack.i.b16 %v3509, %v3460
        %v3555 = vshrl.u32 %v3460, 16
        %v3556 = vshrl.u32 %v3509, 16
        %v3557 = vpack.i.b16 %v3556, %v3555
        %3558 = vrot.lane.b32.xlu0 %v3515, 26
        %v3559 = vpop.permute.xlu0 %3558
        %3560 = vrot.lane.b32.xlu0 %v3521, 26
        %v3561 = vpop.permute.xlu0 %3560
        %3562 = vrot.lane.b32.xlu0 %v3527, 26
        %v3563 = vpop.permute.xlu0 %3562
        %3564 = vrot.lane.b32.xlu0 %v3533, 26
        %v3565 = vpop.permute.xlu0 %3564
        %3566 = vrot.lane.b32.xlu0 %v3539, 26
        %v3567 = vpop.permute.xlu0 %3566
        %3568 = vrot.lane.b32.xlu0 %v3545, 26
        %v3569 = vpop.permute.xlu0 %3568
        %3570 = vrot.lane.b32.xlu0 %v3551, 26
        %v3571 = vpop.permute.xlu0 %3570
        %3572 = vrot.lane.b32.xlu0 %v3557, 26
        %v3573 = vpop.permute.xlu0 %3572
        %vm3574 = vcmask 211968
        %v3577 = vsel %vm3574, %v3512, %v3559
        %v3581 = vsel %vm3574, %v3518, %v3561
        %v3585 = vsel %vm3574, %v3524, %v3563
        %v3589 = vsel %vm3574, %v3530, %v3565
        %v3593 = vsel %vm3574, %v3536, %v3567
        %v3597 = vsel %vm3574, %v3542, %v3569
        %v3601 = vsel %vm3574, %v3548, %v3571
        %v3605 = vsel %vm3574, %v3554, %v3573
        %v3607 = vcombine.low %v2473, %v2481
        %v3609 = vunpack.c.l.s4 1983009808
        %v3610 = vunpack.c.0.s8 %v3609
        %v3611 = vlaneseq
        %v3612 = vshrl.u32 %v3611, 7
        %v3613 = vsub.s32 %v3610, %v3612
        %v3614 = vrot.slane %v3607, %v3613
        %v3615 = vcombine.low %v2477, %v2485
        %v3617 = vunpack.c.l.s4 1983009808
        %v3618 = vunpack.c.0.s8 %v3617
        %v3619 = vlaneseq
        %v3620 = vshrl.u32 %v3619, 7
        %v3621 = vsub.s32 %v3618, %v3620
        %v3622 = vrot.slane %v3615, %v3621
        %v3623 = vcombine.low %v2489, %v2497
        %v3625 = vunpack.c.l.s4 1983009808
        %v3626 = vunpack.c.0.s8 %v3625
        %v3627 = vlaneseq
        %v3628 = vshrl.u32 %v3627, 7
        %v3629 = vsub.s32 %v3626, %v3628
        %v3630 = vrot.slane %v3623, %v3629
        %v3631 = vcombine.low %v2493, %v2501
        %v3633 = vunpack.c.l.s4 1983009808
        %v3634 = vunpack.c.0.s8 %v3633
        %v3635 = vlaneseq
        %v3636 = vshrl.u32 %v3635, 7
        %v3637 = vsub.s32 %v3634, %v3636
        %v3638 = vrot.slane %v3631, %v3637
        %v3639 = vcombine.low %v3614, %v3622
        %v3641 = vunpack.c.l.s4 1934713408
        %v3642 = vunpack.c.0.s8 %v3641
        %v3643 = vlaneseq
        %v3644 = vshrl.u32 %v3643, 7
        %v3645 = vsub.s32 %v3642, %v3644
        %v3646 = vrot.slane %v3639, %v3645
        %v3647 = vcombine.low %v3630, %v3638
        %v3649 = vunpack.c.l.s4 1934713408
        %v3650 = vunpack.c.0.s8 %v3649
        %v3651 = vlaneseq
        %v3652 = vshrl.u32 %v3651, 7
        %v3653 = vsub.s32 %v3650, %v3652
        %v3654 = vrot.slane %v3647, %v3653
        %v3655 = vcombine.low %v3646, %v3654
        %v3656 = vcombine.high %v3646, %v3654
        %v3657 = vcombine.low %v2505, %v2513
        %v3659 = vunpack.c.l.s4 1983009808
        %v3660 = vunpack.c.0.s8 %v3659
        %v3661 = vlaneseq
        %v3662 = vshrl.u32 %v3661, 7
        %v3663 = vsub.s32 %v3660, %v3662
        %v3664 = vrot.slane %v3657, %v3663
        %v3665 = vcombine.low %v2509, %v2517
        %v3667 = vunpack.c.l.s4 1983009808
        %v3668 = vunpack.c.0.s8 %v3667
        %v3669 = vlaneseq
        %v3670 = vshrl.u32 %v3669, 7
        %v3671 = vsub.s32 %v3668, %v3670
        %v3672 = vrot.slane %v3665, %v3671
        %v3673 = vcombine.low %v2521, %v2529
        %v3675 = vunpack.c.l.s4 1983009808
        %v3676 = vunpack.c.0.s8 %v3675
        %v3677 = vlaneseq
        %v3678 = vshrl.u32 %v3677, 7
        %v3679 = vsub.s32 %v3676, %v3678
        %v3680 = vrot.slane %v3673, %v3679
        %v3681 = vcombine.low %v2525, %v2533
        %v3683 = vunpack.c.l.s4 1983009808
        %v3684 = vunpack.c.0.s8 %v3683
        %v3685 = vlaneseq
        %v3686 = vshrl.u32 %v3685, 7
        %v3687 = vsub.s32 %v3684, %v3686
        %v3688 = vrot.slane %v3681, %v3687
        %v3689 = vcombine.low %v3664, %v3672
        %v3691 = vunpack.c.l.s4 1934713408
        %v3692 = vunpack.c.0.s8 %v3691
        %v3693 = vlaneseq
        %v3694 = vshrl.u32 %v3693, 7
        %v3695 = vsub.s32 %v3692, %v3694
        %v3696 = vrot.slane %v3689, %v3695
        %v3697 = vcombine.low %v3680, %v3688
        %v3699 = vunpack.c.l.s4 1934713408
        %v3700 = vunpack.c.0.s8 %v3699
        %v3701 = vlaneseq
        %v3702 = vshrl.u32 %v3701, 7
        %v3703 = vsub.s32 %v3700, %v3702
        %v3704 = vrot.slane %v3697, %v3703
        %v3705 = vcombine.low %v3696, %v3704
        %v3706 = vcombine.high %v3696, %v3704
        %v3707 = vcombine.low %v2537, %v2545
        %v3709 = vunpack.c.l.s4 1983009808
        %v3710 = vunpack.c.0.s8 %v3709
        %v3711 = vlaneseq
        %v3712 = vshrl.u32 %v3711, 7
        %v3713 = vsub.s32 %v3710, %v3712
        %v3714 = vrot.slane %v3707, %v3713
        %v3715 = vcombine.low %v2541, %v2549
        %v3717 = vunpack.c.l.s4 1983009808
        %v3718 = vunpack.c.0.s8 %v3717
        %v3719 = vlaneseq
        %v3720 = vshrl.u32 %v3719, 7
        %v3721 = vsub.s32 %v3718, %v3720
        %v3722 = vrot.slane %v3715, %v3721
        %v3723 = vcombine.low %v2553, %v2561
        %v3725 = vunpack.c.l.s4 1983009808
        %v3726 = vunpack.c.0.s8 %v3725
        %v3727 = vlaneseq
        %v3728 = vshrl.u32 %v3727, 7
        %v3729 = vsub.s32 %v3726, %v3728
        %v3730 = vrot.slane %v3723, %v3729
        %v3731 = vcombine.low %v2557, %v2565
        %v3733 = vunpack.c.l.s4 1983009808
        %v3734 = vunpack.c.0.s8 %v3733
        %v3735 = vlaneseq
        %v3736 = vshrl.u32 %v3735, 7
        %v3737 = vsub.s32 %v3734, %v3736
        %v3738 = vrot.slane %v3731, %v3737
        %v3739 = vcombine.low %v3714, %v3722
        %v3741 = vunpack.c.l.s4 1934713408
        %v3742 = vunpack.c.0.s8 %v3741
        %v3743 = vlaneseq
        %v3744 = vshrl.u32 %v3743, 7
        %v3745 = vsub.s32 %v3742, %v3744
        %v3746 = vrot.slane %v3739, %v3745
        %v3747 = vcombine.low %v3730, %v3738
        %v3749 = vunpack.c.l.s4 1934713408
        %v3750 = vunpack.c.0.s8 %v3749
        %v3751 = vlaneseq
        %v3752 = vshrl.u32 %v3751, 7
        %v3753 = vsub.s32 %v3750, %v3752
        %v3754 = vrot.slane %v3747, %v3753
        %v3755 = vcombine.low %v3746, %v3754
        %v3756 = vcombine.high %v3746, %v3754
        %v3757 = vcombine.low %v2569, %v2577
        %v3759 = vunpack.c.l.s4 1983009808
        %v3760 = vunpack.c.0.s8 %v3759
        %v3761 = vlaneseq
        %v3762 = vshrl.u32 %v3761, 7
        %v3763 = vsub.s32 %v3760, %v3762
        %v3764 = vrot.slane %v3757, %v3763
        %v3765 = vcombine.low %v2573, %v2581
        %v3767 = vunpack.c.l.s4 1983009808
        %v3768 = vunpack.c.0.s8 %v3767
        %v3769 = vlaneseq
        %v3770 = vshrl.u32 %v3769, 7
        %v3771 = vsub.s32 %v3768, %v3770
        %v3772 = vrot.slane %v3765, %v3771
        %v3773 = vcombine.low %v2585, %v2593
        %v3775 = vunpack.c.l.s4 1983009808
        %v3776 = vunpack.c.0.s8 %v3775
        %v3777 = vlaneseq
        %v3778 = vshrl.u32 %v3777, 7
        %v3779 = vsub.s32 %v3776, %v3778
        %v3780 = vrot.slane %v3773, %v3779
        %v3781 = vcombine.low %v2589, %v2597
        %v3783 = vunpack.c.l.s4 1983009808
        %v3784 = vunpack.c.0.s8 %v3783
        %v3785 = vlaneseq
        %v3786 = vshrl.u32 %v3785, 7
        %v3787 = vsub.s32 %v3784, %v3786
        %v3788 = vrot.slane %v3781, %v3787
        %v3789 = vcombine.low %v3764, %v3772
        %v3791 = vunpack.c.l.s4 1934713408
        %v3792 = vunpack.c.0.s8 %v3791
        %v3793 = vlaneseq
        %v3794 = vshrl.u32 %v3793, 7
        %v3795 = vsub.s32 %v3792, %v3794
        %v3796 = vrot.slane %v3789, %v3795
        %v3797 = vcombine.low %v3780, %v3788
        %v3799 = vunpack.c.l.s4 1934713408
        %v3800 = vunpack.c.0.s8 %v3799
        %v3801 = vlaneseq
        %v3802 = vshrl.u32 %v3801, 7
        %v3803 = vsub.s32 %v3800, %v3802
        %v3804 = vrot.slane %v3797, %v3803
        %v3805 = vcombine.low %v3796, %v3804
        %v3806 = vcombine.high %v3796, %v3804
        %v3807 = vcombine.low %v2601, %v2609
        %v3809 = vunpack.c.l.s4 1983009808
        %v3810 = vunpack.c.0.s8 %v3809
        %v3811 = vlaneseq
        %v3812 = vshrl.u32 %v3811, 7
        %v3813 = vsub.s32 %v3810, %v3812
        %v3814 = vrot.slane %v3807, %v3813
        %v3815 = vcombine.low %v2605, %v2613
        %v3817 = vunpack.c.l.s4 1983009808
        %v3818 = vunpack.c.0.s8 %v3817
        %v3819 = vlaneseq
        %v3820 = vshrl.u32 %v3819, 7
        %v3821 = vsub.s32 %v3818, %v3820
        %v3822 = vrot.slane %v3815, %v3821
        %v3823 = vcombine.low %v2617, %v2625
        %v3825 = vunpack.c.l.s4 1983009808
        %v3826 = vunpack.c.0.s8 %v3825
        %v3827 = vlaneseq
        %v3828 = vshrl.u32 %v3827, 7
        %v3829 = vsub.s32 %v3826, %v3828
        %v3830 = vrot.slane %v3823, %v3829
        %v3831 = vcombine.low %v2621, %v2629
        %v3833 = vunpack.c.l.s4 1983009808
        %v3834 = vunpack.c.0.s8 %v3833
        %v3835 = vlaneseq
        %v3836 = vshrl.u32 %v3835, 7
        %v3837 = vsub.s32 %v3834, %v3836
        %v3838 = vrot.slane %v3831, %v3837
        %v3839 = vcombine.low %v3814, %v3822
        %v3841 = vunpack.c.l.s4 1934713408
        %v3842 = vunpack.c.0.s8 %v3841
        %v3843 = vlaneseq
        %v3844 = vshrl.u32 %v3843, 7
        %v3845 = vsub.s32 %v3842, %v3844
        %v3846 = vrot.slane %v3839, %v3845
        %v3847 = vcombine.low %v3830, %v3838
        %v3849 = vunpack.c.l.s4 1934713408
        %v3850 = vunpack.c.0.s8 %v3849
        %v3851 = vlaneseq
        %v3852 = vshrl.u32 %v3851, 7
        %v3853 = vsub.s32 %v3850, %v3852
        %v3854 = vrot.slane %v3847, %v3853
        %v3855 = vcombine.low %v3846, %v3854
        %v3856 = vcombine.high %v3846, %v3854
        %v3857 = vcombine.low %v2633, %v2641
        %v3859 = vunpack.c.l.s4 1983009808
        %v3860 = vunpack.c.0.s8 %v3859
        %v3861 = vlaneseq
        %v3862 = vshrl.u32 %v3861, 7
        %v3863 = vsub.s32 %v3860, %v3862
        %v3864 = vrot.slane %v3857, %v3863
        %v3865 = vcombine.low %v2637, %v2645
        %v3867 = vunpack.c.l.s4 1983009808
        %v3868 = vunpack.c.0.s8 %v3867
        %v3869 = vlaneseq
        %v3870 = vshrl.u32 %v3869, 7
        %v3871 = vsub.s32 %v3868, %v3870
        %v3872 = vrot.slane %v3865, %v3871
        %v3873 = vcombine.low %v2649, %v2657
        %v3875 = vunpack.c.l.s4 1983009808
        %v3876 = vunpack.c.0.s8 %v3875
        %v3877 = vlaneseq
        %v3878 = vshrl.u32 %v3877, 7
        %v3879 = vsub.s32 %v3876, %v3878
        %v3880 = vrot.slane %v3873, %v3879
        %v3881 = vcombine.low %v2653, %v2661
        %v3883 = vunpack.c.l.s4 1983009808
        %v3884 = vunpack.c.0.s8 %v3883
        %v3885 = vlaneseq
        %v3886 = vshrl.u32 %v3885, 7
        %v3887 = vsub.s32 %v3884, %v3886
        %v3888 = vrot.slane %v3881, %v3887
        %v3889 = vcombine.low %v3864, %v3872
        %v3891 = vunpack.c.l.s4 1934713408
        %v3892 = vunpack.c.0.s8 %v3891
        %v3893 = vlaneseq
        %v3894 = vshrl.u32 %v3893, 7
        %v3895 = vsub.s32 %v3892, %v3894
        %v3896 = vrot.slane %v3889, %v3895
        %v3897 = vcombine.low %v3880, %v3888
        %v3899 = vunpack.c.l.s4 1934713408
        %v3900 = vunpack.c.0.s8 %v3899
        %v3901 = vlaneseq
        %v3902 = vshrl.u32 %v3901, 7
        %v3903 = vsub.s32 %v3900, %v3902
        %v3904 = vrot.slane %v3897, %v3903
        %v3905 = vcombine.low %v3896, %v3904
        %v3906 = vcombine.high %v3896, %v3904
        %v3907 = vcombine.low %v2665, %v2673
        %v3909 = vunpack.c.l.s4 1983009808
        %v3910 = vunpack.c.0.s8 %v3909
        %v3911 = vlaneseq
        %v3912 = vshrl.u32 %v3911, 7
        %v3913 = vsub.s32 %v3910, %v3912
        %v3914 = vrot.slane %v3907, %v3913
        %v3915 = vcombine.low %v2669, %v2677
        %v3917 = vunpack.c.l.s4 1983009808
        %v3918 = vunpack.c.0.s8 %v3917
        %v3919 = vlaneseq
        %v3920 = vshrl.u32 %v3919, 7
        %v3921 = vsub.s32 %v3918, %v3920
        %v3922 = vrot.slane %v3915, %v3921
        %v3923 = vcombine.low %v2681, %v2689
        %v3925 = vunpack.c.l.s4 1983009808
        %v3926 = vunpack.c.0.s8 %v3925
        %v3927 = vlaneseq
        %v3928 = vshrl.u32 %v3927, 7
        %v3929 = vsub.s32 %v3926, %v3928
        %v3930 = vrot.slane %v3923, %v3929
        %v3931 = vcombine.low %v2685, %v2693
        %v3933 = vunpack.c.l.s4 1983009808
        %v3934 = vunpack.c.0.s8 %v3933
        %v3935 = vlaneseq
        %v3936 = vshrl.u32 %v3935, 7
        %v3937 = vsub.s32 %v3934, %v3936
        %v3938 = vrot.slane %v3931, %v3937
        %v3939 = vcombine.low %v3914, %v3922
        %v3941 = vunpack.c.l.s4 1934713408
        %v3942 = vunpack.c.0.s8 %v3941
        %v3943 = vlaneseq
        %v3944 = vshrl.u32 %v3943, 7
        %v3945 = vsub.s32 %v3942, %v3944
        %v3946 = vrot.slane %v3939, %v3945
        %v3947 = vcombine.low %v3930, %v3938
        %v3949 = vunpack.c.l.s4 1934713408
        %v3950 = vunpack.c.0.s8 %v3949
        %v3951 = vlaneseq
        %v3952 = vshrl.u32 %v3951, 7
        %v3953 = vsub.s32 %v3950, %v3952
        %v3954 = vrot.slane %v3947, %v3953
        %v3955 = vcombine.low %v3946, %v3954
        %v3956 = vcombine.high %v3946, %v3954
        %v3957 = vcombine.low %v2697, %v2705
        %v3959 = vunpack.c.l.s4 1983009808
        %v3960 = vunpack.c.0.s8 %v3959
        %v3961 = vlaneseq
        %v3962 = vshrl.u32 %v3961, 7
        %v3963 = vsub.s32 %v3960, %v3962
        %v3964 = vrot.slane %v3957, %v3963
        %v3965 = vcombine.low %v2701, %v2709
        %v3967 = vunpack.c.l.s4 1983009808
        %v3968 = vunpack.c.0.s8 %v3967
        %v3969 = vlaneseq
        %v3970 = vshrl.u32 %v3969, 7
        %v3971 = vsub.s32 %v3968, %v3970
        %v3972 = vrot.slane %v3965, %v3971
        %v3973 = vcombine.low %v2713, %v2721
        %v3975 = vunpack.c.l.s4 1983009808
        %v3976 = vunpack.c.0.s8 %v3975
        %v3977 = vlaneseq
        %v3978 = vshrl.u32 %v3977, 7
        %v3979 = vsub.s32 %v3976, %v3978
        %v3980 = vrot.slane %v3973, %v3979
        %v3981 = vcombine.low %v2717, %v2725
        %v3983 = vunpack.c.l.s4 1983009808
        %v3984 = vunpack.c.0.s8 %v3983
        %v3985 = vlaneseq
        %v3986 = vshrl.u32 %v3985, 7
        %v3987 = vsub.s32 %v3984, %v3986
        %v3988 = vrot.slane %v3981, %v3987
        %v3989 = vcombine.low %v3964, %v3972
        %v3991 = vunpack.c.l.s4 1934713408
        %v3992 = vunpack.c.0.s8 %v3991
        %v3993 = vlaneseq
        %v3994 = vshrl.u32 %v3993, 7
        %v3995 = vsub.s32 %v3992, %v3994
        %v3996 = vrot.slane %v3989, %v3995
        %v3997 = vcombine.low %v3980, %v3988
        %v3999 = vunpack.c.l.s4 1934713408
        %v4000 = vunpack.c.0.s8 %v3999
        %v4001 = vlaneseq
        %v4002 = vshrl.u32 %v4001, 7
        %v4003 = vsub.s32 %v4000, %v4002
        %v4004 = vrot.slane %v3997, %v4003
        %v4005 = vcombine.low %v3996, %v4004
        %v4006 = vcombine.high %v3996, %v4004
        %4015 = vrot.lane.b32.xlu0 %v3656, 26
        %v4016 = vpop.permute.xlu0 %4015
        %4017 = vrot.lane.b32.xlu0 %v3706, 26
        %v4018 = vpop.permute.xlu0 %4017
        %4019 = vrot.lane.b32.xlu0 %v3756, 26
        %v4020 = vpop.permute.xlu0 %4019
        %4021 = vrot.lane.b32.xlu0 %v3806, 26
        %v4022 = vpop.permute.xlu0 %4021
        %4023 = vrot.lane.b32.xlu0 %v3856, 26
        %v4024 = vpop.permute.xlu0 %4023
        %4025 = vrot.lane.b32.xlu0 %v3906, 26
        %v4026 = vpop.permute.xlu0 %4025
        %4027 = vrot.lane.b32.xlu0 %v3956, 26
        %v4028 = vpop.permute.xlu0 %4027
        %4029 = vrot.lane.b32.xlu0 %v4006, 26
        %v4030 = vpop.permute.xlu0 %4029
        %v4039 = vsel %vm3574, %v3655, %v4016
        %v4040 = vsel %vm3574, %v3705, %v4018
        %v4041 = vsel %vm3574, %v3755, %v4020
        %v4042 = vsel %vm3574, %v3805, %v4022
        %v4043 = vsel %vm3574, %v3855, %v4024
        %v4044 = vsel %vm3574, %v3905, %v4026
        %v4045 = vsel %vm3574, %v3955, %v4028
        %v4046 = vsel %vm3574, %v4005, %v4030
        %v4055 = vunpack.c.l.b16 %v2426
        %v4056 = vunpack.c.l.b16 %v2427
        %v4057 = vunpack.c.l.b16 %v2428
        %v4058 = vunpack.c.l.b16 %v2429
        %v4059 = vunpack.c.l.b16 %v2430
        %v4060 = vunpack.c.l.b16 %v2431
        %v4061 = vunpack.c.l.b16 %v2432
        %v4062 = vunpack.c.l.b16 %v2433
        %v4063 = vpack.c.b16 %v4056, %v4055
        %v4064 = vpack.c.b16 %v4058, %v4057
        %v4065 = vpack.c.b16 %v4060, %v4059
        %v4066 = vpack.c.b16 %v4062, %v4061
        %4071 = vmatprep.subr.bf16.mxu0 0
        %4072 = vmatpush1.bf16.msra.mxu0 %v3577
        %4073 = vmatprep.subr.bf16.mxu0 0
        %4074 = vmatpush1.bf16.msra.mxu0 %v3581
        %4075 = vmatprep.subr.bf16.mxu0 0
        %4076 = vmatpush1.bf16.msra.mxu0 %v3585
        %4077 = vmatprep.subr.bf16.mxu0 0
        %4078 = vmatpush1.bf16.msra.mxu0 %v3589
        %4079 = vmatprep.subr.bf16.mxu0 0
        %4080 = vmatpush1.bf16.msra.mxu0 %v3593
        %4081 = vmatprep.subr.bf16.mxu0 0
        %4082 = vmatpush1.bf16.msra.mxu0 %v3597
        %4083 = vmatprep.subr.bf16.mxu0 0
        %4084 = vmatpush1.bf16.msra.mxu0 %v3601
        %4085 = vmatprep.subr.bf16.mxu0 0
        %4086 = vmatpush1.bf16.msra.mxu0 %v3605
        %4087 = vmatprep.subr.bf16.mxu0 0
        %4088 = vmatpush1.bf16.msra.mxu0 0
        %4089 = vmatprep.subr.bf16.mxu0 0
        %4090 = vmatpush1.bf16.msra.mxu0 0
        %4091 = vmatprep.subr.bf16.mxu0 0
        %4092 = vmatpush1.bf16.msra.mxu0 0
        %4093 = vmatprep.subr.bf16.mxu0 0
        %4094 = vmatpush1.bf16.msra.mxu0 0
        %4095 = vmatprep.subr.bf16.mxu0 0
        %4096 = vmatpush1.bf16.msra.mxu0 0
        %4097 = vmatprep.subr.bf16.mxu0 0
        %4098 = vmatpush1.bf16.msra.mxu0 0
        %4099 = vmatprep.subr.bf16.mxu0 0
        %4100 = vmatpush1.bf16.msra.mxu0 0
        %4101 = vmatprep.subr.bf16.mxu0 0
        %4102 = vmatpush1.bf16.msra.mxu0 0
        %4103 = vmatprep.mubr.bf16.mxu0 0
        %4104 = vmatmul.mubr.bf16.gmra.mrb[0].mxu0 %v4063
        %v4105 = vpop.f32.mrb[0].mxu0
        %v4106 = vadd.f32 %v4039, %v4105
        %v4107 = vpop.f32.mrb[0].mxu0
        %v4108 = vpop.f32.mrb[0].mxu0
        %v4109 = vadd.f32 %v4040, %v4108
        %v4110 = vpop.f32.mrb[0].mxu0
        %4111 = vmatprep.mubr.bf16.mxu0 0
        %4112 = vmatmul.mubr.bf16.gmra.mrb[0].mxu0 %v4064
        %v4113 = vpop.f32.mrb[0].mxu0
        %v4114 = vadd.f32 %v4041, %v4113
        %v4115 = vpop.f32.mrb[0].mxu0
        %v4116 = vpop.f32.mrb[0].mxu0
        %v4117 = vadd.f32 %v4042, %v4116
        %v4118 = vpop.f32.mrb[0].mxu0
        %4119 = vmatprep.mubr.bf16.mxu0 0
        %4120 = vmatmul.mubr.bf16.gmra.mrb[0].mxu0 %v4065
        %v4121 = vpop.f32.mrb[0].mxu0
        %v4122 = vadd.f32 %v4043, %v4121
        %v4123 = vpop.f32.mrb[0].mxu0
        %v4124 = vpop.f32.mrb[0].mxu0
        %v4125 = vadd.f32 %v4044, %v4124
        %v4126 = vpop.f32.mrb[0].mxu0
        %4127 = vmatprep.mubr.bf16.mxu0 0
        %4128 = vmatmul.mubr.bf16.gmra.mrb[0].mxu0 %v4066
        %v4129 = vpop.f32.mrb[0].mxu0
        %v4130 = vadd.f32 %v4045, %v4129
        %v4131 = vpop.f32.mrb[0].mxu0
        %v4132 = vpop.f32.mrb[0].mxu0
        %v4133 = vadd.f32 %v4046, %v4132
        %v4134 = vpop.f32.mrb[0].mxu0
        %4135 = vdwg.mxu0
        %4144 = vrot.lane.b32.xlu0 %v4106, 102
        %v4145 = vpop.permute.xlu0 %4144
        %4146 = vrot.lane.b32.xlu0 %v4109, 102
        %v4147 = vpop.permute.xlu0 %4146
        %4148 = vrot.lane.b32.xlu0 %v4114, 102
        %v4149 = vpop.permute.xlu0 %4148
        %4150 = vrot.lane.b32.xlu0 %v4117, 102
        %v4151 = vpop.permute.xlu0 %4150
        %4152 = vrot.lane.b32.xlu0 %v4122, 102
        %v4153 = vpop.permute.xlu0 %4152
        %4154 = vrot.lane.b32.xlu0 %v4125, 102
        %v4155 = vpop.permute.xlu0 %4154
        %4156 = vrot.lane.b32.xlu0 %v4130, 102
        %v4157 = vpop.permute.xlu0 %4156
        %4158 = vrot.lane.b32.xlu0 %v4133, 102
        %v4159 = vpop.permute.xlu0 %4158
        %v4168 = vcombine.high %v4106, 0.0
        %v4170 = vunpack.c.l.s4 1983009808
        %v4171 = vunpack.c.0.s8 %v4170
        %v4172 = vlaneseq
        %v4173 = vshrl.u32 %v4172, 7
        %v4174 = vsub.s32 %v4171, %v4173
        %v4175 = vrot.slane %v4106, %v4174
        %v4177 = vunpack.c.l.s4 1983009808
        %v4178 = vunpack.c.0.s8 %v4177
        %v4179 = vlaneseq
        %v4180 = vshrl.u32 %v4179, 7
        %v4181 = vsub.s32 %v4178, %v4180
        %v4182 = vrot.slane %v4168, %v4181
        %v4183 = vcombine.high %v4145, 0.0
        %v4185 = vunpack.c.l.s4 1983009808
        %v4186 = vunpack.c.0.s8 %v4185
        %v4187 = vlaneseq
        %v4188 = vshrl.u32 %v4187, 7
        %v4189 = vsub.s32 %v4186, %v4188
        %v4190 = vrot.slane %v4145, %v4189
        %v4192 = vunpack.c.l.s4 1983009808
        %v4193 = vunpack.c.0.s8 %v4192
        %v4194 = vlaneseq
        %v4195 = vshrl.u32 %v4194, 7
        %v4196 = vsub.s32 %v4193, %v4195
        %v4197 = vrot.slane %v4183, %v4196
        %v4198 = vcombine.low %v4175, %v4190
        %v4199 = vcombine.high %v4175, %v4190
        %v4201 = vunpack.c.l.s4 1934713408
        %v4202 = vunpack.c.0.s8 %v4201
        %v4203 = vlaneseq
        %v4204 = vshrl.u32 %v4203, 7
        %v4205 = vsub.s32 %v4202, %v4204
        %v4206 = vrot.slane %v4198, %v4205
        %v4208 = vunpack.c.l.s4 1934713408
        %v4209 = vunpack.c.0.s8 %v4208
        %v4210 = vlaneseq
        %v4211 = vshrl.u32 %v4210, 7
        %v4212 = vsub.s32 %v4209, %v4211
        %v4213 = vrot.slane %v4199, %v4212
        %v4214 = vcombine.low %v4182, %v4197
        %v4215 = vcombine.high %v4182, %v4197
        %v4217 = vunpack.c.l.s4 1934713408
        %v4218 = vunpack.c.0.s8 %v4217
        %v4219 = vlaneseq
        %v4220 = vshrl.u32 %v4219, 7
        %v4221 = vsub.s32 %v4218, %v4220
        %v4222 = vrot.slane %v4214, %v4221
        %v4224 = vunpack.c.l.s4 1934713408
        %v4225 = vunpack.c.0.s8 %v4224
        %v4226 = vlaneseq
        %v4227 = vshrl.u32 %v4226, 7
        %v4228 = vsub.s32 %v4225, %v4227
        %v4229 = vrot.slane %v4215, %v4228
        %v4230 = vcombine.high %v4206, 0.0
        %v4231 = vcombine.high %v4213, 0.0
        %v4232 = vcombine.high %v4222, 0.0
        %v4233 = vcombine.high %v4229, 0.0
        %v4234 = vcombine.high %v4109, 0.0
        %v4236 = vunpack.c.l.s4 1983009808
        %v4237 = vunpack.c.0.s8 %v4236
        %v4238 = vlaneseq
        %v4239 = vshrl.u32 %v4238, 7
        %v4240 = vsub.s32 %v4237, %v4239
        %v4241 = vrot.slane %v4109, %v4240
        %v4243 = vunpack.c.l.s4 1983009808
        %v4244 = vunpack.c.0.s8 %v4243
        %v4245 = vlaneseq
        %v4246 = vshrl.u32 %v4245, 7
        %v4247 = vsub.s32 %v4244, %v4246
        %v4248 = vrot.slane %v4234, %v4247
        %v4249 = vcombine.high %v4147, 0.0
        %v4251 = vunpack.c.l.s4 1983009808
        %v4252 = vunpack.c.0.s8 %v4251
        %v4253 = vlaneseq
        %v4254 = vshrl.u32 %v4253, 7
        %v4255 = vsub.s32 %v4252, %v4254
        %v4256 = vrot.slane %v4147, %v4255
        %v4258 = vunpack.c.l.s4 1983009808
        %v4259 = vunpack.c.0.s8 %v4258
        %v4260 = vlaneseq
        %v4261 = vshrl.u32 %v4260, 7
        %v4262 = vsub.s32 %v4259, %v4261
        %v4263 = vrot.slane %v4249, %v4262
        %v4264 = vcombine.low %v4241, %v4256
        %v4265 = vcombine.high %v4241, %v4256
        %v4267 = vunpack.c.l.s4 1934713408
        %v4268 = vunpack.c.0.s8 %v4267
        %v4269 = vlaneseq
        %v4270 = vshrl.u32 %v4269, 7
        %v4271 = vsub.s32 %v4268, %v4270
        %v4272 = vrot.slane %v4264, %v4271
        %v4274 = vunpack.c.l.s4 1934713408
        %v4275 = vunpack.c.0.s8 %v4274
        %v4276 = vlaneseq
        %v4277 = vshrl.u32 %v4276, 7
        %v4278 = vsub.s32 %v4275, %v4277
        %v4279 = vrot.slane %v4265, %v4278
        %v4280 = vcombine.low %v4248, %v4263
        %v4281 = vcombine.high %v4248, %v4263
        %v4283 = vunpack.c.l.s4 1934713408
        %v4284 = vunpack.c.0.s8 %v4283
        %v4285 = vlaneseq
        %v4286 = vshrl.u32 %v4285, 7
        %v4287 = vsub.s32 %v4284, %v4286
        %v4288 = vrot.slane %v4280, %v4287
        %v4290 = vunpack.c.l.s4 1934713408
        %v4291 = vunpack.c.0.s8 %v4290
        %v4292 = vlaneseq
        %v4293 = vshrl.u32 %v4292, 7
        %v4294 = vsub.s32 %v4291, %v4293
        %v4295 = vrot.slane %v4281, %v4294
        %v4296 = vcombine.high %v4272, 0.0
        %v4297 = vcombine.high %v4279, 0.0
        %v4298 = vcombine.high %v4288, 0.0
        %v4299 = vcombine.high %v4295, 0.0
        %v4300 = vcombine.high %v4114, 0.0
        %v4302 = vunpack.c.l.s4 1983009808
        %v4303 = vunpack.c.0.s8 %v4302
        %v4304 = vlaneseq
        %v4305 = vshrl.u32 %v4304, 7
        %v4306 = vsub.s32 %v4303, %v4305
        %v4307 = vrot.slane %v4114, %v4306
        %v4309 = vunpack.c.l.s4 1983009808
        %v4310 = vunpack.c.0.s8 %v4309
        %v4311 = vlaneseq
        %v4312 = vshrl.u32 %v4311, 7
        %v4313 = vsub.s32 %v4310, %v4312
        %v4314 = vrot.slane %v4300, %v4313
        %v4315 = vcombine.high %v4149, 0.0
        %v4317 = vunpack.c.l.s4 1983009808
        %v4318 = vunpack.c.0.s8 %v4317
        %v4319 = vlaneseq
        %v4320 = vshrl.u32 %v4319, 7
        %v4321 = vsub.s32 %v4318, %v4320
        %v4322 = vrot.slane %v4149, %v4321
        %v4324 = vunpack.c.l.s4 1983009808
        %v4325 = vunpack.c.0.s8 %v4324
        %v4326 = vlaneseq
        %v4327 = vshrl.u32 %v4326, 7
        %v4328 = vsub.s32 %v4325, %v4327
        %v4329 = vrot.slane %v4315, %v4328
        %v4330 = vcombine.low %v4307, %v4322
        %v4331 = vcombine.high %v4307, %v4322
        %v4333 = vunpack.c.l.s4 1934713408
        %v4334 = vunpack.c.0.s8 %v4333
        %v4335 = vlaneseq
        %v4336 = vshrl.u32 %v4335, 7
        %v4337 = vsub.s32 %v4334, %v4336
        %v4338 = vrot.slane %v4330, %v4337
        %v4340 = vunpack.c.l.s4 1934713408
        %v4341 = vunpack.c.0.s8 %v4340
        %v4342 = vlaneseq
        %v4343 = vshrl.u32 %v4342, 7
        %v4344 = vsub.s32 %v4341, %v4343
        %v4345 = vrot.slane %v4331, %v4344
        %v4346 = vcombine.low %v4314, %v4329
        %v4347 = vcombine.high %v4314, %v4329
        %v4349 = vunpack.c.l.s4 1934713408
        %v4350 = vunpack.c.0.s8 %v4349
        %v4351 = vlaneseq
        %v4352 = vshrl.u32 %v4351, 7
        %v4353 = vsub.s32 %v4350, %v4352
        %v4354 = vrot.slane %v4346, %v4353
        %v4356 = vunpack.c.l.s4 1934713408
        %v4357 = vunpack.c.0.s8 %v4356
        %v4358 = vlaneseq
        %v4359 = vshrl.u32 %v4358, 7
        %v4360 = vsub.s32 %v4357, %v4359
        %v4361 = vrot.slane %v4347, %v4360
        %v4362 = vcombine.high %v4338, 0.0
        %v4363 = vcombine.high %v4345, 0.0
        %v4364 = vcombine.high %v4354, 0.0
        %v4365 = vcombine.high %v4361, 0.0
        %v4366 = vcombine.high %v4117, 0.0
        %v4368 = vunpack.c.l.s4 1983009808
        %v4369 = vunpack.c.0.s8 %v4368
        %v4370 = vlaneseq
        %v4371 = vshrl.u32 %v4370, 7
        %v4372 = vsub.s32 %v4369, %v4371
        %v4373 = vrot.slane %v4117, %v4372
        %v4375 = vunpack.c.l.s4 1983009808
        %v4376 = vunpack.c.0.s8 %v4375
        %v4377 = vlaneseq
        %v4378 = vshrl.u32 %v4377, 7
        %v4379 = vsub.s32 %v4376, %v4378
        %v4380 = vrot.slane %v4366, %v4379
        %v4381 = vcombine.high %v4151, 0.0
        %v4383 = vunpack.c.l.s4 1983009808
        %v4384 = vunpack.c.0.s8 %v4383
        %v4385 = vlaneseq
        %v4386 = vshrl.u32 %v4385, 7
        %v4387 = vsub.s32 %v4384, %v4386
        %v4388 = vrot.slane %v4151, %v4387
        %v4390 = vunpack.c.l.s4 1983009808
        %v4391 = vunpack.c.0.s8 %v4390
        %v4392 = vlaneseq
        %v4393 = vshrl.u32 %v4392, 7
        %v4394 = vsub.s32 %v4391, %v4393
        %v4395 = vrot.slane %v4381, %v4394
        %v4396 = vcombine.low %v4373, %v4388
        %v4397 = vcombine.high %v4373, %v4388
        %v4399 = vunpack.c.l.s4 1934713408
        %v4400 = vunpack.c.0.s8 %v4399
        %v4401 = vlaneseq
        %v4402 = vshrl.u32 %v4401, 7
        %v4403 = vsub.s32 %v4400, %v4402
        %v4404 = vrot.slane %v4396, %v4403
        %v4406 = vunpack.c.l.s4 1934713408
        %v4407 = vunpack.c.0.s8 %v4406
        %v4408 = vlaneseq
        %v4409 = vshrl.u32 %v4408, 7
        %v4410 = vsub.s32 %v4407, %v4409
        %v4411 = vrot.slane %v4397, %v4410
        %v4412 = vcombine.low %v4380, %v4395
        %v4413 = vcombine.high %v4380, %v4395
        %v4415 = vunpack.c.l.s4 1934713408
        %v4416 = vunpack.c.0.s8 %v4415
        %v4417 = vlaneseq
        %v4418 = vshrl.u32 %v4417, 7
        %v4419 = vsub.s32 %v4416, %v4418
        %v4420 = vrot.slane %v4412, %v4419
        %v4422 = vunpack.c.l.s4 1934713408
        %v4423 = vunpack.c.0.s8 %v4422
        %v4424 = vlaneseq
        %v4425 = vshrl.u32 %v4424, 7
        %v4426 = vsub.s32 %v4423, %v4425
        %v4427 = vrot.slane %v4413, %v4426
        %v4428 = vcombine.high %v4404, 0.0
        %v4429 = vcombine.high %v4411, 0.0
        %v4430 = vcombine.high %v4420, 0.0
        %v4431 = vcombine.high %v4427, 0.0
        %v4432 = vcombine.high %v4122, 0.0
        %v4434 = vunpack.c.l.s4 1983009808
        %v4435 = vunpack.c.0.s8 %v4434
        %v4436 = vlaneseq
        %v4437 = vshrl.u32 %v4436, 7
        %v4438 = vsub.s32 %v4435, %v4437
        %v4439 = vrot.slane %v4122, %v4438
        %v4441 = vunpack.c.l.s4 1983009808
        %v4442 = vunpack.c.0.s8 %v4441
        %v4443 = vlaneseq
        %v4444 = vshrl.u32 %v4443, 7
        %v4445 = vsub.s32 %v4442, %v4444
        %v4446 = vrot.slane %v4432, %v4445
        %v4447 = vcombine.high %v4153, 0.0
        %v4449 = vunpack.c.l.s4 1983009808
        %v4450 = vunpack.c.0.s8 %v4449
        %v4451 = vlaneseq
        %v4452 = vshrl.u32 %v4451, 7
        %v4453 = vsub.s32 %v4450, %v4452
        %v4454 = vrot.slane %v4153, %v4453
        %v4456 = vunpack.c.l.s4 1983009808
        %v4457 = vunpack.c.0.s8 %v4456
        %v4458 = vlaneseq
        %v4459 = vshrl.u32 %v4458, 7
        %v4460 = vsub.s32 %v4457, %v4459
        %v4461 = vrot.slane %v4447, %v4460
        %v4462 = vcombine.low %v4439, %v4454
        %v4463 = vcombine.high %v4439, %v4454
        %v4465 = vunpack.c.l.s4 1934713408
        %v4466 = vunpack.c.0.s8 %v4465
        %v4467 = vlaneseq
        %v4468 = vshrl.u32 %v4467, 7
        %v4469 = vsub.s32 %v4466, %v4468
        %v4470 = vrot.slane %v4462, %v4469
        %v4472 = vunpack.c.l.s4 1934713408
        %v4473 = vunpack.c.0.s8 %v4472
        %v4474 = vlaneseq
        %v4475 = vshrl.u32 %v4474, 7
        %v4476 = vsub.s32 %v4473, %v4475
        %v4477 = vrot.slane %v4463, %v4476
        %v4478 = vcombine.low %v4446, %v4461
        %v4479 = vcombine.high %v4446, %v4461
        %v4481 = vunpack.c.l.s4 1934713408
        %v4482 = vunpack.c.0.s8 %v4481
        %v4483 = vlaneseq
        %v4484 = vshrl.u32 %v4483, 7
        %v4485 = vsub.s32 %v4482, %v4484
        %v4486 = vrot.slane %v4478, %v4485
        %v4488 = vunpack.c.l.s4 1934713408
        %v4489 = vunpack.c.0.s8 %v4488
        %v4490 = vlaneseq
        %v4491 = vshrl.u32 %v4490, 7
        %v4492 = vsub.s32 %v4489, %v4491
        %v4493 = vrot.slane %v4479, %v4492
        %v4494 = vcombine.high %v4470, 0.0
        %v4495 = vcombine.high %v4477, 0.0
        %v4496 = vcombine.high %v4486, 0.0
        %v4497 = vcombine.high %v4493, 0.0
        %v4498 = vcombine.high %v4125, 0.0
        %v4500 = vunpack.c.l.s4 1983009808
        %v4501 = vunpack.c.0.s8 %v4500
        %v4502 = vlaneseq
        %v4503 = vshrl.u32 %v4502, 7
        %v4504 = vsub.s32 %v4501, %v4503
        %v4505 = vrot.slane %v4125, %v4504
        %v4507 = vunpack.c.l.s4 1983009808
        %v4508 = vunpack.c.0.s8 %v4507
        %v4509 = vlaneseq
        %v4510 = vshrl.u32 %v4509, 7
        %v4511 = vsub.s32 %v4508, %v4510
        %v4512 = vrot.slane %v4498, %v4511
        %v4513 = vcombine.high %v4155, 0.0
        %v4515 = vunpack.c.l.s4 1983009808
        %v4516 = vunpack.c.0.s8 %v4515
        %v4517 = vlaneseq
        %v4518 = vshrl.u32 %v4517, 7
        %v4519 = vsub.s32 %v4516, %v4518
        %v4520 = vrot.slane %v4155, %v4519
        %v4522 = vunpack.c.l.s4 1983009808
        %v4523 = vunpack.c.0.s8 %v4522
        %v4524 = vlaneseq
        %v4525 = vshrl.u32 %v4524, 7
        %v4526 = vsub.s32 %v4523, %v4525
        %v4527 = vrot.slane %v4513, %v4526
        %v4528 = vcombine.low %v4505, %v4520
        %v4529 = vcombine.high %v4505, %v4520
        %v4531 = vunpack.c.l.s4 1934713408
        %v4532 = vunpack.c.0.s8 %v4531
        %v4533 = vlaneseq
        %v4534 = vshrl.u32 %v4533, 7
        %v4535 = vsub.s32 %v4532, %v4534
        %v4536 = vrot.slane %v4528, %v4535
        %v4538 = vunpack.c.l.s4 1934713408
        %v4539 = vunpack.c.0.s8 %v4538
        %v4540 = vlaneseq
        %v4541 = vshrl.u32 %v4540, 7
        %v4542 = vsub.s32 %v4539, %v4541
        %v4543 = vrot.slane %v4529, %v4542
        %v4544 = vcombine.low %v4512, %v4527
        %v4545 = vcombine.high %v4512, %v4527
        %v4547 = vunpack.c.l.s4 1934713408
        %v4548 = vunpack.c.0.s8 %v4547
        %v4549 = vlaneseq
        %v4550 = vshrl.u32 %v4549, 7
        %v4551 = vsub.s32 %v4548, %v4550
        %v4552 = vrot.slane %v4544, %v4551
        %v4554 = vunpack.c.l.s4 1934713408
        %v4555 = vunpack.c.0.s8 %v4554
        %v4556 = vlaneseq
        %v4557 = vshrl.u32 %v4556, 7
        %v4558 = vsub.s32 %v4555, %v4557
        %v4559 = vrot.slane %v4545, %v4558
        %v4560 = vcombine.high %v4536, 0.0
        %v4561 = vcombine.high %v4543, 0.0
        %v4562 = vcombine.high %v4552, 0.0
        %v4563 = vcombine.high %v4559, 0.0
        %v4564 = vcombine.high %v4130, 0.0
        %v4566 = vunpack.c.l.s4 1983009808
        %v4567 = vunpack.c.0.s8 %v4566
        %v4568 = vlaneseq
        %v4569 = vshrl.u32 %v4568, 7
        %v4570 = vsub.s32 %v4567, %v4569
        %v4571 = vrot.slane %v4130, %v4570
        %v4573 = vunpack.c.l.s4 1983009808
        %v4574 = vunpack.c.0.s8 %v4573
        %v4575 = vlaneseq
        %v4576 = vshrl.u32 %v4575, 7
        %v4577 = vsub.s32 %v4574, %v4576
        %v4578 = vrot.slane %v4564, %v4577
        %v4579 = vcombine.high %v4157, 0.0
        %v4581 = vunpack.c.l.s4 1983009808
        %v4582 = vunpack.c.0.s8 %v4581
        %v4583 = vlaneseq
        %v4584 = vshrl.u32 %v4583, 7
        %v4585 = vsub.s32 %v4582, %v4584
        %v4586 = vrot.slane %v4157, %v4585
        %v4588 = vunpack.c.l.s4 1983009808
        %v4589 = vunpack.c.0.s8 %v4588
        %v4590 = vlaneseq
        %v4591 = vshrl.u32 %v4590, 7
        %v4592 = vsub.s32 %v4589, %v4591
        %v4593 = vrot.slane %v4579, %v4592
        %v4594 = vcombine.low %v4571, %v4586
        %v4595 = vcombine.high %v4571, %v4586
        %v4597 = vunpack.c.l.s4 1934713408
        %v4598 = vunpack.c.0.s8 %v4597
        %v4599 = vlaneseq
        %v4600 = vshrl.u32 %v4599, 7
        %v4601 = vsub.s32 %v4598, %v4600
        %v4602 = vrot.slane %v4594, %v4601
        %v4604 = vunpack.c.l.s4 1934713408
        %v4605 = vunpack.c.0.s8 %v4604
        %v4606 = vlaneseq
        %v4607 = vshrl.u32 %v4606, 7
        %v4608 = vsub.s32 %v4605, %v4607
        %v4609 = vrot.slane %v4595, %v4608
        %v4610 = vcombine.low %v4578, %v4593
        %v4611 = vcombine.high %v4578, %v4593
        %v4613 = vunpack.c.l.s4 1934713408
        %v4614 = vunpack.c.0.s8 %v4613
        %v4615 = vlaneseq
        %v4616 = vshrl.u32 %v4615, 7
        %v4617 = vsub.s32 %v4614, %v4616
        %v4618 = vrot.slane %v4610, %v4617
        %v4620 = vunpack.c.l.s4 1934713408
        %v4621 = vunpack.c.0.s8 %v4620
        %v4622 = vlaneseq
        %v4623 = vshrl.u32 %v4622, 7
        %v4624 = vsub.s32 %v4621, %v4623
        %v4625 = vrot.slane %v4611, %v4624
        %v4626 = vcombine.high %v4602, 0.0
        %v4627 = vcombine.high %v4609, 0.0
        %v4628 = vcombine.high %v4618, 0.0
        %v4629 = vcombine.high %v4625, 0.0
        %v4630 = vcombine.high %v4133, 0.0
        %v4632 = vunpack.c.l.s4 1983009808
        %v4633 = vunpack.c.0.s8 %v4632
        %v4634 = vlaneseq
        %v4635 = vshrl.u32 %v4634, 7
        %v4636 = vsub.s32 %v4633, %v4635
        %v4637 = vrot.slane %v4133, %v4636
        %v4639 = vunpack.c.l.s4 1983009808
        %v4640 = vunpack.c.0.s8 %v4639
        %v4641 = vlaneseq
        %v4642 = vshrl.u32 %v4641, 7
        %v4643 = vsub.s32 %v4640, %v4642
        %v4644 = vrot.slane %v4630, %v4643
        %v4645 = vcombine.high %v4159, 0.0
        %v4647 = vunpack.c.l.s4 1983009808
        %v4648 = vunpack.c.0.s8 %v4647
        %v4649 = vlaneseq
        %v4650 = vshrl.u32 %v4649, 7
        %v4651 = vsub.s32 %v4648, %v4650
        %v4652 = vrot.slane %v4159, %v4651
        %v4654 = vunpack.c.l.s4 1983009808
        %v4655 = vunpack.c.0.s8 %v4654
        %v4656 = vlaneseq
        %v4657 = vshrl.u32 %v4656, 7
        %v4658 = vsub.s32 %v4655, %v4657
        %v4659 = vrot.slane %v4645, %v4658
        %v4660 = vcombine.low %v4637, %v4652
        %v4661 = vcombine.high %v4637, %v4652
        %v4663 = vunpack.c.l.s4 1934713408
        %v4664 = vunpack.c.0.s8 %v4663
        %v4665 = vlaneseq
        %v4666 = vshrl.u32 %v4665, 7
        %v4667 = vsub.s32 %v4664, %v4666
        %v4668 = vrot.slane %v4660, %v4667
        %v4670 = vunpack.c.l.s4 1934713408
        %v4671 = vunpack.c.0.s8 %v4670
        %v4672 = vlaneseq
        %v4673 = vshrl.u32 %v4672, 7
        %v4674 = vsub.s32 %v4671, %v4673
        %v4675 = vrot.slane %v4661, %v4674
        %v4676 = vcombine.low %v4644, %v4659
        %v4677 = vcombine.high %v4644, %v4659
        %v4679 = vunpack.c.l.s4 1934713408
        %v4680 = vunpack.c.0.s8 %v4679
        %v4681 = vlaneseq
        %v4682 = vshrl.u32 %v4681, 7
        %v4683 = vsub.s32 %v4680, %v4682
        %v4684 = vrot.slane %v4676, %v4683
        %v4686 = vunpack.c.l.s4 1934713408
        %v4687 = vunpack.c.0.s8 %v4686
        %v4688 = vlaneseq
        %v4689 = vshrl.u32 %v4688, 7
        %v4690 = vsub.s32 %v4687, %v4689
        %v4691 = vrot.slane %v4677, %v4690
        %v4692 = vcombine.high %v4668, 0.0
        %v4693 = vcombine.high %v4675, 0.0
        %v4694 = vcombine.high %v4684, 0.0
        %v4695 = vcombine.high %v4691, 0.0
        %v4696 = vmax.f32 %v4206, 0.0
        %v4697 = vmax.f32 %v4230, 0.0
        %v4698 = vmax.f32 %v4213, 0.0
        %v4699 = vmax.f32 %v4231, 0.0
        %v4700 = vmax.f32 %v4222, 0.0
        %v4701 = vmax.f32 %v4232, 0.0
        %v4702 = vmax.f32 %v4229, 0.0
        %v4703 = vmax.f32 %v4233, 0.0
        %v4704 = vmax.f32 %v4272, 0.0
        %v4705 = vmax.f32 %v4296, 0.0
        %v4706 = vmax.f32 %v4279, 0.0
        %v4707 = vmax.f32 %v4297, 0.0
        %v4708 = vmax.f32 %v4288, 0.0
        %v4709 = vmax.f32 %v4298, 0.0
        %v4710 = vmax.f32 %v4295, 0.0
        %v4711 = vmax.f32 %v4299, 0.0
        %v4712 = vmax.f32 %v4338, 0.0
        %v4713 = vmax.f32 %v4362, 0.0
        %v4714 = vmax.f32 %v4345, 0.0
        %v4715 = vmax.f32 %v4363, 0.0
        %v4716 = vmax.f32 %v4354, 0.0
        %v4717 = vmax.f32 %v4364, 0.0
        %v4718 = vmax.f32 %v4361, 0.0
        %v4719 = vmax.f32 %v4365, 0.0
        %v4720 = vmax.f32 %v4404, 0.0
        %v4721 = vmax.f32 %v4428, 0.0
        %v4722 = vmax.f32 %v4411, 0.0
        %v4723 = vmax.f32 %v4429, 0.0
        %v4724 = vmax.f32 %v4420, 0.0
        %v4725 = vmax.f32 %v4430, 0.0
        %v4726 = vmax.f32 %v4427, 0.0
        %v4727 = vmax.f32 %v4431, 0.0
        %v4728 = vmax.f32 %v4470, 0.0
        %v4729 = vmax.f32 %v4494, 0.0
        %v4730 = vmax.f32 %v4477, 0.0
        %v4731 = vmax.f32 %v4495, 0.0
        %v4732 = vmax.f32 %v4486, 0.0
        %v4733 = vmax.f32 %v4496, 0.0
        %v4734 = vmax.f32 %v4493, 0.0
        %v4735 = vmax.f32 %v4497, 0.0
        %v4736 = vmax.f32 %v4536, 0.0
        %v4737 = vmax.f32 %v4560, 0.0
        %v4738 = vmax.f32 %v4543, 0.0
        %v4739 = vmax.f32 %v4561, 0.0
        %v4740 = vmax.f32 %v4552, 0.0
        %v4741 = vmax.f32 %v4562, 0.0
        %v4742 = vmax.f32 %v4559, 0.0
        %v4743 = vmax.f32 %v4563, 0.0
        %v4744 = vmax.f32 %v4602, 0.0
        %v4745 = vmax.f32 %v4626, 0.0
        %v4746 = vmax.f32 %v4609, 0.0
        %v4747 = vmax.f32 %v4627, 0.0
        %v4748 = vmax.f32 %v4618, 0.0
        %v4749 = vmax.f32 %v4628, 0.0
        %v4750 = vmax.f32 %v4625, 0.0
        %v4751 = vmax.f32 %v4629, 0.0
        %v4752 = vmax.f32 %v4668, 0.0
        %v4753 = vmax.f32 %v4692, 0.0
        %v4754 = vmax.f32 %v4675, 0.0
        %v4755 = vmax.f32 %v4693, 0.0
        %v4756 = vmax.f32 %v4684, 0.0
        %v4757 = vmax.f32 %v4694, 0.0
        %v4758 = vmax.f32 %v4691, 0.0
        %v4759 = vmax.f32 %v4695, 0.0
        %v4760 = vpack.c.bf16 %v4696, %v4696
        %v4761 = vpack.c.bf16 %v4697, %v4697
        %v4762 = vpack.c.bf16 %v4698, %v4698
        %v4763 = vpack.c.bf16 %v4699, %v4699
        %v4764 = vpack.c.bf16 %v4700, %v4700
        %v4765 = vpack.c.bf16 %v4701, %v4701
        %v4766 = vpack.c.bf16 %v4702, %v4702
        %v4767 = vpack.c.bf16 %v4703, %v4703
        %v4768 = vpack.c.bf16 %v4704, %v4704
        %v4769 = vpack.c.bf16 %v4705, %v4705
        %v4770 = vpack.c.bf16 %v4706, %v4706
        %v4771 = vpack.c.bf16 %v4707, %v4707
        %v4772 = vpack.c.bf16 %v4708, %v4708
        %v4773 = vpack.c.bf16 %v4709, %v4709
        %v4774 = vpack.c.bf16 %v4710, %v4710
        %v4775 = vpack.c.bf16 %v4711, %v4711
        %v4776 = vpack.c.bf16 %v4712, %v4712
        %v4777 = vpack.c.bf16 %v4713, %v4713
        %v4778 = vpack.c.bf16 %v4714, %v4714
        %v4779 = vpack.c.bf16 %v4715, %v4715
        %v4780 = vpack.c.bf16 %v4716, %v4716
        %v4781 = vpack.c.bf16 %v4717, %v4717
        %v4782 = vpack.c.bf16 %v4718, %v4718
        %v4783 = vpack.c.bf16 %v4719, %v4719
        %v4784 = vpack.c.bf16 %v4720, %v4720
        %v4785 = vpack.c.bf16 %v4721, %v4721
        %v4786 = vpack.c.bf16 %v4722, %v4722
        %v4787 = vpack.c.bf16 %v4723, %v4723
        %v4788 = vpack.c.bf16 %v4724, %v4724
        %v4789 = vpack.c.bf16 %v4725, %v4725
        %v4790 = vpack.c.bf16 %v4726, %v4726
        %v4791 = vpack.c.bf16 %v4727, %v4727
        %v4792 = vpack.c.bf16 %v4728, %v4728
        %v4793 = vpack.c.bf16 %v4729, %v4729
        %v4794 = vpack.c.bf16 %v4730, %v4730
        %v4795 = vpack.c.bf16 %v4731, %v4731
        %v4796 = vpack.c.bf16 %v4732, %v4732
        %v4797 = vpack.c.bf16 %v4733, %v4733
        %v4798 = vpack.c.bf16 %v4734, %v4734
        %v4799 = vpack.c.bf16 %v4735, %v4735
        %v4800 = vpack.c.bf16 %v4736, %v4736
        %v4801 = vpack.c.bf16 %v4737, %v4737
        %v4802 = vpack.c.bf16 %v4738, %v4738
        %v4803 = vpack.c.bf16 %v4739, %v4739
        %v4804 = vpack.c.bf16 %v4740, %v4740
        %v4805 = vpack.c.bf16 %v4741, %v4741
        %v4806 = vpack.c.bf16 %v4742, %v4742
        %v4807 = vpack.c.bf16 %v4743, %v4743
        %v4808 = vpack.c.bf16 %v4744, %v4744
        %v4809 = vpack.c.bf16 %v4745, %v4745
        %v4810 = vpack.c.bf16 %v4746, %v4746
        %v4811 = vpack.c.bf16 %v4747, %v4747
        %v4812 = vpack.c.bf16 %v4748, %v4748
        %v4813 = vpack.c.bf16 %v4749, %v4749
        %v4814 = vpack.c.bf16 %v4750, %v4750
        %v4815 = vpack.c.bf16 %v4751, %v4751
        %v4816 = vpack.c.bf16 %v4752, %v4752
        %v4817 = vpack.c.bf16 %v4753, %v4753
        %v4818 = vpack.c.bf16 %v4754, %v4754
        %v4819 = vpack.c.bf16 %v4755, %v4755
        %v4820 = vpack.c.bf16 %v4756, %v4756
        %v4821 = vpack.c.bf16 %v4757, %v4757
        %v4822 = vpack.c.bf16 %v4758, %v4758
        %v4823 = vpack.c.bf16 %v4759, %v4759
        %4888 = vrot.lane.b32.xlu0 %v4760, 127
        %v4889 = vpop.permute.xlu0 %4888
        %4890 = vrot.lane.b32.xlu0 %v4761, 127
        %v4891 = vpop.permute.xlu0 %4890
        %4892 = vrot.lane.b32.xlu0 %v4762, 127
        %v4893 = vpop.permute.xlu0 %4892
        %4894 = vrot.lane.b32.xlu0 %v4763, 127
        %v4895 = vpop.permute.xlu0 %4894
        %4896 = vrot.lane.b32.xlu0 %v4764, 127
        %v4897 = vpop.permute.xlu0 %4896
        %4898 = vrot.lane.b32.xlu0 %v4765, 127
        %v4899 = vpop.permute.xlu0 %4898
        %4900 = vrot.lane.b32.xlu0 %v4766, 127
        %v4901 = vpop.permute.xlu0 %4900
        %4902 = vrot.lane.b32.xlu0 %v4767, 127
        %v4903 = vpop.permute.xlu0 %4902
        %4904 = vrot.lane.b32.xlu0 %v4768, 127
        %v4905 = vpop.permute.xlu0 %4904
        %4906 = vrot.lane.b32.xlu0 %v4769, 127
        %v4907 = vpop.permute.xlu0 %4906
        %4908 = vrot.lane.b32.xlu0 %v4770, 127
        %v4909 = vpop.permute.xlu0 %4908
        %4910 = vrot.lane.b32.xlu0 %v4771, 127
        %v4911 = vpop.permute.xlu0 %4910
        %4912 = vrot.lane.b32.xlu0 %v4772, 127
        %v4913 = vpop.permute.xlu0 %4912
        %4914 = vrot.lane.b32.xlu0 %v4773, 127
        %v4915 = vpop.permute.xlu0 %4914
        %4916 = vrot.lane.b32.xlu0 %v4774, 127
        %v4917 = vpop.permute.xlu0 %4916
        %4918 = vrot.lane.b32.xlu0 %v4775, 127
        %v4919 = vpop.permute.xlu0 %4918
        %4920 = vrot.lane.b32.xlu0 %v4776, 127
        %v4921 = vpop.permute.xlu0 %4920
        %4922 = vrot.lane.b32.xlu0 %v4777, 127
        %v4923 = vpop.permute.xlu0 %4922
        %4924 = vrot.lane.b32.xlu0 %v4778, 127
        %v4925 = vpop.permute.xlu0 %4924
        %4926 = vrot.lane.b32.xlu0 %v4779, 127
        %v4927 = vpop.permute.xlu0 %4926
        %4928 = vrot.lane.b32.xlu0 %v4780, 127
        %v4929 = vpop.permute.xlu0 %4928
        %4930 = vrot.lane.b32.xlu0 %v4781, 127
        %v4931 = vpop.permute.xlu0 %4930
        %4932 = vrot.lane.b32.xlu0 %v4782, 127
        %v4933 = vpop.permute.xlu0 %4932
        %4934 = vrot.lane.b32.xlu0 %v4783, 127
        %v4935 = vpop.permute.xlu0 %4934
        %4936 = vrot.lane.b32.xlu0 %v4784, 127
        %v4937 = vpop.permute.xlu0 %4936
        %4938 = vrot.lane.b32.xlu0 %v4785, 127
        %v4939 = vpop.permute.xlu0 %4938
        %4940 = vrot.lane.b32.xlu0 %v4786, 127
        %v4941 = vpop.permute.xlu0 %4940
        %4942 = vrot.lane.b32.xlu0 %v4787, 127
        %v4943 = vpop.permute.xlu0 %4942
        %4944 = vrot.lane.b32.xlu0 %v4788, 127
        %v4945 = vpop.permute.xlu0 %4944
        %4946 = vrot.lane.b32.xlu0 %v4789, 127
        %v4947 = vpop.permute.xlu0 %4946
        %4948 = vrot.lane.b32.xlu0 %v4790, 127
        %v4949 = vpop.permute.xlu0 %4948
        %4950 = vrot.lane.b32.xlu0 %v4791, 127
        %v4951 = vpop.permute.xlu0 %4950
        %4952 = vrot.lane.b32.xlu0 %v4792, 127
        %v4953 = vpop.permute.xlu0 %4952
        %4954 = vrot.lane.b32.xlu0 %v4793, 127
        %v4955 = vpop.permute.xlu0 %4954
        %4956 = vrot.lane.b32.xlu0 %v4794, 127
        %v4957 = vpop.permute.xlu0 %4956
        %4958 = vrot.lane.b32.xlu0 %v4795, 127
        %v4959 = vpop.permute.xlu0 %4958
        %4960 = vrot.lane.b32.xlu0 %v4796, 127
        %v4961 = vpop.permute.xlu0 %4960
        %4962 = vrot.lane.b32.xlu0 %v4797, 127
        %v4963 = vpop.permute.xlu0 %4962
        %4964 = vrot.lane.b32.xlu0 %v4798, 127
        %v4965 = vpop.permute.xlu0 %4964
        %4966 = vrot.lane.b32.xlu0 %v4799, 127
        %v4967 = vpop.permute.xlu0 %4966
        %4968 = vrot.lane.b32.xlu0 %v4800, 127
        %v4969 = vpop.permute.xlu0 %4968
        %4970 = vrot.lane.b32.xlu0 %v4801, 127
        %v4971 = vpop.permute.xlu0 %4970
        %4972 = vrot.lane.b32.xlu0 %v4802, 127
        %v4973 = vpop.permute.xlu0 %4972
        %4974 = vrot.lane.b32.xlu0 %v4803, 127
        %v4975 = vpop.permute.xlu0 %4974
        %4976 = vrot.lane.b32.xlu0 %v4804, 127
        %v4977 = vpop.permute.xlu0 %4976
        %4978 = vrot.lane.b32.xlu0 %v4805, 127
        %v4979 = vpop.permute.xlu0 %4978
        %4980 = vrot.lane.b32.xlu0 %v4806, 127
        %v4981 = vpop.permute.xlu0 %4980
        %4982 = vrot.lane.b32.xlu0 %v4807, 127
        %v4983 = vpop.permute.xlu0 %4982
        %4984 = vrot.lane.b32.xlu0 %v4808, 127
        %v4985 = vpop.permute.xlu0 %4984
        %4986 = vrot.lane.b32.xlu0 %v4809, 127
        %v4987 = vpop.permute.xlu0 %4986
        %4988 = vrot.lane.b32.xlu0 %v4810, 127
        %v4989 = vpop.permute.xlu0 %4988
        %4990 = vrot.lane.b32.xlu0 %v4811, 127
        %v4991 = vpop.permute.xlu0 %4990
        %4992 = vrot.lane.b32.xlu0 %v4812, 127
        %v4993 = vpop.permute.xlu0 %4992
        %4994 = vrot.lane.b32.xlu0 %v4813, 127
        %v4995 = vpop.permute.xlu0 %4994
        %4996 = vrot.lane.b32.xlu0 %v4814, 127
        %v4997 = vpop.permute.xlu0 %4996
        %4998 = vrot.lane.b32.xlu0 %v4815, 127
        %v4999 = vpop.permute.xlu0 %4998
        %5000 = vrot.lane.b32.xlu0 %v4816, 127
        %v5001 = vpop.permute.xlu0 %5000
        %5002 = vrot.lane.b32.xlu0 %v4817, 127
        %v5003 = vpop.permute.xlu0 %5002
        %5004 = vrot.lane.b32.xlu0 %v4818, 127
        %v5005 = vpop.permute.xlu0 %5004
        %5006 = vrot.lane.b32.xlu0 %v4819, 127
        %v5007 = vpop.permute.xlu0 %5006
        %5008 = vrot.lane.b32.xlu0 %v4820, 127
        %v5009 = vpop.permute.xlu0 %5008
        %5010 = vrot.lane.b32.xlu0 %v4821, 127
        %v5011 = vpop.permute.xlu0 %5010
        %5012 = vrot.lane.b32.xlu0 %v4822, 127
        %v5013 = vpop.permute.xlu0 %5012
        %5014 = vrot.lane.b32.xlu0 %v4823, 127
        %v5015 = vpop.permute.xlu0 %5014
        %5080 = vrot.lane.b32.xlu0 %v4760, 126
        %v5081 = vpop.permute.xlu0 %5080
        %5082 = vrot.lane.b32.xlu0 %v4761, 126
        %v5083 = vpop.permute.xlu0 %5082
        %5084 = vrot.lane.b32.xlu0 %v4762, 126
        %v5085 = vpop.permute.xlu0 %5084
        %5086 = vrot.lane.b32.xlu0 %v4763, 126
        %v5087 = vpop.permute.xlu0 %5086
        %5088 = vrot.lane.b32.xlu0 %v4764, 126
        %v5089 = vpop.permute.xlu0 %5088
        %5090 = vrot.lane.b32.xlu0 %v4765, 126
        %v5091 = vpop.permute.xlu0 %5090
        %5092 = vrot.lane.b32.xlu0 %v4766, 126
        %v5093 = vpop.permute.xlu0 %5092
        %5094 = vrot.lane.b32.xlu0 %v4767, 126
        %v5095 = vpop.permute.xlu0 %5094
        %5096 = vrot.lane.b32.xlu0 %v4768, 126
        %v5097 = vpop.permute.xlu0 %5096
        %5098 = vrot.lane.b32.xlu0 %v4769, 126
        %v5099 = vpop.permute.xlu0 %5098
        %5100 = vrot.lane.b32.xlu0 %v4770, 126
        %v5101 = vpop.permute.xlu0 %5100
        %5102 = vrot.lane.b32.xlu0 %v4771, 126
        %v5103 = vpop.permute.xlu0 %5102
        %5104 = vrot.lane.b32.xlu0 %v4772, 126
        %v5105 = vpop.permute.xlu0 %5104
        %5106 = vrot.lane.b32.xlu0 %v4773, 126
        %v5107 = vpop.permute.xlu0 %5106
        %5108 = vrot.lane.b32.xlu0 %v4774, 126
        %v5109 = vpop.permute.xlu0 %5108
        %5110 = vrot.lane.b32.xlu0 %v4775, 126
        %v5111 = vpop.permute.xlu0 %5110
        %5112 = vrot.lane.b32.xlu0 %v4776, 126
        %v5113 = vpop.permute.xlu0 %5112
        %5114 = vrot.lane.b32.xlu0 %v4777, 126
        %v5115 = vpop.permute.xlu0 %5114
        %5116 = vrot.lane.b32.xlu0 %v4778, 126
        %v5117 = vpop.permute.xlu0 %5116
        %5118 = vrot.lane.b32.xlu0 %v4779, 126
        %v5119 = vpop.permute.xlu0 %5118
        %5120 = vrot.lane.b32.xlu0 %v4780, 126
        %v5121 = vpop.permute.xlu0 %5120
        %5122 = vrot.lane.b32.xlu0 %v4781, 126
        %v5123 = vpop.permute.xlu0 %5122
        %5124 = vrot.lane.b32.xlu0 %v4782, 126
        %v5125 = vpop.permute.xlu0 %5124
        %5126 = vrot.lane.b32.xlu0 %v4783, 126
        %v5127 = vpop.permute.xlu0 %5126
        %5128 = vrot.lane.b32.xlu0 %v4784, 126
        %v5129 = vpop.permute.xlu0 %5128
        %5130 = vrot.lane.b32.xlu0 %v4785, 126
        %v5131 = vpop.permute.xlu0 %5130
        %5132 = vrot.lane.b32.xlu0 %v4786, 126
        %v5133 = vpop.permute.xlu0 %5132
        %5134 = vrot.lane.b32.xlu0 %v4787, 126
        %v5135 = vpop.permute.xlu0 %5134
        %5136 = vrot.lane.b32.xlu0 %v4788, 126
        %v5137 = vpop.permute.xlu0 %5136
        %5138 = vrot.lane.b32.xlu0 %v4789, 126
        %v5139 = vpop.permute.xlu0 %5138
        %5140 = vrot.lane.b32.xlu0 %v4790, 126
        %v5141 = vpop.permute.xlu0 %5140
        %5142 = vrot.lane.b32.xlu0 %v4791, 126
        %v5143 = vpop.permute.xlu0 %5142
        %5144 = vrot.lane.b32.xlu0 %v4792, 126
        %v5145 = vpop.permute.xlu0 %5144
        %5146 = vrot.lane.b32.xlu0 %v4793, 126
        %v5147 = vpop.permute.xlu0 %5146
        %5148 = vrot.lane.b32.xlu0 %v4794, 126
        %v5149 = vpop.permute.xlu0 %5148
        %5150 = vrot.lane.b32.xlu0 %v4795, 126
        %v5151 = vpop.permute.xlu0 %5150
        %5152 = vrot.lane.b32.xlu0 %v4796, 126
        %v5153 = vpop.permute.xlu0 %5152
        %5154 = vrot.lane.b32.xlu0 %v4797, 126
        %v5155 = vpop.permute.xlu0 %5154
        %5156 = vrot.lane.b32.xlu0 %v4798, 126
        %v5157 = vpop.permute.xlu0 %5156
        %5158 = vrot.lane.b32.xlu0 %v4799, 126
        %v5159 = vpop.permute.xlu0 %5158
        %5160 = vrot.lane.b32.xlu0 %v4800, 126
        %v5161 = vpop.permute.xlu0 %5160
        %5162 = vrot.lane.b32.xlu0 %v4801, 126
        %v5163 = vpop.permute.xlu0 %5162
        %5164 = vrot.lane.b32.xlu0 %v4802, 126
        %v5165 = vpop.permute.xlu0 %5164
        %5166 = vrot.lane.b32.xlu0 %v4803, 126
        %v5167 = vpop.permute.xlu0 %5166
        %5168 = vrot.lane.b32.xlu0 %v4804, 126
        %v5169 = vpop.permute.xlu0 %5168
        %5170 = vrot.lane.b32.xlu0 %v4805, 126
        %v5171 = vpop.permute.xlu0 %5170
        %5172 = vrot.lane.b32.xlu0 %v4806, 126
        %v5173 = vpop.permute.xlu0 %5172
        %5174 = vrot.lane.b32.xlu0 %v4807, 126
        %v5175 = vpop.permute.xlu0 %5174
        %5176 = vrot.lane.b32.xlu0 %v4808, 126
        %v5177 = vpop.permute.xlu0 %5176
        %5178 = vrot.lane.b32.xlu0 %v4809, 126
        %v5179 = vpop.permute.xlu0 %5178
        %5180 = vrot.lane.b32.xlu0 %v4810, 126
        %v5181 = vpop.permute.xlu0 %5180
        %5182 = vrot.lane.b32.xlu0 %v4811, 126
        %v5183 = vpop.permute.xlu0 %5182
        %5184 = vrot.lane.b32.xlu0 %v4812, 126
        %v5185 = vpop.permute.xlu0 %5184
        %5186 = vrot.lane.b32.xlu0 %v4813, 126
        %v5187 = vpop.permute.xlu0 %5186
        %5188 = vrot.lane.b32.xlu0 %v4814, 126
        %v5189 = vpop.permute.xlu0 %5188
        %5190 = vrot.lane.b32.xlu0 %v4815, 126
        %v5191 = vpop.permute.xlu0 %5190
        %5192 = vrot.lane.b32.xlu0 %v4816, 126
        %v5193 = vpop.permute.xlu0 %5192
        %5194 = vrot.lane.b32.xlu0 %v4817, 126
        %v5195 = vpop.permute.xlu0 %5194
        %5196 = vrot.lane.b32.xlu0 %v4818, 126
        %v5197 = vpop.permute.xlu0 %5196
        %5198 = vrot.lane.b32.xlu0 %v4819, 126
        %v5199 = vpop.permute.xlu0 %5198
        %5200 = vrot.lane.b32.xlu0 %v4820, 126
        %v5201 = vpop.permute.xlu0 %5200
        %5202 = vrot.lane.b32.xlu0 %v4821, 126
        %v5203 = vpop.permute.xlu0 %5202
        %5204 = vrot.lane.b32.xlu0 %v4822, 126
        %v5205 = vpop.permute.xlu0 %5204
        %5206 = vrot.lane.b32.xlu0 %v4823, 126
        %v5207 = vpop.permute.xlu0 %5206
        %5272 = vrot.lane.b32.xlu0 %v4760, 125
        %v5273 = vpop.permute.xlu0 %5272
        %5274 = vrot.lane.b32.xlu0 %v4761, 125
        %v5275 = vpop.permute.xlu0 %5274
        %5276 = vrot.lane.b32.xlu0 %v4762, 125
        %v5277 = vpop.permute.xlu0 %5276
        %5278 = vrot.lane.b32.xlu0 %v4763, 125
        %v5279 = vpop.permute.xlu0 %5278
        %5280 = vrot.lane.b32.xlu0 %v4764, 125
        %v5281 = vpop.permute.xlu0 %5280
        %5282 = vrot.lane.b32.xlu0 %v4765, 125
        %v5283 = vpop.permute.xlu0 %5282
        %5284 = vrot.lane.b32.xlu0 %v4766, 125
        %v5285 = vpop.permute.xlu0 %5284
        %5286 = vrot.lane.b32.xlu0 %v4767, 125
        %v5287 = vpop.permute.xlu0 %5286
        %5288 = vrot.lane.b32.xlu0 %v4768, 125
        %v5289 = vpop.permute.xlu0 %5288
        %5290 = vrot.lane.b32.xlu0 %v4769, 125
        %v5291 = vpop.permute.xlu0 %5290
        %5292 = vrot.lane.b32.xlu0 %v4770, 125
        %v5293 = vpop.permute.xlu0 %5292
        %5294 = vrot.lane.b32.xlu0 %v4771, 125
        %v5295 = vpop.permute.xlu0 %5294
        %5296 = vrot.lane.b32.xlu0 %v4772, 125
        %v5297 = vpop.permute.xlu0 %5296
        %5298 = vrot.lane.b32.xlu0 %v4773, 125
        %v5299 = vpop.permute.xlu0 %5298
        %5300 = vrot.lane.b32.xlu0 %v4774, 125
        %v5301 = vpop.permute.xlu0 %5300
        %5302 = vrot.lane.b32.xlu0 %v4775, 125
        %v5303 = vpop.permute.xlu0 %5302
        %5304 = vrot.lane.b32.xlu0 %v4776, 125
        %v5305 = vpop.permute.xlu0 %5304
        %5306 = vrot.lane.b32.xlu0 %v4777, 125
        %v5307 = vpop.permute.xlu0 %5306
        %5308 = vrot.lane.b32.xlu0 %v4778, 125
        %v5309 = vpop.permute.xlu0 %5308
        %5310 = vrot.lane.b32.xlu0 %v4779, 125
        %v5311 = vpop.permute.xlu0 %5310
        %5312 = vrot.lane.b32.xlu0 %v4780, 125
        %v5313 = vpop.permute.xlu0 %5312
        %5314 = vrot.lane.b32.xlu0 %v4781, 125
        %v5315 = vpop.permute.xlu0 %5314
        %5316 = vrot.lane.b32.xlu0 %v4782, 125
        %v5317 = vpop.permute.xlu0 %5316
        %5318 = vrot.lane.b32.xlu0 %v4783, 125
        %v5319 = vpop.permute.xlu0 %5318
        %5320 = vrot.lane.b32.xlu0 %v4784, 125
        %v5321 = vpop.permute.xlu0 %5320
        %5322 = vrot.lane.b32.xlu0 %v4785, 125
        %v5323 = vpop.permute.xlu0 %5322
        %5324 = vrot.lane.b32.xlu0 %v4786, 125
        %v5325 = vpop.permute.xlu0 %5324
        %5326 = vrot.lane.b32.xlu0 %v4787, 125
        %v5327 = vpop.permute.xlu0 %5326
        %5328 = vrot.lane.b32.xlu0 %v4788, 125
        %v5329 = vpop.permute.xlu0 %5328
        %5330 = vrot.lane.b32.xlu0 %v4789, 125
        %v5331 = vpop.permute.xlu0 %5330
        %5332 = vrot.lane.b32.xlu0 %v4790, 125
        %v5333 = vpop.permute.xlu0 %5332
        %5334 = vrot.lane.b32.xlu0 %v4791, 125
        %v5335 = vpop.permute.xlu0 %5334
        %5336 = vrot.lane.b32.xlu0 %v4792, 125
        %v5337 = vpop.permute.xlu0 %5336
        %5338 = vrot.lane.b32.xlu0 %v4793, 125
        %v5339 = vpop.permute.xlu0 %5338
        %5340 = vrot.lane.b32.xlu0 %v4794, 125
        %v5341 = vpop.permute.xlu0 %5340
        %5342 = vrot.lane.b32.xlu0 %v4795, 125
        %v5343 = vpop.permute.xlu0 %5342
        %5344 = vrot.lane.b32.xlu0 %v4796, 125
        %v5345 = vpop.permute.xlu0 %5344
        %5346 = vrot.lane.b32.xlu0 %v4797, 125
        %v5347 = vpop.permute.xlu0 %5346
        %5348 = vrot.lane.b32.xlu0 %v4798, 125
        %v5349 = vpop.permute.xlu0 %5348
        %5350 = vrot.lane.b32.xlu0 %v4799, 125
        %v5351 = vpop.permute.xlu0 %5350
        %5352 = vrot.lane.b32.xlu0 %v4800, 125
        %v5353 = vpop.permute.xlu0 %5352
        %5354 = vrot.lane.b32.xlu0 %v4801, 125
        %v5355 = vpop.permute.xlu0 %5354
        %5356 = vrot.lane.b32.xlu0 %v4802, 125
        %v5357 = vpop.permute.xlu0 %5356
        %5358 = vrot.lane.b32.xlu0 %v4803, 125
        %v5359 = vpop.permute.xlu0 %5358
        %5360 = vrot.lane.b32.xlu0 %v4804, 125
        %v5361 = vpop.permute.xlu0 %5360
        %5362 = vrot.lane.b32.xlu0 %v4805, 125
        %v5363 = vpop.permute.xlu0 %5362
        %5364 = vrot.lane.b32.xlu0 %v4806, 125
        %v5365 = vpop.permute.xlu0 %5364
        %5366 = vrot.lane.b32.xlu0 %v4807, 125
        %v5367 = vpop.permute.xlu0 %5366
        %5368 = vrot.lane.b32.xlu0 %v4808, 125
        %v5369 = vpop.permute.xlu0 %5368
        %5370 = vrot.lane.b32.xlu0 %v4809, 125
        %v5371 = vpop.permute.xlu0 %5370
        %5372 = vrot.lane.b32.xlu0 %v4810, 125
        %v5373 = vpop.permute.xlu0 %5372
        %5374 = vrot.lane.b32.xlu0 %v4811, 125
        %v5375 = vpop.permute.xlu0 %5374
        %5376 = vrot.lane.b32.xlu0 %v4812, 125
        %v5377 = vpop.permute.xlu0 %5376
        %5378 = vrot.lane.b32.xlu0 %v4813, 125
        %v5379 = vpop.permute.xlu0 %5378
        %5380 = vrot.lane.b32.xlu0 %v4814, 125
        %v5381 = vpop.permute.xlu0 %5380
        %5382 = vrot.lane.b32.xlu0 %v4815, 125
        %v5383 = vpop.permute.xlu0 %5382
        %5384 = vrot.lane.b32.xlu0 %v4816, 125
        %v5385 = vpop.permute.xlu0 %5384
        %5386 = vrot.lane.b32.xlu0 %v4817, 125
        %v5387 = vpop.permute.xlu0 %5386
        %5388 = vrot.lane.b32.xlu0 %v4818, 125
        %v5389 = vpop.permute.xlu0 %5388
        %5390 = vrot.lane.b32.xlu0 %v4819, 125
        %v5391 = vpop.permute.xlu0 %5390
        %5392 = vrot.lane.b32.xlu0 %v4820, 125
        %v5393 = vpop.permute.xlu0 %5392
        %5394 = vrot.lane.b32.xlu0 %v4821, 125
        %v5395 = vpop.permute.xlu0 %5394
        %5396 = vrot.lane.b32.xlu0 %v4822, 125
        %v5397 = vpop.permute.xlu0 %5396
        %5398 = vrot.lane.b32.xlu0 %v4823, 125
        %v5399 = vpop.permute.xlu0 %5398
        %v5464 = vld [vmem:[%s372] sm:$0xff]
        %v5465 = vld [vmem:[%s372 + $0x8] sm:$0xff]
        %v5466 = vld [vmem:[%s372 + $0x10] sm:$0xff]
        %v5467 = vld [vmem:[%s372 + $0x18] sm:$0xff]
        %v5468 = vld [vmem:[%s372 + $0x20] sm:$0xff]
        %v5469 = vld [vmem:[%s372 + $0x28] sm:$0xff]
        %v5470 = vld [vmem:[%s372 + $0x30] sm:$0xff]
        %v5471 = vld [vmem:[%s372 + $0x38] sm:$0xff]
        %v5472 = vld [vmem:[%s372 + $0x40] sm:$0xff]
        %v5473 = vld [vmem:[%s372 + $0x48] sm:$0xff]
        %v5474 = vld [vmem:[%s372 + $0x50] sm:$0xff]
        %v5475 = vld [vmem:[%s372 + $0x58] sm:$0xff]
        %v5476 = vld [vmem:[%s372 + $0x60] sm:$0xff]
        %v5477 = vld [vmem:[%s372 + $0x68] sm:$0xff]
        %v5478 = vld [vmem:[%s372 + $0x70] sm:$0xff]
        %v5479 = vld [vmem:[%s372 + $0x78] sm:$0xff]
        %v5480 = vld [vmem:[%s375] sm:$0x1]
        %v5481 = vlaneseq
        %v5482 = vshrl.u32 %v5481, 7
        %v5483 = vsub.s32 0, %v5482
        %v5484 = vrot.slane %v5480, %v5483
        %5486 = vbcast.lane.b32.xlu0 %v5484, 256
        %v5487 = vpop.permute.xlu0 %5486
        %s5489 = sor.u32 256, 8
        %5490 = vbcast.lane.b32.xlu0 %v5484, %s5489
        %v5491 = vpop.permute.xlu0 %5490
        %s5493 = sor.u32 256, 16
        %5494 = vbcast.lane.b32.xlu0 %v5484, %s5493
        %v5495 = vpop.permute.xlu0 %5494
        %s5497 = sor.u32 256, 24
        %5498 = vbcast.lane.b32.xlu0 %v5484, %s5497
        %v5499 = vpop.permute.xlu0 %5498
        %s5501 = sor.u32 256, 32
        %5502 = vbcast.lane.b32.xlu0 %v5484, %s5501
        %v5503 = vpop.permute.xlu0 %5502
        %s5505 = sor.u32 256, 40
        %5506 = vbcast.lane.b32.xlu0 %v5484, %s5505
        %v5507 = vpop.permute.xlu0 %5506
        %s5509 = sor.u32 256, 48
        %5510 = vbcast.lane.b32.xlu0 %v5484, %s5509
        %v5511 = vpop.permute.xlu0 %5510
        %s5513 = sor.u32 256, 56
        %5514 = vbcast.lane.b32.xlu0 %v5484, %s5513
        %v5515 = vpop.permute.xlu0 %5514
        %s5517 = sor.u32 256, 64
        %5518 = vbcast.lane.b32.xlu0 %v5484, %s5517
        %v5519 = vpop.permute.xlu0 %5518
        %s5521 = sor.u32 256, 72
        %5522 = vbcast.lane.b32.xlu0 %v5484, %s5521
        %v5523 = vpop.permute.xlu0 %5522
        %s5525 = sor.u32 256, 80
        %5526 = vbcast.lane.b32.xlu0 %v5484, %s5525
        %v5527 = vpop.permute.xlu0 %5526
        %s5529 = sor.u32 256, 88
        %5530 = vbcast.lane.b32.xlu0 %v5484, %s5529
        %v5531 = vpop.permute.xlu0 %5530
        %s5533 = sor.u32 256, 96
        %5534 = vbcast.lane.b32.xlu0 %v5484, %s5533
        %v5535 = vpop.permute.xlu0 %5534
        %s5537 = sor.u32 256, 104
        %5538 = vbcast.lane.b32.xlu0 %v5484, %s5537
        %v5539 = vpop.permute.xlu0 %5538
        %s5541 = sor.u32 256, 112
        %5542 = vbcast.lane.b32.xlu0 %v5484, %s5541
        %v5543 = vpop.permute.xlu0 %5542
        %s5545 = sor.u32 256, 120
        %5546 = vbcast.lane.b32.xlu0 %v5484, %s5545
        %v5547 = vpop.permute.xlu0 %5546
        %v5548 = vlaneseq
        %v5549 = vshrl.u32 %v5548, 7
        %v5550 = vsub.s32 0, %v5549
        %v5551 = vrot.slane %v5487, %v5550
        %v5552 = vlaneseq
        %v5553 = vshrl.u32 %v5552, 7
        %v5554 = vsub.s32 1, %v5553
        %v5555 = vrot.slane %v5487, %v5554
        %v5556 = vlaneseq
        %v5557 = vshrl.u32 %v5556, 7
        %v5558 = vsub.s32 2, %v5557
        %v5559 = vrot.slane %v5487, %v5558
        %v5560 = vlaneseq
        %v5561 = vshrl.u32 %v5560, 7
        %v5562 = vsub.s32 3, %v5561
        %v5563 = vrot.slane %v5487, %v5562
        %v5564 = vlaneseq
        %v5565 = vshrl.u32 %v5564, 7
        %v5566 = vsub.s32 4, %v5565
        %v5567 = vrot.slane %v5487, %v5566
        %v5568 = vlaneseq
        %v5569 = vshrl.u32 %v5568, 7
        %v5570 = vsub.s32 5, %v5569
        %v5571 = vrot.slane %v5487, %v5570
        %v5572 = vlaneseq
        %v5573 = vshrl.u32 %v5572, 7
        %v5574 = vsub.s32 6, %v5573
        %v5575 = vrot.slane %v5487, %v5574
        %v5576 = vlaneseq
        %v5577 = vshrl.u32 %v5576, 7
        %v5578 = vsub.s32 7, %v5577
        %v5579 = vrot.slane %v5487, %v5578
        %v5580 = vlaneseq
        %v5581 = vshrl.u32 %v5580, 7
        %v5582 = vsub.s32 0, %v5581
        %v5583 = vrot.slane %v5491, %v5582
        %v5584 = vlaneseq
        %v5585 = vshrl.u32 %v5584, 7
        %v5586 = vsub.s32 1, %v5585
        %v5587 = vrot.slane %v5491, %v5586
        %v5588 = vlaneseq
        %v5589 = vshrl.u32 %v5588, 7
        %v5590 = vsub.s32 2, %v5589
        %v5591 = vrot.slane %v5491, %v5590
        %v5592 = vlaneseq
        %v5593 = vshrl.u32 %v5592, 7
        %v5594 = vsub.s32 3, %v5593
        %v5595 = vrot.slane %v5491, %v5594
        %v5596 = vlaneseq
        %v5597 = vshrl.u32 %v5596, 7
        %v5598 = vsub.s32 4, %v5597
        %v5599 = vrot.slane %v5491, %v5598
        %v5600 = vlaneseq
        %v5601 = vshrl.u32 %v5600, 7
        %v5602 = vsub.s32 5, %v5601
        %v5603 = vrot.slane %v5491, %v5602
        %v5604 = vlaneseq
        %v5605 = vshrl.u32 %v5604, 7
        %v5606 = vsub.s32 6, %v5605
        %v5607 = vrot.slane %v5491, %v5606
        %v5608 = vlaneseq
        %v5609 = vshrl.u32 %v5608, 7
        %v5610 = vsub.s32 7, %v5609
        %v5611 = vrot.slane %v5491, %v5610
        %v5612 = vlaneseq
        %v5613 = vshrl.u32 %v5612, 7
        %v5614 = vsub.s32 0, %v5613
        %v5615 = vrot.slane %v5495, %v5614
        %v5616 = vlaneseq
        %v5617 = vshrl.u32 %v5616, 7
        %v5618 = vsub.s32 1, %v5617
        %v5619 = vrot.slane %v5495, %v5618
        %v5620 = vlaneseq
        %v5621 = vshrl.u32 %v5620, 7
        %v5622 = vsub.s32 2, %v5621
        %v5623 = vrot.slane %v5495, %v5622
        %v5624 = vlaneseq
        %v5625 = vshrl.u32 %v5624, 7
        %v5626 = vsub.s32 3, %v5625
        %v5627 = vrot.slane %v5495, %v5626
        %v5628 = vlaneseq
        %v5629 = vshrl.u32 %v5628, 7
        %v5630 = vsub.s32 4, %v5629
        %v5631 = vrot.slane %v5495, %v5630
        %v5632 = vlaneseq
        %v5633 = vshrl.u32 %v5632, 7
        %v5634 = vsub.s32 5, %v5633
        %v5635 = vrot.slane %v5495, %v5634
        %v5636 = vlaneseq
        %v5637 = vshrl.u32 %v5636, 7
        %v5638 = vsub.s32 6, %v5637
        %v5639 = vrot.slane %v5495, %v5638
        %v5640 = vlaneseq
        %v5641 = vshrl.u32 %v5640, 7
        %v5642 = vsub.s32 7, %v5641
        %v5643 = vrot.slane %v5495, %v5642
        %v5644 = vlaneseq
        %v5645 = vshrl.u32 %v5644, 7
        %v5646 = vsub.s32 0, %v5645
        %v5647 = vrot.slane %v5499, %v5646
        %v5648 = vlaneseq
        %v5649 = vshrl.u32 %v5648, 7
        %v5650 = vsub.s32 1, %v5649
        %v5651 = vrot.slane %v5499, %v5650
        %v5652 = vlaneseq
        %v5653 = vshrl.u32 %v5652, 7
        %v5654 = vsub.s32 2, %v5653
        %v5655 = vrot.slane %v5499, %v5654
        %v5656 = vlaneseq
        %v5657 = vshrl.u32 %v5656, 7
        %v5658 = vsub.s32 3, %v5657
        %v5659 = vrot.slane %v5499, %v5658
        %v5660 = vlaneseq
        %v5661 = vshrl.u32 %v5660, 7
        %v5662 = vsub.s32 4, %v5661
        %v5663 = vrot.slane %v5499, %v5662
        %v5664 = vlaneseq
        %v5665 = vshrl.u32 %v5664, 7
        %v5666 = vsub.s32 5, %v5665
        %v5667 = vrot.slane %v5499, %v5666
        %v5668 = vlaneseq
        %v5669 = vshrl.u32 %v5668, 7
        %v5670 = vsub.s32 6, %v5669
        %v5671 = vrot.slane %v5499, %v5670
        %v5672 = vlaneseq
        %v5673 = vshrl.u32 %v5672, 7
        %v5674 = vsub.s32 7, %v5673
        %v5675 = vrot.slane %v5499, %v5674
        %v5676 = vlaneseq
        %v5677 = vshrl.u32 %v5676, 7
        %v5678 = vsub.s32 0, %v5677
        %v5679 = vrot.slane %v5503, %v5678
        %v5680 = vlaneseq
        %v5681 = vshrl.u32 %v5680, 7
        %v5682 = vsub.s32 1, %v5681
        %v5683 = vrot.slane %v5503, %v5682
        %v5684 = vlaneseq
        %v5685 = vshrl.u32 %v5684, 7
        %v5686 = vsub.s32 2, %v5685
        %v5687 = vrot.slane %v5503, %v5686
        %v5688 = vlaneseq
        %v5689 = vshrl.u32 %v5688, 7
        %v5690 = vsub.s32 3, %v5689
        %v5691 = vrot.slane %v5503, %v5690
        %v5692 = vlaneseq
        %v5693 = vshrl.u32 %v5692, 7
        %v5694 = vsub.s32 4, %v5693
        %v5695 = vrot.slane %v5503, %v5694
        %v5696 = vlaneseq
        %v5697 = vshrl.u32 %v5696, 7
        %v5698 = vsub.s32 5, %v5697
        %v5699 = vrot.slane %v5503, %v5698
        %v5700 = vlaneseq
        %v5701 = vshrl.u32 %v5700, 7
        %v5702 = vsub.s32 6, %v5701
        %v5703 = vrot.slane %v5503, %v5702
        %v5704 = vlaneseq
        %v5705 = vshrl.u32 %v5704, 7
        %v5706 = vsub.s32 7, %v5705
        %v5707 = vrot.slane %v5503, %v5706
        %v5708 = vlaneseq
        %v5709 = vshrl.u32 %v5708, 7
        %v5710 = vsub.s32 0, %v5709
        %v5711 = vrot.slane %v5507, %v5710
        %v5712 = vlaneseq
        %v5713 = vshrl.u32 %v5712, 7
        %v5714 = vsub.s32 1, %v5713
        %v5715 = vrot.slane %v5507, %v5714
        %v5716 = vlaneseq
        %v5717 = vshrl.u32 %v5716, 7
        %v5718 = vsub.s32 2, %v5717
        %v5719 = vrot.slane %v5507, %v5718
        %v5720 = vlaneseq
        %v5721 = vshrl.u32 %v5720, 7
        %v5722 = vsub.s32 3, %v5721
        %v5723 = vrot.slane %v5507, %v5722
        %v5724 = vlaneseq
        %v5725 = vshrl.u32 %v5724, 7
        %v5726 = vsub.s32 4, %v5725
        %v5727 = vrot.slane %v5507, %v5726
        %v5728 = vlaneseq
        %v5729 = vshrl.u32 %v5728, 7
        %v5730 = vsub.s32 5, %v5729
        %v5731 = vrot.slane %v5507, %v5730
        %v5732 = vlaneseq
        %v5733 = vshrl.u32 %v5732, 7
        %v5734 = vsub.s32 6, %v5733
        %v5735 = vrot.slane %v5507, %v5734
        %v5736 = vlaneseq
        %v5737 = vshrl.u32 %v5736, 7
        %v5738 = vsub.s32 7, %v5737
        %v5739 = vrot.slane %v5507, %v5738
        %v5740 = vlaneseq
        %v5741 = vshrl.u32 %v5740, 7
        %v5742 = vsub.s32 0, %v5741
        %v5743 = vrot.slane %v5511, %v5742
        %v5744 = vlaneseq
        %v5745 = vshrl.u32 %v5744, 7
        %v5746 = vsub.s32 1, %v5745
        %v5747 = vrot.slane %v5511, %v5746
        %v5748 = vlaneseq
        %v5749 = vshrl.u32 %v5748, 7
        %v5750 = vsub.s32 2, %v5749
        %v5751 = vrot.slane %v5511, %v5750
        %v5752 = vlaneseq
        %v5753 = vshrl.u32 %v5752, 7
        %v5754 = vsub.s32 3, %v5753
        %v5755 = vrot.slane %v5511, %v5754
        %v5756 = vlaneseq
        %v5757 = vshrl.u32 %v5756, 7
        %v5758 = vsub.s32 4, %v5757
        %v5759 = vrot.slane %v5511, %v5758
        %v5760 = vlaneseq
        %v5761 = vshrl.u32 %v5760, 7
        %v5762 = vsub.s32 5, %v5761
        %v5763 = vrot.slane %v5511, %v5762
        %v5764 = vlaneseq
        %v5765 = vshrl.u32 %v5764, 7
        %v5766 = vsub.s32 6, %v5765
        %v5767 = vrot.slane %v5511, %v5766
        %v5768 = vlaneseq
        %v5769 = vshrl.u32 %v5768, 7
        %v5770 = vsub.s32 7, %v5769
        %v5771 = vrot.slane %v5511, %v5770
        %v5772 = vlaneseq
        %v5773 = vshrl.u32 %v5772, 7
        %v5774 = vsub.s32 0, %v5773
        %v5775 = vrot.slane %v5515, %v5774
        %v5776 = vlaneseq
        %v5777 = vshrl.u32 %v5776, 7
        %v5778 = vsub.s32 1, %v5777
        %v5779 = vrot.slane %v5515, %v5778
        %v5780 = vlaneseq
        %v5781 = vshrl.u32 %v5780, 7
        %v5782 = vsub.s32 2, %v5781
        %v5783 = vrot.slane %v5515, %v5782
        %v5784 = vlaneseq
        %v5785 = vshrl.u32 %v5784, 7
        %v5786 = vsub.s32 3, %v5785
        %v5787 = vrot.slane %v5515, %v5786
        %v5788 = vlaneseq
        %v5789 = vshrl.u32 %v5788, 7
        %v5790 = vsub.s32 4, %v5789
        %v5791 = vrot.slane %v5515, %v5790
        %v5792 = vlaneseq
        %v5793 = vshrl.u32 %v5792, 7
        %v5794 = vsub.s32 5, %v5793
        %v5795 = vrot.slane %v5515, %v5794
        %v5796 = vlaneseq
        %v5797 = vshrl.u32 %v5796, 7
        %v5798 = vsub.s32 6, %v5797
        %v5799 = vrot.slane %v5515, %v5798
        %v5800 = vlaneseq
        %v5801 = vshrl.u32 %v5800, 7
        %v5802 = vsub.s32 7, %v5801
        %v5803 = vrot.slane %v5515, %v5802
        %v5804 = vlaneseq
        %v5805 = vshrl.u32 %v5804, 7
        %v5806 = vsub.s32 0, %v5805
        %v5807 = vrot.slane %v5519, %v5806
        %v5808 = vlaneseq
        %v5809 = vshrl.u32 %v5808, 7
        %v5810 = vsub.s32 1, %v5809
        %v5811 = vrot.slane %v5519, %v5810
        %v5812 = vlaneseq
        %v5813 = vshrl.u32 %v5812, 7
        %v5814 = vsub.s32 2, %v5813
        %v5815 = vrot.slane %v5519, %v5814
        %v5816 = vlaneseq
        %v5817 = vshrl.u32 %v5816, 7
        %v5818 = vsub.s32 3, %v5817
        %v5819 = vrot.slane %v5519, %v5818
        %v5820 = vlaneseq
        %v5821 = vshrl.u32 %v5820, 7
        %v5822 = vsub.s32 4, %v5821
        %v5823 = vrot.slane %v5519, %v5822
        %v5824 = vlaneseq
        %v5825 = vshrl.u32 %v5824, 7
        %v5826 = vsub.s32 5, %v5825
        %v5827 = vrot.slane %v5519, %v5826
        %v5828 = vlaneseq
        %v5829 = vshrl.u32 %v5828, 7
        %v5830 = vsub.s32 6, %v5829
        %v5831 = vrot.slane %v5519, %v5830
        %v5832 = vlaneseq
        %v5833 = vshrl.u32 %v5832, 7
        %v5834 = vsub.s32 7, %v5833
        %v5835 = vrot.slane %v5519, %v5834
        %v5836 = vlaneseq
        %v5837 = vshrl.u32 %v5836, 7
        %v5838 = vsub.s32 0, %v5837
        %v5839 = vrot.slane %v5523, %v5838
        %v5840 = vlaneseq
        %v5841 = vshrl.u32 %v5840, 7
        %v5842 = vsub.s32 1, %v5841
        %v5843 = vrot.slane %v5523, %v5842
        %v5844 = vlaneseq
        %v5845 = vshrl.u32 %v5844, 7
        %v5846 = vsub.s32 2, %v5845
        %v5847 = vrot.slane %v5523, %v5846
        %v5848 = vlaneseq
        %v5849 = vshrl.u32 %v5848, 7
        %v5850 = vsub.s32 3, %v5849
        %v5851 = vrot.slane %v5523, %v5850
        %v5852 = vlaneseq
        %v5853 = vshrl.u32 %v5852, 7
        %v5854 = vsub.s32 4, %v5853
        %v5855 = vrot.slane %v5523, %v5854
        %v5856 = vlaneseq
        %v5857 = vshrl.u32 %v5856, 7
        %v5858 = vsub.s32 5, %v5857
        %v5859 = vrot.slane %v5523, %v5858
        %v5860 = vlaneseq
        %v5861 = vshrl.u32 %v5860, 7
        %v5862 = vsub.s32 6, %v5861
        %v5863 = vrot.slane %v5523, %v5862
        %v5864 = vlaneseq
        %v5865 = vshrl.u32 %v5864, 7
        %v5866 = vsub.s32 7, %v5865
        %v5867 = vrot.slane %v5523, %v5866
        %v5868 = vlaneseq
        %v5869 = vshrl.u32 %v5868, 7
        %v5870 = vsub.s32 0, %v5869
        %v5871 = vrot.slane %v5527, %v5870
        %v5872 = vlaneseq
        %v5873 = vshrl.u32 %v5872, 7
        %v5874 = vsub.s32 1, %v5873
        %v5875 = vrot.slane %v5527, %v5874
        %v5876 = vlaneseq
        %v5877 = vshrl.u32 %v5876, 7
        %v5878 = vsub.s32 2, %v5877
        %v5879 = vrot.slane %v5527, %v5878
        %v5880 = vlaneseq
        %v5881 = vshrl.u32 %v5880, 7
        %v5882 = vsub.s32 3, %v5881
        %v5883 = vrot.slane %v5527, %v5882
        %v5884 = vlaneseq
        %v5885 = vshrl.u32 %v5884, 7
        %v5886 = vsub.s32 4, %v5885
        %v5887 = vrot.slane %v5527, %v5886
        %v5888 = vlaneseq
        %v5889 = vshrl.u32 %v5888, 7
        %v5890 = vsub.s32 5, %v5889
        %v5891 = vrot.slane %v5527, %v5890
        %v5892 = vlaneseq
        %v5893 = vshrl.u32 %v5892, 7
        %v5894 = vsub.s32 6, %v5893
        %v5895 = vrot.slane %v5527, %v5894
        %v5896 = vlaneseq
        %v5897 = vshrl.u32 %v5896, 7
        %v5898 = vsub.s32 7, %v5897
        %v5899 = vrot.slane %v5527, %v5898
        %v5900 = vlaneseq
        %v5901 = vshrl.u32 %v5900, 7
        %v5902 = vsub.s32 0, %v5901
        %v5903 = vrot.slane %v5531, %v5902
        %v5904 = vlaneseq
        %v5905 = vshrl.u32 %v5904, 7
        %v5906 = vsub.s32 1, %v5905
        %v5907 = vrot.slane %v5531, %v5906
        %v5908 = vlaneseq
        %v5909 = vshrl.u32 %v5908, 7
        %v5910 = vsub.s32 2, %v5909
        %v5911 = vrot.slane %v5531, %v5910
        %v5912 = vlaneseq
        %v5913 = vshrl.u32 %v5912, 7
        %v5914 = vsub.s32 3, %v5913
        %v5915 = vrot.slane %v5531, %v5914
        %v5916 = vlaneseq
        %v5917 = vshrl.u32 %v5916, 7
        %v5918 = vsub.s32 4, %v5917
        %v5919 = vrot.slane %v5531, %v5918
        %v5920 = vlaneseq
        %v5921 = vshrl.u32 %v5920, 7
        %v5922 = vsub.s32 5, %v5921
        %v5923 = vrot.slane %v5531, %v5922
        %v5924 = vlaneseq
        %v5925 = vshrl.u32 %v5924, 7
        %v5926 = vsub.s32 6, %v5925
        %v5927 = vrot.slane %v5531, %v5926
        %v5928 = vlaneseq
        %v5929 = vshrl.u32 %v5928, 7
        %v5930 = vsub.s32 7, %v5929
        %v5931 = vrot.slane %v5531, %v5930
        %v5932 = vlaneseq
        %v5933 = vshrl.u32 %v5932, 7
        %v5934 = vsub.s32 0, %v5933
        %v5935 = vrot.slane %v5535, %v5934
        %v5936 = vlaneseq
        %v5937 = vshrl.u32 %v5936, 7
        %v5938 = vsub.s32 1, %v5937
        %v5939 = vrot.slane %v5535, %v5938
        %v5940 = vlaneseq
        %v5941 = vshrl.u32 %v5940, 7
        %v5942 = vsub.s32 2, %v5941
        %v5943 = vrot.slane %v5535, %v5942
        %v5944 = vlaneseq
        %v5945 = vshrl.u32 %v5944, 7
        %v5946 = vsub.s32 3, %v5945
        %v5947 = vrot.slane %v5535, %v5946
        %v5948 = vlaneseq
        %v5949 = vshrl.u32 %v5948, 7
        %v5950 = vsub.s32 4, %v5949
        %v5951 = vrot.slane %v5535, %v5950
        %v5952 = vlaneseq
        %v5953 = vshrl.u32 %v5952, 7
        %v5954 = vsub.s32 5, %v5953
        %v5955 = vrot.slane %v5535, %v5954
        %v5956 = vlaneseq
        %v5957 = vshrl.u32 %v5956, 7
        %v5958 = vsub.s32 6, %v5957
        %v5959 = vrot.slane %v5535, %v5958
        %v5960 = vlaneseq
        %v5961 = vshrl.u32 %v5960, 7
        %v5962 = vsub.s32 7, %v5961
        %v5963 = vrot.slane %v5535, %v5962
        %v5964 = vlaneseq
        %v5965 = vshrl.u32 %v5964, 7
        %v5966 = vsub.s32 0, %v5965
        %v5967 = vrot.slane %v5539, %v5966
        %v5968 = vlaneseq
        %v5969 = vshrl.u32 %v5968, 7
        %v5970 = vsub.s32 1, %v5969
        %v5971 = vrot.slane %v5539, %v5970
        %v5972 = vlaneseq
        %v5973 = vshrl.u32 %v5972, 7
        %v5974 = vsub.s32 2, %v5973
        %v5975 = vrot.slane %v5539, %v5974
        %v5976 = vlaneseq
        %v5977 = vshrl.u32 %v5976, 7
        %v5978 = vsub.s32 3, %v5977
        %v5979 = vrot.slane %v5539, %v5978
        %v5980 = vlaneseq
        %v5981 = vshrl.u32 %v5980, 7
        %v5982 = vsub.s32 4, %v5981
        %v5983 = vrot.slane %v5539, %v5982
        %v5984 = vlaneseq
        %v5985 = vshrl.u32 %v5984, 7
        %v5986 = vsub.s32 5, %v5985
        %v5987 = vrot.slane %v5539, %v5986
        %v5988 = vlaneseq
        %v5989 = vshrl.u32 %v5988, 7
        %v5990 = vsub.s32 6, %v5989
        %v5991 = vrot.slane %v5539, %v5990
        %v5992 = vlaneseq
        %v5993 = vshrl.u32 %v5992, 7
        %v5994 = vsub.s32 7, %v5993
        %v5995 = vrot.slane %v5539, %v5994
        %v5996 = vlaneseq
        %v5997 = vshrl.u32 %v5996, 7
        %v5998 = vsub.s32 0, %v5997
        %v5999 = vrot.slane %v5543, %v5998
        %v6000 = vlaneseq
        %v6001 = vshrl.u32 %v6000, 7
        %v6002 = vsub.s32 1, %v6001
        %v6003 = vrot.slane %v5543, %v6002
        %v6004 = vlaneseq
        %v6005 = vshrl.u32 %v6004, 7
        %v6006 = vsub.s32 2, %v6005
        %v6007 = vrot.slane %v5543, %v6006
        %v6008 = vlaneseq
        %v6009 = vshrl.u32 %v6008, 7
        %v6010 = vsub.s32 3, %v6009
        %v6011 = vrot.slane %v5543, %v6010
        %v6012 = vlaneseq
        %v6013 = vshrl.u32 %v6012, 7
        %v6014 = vsub.s32 4, %v6013
        %v6015 = vrot.slane %v5543, %v6014
        %v6016 = vlaneseq
        %v6017 = vshrl.u32 %v6016, 7
        %v6018 = vsub.s32 5, %v6017
        %v6019 = vrot.slane %v5543, %v6018
        %v6020 = vlaneseq
        %v6021 = vshrl.u32 %v6020, 7
        %v6022 = vsub.s32 6, %v6021
        %v6023 = vrot.slane %v5543, %v6022
        %v6024 = vlaneseq
        %v6025 = vshrl.u32 %v6024, 7
        %v6026 = vsub.s32 7, %v6025
        %v6027 = vrot.slane %v5543, %v6026
        %v6028 = vlaneseq
        %v6029 = vshrl.u32 %v6028, 7
        %v6030 = vsub.s32 0, %v6029
        %v6031 = vrot.slane %v5547, %v6030
        %v6032 = vlaneseq
        %v6033 = vshrl.u32 %v6032, 7
        %v6034 = vsub.s32 1, %v6033
        %v6035 = vrot.slane %v5547, %v6034
        %v6036 = vlaneseq
        %v6037 = vshrl.u32 %v6036, 7
        %v6038 = vsub.s32 2, %v6037
        %v6039 = vrot.slane %v5547, %v6038
        %v6040 = vlaneseq
        %v6041 = vshrl.u32 %v6040, 7
        %v6042 = vsub.s32 3, %v6041
        %v6043 = vrot.slane %v5547, %v6042
        %v6044 = vlaneseq
        %v6045 = vshrl.u32 %v6044, 7
        %v6046 = vsub.s32 4, %v6045
        %v6047 = vrot.slane %v5547, %v6046
        %v6048 = vlaneseq
        %v6049 = vshrl.u32 %v6048, 7
        %v6050 = vsub.s32 5, %v6049
        %v6051 = vrot.slane %v5547, %v6050
        %v6052 = vlaneseq
        %v6053 = vshrl.u32 %v6052, 7
        %v6054 = vsub.s32 6, %v6053
        %v6055 = vrot.slane %v5547, %v6054
        %v6056 = vlaneseq
        %v6057 = vshrl.u32 %v6056, 7
        %v6058 = vsub.s32 7, %v6057
        %v6059 = vrot.slane %v5547, %v6058
        %v6060 = vcombine.low %v4760, %v4764
        %v6062 = vunpack.c.l.s4 1983009808
        %v6063 = vunpack.c.0.s8 %v6062
        %v6064 = vlaneseq
        %v6065 = vshrl.u32 %v6064, 7
        %v6066 = vsub.s32 %v6063, %v6065
        %v6067 = vrot.slane %v6060, %v6066
        %v6068 = vcombine.low %v4762, %v4766
        %v6070 = vunpack.c.l.s4 1983009808
        %v6071 = vunpack.c.0.s8 %v6070
        %v6072 = vlaneseq
        %v6073 = vshrl.u32 %v6072, 7
        %v6074 = vsub.s32 %v6071, %v6073
        %v6075 = vrot.slane %v6068, %v6074
        %v6076 = vcombine.low %v4768, %v4772
        %v6078 = vunpack.c.l.s4 1983009808
        %v6079 = vunpack.c.0.s8 %v6078
        %v6080 = vlaneseq
        %v6081 = vshrl.u32 %v6080, 7
        %v6082 = vsub.s32 %v6079, %v6081
        %v6083 = vrot.slane %v6076, %v6082
        %v6084 = vcombine.low %v4770, %v4774
        %v6086 = vunpack.c.l.s4 1983009808
        %v6087 = vunpack.c.0.s8 %v6086
        %v6088 = vlaneseq
        %v6089 = vshrl.u32 %v6088, 7
        %v6090 = vsub.s32 %v6087, %v6089
        %v6091 = vrot.slane %v6084, %v6090
        %v6092 = vcombine.low %v6067, %v6075
        %v6094 = vunpack.c.l.s4 1934713408
        %v6095 = vunpack.c.0.s8 %v6094
        %v6096 = vlaneseq
        %v6097 = vshrl.u32 %v6096, 7
        %v6098 = vsub.s32 %v6095, %v6097
        %v6099 = vrot.slane %v6092, %v6098
        %v6100 = vcombine.low %v6083, %v6091
        %v6102 = vunpack.c.l.s4 1934713408
        %v6103 = vunpack.c.0.s8 %v6102
        %v6104 = vlaneseq
        %v6105 = vshrl.u32 %v6104, 7
        %v6106 = vsub.s32 %v6103, %v6105
        %v6107 = vrot.slane %v6100, %v6106
        %v6108 = vcombine.low %v6099, %v6107
        %v6109 = vcombine.low %v4761, %v4765
        %v6111 = vunpack.c.l.s4 1983009808
        %v6112 = vunpack.c.0.s8 %v6111
        %v6113 = vlaneseq
        %v6114 = vshrl.u32 %v6113, 7
        %v6115 = vsub.s32 %v6112, %v6114
        %v6116 = vrot.slane %v6109, %v6115
        %v6117 = vcombine.low %v4763, %v4767
        %v6119 = vunpack.c.l.s4 1983009808
        %v6120 = vunpack.c.0.s8 %v6119
        %v6121 = vlaneseq
        %v6122 = vshrl.u32 %v6121, 7
        %v6123 = vsub.s32 %v6120, %v6122
        %v6124 = vrot.slane %v6117, %v6123
        %v6125 = vcombine.low %v4769, %v4773
        %v6127 = vunpack.c.l.s4 1983009808
        %v6128 = vunpack.c.0.s8 %v6127
        %v6129 = vlaneseq
        %v6130 = vshrl.u32 %v6129, 7
        %v6131 = vsub.s32 %v6128, %v6130
        %v6132 = vrot.slane %v6125, %v6131
        %v6133 = vcombine.low %v4771, %v4775
        %v6135 = vunpack.c.l.s4 1983009808
        %v6136 = vunpack.c.0.s8 %v6135
        %v6137 = vlaneseq
        %v6138 = vshrl.u32 %v6137, 7
        %v6139 = vsub.s32 %v6136, %v6138
        %v6140 = vrot.slane %v6133, %v6139
        %v6141 = vcombine.low %v6116, %v6124
        %v6143 = vunpack.c.l.s4 1934713408
        %v6144 = vunpack.c.0.s8 %v6143
        %v6145 = vlaneseq
        %v6146 = vshrl.u32 %v6145, 7
        %v6147 = vsub.s32 %v6144, %v6146
        %v6148 = vrot.slane %v6141, %v6147
        %v6149 = vcombine.low %v6132, %v6140
        %v6151 = vunpack.c.l.s4 1934713408
        %v6152 = vunpack.c.0.s8 %v6151
        %v6153 = vlaneseq
        %v6154 = vshrl.u32 %v6153, 7
        %v6155 = vsub.s32 %v6152, %v6154
        %v6156 = vrot.slane %v6149, %v6155
        %v6157 = vcombine.low %v6148, %v6156
        %v6158 = vcombine.low %v4776, %v4780
        %v6160 = vunpack.c.l.s4 1983009808
        %v6161 = vunpack.c.0.s8 %v6160
        %v6162 = vlaneseq
        %v6163 = vshrl.u32 %v6162, 7
        %v6164 = vsub.s32 %v6161, %v6163
        %v6165 = vrot.slane %v6158, %v6164
        %v6166 = vcombine.low %v4778, %v4782
        %v6168 = vunpack.c.l.s4 1983009808
        %v6169 = vunpack.c.0.s8 %v6168
        %v6170 = vlaneseq
        %v6171 = vshrl.u32 %v6170, 7
        %v6172 = vsub.s32 %v6169, %v6171
        %v6173 = vrot.slane %v6166, %v6172
        %v6174 = vcombine.low %v4784, %v4788
        %v6176 = vunpack.c.l.s4 1983009808
        %v6177 = vunpack.c.0.s8 %v6176
        %v6178 = vlaneseq
        %v6179 = vshrl.u32 %v6178, 7
        %v6180 = vsub.s32 %v6177, %v6179
        %v6181 = vrot.slane %v6174, %v6180
        %v6182 = vcombine.low %v4786, %v4790
        %v6184 = vunpack.c.l.s4 1983009808
        %v6185 = vunpack.c.0.s8 %v6184
        %v6186 = vlaneseq
        %v6187 = vshrl.u32 %v6186, 7
        %v6188 = vsub.s32 %v6185, %v6187
        %v6189 = vrot.slane %v6182, %v6188
        %v6190 = vcombine.low %v6165, %v6173
        %v6192 = vunpack.c.l.s4 1934713408
        %v6193 = vunpack.c.0.s8 %v6192
        %v6194 = vlaneseq
        %v6195 = vshrl.u32 %v6194, 7
        %v6196 = vsub.s32 %v6193, %v6195
        %v6197 = vrot.slane %v6190, %v6196
        %v6198 = vcombine.low %v6181, %v6189
        %v6200 = vunpack.c.l.s4 1934713408
        %v6201 = vunpack.c.0.s8 %v6200
        %v6202 = vlaneseq
        %v6203 = vshrl.u32 %v6202, 7
        %v6204 = vsub.s32 %v6201, %v6203
        %v6205 = vrot.slane %v6198, %v6204
        %v6206 = vcombine.low %v6197, %v6205
        %v6207 = vcombine.low %v4777, %v4781
        %v6209 = vunpack.c.l.s4 1983009808
        %v6210 = vunpack.c.0.s8 %v6209
        %v6211 = vlaneseq
        %v6212 = vshrl.u32 %v6211, 7
        %v6213 = vsub.s32 %v6210, %v6212
        %v6214 = vrot.slane %v6207, %v6213
        %v6215 = vcombine.low %v4779, %v4783
        %v6217 = vunpack.c.l.s4 1983009808
        %v6218 = vunpack.c.0.s8 %v6217
        %v6219 = vlaneseq
        %v6220 = vshrl.u32 %v6219, 7
        %v6221 = vsub.s32 %v6218, %v6220
        %v6222 = vrot.slane %v6215, %v6221
        %v6223 = vcombine.low %v4785, %v4789
        %v6225 = vunpack.c.l.s4 1983009808
        %v6226 = vunpack.c.0.s8 %v6225
        %v6227 = vlaneseq
        %v6228 = vshrl.u32 %v6227, 7
        %v6229 = vsub.s32 %v6226, %v6228
        %v6230 = vrot.slane %v6223, %v6229
        %v6231 = vcombine.low %v4787, %v4791
        %v6233 = vunpack.c.l.s4 1983009808
        %v6234 = vunpack.c.0.s8 %v6233
        %v6235 = vlaneseq
        %v6236 = vshrl.u32 %v6235, 7
        %v6237 = vsub.s32 %v6234, %v6236
        %v6238 = vrot.slane %v6231, %v6237
        %v6239 = vcombine.low %v6214, %v6222
        %v6241 = vunpack.c.l.s4 1934713408
        %v6242 = vunpack.c.0.s8 %v6241
        %v6243 = vlaneseq
        %v6244 = vshrl.u32 %v6243, 7
        %v6245 = vsub.s32 %v6242, %v6244
        %v6246 = vrot.slane %v6239, %v6245
        %v6247 = vcombine.low %v6230, %v6238
        %v6249 = vunpack.c.l.s4 1934713408
        %v6250 = vunpack.c.0.s8 %v6249
        %v6251 = vlaneseq
        %v6252 = vshrl.u32 %v6251, 7
        %v6253 = vsub.s32 %v6250, %v6252
        %v6254 = vrot.slane %v6247, %v6253
        %v6255 = vcombine.low %v6246, %v6254
        %v6256 = vcombine.low %v4792, %v4796
        %v6258 = vunpack.c.l.s4 1983009808
        %v6259 = vunpack.c.0.s8 %v6258
        %v6260 = vlaneseq
        %v6261 = vshrl.u32 %v6260, 7
        %v6262 = vsub.s32 %v6259, %v6261
        %v6263 = vrot.slane %v6256, %v6262
        %v6264 = vcombine.low %v4794, %v4798
        %v6266 = vunpack.c.l.s4 1983009808
        %v6267 = vunpack.c.0.s8 %v6266
        %v6268 = vlaneseq
        %v6269 = vshrl.u32 %v6268, 7
        %v6270 = vsub.s32 %v6267, %v6269
        %v6271 = vrot.slane %v6264, %v6270
        %v6272 = vcombine.low %v4800, %v4804
        %v6274 = vunpack.c.l.s4 1983009808
        %v6275 = vunpack.c.0.s8 %v6274
        %v6276 = vlaneseq
        %v6277 = vshrl.u32 %v6276, 7
        %v6278 = vsub.s32 %v6275, %v6277
        %v6279 = vrot.slane %v6272, %v6278
        %v6280 = vcombine.low %v4802, %v4806
        %v6282 = vunpack.c.l.s4 1983009808
        %v6283 = vunpack.c.0.s8 %v6282
        %v6284 = vlaneseq
        %v6285 = vshrl.u32 %v6284, 7
        %v6286 = vsub.s32 %v6283, %v6285
        %v6287 = vrot.slane %v6280, %v6286
        %v6288 = vcombine.low %v6263, %v6271
        %v6290 = vunpack.c.l.s4 1934713408
        %v6291 = vunpack.c.0.s8 %v6290
        %v6292 = vlaneseq
        %v6293 = vshrl.u32 %v6292, 7
        %v6294 = vsub.s32 %v6291, %v6293
        %v6295 = vrot.slane %v6288, %v6294
        %v6296 = vcombine.low %v6279, %v6287
        %v6298 = vunpack.c.l.s4 1934713408
        %v6299 = vunpack.c.0.s8 %v6298
        %v6300 = vlaneseq
        %v6301 = vshrl.u32 %v6300, 7
        %v6302 = vsub.s32 %v6299, %v6301
        %v6303 = vrot.slane %v6296, %v6302
        %v6304 = vcombine.low %v6295, %v6303
        %v6305 = vcombine.low %v4793, %v4797
        %v6307 = vunpack.c.l.s4 1983009808
        %v6308 = vunpack.c.0.s8 %v6307
        %v6309 = vlaneseq
        %v6310 = vshrl.u32 %v6309, 7
        %v6311 = vsub.s32 %v6308, %v6310
        %v6312 = vrot.slane %v6305, %v6311
        %v6313 = vcombine.low %v4795, %v4799
        %v6315 = vunpack.c.l.s4 1983009808
        %v6316 = vunpack.c.0.s8 %v6315
        %v6317 = vlaneseq
        %v6318 = vshrl.u32 %v6317, 7
        %v6319 = vsub.s32 %v6316, %v6318
        %v6320 = vrot.slane %v6313, %v6319
        %v6321 = vcombine.low %v4801, %v4805
        %v6323 = vunpack.c.l.s4 1983009808
        %v6324 = vunpack.c.0.s8 %v6323
        %v6325 = vlaneseq
        %v6326 = vshrl.u32 %v6325, 7
        %v6327 = vsub.s32 %v6324, %v6326
        %v6328 = vrot.slane %v6321, %v6327
        %v6329 = vcombine.low %v4803, %v4807
        %v6331 = vunpack.c.l.s4 1983009808
        %v6332 = vunpack.c.0.s8 %v6331
        %v6333 = vlaneseq
        %v6334 = vshrl.u32 %v6333, 7
        %v6335 = vsub.s32 %v6332, %v6334
        %v6336 = vrot.slane %v6329, %v6335
        %v6337 = vcombine.low %v6312, %v6320
        %v6339 = vunpack.c.l.s4 1934713408
        %v6340 = vunpack.c.0.s8 %v6339
        %v6341 = vlaneseq
        %v6342 = vshrl.u32 %v6341, 7
        %v6343 = vsub.s32 %v6340, %v6342
        %v6344 = vrot.slane %v6337, %v6343
        %v6345 = vcombine.low %v6328, %v6336
        %v6347 = vunpack.c.l.s4 1934713408
        %v6348 = vunpack.c.0.s8 %v6347
        %v6349 = vlaneseq
        %v6350 = vshrl.u32 %v6349, 7
        %v6351 = vsub.s32 %v6348, %v6350
        %v6352 = vrot.slane %v6345, %v6351
        %v6353 = vcombine.low %v6344, %v6352
        %v6354 = vcombine.low %v4808, %v4812
        %v6356 = vunpack.c.l.s4 1983009808
        %v6357 = vunpack.c.0.s8 %v6356
        %v6358 = vlaneseq
        %v6359 = vshrl.u32 %v6358, 7
        %v6360 = vsub.s32 %v6357, %v6359
        %v6361 = vrot.slane %v6354, %v6360
        %v6362 = vcombine.low %v4810, %v4814
        %v6364 = vunpack.c.l.s4 1983009808
        %v6365 = vunpack.c.0.s8 %v6364
        %v6366 = vlaneseq
        %v6367 = vshrl.u32 %v6366, 7
        %v6368 = vsub.s32 %v6365, %v6367
        %v6369 = vrot.slane %v6362, %v6368
        %v6370 = vcombine.low %v4816, %v4820
        %v6372 = vunpack.c.l.s4 1983009808
        %v6373 = vunpack.c.0.s8 %v6372
        %v6374 = vlaneseq
        %v6375 = vshrl.u32 %v6374, 7
        %v6376 = vsub.s32 %v6373, %v6375
        %v6377 = vrot.slane %v6370, %v6376
        %v6378 = vcombine.low %v4818, %v4822
        %v6380 = vunpack.c.l.s4 1983009808
        %v6381 = vunpack.c.0.s8 %v6380
        %v6382 = vlaneseq
        %v6383 = vshrl.u32 %v6382, 7
        %v6384 = vsub.s32 %v6381, %v6383
        %v6385 = vrot.slane %v6378, %v6384
        %v6386 = vcombine.low %v6361, %v6369
        %v6388 = vunpack.c.l.s4 1934713408
        %v6389 = vunpack.c.0.s8 %v6388
        %v6390 = vlaneseq
        %v6391 = vshrl.u32 %v6390, 7
        %v6392 = vsub.s32 %v6389, %v6391
        %v6393 = vrot.slane %v6386, %v6392
        %v6394 = vcombine.low %v6377, %v6385
        %v6396 = vunpack.c.l.s4 1934713408
        %v6397 = vunpack.c.0.s8 %v6396
        %v6398 = vlaneseq
        %v6399 = vshrl.u32 %v6398, 7
        %v6400 = vsub.s32 %v6397, %v6399
        %v6401 = vrot.slane %v6394, %v6400
        %v6402 = vcombine.low %v6393, %v6401
        %v6403 = vcombine.low %v4809, %v4813
        %v6405 = vunpack.c.l.s4 1983009808
        %v6406 = vunpack.c.0.s8 %v6405
        %v6407 = vlaneseq
        %v6408 = vshrl.u32 %v6407, 7
        %v6409 = vsub.s32 %v6406, %v6408
        %v6410 = vrot.slane %v6403, %v6409
        %v6411 = vcombine.low %v4811, %v4815
        %v6413 = vunpack.c.l.s4 1983009808
        %v6414 = vunpack.c.0.s8 %v6413
        %v6415 = vlaneseq
        %v6416 = vshrl.u32 %v6415, 7
        %v6417 = vsub.s32 %v6414, %v6416
        %v6418 = vrot.slane %v6411, %v6417
        %v6419 = vcombine.low %v4817, %v4821
        %v6421 = vunpack.c.l.s4 1983009808
        %v6422 = vunpack.c.0.s8 %v6421
        %v6423 = vlaneseq
        %v6424 = vshrl.u32 %v6423, 7
        %v6425 = vsub.s32 %v6422, %v6424
        %v6426 = vrot.slane %v6419, %v6425
        %v6427 = vcombine.low %v4819, %v4823
        %v6429 = vunpack.c.l.s4 1983009808
        %v6430 = vunpack.c.0.s8 %v6429
        %v6431 = vlaneseq
        %v6432 = vshrl.u32 %v6431, 7
        %v6433 = vsub.s32 %v6430, %v6432
        %v6434 = vrot.slane %v6427, %v6433
        %v6435 = vcombine.low %v6410, %v6418
        %v6437 = vunpack.c.l.s4 1934713408
        %v6438 = vunpack.c.0.s8 %v6437
        %v6439 = vlaneseq
        %v6440 = vshrl.u32 %v6439, 7
        %v6441 = vsub.s32 %v6438, %v6440
        %v6442 = vrot.slane %v6435, %v6441
        %v6443 = vcombine.low %v6426, %v6434
        %v6445 = vunpack.c.l.s4 1934713408
        %v6446 = vunpack.c.0.s8 %v6445
        %v6447 = vlaneseq
        %v6448 = vshrl.u32 %v6447, 7
        %v6449 = vsub.s32 %v6446, %v6448
        %v6450 = vrot.slane %v6443, %v6449
        %v6451 = vcombine.low %v6442, %v6450
        %v6452 = vcombine.low %v4889, %v4897
        %v6454 = vunpack.c.l.s4 1983009808
        %v6455 = vunpack.c.0.s8 %v6454
        %v6456 = vlaneseq
        %v6457 = vshrl.u32 %v6456, 7
        %v6458 = vsub.s32 %v6455, %v6457
        %v6459 = vrot.slane %v6452, %v6458
        %v6460 = vcombine.low %v4893, %v4901
        %v6462 = vunpack.c.l.s4 1983009808
        %v6463 = vunpack.c.0.s8 %v6462
        %v6464 = vlaneseq
        %v6465 = vshrl.u32 %v6464, 7
        %v6466 = vsub.s32 %v6463, %v6465
        %v6467 = vrot.slane %v6460, %v6466
        %v6468 = vcombine.low %v4905, %v4913
        %v6470 = vunpack.c.l.s4 1983009808
        %v6471 = vunpack.c.0.s8 %v6470
        %v6472 = vlaneseq
        %v6473 = vshrl.u32 %v6472, 7
        %v6474 = vsub.s32 %v6471, %v6473
        %v6475 = vrot.slane %v6468, %v6474
        %v6476 = vcombine.low %v4909, %v4917
        %v6478 = vunpack.c.l.s4 1983009808
        %v6479 = vunpack.c.0.s8 %v6478
        %v6480 = vlaneseq
        %v6481 = vshrl.u32 %v6480, 7
        %v6482 = vsub.s32 %v6479, %v6481
        %v6483 = vrot.slane %v6476, %v6482
        %v6484 = vcombine.low %v6459, %v6467
        %v6486 = vunpack.c.l.s4 1934713408
        %v6487 = vunpack.c.0.s8 %v6486
        %v6488 = vlaneseq
        %v6489 = vshrl.u32 %v6488, 7
        %v6490 = vsub.s32 %v6487, %v6489
        %v6491 = vrot.slane %v6484, %v6490
        %v6492 = vcombine.low %v6475, %v6483
        %v6494 = vunpack.c.l.s4 1934713408
        %v6495 = vunpack.c.0.s8 %v6494
        %v6496 = vlaneseq
        %v6497 = vshrl.u32 %v6496, 7
        %v6498 = vsub.s32 %v6495, %v6497
        %v6499 = vrot.slane %v6492, %v6498
        %v6500 = vcombine.low %v6491, %v6499
        %v6501 = vcombine.low %v4891, %v4899
        %v6503 = vunpack.c.l.s4 1983009808
        %v6504 = vunpack.c.0.s8 %v6503
        %v6505 = vlaneseq
        %v6506 = vshrl.u32 %v6505, 7
        %v6507 = vsub.s32 %v6504, %v6506
        %v6508 = vrot.slane %v6501, %v6507
        %v6509 = vcombine.low %v4895, %v4903
        %v6511 = vunpack.c.l.s4 1983009808
        %v6512 = vunpack.c.0.s8 %v6511
        %v6513 = vlaneseq
        %v6514 = vshrl.u32 %v6513, 7
        %v6515 = vsub.s32 %v6512, %v6514
        %v6516 = vrot.slane %v6509, %v6515
        %v6517 = vcombine.low %v4907, %v4915
        %v6519 = vunpack.c.l.s4 1983009808
        %v6520 = vunpack.c.0.s8 %v6519
        %v6521 = vlaneseq
        %v6522 = vshrl.u32 %v6521, 7
        %v6523 = vsub.s32 %v6520, %v6522
        %v6524 = vrot.slane %v6517, %v6523
        %v6525 = vcombine.low %v4911, %v4919
        %v6527 = vunpack.c.l.s4 1983009808
        %v6528 = vunpack.c.0.s8 %v6527
        %v6529 = vlaneseq
        %v6530 = vshrl.u32 %v6529, 7
        %v6531 = vsub.s32 %v6528, %v6530
        %v6532 = vrot.slane %v6525, %v6531
        %v6533 = vcombine.low %v6508, %v6516
        %v6535 = vunpack.c.l.s4 1934713408
        %v6536 = vunpack.c.0.s8 %v6535
        %v6537 = vlaneseq
        %v6538 = vshrl.u32 %v6537, 7
        %v6539 = vsub.s32 %v6536, %v6538
        %v6540 = vrot.slane %v6533, %v6539
        %v6541 = vcombine.low %v6524, %v6532
        %v6543 = vunpack.c.l.s4 1934713408
        %v6544 = vunpack.c.0.s8 %v6543
        %v6545 = vlaneseq
        %v6546 = vshrl.u32 %v6545, 7
        %v6547 = vsub.s32 %v6544, %v6546
        %v6548 = vrot.slane %v6541, %v6547
        %v6549 = vcombine.low %v6540, %v6548
        %v6550 = vcombine.low %v4921, %v4929
        %v6552 = vunpack.c.l.s4 1983009808
        %v6553 = vunpack.c.0.s8 %v6552
        %v6554 = vlaneseq
        %v6555 = vshrl.u32 %v6554, 7
        %v6556 = vsub.s32 %v6553, %v6555
        %v6557 = vrot.slane %v6550, %v6556
        %v6558 = vcombine.low %v4925, %v4933
        %v6560 = vunpack.c.l.s4 1983009808
        %v6561 = vunpack.c.0.s8 %v6560
        %v6562 = vlaneseq
        %v6563 = vshrl.u32 %v6562, 7
        %v6564 = vsub.s32 %v6561, %v6563
        %v6565 = vrot.slane %v6558, %v6564
        %v6566 = vcombine.low %v4937, %v4945
        %v6568 = vunpack.c.l.s4 1983009808
        %v6569 = vunpack.c.0.s8 %v6568
        %v6570 = vlaneseq
        %v6571 = vshrl.u32 %v6570, 7
        %v6572 = vsub.s32 %v6569, %v6571
        %v6573 = vrot.slane %v6566, %v6572
        %v6574 = vcombine.low %v4941, %v4949
        %v6576 = vunpack.c.l.s4 1983009808
        %v6577 = vunpack.c.0.s8 %v6576
        %v6578 = vlaneseq
        %v6579 = vshrl.u32 %v6578, 7
        %v6580 = vsub.s32 %v6577, %v6579
        %v6581 = vrot.slane %v6574, %v6580
        %v6582 = vcombine.low %v6557, %v6565
        %v6584 = vunpack.c.l.s4 1934713408
        %v6585 = vunpack.c.0.s8 %v6584
        %v6586 = vlaneseq
        %v6587 = vshrl.u32 %v6586, 7
        %v6588 = vsub.s32 %v6585, %v6587
        %v6589 = vrot.slane %v6582, %v6588
        %v6590 = vcombine.low %v6573, %v6581
        %v6592 = vunpack.c.l.s4 1934713408
        %v6593 = vunpack.c.0.s8 %v6592
        %v6594 = vlaneseq
        %v6595 = vshrl.u32 %v6594, 7
        %v6596 = vsub.s32 %v6593, %v6595
        %v6597 = vrot.slane %v6590, %v6596
        %v6598 = vcombine.low %v6589, %v6597
        %v6599 = vcombine.low %v4923, %v4931
        %v6601 = vunpack.c.l.s4 1983009808
        %v6602 = vunpack.c.0.s8 %v6601
        %v6603 = vlaneseq
        %v6604 = vshrl.u32 %v6603, 7
        %v6605 = vsub.s32 %v6602, %v6604
        %v6606 = vrot.slane %v6599, %v6605
        %v6607 = vcombine.low %v4927, %v4935
        %v6609 = vunpack.c.l.s4 1983009808
        %v6610 = vunpack.c.0.s8 %v6609
        %v6611 = vlaneseq
        %v6612 = vshrl.u32 %v6611, 7
        %v6613 = vsub.s32 %v6610, %v6612
        %v6614 = vrot.slane %v6607, %v6613
        %v6615 = vcombine.low %v4939, %v4947
        %v6617 = vunpack.c.l.s4 1983009808
        %v6618 = vunpack.c.0.s8 %v6617
        %v6619 = vlaneseq
        %v6620 = vshrl.u32 %v6619, 7
        %v6621 = vsub.s32 %v6618, %v6620
        %v6622 = vrot.slane %v6615, %v6621
        %v6623 = vcombine.low %v4943, %v4951
        %v6625 = vunpack.c.l.s4 1983009808
        %v6626 = vunpack.c.0.s8 %v6625
        %v6627 = vlaneseq
        %v6628 = vshrl.u32 %v6627, 7
        %v6629 = vsub.s32 %v6626, %v6628
        %v6630 = vrot.slane %v6623, %v6629
        %v6631 = vcombine.low %v6606, %v6614
        %v6633 = vunpack.c.l.s4 1934713408
        %v6634 = vunpack.c.0.s8 %v6633
        %v6635 = vlaneseq
        %v6636 = vshrl.u32 %v6635, 7
        %v6637 = vsub.s32 %v6634, %v6636
        %v6638 = vrot.slane %v6631, %v6637
        %v6639 = vcombine.low %v6622, %v6630
        %v6641 = vunpack.c.l.s4 1934713408
        %v6642 = vunpack.c.0.s8 %v6641
        %v6643 = vlaneseq
        %v6644 = vshrl.u32 %v6643, 7
        %v6645 = vsub.s32 %v6642, %v6644
        %v6646 = vrot.slane %v6639, %v6645
        %v6647 = vcombine.low %v6638, %v6646
        %v6648 = vcombine.low %v4953, %v4961
        %v6650 = vunpack.c.l.s4 1983009808
        %v6651 = vunpack.c.0.s8 %v6650
        %v6652 = vlaneseq
        %v6653 = vshrl.u32 %v6652, 7
        %v6654 = vsub.s32 %v6651, %v6653
        %v6655 = vrot.slane %v6648, %v6654
        %v6656 = vcombine.low %v4957, %v4965
        %v6658 = vunpack.c.l.s4 1983009808
        %v6659 = vunpack.c.0.s8 %v6658
        %v6660 = vlaneseq
        %v6661 = vshrl.u32 %v6660, 7
        %v6662 = vsub.s32 %v6659, %v6661
        %v6663 = vrot.slane %v6656, %v6662
        %v6664 = vcombine.low %v4969, %v4977
        %v6666 = vunpack.c.l.s4 1983009808
        %v6667 = vunpack.c.0.s8 %v6666
        %v6668 = vlaneseq
        %v6669 = vshrl.u32 %v6668, 7
        %v6670 = vsub.s32 %v6667, %v6669
        %v6671 = vrot.slane %v6664, %v6670
        %v6672 = vcombine.low %v4973, %v4981
        %v6674 = vunpack.c.l.s4 1983009808
        %v6675 = vunpack.c.0.s8 %v6674
        %v6676 = vlaneseq
        %v6677 = vshrl.u32 %v6676, 7
        %v6678 = vsub.s32 %v6675, %v6677
        %v6679 = vrot.slane %v6672, %v6678
        %v6680 = vcombine.low %v6655, %v6663
        %v6682 = vunpack.c.l.s4 1934713408
        %v6683 = vunpack.c.0.s8 %v6682
        %v6684 = vlaneseq
        %v6685 = vshrl.u32 %v6684, 7
        %v6686 = vsub.s32 %v6683, %v6685
        %v6687 = vrot.slane %v6680, %v6686
        %v6688 = vcombine.low %v6671, %v6679
        %v6690 = vunpack.c.l.s4 1934713408
        %v6691 = vunpack.c.0.s8 %v6690
        %v6692 = vlaneseq
        %v6693 = vshrl.u32 %v6692, 7
        %v6694 = vsub.s32 %v6691, %v6693
        %v6695 = vrot.slane %v6688, %v6694
        %v6696 = vcombine.low %v6687, %v6695
        %v6697 = vcombine.low %v4955, %v4963
        %v6699 = vunpack.c.l.s4 1983009808
        %v6700 = vunpack.c.0.s8 %v6699
        %v6701 = vlaneseq
        %v6702 = vshrl.u32 %v6701, 7
        %v6703 = vsub.s32 %v6700, %v6702
        %v6704 = vrot.slane %v6697, %v6703
        %v6705 = vcombine.low %v4959, %v4967
        %v6707 = vunpack.c.l.s4 1983009808
        %v6708 = vunpack.c.0.s8 %v6707
        %v6709 = vlaneseq
        %v6710 = vshrl.u32 %v6709, 7
        %v6711 = vsub.s32 %v6708, %v6710
        %v6712 = vrot.slane %v6705, %v6711
        %v6713 = vcombine.low %v4971, %v4979
        %v6715 = vunpack.c.l.s4 1983009808
        %v6716 = vunpack.c.0.s8 %v6715
        %v6717 = vlaneseq
        %v6718 = vshrl.u32 %v6717, 7
        %v6719 = vsub.s32 %v6716, %v6718
        %v6720 = vrot.slane %v6713, %v6719
        %v6721 = vcombine.low %v4975, %v4983
        %v6723 = vunpack.c.l.s4 1983009808
        %v6724 = vunpack.c.0.s8 %v6723
        %v6725 = vlaneseq
        %v6726 = vshrl.u32 %v6725, 7
        %v6727 = vsub.s32 %v6724, %v6726
        %v6728 = vrot.slane %v6721, %v6727
        %v6729 = vcombine.low %v6704, %v6712
        %v6731 = vunpack.c.l.s4 1934713408
        %v6732 = vunpack.c.0.s8 %v6731
        %v6733 = vlaneseq
        %v6734 = vshrl.u32 %v6733, 7
        %v6735 = vsub.s32 %v6732, %v6734
        %v6736 = vrot.slane %v6729, %v6735
        %v6737 = vcombine.low %v6720, %v6728
        %v6739 = vunpack.c.l.s4 1934713408
        %v6740 = vunpack.c.0.s8 %v6739
        %v6741 = vlaneseq
        %v6742 = vshrl.u32 %v6741, 7
        %v6743 = vsub.s32 %v6740, %v6742
        %v6744 = vrot.slane %v6737, %v6743
        %v6745 = vcombine.low %v6736, %v6744
        %v6746 = vcombine.low %v4985, %v4993
        %v6748 = vunpack.c.l.s4 1983009808
        %v6749 = vunpack.c.0.s8 %v6748
        %v6750 = vlaneseq
        %v6751 = vshrl.u32 %v6750, 7
        %v6752 = vsub.s32 %v6749, %v6751
        %v6753 = vrot.slane %v6746, %v6752
        %v6754 = vcombine.low %v4989, %v4997
        %v6756 = vunpack.c.l.s4 1983009808
        %v6757 = vunpack.c.0.s8 %v6756
        %v6758 = vlaneseq
        %v6759 = vshrl.u32 %v6758, 7
        %v6760 = vsub.s32 %v6757, %v6759
        %v6761 = vrot.slane %v6754, %v6760
        %v6762 = vcombine.low %v5001, %v5009
        %v6764 = vunpack.c.l.s4 1983009808
        %v6765 = vunpack.c.0.s8 %v6764
        %v6766 = vlaneseq
        %v6767 = vshrl.u32 %v6766, 7
        %v6768 = vsub.s32 %v6765, %v6767
        %v6769 = vrot.slane %v6762, %v6768
        %v6770 = vcombine.low %v5005, %v5013
        %v6772 = vunpack.c.l.s4 1983009808
        %v6773 = vunpack.c.0.s8 %v6772
        %v6774 = vlaneseq
        %v6775 = vshrl.u32 %v6774, 7
        %v6776 = vsub.s32 %v6773, %v6775
        %v6777 = vrot.slane %v6770, %v6776
        %v6778 = vcombine.low %v6753, %v6761
        %v6780 = vunpack.c.l.s4 1934713408
        %v6781 = vunpack.c.0.s8 %v6780
        %v6782 = vlaneseq
        %v6783 = vshrl.u32 %v6782, 7
        %v6784 = vsub.s32 %v6781, %v6783
        %v6785 = vrot.slane %v6778, %v6784
        %v6786 = vcombine.low %v6769, %v6777
        %v6788 = vunpack.c.l.s4 1934713408
        %v6789 = vunpack.c.0.s8 %v6788
        %v6790 = vlaneseq
        %v6791 = vshrl.u32 %v6790, 7
        %v6792 = vsub.s32 %v6789, %v6791
        %v6793 = vrot.slane %v6786, %v6792
        %v6794 = vcombine.low %v6785, %v6793
        %v6795 = vcombine.low %v4987, %v4995
        %v6797 = vunpack.c.l.s4 1983009808
        %v6798 = vunpack.c.0.s8 %v6797
        %v6799 = vlaneseq
        %v6800 = vshrl.u32 %v6799, 7
        %v6801 = vsub.s32 %v6798, %v6800
        %v6802 = vrot.slane %v6795, %v6801
        %v6803 = vcombine.low %v4991, %v4999
        %v6805 = vunpack.c.l.s4 1983009808
        %v6806 = vunpack.c.0.s8 %v6805
        %v6807 = vlaneseq
        %v6808 = vshrl.u32 %v6807, 7
        %v6809 = vsub.s32 %v6806, %v6808
        %v6810 = vrot.slane %v6803, %v6809
        %v6811 = vcombine.low %v5003, %v5011
        %v6813 = vunpack.c.l.s4 1983009808
        %v6814 = vunpack.c.0.s8 %v6813
        %v6815 = vlaneseq
        %v6816 = vshrl.u32 %v6815, 7
        %v6817 = vsub.s32 %v6814, %v6816
        %v6818 = vrot.slane %v6811, %v6817
        %v6819 = vcombine.low %v5007, %v5015
        %v6821 = vunpack.c.l.s4 1983009808
        %v6822 = vunpack.c.0.s8 %v6821
        %v6823 = vlaneseq
        %v6824 = vshrl.u32 %v6823, 7
        %v6825 = vsub.s32 %v6822, %v6824
        %v6826 = vrot.slane %v6819, %v6825
        %v6827 = vcombine.low %v6802, %v6810
        %v6829 = vunpack.c.l.s4 1934713408
        %v6830 = vunpack.c.0.s8 %v6829
        %v6831 = vlaneseq
        %v6832 = vshrl.u32 %v6831, 7
        %v6833 = vsub.s32 %v6830, %v6832
        %v6834 = vrot.slane %v6827, %v6833
        %v6835 = vcombine.low %v6818, %v6826
        %v6837 = vunpack.c.l.s4 1934713408
        %v6838 = vunpack.c.0.s8 %v6837
        %v6839 = vlaneseq
        %v6840 = vshrl.u32 %v6839, 7
        %v6841 = vsub.s32 %v6838, %v6840
        %v6842 = vrot.slane %v6835, %v6841
        %v6843 = vcombine.low %v6834, %v6842
        %v6844 = vcombine.low %v5081, %v5089
        %v6846 = vunpack.c.l.s4 1983009808
        %v6847 = vunpack.c.0.s8 %v6846
        %v6848 = vlaneseq
        %v6849 = vshrl.u32 %v6848, 7
        %v6850 = vsub.s32 %v6847, %v6849
        %v6851 = vrot.slane %v6844, %v6850
        %v6852 = vcombine.low %v5085, %v5093
        %v6854 = vunpack.c.l.s4 1983009808
        %v6855 = vunpack.c.0.s8 %v6854
        %v6856 = vlaneseq
        %v6857 = vshrl.u32 %v6856, 7
        %v6858 = vsub.s32 %v6855, %v6857
        %v6859 = vrot.slane %v6852, %v6858
        %v6860 = vcombine.low %v5097, %v5105
        %v6862 = vunpack.c.l.s4 1983009808
        %v6863 = vunpack.c.0.s8 %v6862
        %v6864 = vlaneseq
        %v6865 = vshrl.u32 %v6864, 7
        %v6866 = vsub.s32 %v6863, %v6865
        %v6867 = vrot.slane %v6860, %v6866
        %v6868 = vcombine.low %v5101, %v5109
        %v6870 = vunpack.c.l.s4 1983009808
        %v6871 = vunpack.c.0.s8 %v6870
        %v6872 = vlaneseq
        %v6873 = vshrl.u32 %v6872, 7
        %v6874 = vsub.s32 %v6871, %v6873
        %v6875 = vrot.slane %v6868, %v6874
        %v6876 = vcombine.low %v6851, %v6859
        %v6878 = vunpack.c.l.s4 1934713408
        %v6879 = vunpack.c.0.s8 %v6878
        %v6880 = vlaneseq
        %v6881 = vshrl.u32 %v6880, 7
        %v6882 = vsub.s32 %v6879, %v6881
        %v6883 = vrot.slane %v6876, %v6882
        %v6884 = vcombine.low %v6867, %v6875
        %v6886 = vunpack.c.l.s4 1934713408
        %v6887 = vunpack.c.0.s8 %v6886
        %v6888 = vlaneseq
        %v6889 = vshrl.u32 %v6888, 7
        %v6890 = vsub.s32 %v6887, %v6889
        %v6891 = vrot.slane %v6884, %v6890
        %v6892 = vcombine.low %v6883, %v6891
        %v6893 = vcombine.low %v5083, %v5091
        %v6895 = vunpack.c.l.s4 1983009808
        %v6896 = vunpack.c.0.s8 %v6895
        %v6897 = vlaneseq
        %v6898 = vshrl.u32 %v6897, 7
        %v6899 = vsub.s32 %v6896, %v6898
        %v6900 = vrot.slane %v6893, %v6899
        %v6901 = vcombine.low %v5087, %v5095
        %v6903 = vunpack.c.l.s4 1983009808
        %v6904 = vunpack.c.0.s8 %v6903
        %v6905 = vlaneseq
        %v6906 = vshrl.u32 %v6905, 7
        %v6907 = vsub.s32 %v6904, %v6906
        %v6908 = vrot.slane %v6901, %v6907
        %v6909 = vcombine.low %v5099, %v5107
        %v6911 = vunpack.c.l.s4 1983009808
        %v6912 = vunpack.c.0.s8 %v6911
        %v6913 = vlaneseq
        %v6914 = vshrl.u32 %v6913, 7
        %v6915 = vsub.s32 %v6912, %v6914
        %v6916 = vrot.slane %v6909, %v6915
        %v6917 = vcombine.low %v5103, %v5111
        %v6919 = vunpack.c.l.s4 1983009808
        %v6920 = vunpack.c.0.s8 %v6919
        %v6921 = vlaneseq
        %v6922 = vshrl.u32 %v6921, 7
        %v6923 = vsub.s32 %v6920, %v6922
        %v6924 = vrot.slane %v6917, %v6923
        %v6925 = vcombine.low %v6900, %v6908
        %v6927 = vunpack.c.l.s4 1934713408
        %v6928 = vunpack.c.0.s8 %v6927
        %v6929 = vlaneseq
        %v6930 = vshrl.u32 %v6929, 7
        %v6931 = vsub.s32 %v6928, %v6930
        %v6932 = vrot.slane %v6925, %v6931
        %v6933 = vcombine.low %v6916, %v6924
        %v6935 = vunpack.c.l.s4 1934713408
        %v6936 = vunpack.c.0.s8 %v6935
        %v6937 = vlaneseq
        %v6938 = vshrl.u32 %v6937, 7
        %v6939 = vsub.s32 %v6936, %v6938
        %v6940 = vrot.slane %v6933, %v6939
        %v6941 = vcombine.low %v6932, %v6940
        %v6942 = vcombine.low %v5113, %v5121
        %v6944 = vunpack.c.l.s4 1983009808
        %v6945 = vunpack.c.0.s8 %v6944
        %v6946 = vlaneseq
        %v6947 = vshrl.u32 %v6946, 7
        %v6948 = vsub.s32 %v6945, %v6947
        %v6949 = vrot.slane %v6942, %v6948
        %v6950 = vcombine.low %v5117, %v5125
        %v6952 = vunpack.c.l.s4 1983009808
        %v6953 = vunpack.c.0.s8 %v6952
        %v6954 = vlaneseq
        %v6955 = vshrl.u32 %v6954, 7
        %v6956 = vsub.s32 %v6953, %v6955
        %v6957 = vrot.slane %v6950, %v6956
        %v6958 = vcombine.low %v5129, %v5137
        %v6960 = vunpack.c.l.s4 1983009808
        %v6961 = vunpack.c.0.s8 %v6960
        %v6962 = vlaneseq
        %v6963 = vshrl.u32 %v6962, 7
        %v6964 = vsub.s32 %v6961, %v6963
        %v6965 = vrot.slane %v6958, %v6964
        %v6966 = vcombine.low %v5133, %v5141
        %v6968 = vunpack.c.l.s4 1983009808
        %v6969 = vunpack.c.0.s8 %v6968
        %v6970 = vlaneseq
        %v6971 = vshrl.u32 %v6970, 7
        %v6972 = vsub.s32 %v6969, %v6971
        %v6973 = vrot.slane %v6966, %v6972
        %v6974 = vcombine.low %v6949, %v6957
        %v6976 = vunpack.c.l.s4 1934713408
        %v6977 = vunpack.c.0.s8 %v6976
        %v6978 = vlaneseq
        %v6979 = vshrl.u32 %v6978, 7
        %v6980 = vsub.s32 %v6977, %v6979
        %v6981 = vrot.slane %v6974, %v6980
        %v6982 = vcombine.low %v6965, %v6973
        %v6984 = vunpack.c.l.s4 1934713408
        %v6985 = vunpack.c.0.s8 %v6984
        %v6986 = vlaneseq
        %v6987 = vshrl.u32 %v6986, 7
        %v6988 = vsub.s32 %v6985, %v6987
        %v6989 = vrot.slane %v6982, %v6988
        %v6990 = vcombine.low %v6981, %v6989
        %v6991 = vcombine.low %v5115, %v5123
        %v6993 = vunpack.c.l.s4 1983009808
        %v6994 = vunpack.c.0.s8 %v6993
        %v6995 = vlaneseq
        %v6996 = vshrl.u32 %v6995, 7
        %v6997 = vsub.s32 %v6994, %v6996
        %v6998 = vrot.slane %v6991, %v6997
        %v6999 = vcombine.low %v5119, %v5127
        %v7001 = vunpack.c.l.s4 1983009808
        %v7002 = vunpack.c.0.s8 %v7001
        %v7003 = vlaneseq
        %v7004 = vshrl.u32 %v7003, 7
        %v7005 = vsub.s32 %v7002, %v7004
        %v7006 = vrot.slane %v6999, %v7005
        %v7007 = vcombine.low %v5131, %v5139
        %v7009 = vunpack.c.l.s4 1983009808
        %v7010 = vunpack.c.0.s8 %v7009
        %v7011 = vlaneseq
        %v7012 = vshrl.u32 %v7011, 7
        %v7013 = vsub.s32 %v7010, %v7012
        %v7014 = vrot.slane %v7007, %v7013
        %v7015 = vcombine.low %v5135, %v5143
        %v7017 = vunpack.c.l.s4 1983009808
        %v7018 = vunpack.c.0.s8 %v7017
        %v7019 = vlaneseq
        %v7020 = vshrl.u32 %v7019, 7
        %v7021 = vsub.s32 %v7018, %v7020
        %v7022 = vrot.slane %v7015, %v7021
        %v7023 = vcombine.low %v6998, %v7006
        %v7025 = vunpack.c.l.s4 1934713408
        %v7026 = vunpack.c.0.s8 %v7025
        %v7027 = vlaneseq
        %v7028 = vshrl.u32 %v7027, 7
        %v7029 = vsub.s32 %v7026, %v7028
        %v7030 = vrot.slane %v7023, %v7029
        %v7031 = vcombine.low %v7014, %v7022
        %v7033 = vunpack.c.l.s4 1934713408
        %v7034 = vunpack.c.0.s8 %v7033
        %v7035 = vlaneseq
        %v7036 = vshrl.u32 %v7035, 7
        %v7037 = vsub.s32 %v7034, %v7036
        %v7038 = vrot.slane %v7031, %v7037
        %v7039 = vcombine.low %v7030, %v7038
        %v7040 = vcombine.low %v5145, %v5153
        %v7042 = vunpack.c.l.s4 1983009808
        %v7043 = vunpack.c.0.s8 %v7042
        %v7044 = vlaneseq
        %v7045 = vshrl.u32 %v7044, 7
        %v7046 = vsub.s32 %v7043, %v7045
        %v7047 = vrot.slane %v7040, %v7046
        %v7048 = vcombine.low %v5149, %v5157
        %v7050 = vunpack.c.l.s4 1983009808
        %v7051 = vunpack.c.0.s8 %v7050
        %v7052 = vlaneseq
        %v7053 = vshrl.u32 %v7052, 7
        %v7054 = vsub.s32 %v7051, %v7053
        %v7055 = vrot.slane %v7048, %v7054
        %v7056 = vcombine.low %v5161, %v5169
        %v7058 = vunpack.c.l.s4 1983009808
        %v7059 = vunpack.c.0.s8 %v7058
        %v7060 = vlaneseq
        %v7061 = vshrl.u32 %v7060, 7
        %v7062 = vsub.s32 %v7059, %v7061
        %v7063 = vrot.slane %v7056, %v7062
        %v7064 = vcombine.low %v5165, %v5173
        %v7066 = vunpack.c.l.s4 1983009808
        %v7067 = vunpack.c.0.s8 %v7066
        %v7068 = vlaneseq
        %v7069 = vshrl.u32 %v7068, 7
        %v7070 = vsub.s32 %v7067, %v7069
        %v7071 = vrot.slane %v7064, %v7070
        %v7072 = vcombine.low %v7047, %v7055
        %v7074 = vunpack.c.l.s4 1934713408
        %v7075 = vunpack.c.0.s8 %v7074
        %v7076 = vlaneseq
        %v7077 = vshrl.u32 %v7076, 7
        %v7078 = vsub.s32 %v7075, %v7077
        %v7079 = vrot.slane %v7072, %v7078
        %v7080 = vcombine.low %v7063, %v7071
        %v7082 = vunpack.c.l.s4 1934713408
        %v7083 = vunpack.c.0.s8 %v7082
        %v7084 = vlaneseq
        %v7085 = vshrl.u32 %v7084, 7
        %v7086 = vsub.s32 %v7083, %v7085
        %v7087 = vrot.slane %v7080, %v7086
        %v7088 = vcombine.low %v7079, %v7087
        %v7089 = vcombine.low %v5147, %v5155
        %v7091 = vunpack.c.l.s4 1983009808
        %v7092 = vunpack.c.0.s8 %v7091
        %v7093 = vlaneseq
        %v7094 = vshrl.u32 %v7093, 7
        %v7095 = vsub.s32 %v7092, %v7094
        %v7096 = vrot.slane %v7089, %v7095
        %v7097 = vcombine.low %v5151, %v5159
        %v7099 = vunpack.c.l.s4 1983009808
        %v7100 = vunpack.c.0.s8 %v7099
        %v7101 = vlaneseq
        %v7102 = vshrl.u32 %v7101, 7
        %v7103 = vsub.s32 %v7100, %v7102
        %v7104 = vrot.slane %v7097, %v7103
        %v7105 = vcombine.low %v5163, %v5171
        %v7107 = vunpack.c.l.s4 1983009808
        %v7108 = vunpack.c.0.s8 %v7107
        %v7109 = vlaneseq
        %v7110 = vshrl.u32 %v7109, 7
        %v7111 = vsub.s32 %v7108, %v7110
        %v7112 = vrot.slane %v7105, %v7111
        %v7113 = vcombine.low %v5167, %v5175
        %v7115 = vunpack.c.l.s4 1983009808
        %v7116 = vunpack.c.0.s8 %v7115
        %v7117 = vlaneseq
        %v7118 = vshrl.u32 %v7117, 7
        %v7119 = vsub.s32 %v7116, %v7118
        %v7120 = vrot.slane %v7113, %v7119
        %v7121 = vcombine.low %v7096, %v7104
        %v7123 = vunpack.c.l.s4 1934713408
        %v7124 = vunpack.c.0.s8 %v7123
        %v7125 = vlaneseq
        %v7126 = vshrl.u32 %v7125, 7
        %v7127 = vsub.s32 %v7124, %v7126
        %v7128 = vrot.slane %v7121, %v7127
        %v7129 = vcombine.low %v7112, %v7120
        %v7131 = vunpack.c.l.s4 1934713408
        %v7132 = vunpack.c.0.s8 %v7131
        %v7133 = vlaneseq
        %v7134 = vshrl.u32 %v7133, 7
        %v7135 = vsub.s32 %v7132, %v7134
        %v7136 = vrot.slane %v7129, %v7135
        %v7137 = vcombine.low %v7128, %v7136
        %v7138 = vcombine.low %v5177, %v5185
        %v7140 = vunpack.c.l.s4 1983009808
        %v7141 = vunpack.c.0.s8 %v7140
        %v7142 = vlaneseq
        %v7143 = vshrl.u32 %v7142, 7
        %v7144 = vsub.s32 %v7141, %v7143
        %v7145 = vrot.slane %v7138, %v7144
        %v7146 = vcombine.low %v5181, %v5189
        %v7148 = vunpack.c.l.s4 1983009808
        %v7149 = vunpack.c.0.s8 %v7148
        %v7150 = vlaneseq
        %v7151 = vshrl.u32 %v7150, 7
        %v7152 = vsub.s32 %v7149, %v7151
        %v7153 = vrot.slane %v7146, %v7152
        %v7154 = vcombine.low %v5193, %v5201
        %v7156 = vunpack.c.l.s4 1983009808
        %v7157 = vunpack.c.0.s8 %v7156
        %v7158 = vlaneseq
        %v7159 = vshrl.u32 %v7158, 7
        %v7160 = vsub.s32 %v7157, %v7159
        %v7161 = vrot.slane %v7154, %v7160
        %v7162 = vcombine.low %v5197, %v5205
        %v7164 = vunpack.c.l.s4 1983009808
        %v7165 = vunpack.c.0.s8 %v7164
        %v7166 = vlaneseq
        %v7167 = vshrl.u32 %v7166, 7
        %v7168 = vsub.s32 %v7165, %v7167
        %v7169 = vrot.slane %v7162, %v7168
        %v7170 = vcombine.low %v7145, %v7153
        %v7172 = vunpack.c.l.s4 1934713408
        %v7173 = vunpack.c.0.s8 %v7172
        %v7174 = vlaneseq
        %v7175 = vshrl.u32 %v7174, 7
        %v7176 = vsub.s32 %v7173, %v7175
        %v7177 = vrot.slane %v7170, %v7176
        %v7178 = vcombine.low %v7161, %v7169
        %v7180 = vunpack.c.l.s4 1934713408
        %v7181 = vunpack.c.0.s8 %v7180
        %v7182 = vlaneseq
        %v7183 = vshrl.u32 %v7182, 7
        %v7184 = vsub.s32 %v7181, %v7183
        %v7185 = vrot.slane %v7178, %v7184
        %v7186 = vcombine.low %v7177, %v7185
        %v7187 = vcombine.low %v5179, %v5187
        %v7189 = vunpack.c.l.s4 1983009808
        %v7190 = vunpack.c.0.s8 %v7189
        %v7191 = vlaneseq
        %v7192 = vshrl.u32 %v7191, 7
        %v7193 = vsub.s32 %v7190, %v7192
        %v7194 = vrot.slane %v7187, %v7193
        %v7195 = vcombine.low %v5183, %v5191
        %v7197 = vunpack.c.l.s4 1983009808
        %v7198 = vunpack.c.0.s8 %v7197
        %v7199 = vlaneseq
        %v7200 = vshrl.u32 %v7199, 7
        %v7201 = vsub.s32 %v7198, %v7200
        %v7202 = vrot.slane %v7195, %v7201
        %v7203 = vcombine.low %v5195, %v5203
        %v7205 = vunpack.c.l.s4 1983009808
        %v7206 = vunpack.c.0.s8 %v7205
        %v7207 = vlaneseq
        %v7208 = vshrl.u32 %v7207, 7
        %v7209 = vsub.s32 %v7206, %v7208
        %v7210 = vrot.slane %v7203, %v7209
        %v7211 = vcombine.low %v5199, %v5207
        %v7213 = vunpack.c.l.s4 1983009808
        %v7214 = vunpack.c.0.s8 %v7213
        %v7215 = vlaneseq
        %v7216 = vshrl.u32 %v7215, 7
        %v7217 = vsub.s32 %v7214, %v7216
        %v7218 = vrot.slane %v7211, %v7217
        %v7219 = vcombine.low %v7194, %v7202
        %v7221 = vunpack.c.l.s4 1934713408
        %v7222 = vunpack.c.0.s8 %v7221
        %v7223 = vlaneseq
        %v7224 = vshrl.u32 %v7223, 7
        %v7225 = vsub.s32 %v7222, %v7224
        %v7226 = vrot.slane %v7219, %v7225
        %v7227 = vcombine.low %v7210, %v7218
        %v7229 = vunpack.c.l.s4 1934713408
        %v7230 = vunpack.c.0.s8 %v7229
        %v7231 = vlaneseq
        %v7232 = vshrl.u32 %v7231, 7
        %v7233 = vsub.s32 %v7230, %v7232
        %v7234 = vrot.slane %v7227, %v7233
        %v7235 = vcombine.low %v7226, %v7234
        %v7236 = vcombine.low %v5273, %v5281
        %v7238 = vunpack.c.l.s4 1983009808
        %v7239 = vunpack.c.0.s8 %v7238
        %v7240 = vlaneseq
        %v7241 = vshrl.u32 %v7240, 7
        %v7242 = vsub.s32 %v7239, %v7241
        %v7243 = vrot.slane %v7236, %v7242
        %v7244 = vcombine.low %v5277, %v5285
        %v7246 = vunpack.c.l.s4 1983009808
        %v7247 = vunpack.c.0.s8 %v7246
        %v7248 = vlaneseq
        %v7249 = vshrl.u32 %v7248, 7
        %v7250 = vsub.s32 %v7247, %v7249
        %v7251 = vrot.slane %v7244, %v7250
        %v7252 = vcombine.low %v5289, %v5297
        %v7254 = vunpack.c.l.s4 1983009808
        %v7255 = vunpack.c.0.s8 %v7254
        %v7256 = vlaneseq
        %v7257 = vshrl.u32 %v7256, 7
        %v7258 = vsub.s32 %v7255, %v7257
        %v7259 = vrot.slane %v7252, %v7258
        %v7260 = vcombine.low %v5293, %v5301
        %v7262 = vunpack.c.l.s4 1983009808
        %v7263 = vunpack.c.0.s8 %v7262
        %v7264 = vlaneseq
        %v7265 = vshrl.u32 %v7264, 7
        %v7266 = vsub.s32 %v7263, %v7265
        %v7267 = vrot.slane %v7260, %v7266
        %v7268 = vcombine.low %v7243, %v7251
        %v7270 = vunpack.c.l.s4 1934713408
        %v7271 = vunpack.c.0.s8 %v7270
        %v7272 = vlaneseq
        %v7273 = vshrl.u32 %v7272, 7
        %v7274 = vsub.s32 %v7271, %v7273
        %v7275 = vrot.slane %v7268, %v7274
        %v7276 = vcombine.low %v7259, %v7267
        %v7278 = vunpack.c.l.s4 1934713408
        %v7279 = vunpack.c.0.s8 %v7278
        %v7280 = vlaneseq
        %v7281 = vshrl.u32 %v7280, 7
        %v7282 = vsub.s32 %v7279, %v7281
        %v7283 = vrot.slane %v7276, %v7282
        %v7284 = vcombine.low %v7275, %v7283
        %v7285 = vcombine.low %v5275, %v5283
        %v7287 = vunpack.c.l.s4 1983009808
        %v7288 = vunpack.c.0.s8 %v7287
        %v7289 = vlaneseq
        %v7290 = vshrl.u32 %v7289, 7
        %v7291 = vsub.s32 %v7288, %v7290
        %v7292 = vrot.slane %v7285, %v7291
        %v7293 = vcombine.low %v5279, %v5287
        %v7295 = vunpack.c.l.s4 1983009808
        %v7296 = vunpack.c.0.s8 %v7295
        %v7297 = vlaneseq
        %v7298 = vshrl.u32 %v7297, 7
        %v7299 = vsub.s32 %v7296, %v7298
        %v7300 = vrot.slane %v7293, %v7299
        %v7301 = vcombine.low %v5291, %v5299
        %v7303 = vunpack.c.l.s4 1983009808
        %v7304 = vunpack.c.0.s8 %v7303
        %v7305 = vlaneseq
        %v7306 = vshrl.u32 %v7305, 7
        %v7307 = vsub.s32 %v7304, %v7306
        %v7308 = vrot.slane %v7301, %v7307
        %v7309 = vcombine.low %v5295, %v5303
        %v7311 = vunpack.c.l.s4 1983009808
        %v7312 = vunpack.c.0.s8 %v7311
        %v7313 = vlaneseq
        %v7314 = vshrl.u32 %v7313, 7
        %v7315 = vsub.s32 %v7312, %v7314
        %v7316 = vrot.slane %v7309, %v7315
        %v7317 = vcombine.low %v7292, %v7300
        %v7319 = vunpack.c.l.s4 1934713408
        %v7320 = vunpack.c.0.s8 %v7319
        %v7321 = vlaneseq
        %v7322 = vshrl.u32 %v7321, 7
        %v7323 = vsub.s32 %v7320, %v7322
        %v7324 = vrot.slane %v7317, %v7323
        %v7325 = vcombine.low %v7308, %v7316
        %v7327 = vunpack.c.l.s4 1934713408
        %v7328 = vunpack.c.0.s8 %v7327
        %v7329 = vlaneseq
        %v7330 = vshrl.u32 %v7329, 7
        %v7331 = vsub.s32 %v7328, %v7330
        %v7332 = vrot.slane %v7325, %v7331
        %v7333 = vcombine.low %v7324, %v7332
        %v7334 = vcombine.low %v5305, %v5313
        %v7336 = vunpack.c.l.s4 1983009808
        %v7337 = vunpack.c.0.s8 %v7336
        %v7338 = vlaneseq
        %v7339 = vshrl.u32 %v7338, 7
        %v7340 = vsub.s32 %v7337, %v7339
        %v7341 = vrot.slane %v7334, %v7340
        %v7342 = vcombine.low %v5309, %v5317
        %v7344 = vunpack.c.l.s4 1983009808
        %v7345 = vunpack.c.0.s8 %v7344
        %v7346 = vlaneseq
        %v7347 = vshrl.u32 %v7346, 7
        %v7348 = vsub.s32 %v7345, %v7347
        %v7349 = vrot.slane %v7342, %v7348
        %v7350 = vcombine.low %v5321, %v5329
        %v7352 = vunpack.c.l.s4 1983009808
        %v7353 = vunpack.c.0.s8 %v7352
        %v7354 = vlaneseq
        %v7355 = vshrl.u32 %v7354, 7
        %v7356 = vsub.s32 %v7353, %v7355
        %v7357 = vrot.slane %v7350, %v7356
        %v7358 = vcombine.low %v5325, %v5333
        %v7360 = vunpack.c.l.s4 1983009808
        %v7361 = vunpack.c.0.s8 %v7360
        %v7362 = vlaneseq
        %v7363 = vshrl.u32 %v7362, 7
        %v7364 = vsub.s32 %v7361, %v7363
        %v7365 = vrot.slane %v7358, %v7364
        %v7366 = vcombine.low %v7341, %v7349
        %v7368 = vunpack.c.l.s4 1934713408
        %v7369 = vunpack.c.0.s8 %v7368
        %v7370 = vlaneseq
        %v7371 = vshrl.u32 %v7370, 7
        %v7372 = vsub.s32 %v7369, %v7371
        %v7373 = vrot.slane %v7366, %v7372
        %v7374 = vcombine.low %v7357, %v7365
        %v7376 = vunpack.c.l.s4 1934713408
        %v7377 = vunpack.c.0.s8 %v7376
        %v7378 = vlaneseq
        %v7379 = vshrl.u32 %v7378, 7
        %v7380 = vsub.s32 %v7377, %v7379
        %v7381 = vrot.slane %v7374, %v7380
        %v7382 = vcombine.low %v7373, %v7381
        %v7383 = vcombine.low %v5307, %v5315
        %v7385 = vunpack.c.l.s4 1983009808
        %v7386 = vunpack.c.0.s8 %v7385
        %v7387 = vlaneseq
        %v7388 = vshrl.u32 %v7387, 7
        %v7389 = vsub.s32 %v7386, %v7388
        %v7390 = vrot.slane %v7383, %v7389
        %v7391 = vcombine.low %v5311, %v5319
        %v7393 = vunpack.c.l.s4 1983009808
        %v7394 = vunpack.c.0.s8 %v7393
        %v7395 = vlaneseq
        %v7396 = vshrl.u32 %v7395, 7
        %v7397 = vsub.s32 %v7394, %v7396
        %v7398 = vrot.slane %v7391, %v7397
        %v7399 = vcombine.low %v5323, %v5331
        %v7401 = vunpack.c.l.s4 1983009808
        %v7402 = vunpack.c.0.s8 %v7401
        %v7403 = vlaneseq
        %v7404 = vshrl.u32 %v7403, 7
        %v7405 = vsub.s32 %v7402, %v7404
        %v7406 = vrot.slane %v7399, %v7405
        %v7407 = vcombine.low %v5327, %v5335
        %v7409 = vunpack.c.l.s4 1983009808
        %v7410 = vunpack.c.0.s8 %v7409
        %v7411 = vlaneseq
        %v7412 = vshrl.u32 %v7411, 7
        %v7413 = vsub.s32 %v7410, %v7412
        %v7414 = vrot.slane %v7407, %v7413
        %v7415 = vcombine.low %v7390, %v7398
        %v7417 = vunpack.c.l.s4 1934713408
        %v7418 = vunpack.c.0.s8 %v7417
        %v7419 = vlaneseq
        %v7420 = vshrl.u32 %v7419, 7
        %v7421 = vsub.s32 %v7418, %v7420
        %v7422 = vrot.slane %v7415, %v7421
        %v7423 = vcombine.low %v7406, %v7414
        %v7425 = vunpack.c.l.s4 1934713408
        %v7426 = vunpack.c.0.s8 %v7425
        %v7427 = vlaneseq
        %v7428 = vshrl.u32 %v7427, 7
        %v7429 = vsub.s32 %v7426, %v7428
        %v7430 = vrot.slane %v7423, %v7429
        %v7431 = vcombine.low %v7422, %v7430
        %v7432 = vcombine.low %v5337, %v5345
        %v7434 = vunpack.c.l.s4 1983009808
        %v7435 = vunpack.c.0.s8 %v7434
        %v7436 = vlaneseq
        %v7437 = vshrl.u32 %v7436, 7
        %v7438 = vsub.s32 %v7435, %v7437
        %v7439 = vrot.slane %v7432, %v7438
        %v7440 = vcombine.low %v5341, %v5349
        %v7442 = vunpack.c.l.s4 1983009808
        %v7443 = vunpack.c.0.s8 %v7442
        %v7444 = vlaneseq
        %v7445 = vshrl.u32 %v7444, 7
        %v7446 = vsub.s32 %v7443, %v7445
        %v7447 = vrot.slane %v7440, %v7446
        %v7448 = vcombine.low %v5353, %v5361
        %v7450 = vunpack.c.l.s4 1983009808
        %v7451 = vunpack.c.0.s8 %v7450
        %v7452 = vlaneseq
        %v7453 = vshrl.u32 %v7452, 7
        %v7454 = vsub.s32 %v7451, %v7453
        %v7455 = vrot.slane %v7448, %v7454
        %v7456 = vcombine.low %v5357, %v5365
        %v7458 = vunpack.c.l.s4 1983009808
        %v7459 = vunpack.c.0.s8 %v7458
        %v7460 = vlaneseq
        %v7461 = vshrl.u32 %v7460, 7
        %v7462 = vsub.s32 %v7459, %v7461
        %v7463 = vrot.slane %v7456, %v7462
        %v7464 = vcombine.low %v7439, %v7447
        %v7466 = vunpack.c.l.s4 1934713408
        %v7467 = vunpack.c.0.s8 %v7466
        %v7468 = vlaneseq
        %v7469 = vshrl.u32 %v7468, 7
        %v7470 = vsub.s32 %v7467, %v7469
        %v7471 = vrot.slane %v7464, %v7470
        %v7472 = vcombine.low %v7455, %v7463
        %v7474 = vunpack.c.l.s4 1934713408
        %v7475 = vunpack.c.0.s8 %v7474
        %v7476 = vlaneseq
        %v7477 = vshrl.u32 %v7476, 7
        %v7478 = vsub.s32 %v7475, %v7477
        %v7479 = vrot.slane %v7472, %v7478
        %v7480 = vcombine.low %v7471, %v7479
        %v7481 = vcombine.low %v5339, %v5347
        %v7483 = vunpack.c.l.s4 1983009808
        %v7484 = vunpack.c.0.s8 %v7483
        %v7485 = vlaneseq
        %v7486 = vshrl.u32 %v7485, 7
        %v7487 = vsub.s32 %v7484, %v7486
        %v7488 = vrot.slane %v7481, %v7487
        %v7489 = vcombine.low %v5343, %v5351
        %v7491 = vunpack.c.l.s4 1983009808
        %v7492 = vunpack.c.0.s8 %v7491
        %v7493 = vlaneseq
        %v7494 = vshrl.u32 %v7493, 7
        %v7495 = vsub.s32 %v7492, %v7494
        %v7496 = vrot.slane %v7489, %v7495
        %v7497 = vcombine.low %v5355, %v5363
        %v7499 = vunpack.c.l.s4 1983009808
        %v7500 = vunpack.c.0.s8 %v7499
        %v7501 = vlaneseq
        %v7502 = vshrl.u32 %v7501, 7
        %v7503 = vsub.s32 %v7500, %v7502
        %v7504 = vrot.slane %v7497, %v7503
        %v7505 = vcombine.low %v5359, %v5367
        %v7507 = vunpack.c.l.s4 1983009808
        %v7508 = vunpack.c.0.s8 %v7507
        %v7509 = vlaneseq
        %v7510 = vshrl.u32 %v7509, 7
        %v7511 = vsub.s32 %v7508, %v7510
        %v7512 = vrot.slane %v7505, %v7511
        %v7513 = vcombine.low %v7488, %v7496
        %v7515 = vunpack.c.l.s4 1934713408
        %v7516 = vunpack.c.0.s8 %v7515
        %v7517 = vlaneseq
        %v7518 = vshrl.u32 %v7517, 7
        %v7519 = vsub.s32 %v7516, %v7518
        %v7520 = vrot.slane %v7513, %v7519
        %v7521 = vcombine.low %v7504, %v7512
        %v7523 = vunpack.c.l.s4 1934713408
        %v7524 = vunpack.c.0.s8 %v7523
        %v7525 = vlaneseq
        %v7526 = vshrl.u32 %v7525, 7
        %v7527 = vsub.s32 %v7524, %v7526
        %v7528 = vrot.slane %v7521, %v7527
        %v7529 = vcombine.low %v7520, %v7528
        %v7530 = vcombine.low %v5369, %v5377
        %v7532 = vunpack.c.l.s4 1983009808
        %v7533 = vunpack.c.0.s8 %v7532
        %v7534 = vlaneseq
        %v7535 = vshrl.u32 %v7534, 7
        %v7536 = vsub.s32 %v7533, %v7535
        %v7537 = vrot.slane %v7530, %v7536
        %v7538 = vcombine.low %v5373, %v5381
        %v7540 = vunpack.c.l.s4 1983009808
        %v7541 = vunpack.c.0.s8 %v7540
        %v7542 = vlaneseq
        %v7543 = vshrl.u32 %v7542, 7
        %v7544 = vsub.s32 %v7541, %v7543
        %v7545 = vrot.slane %v7538, %v7544
        %v7546 = vcombine.low %v5385, %v5393
        %v7548 = vunpack.c.l.s4 1983009808
        %v7549 = vunpack.c.0.s8 %v7548
        %v7550 = vlaneseq
        %v7551 = vshrl.u32 %v7550, 7
        %v7552 = vsub.s32 %v7549, %v7551
        %v7553 = vrot.slane %v7546, %v7552
        %v7554 = vcombine.low %v5389, %v5397
        %v7556 = vunpack.c.l.s4 1983009808
        %v7557 = vunpack.c.0.s8 %v7556
        %v7558 = vlaneseq
        %v7559 = vshrl.u32 %v7558, 7
        %v7560 = vsub.s32 %v7557, %v7559
        %v7561 = vrot.slane %v7554, %v7560
        %v7562 = vcombine.low %v7537, %v7545
        %v7564 = vunpack.c.l.s4 1934713408
        %v7565 = vunpack.c.0.s8 %v7564
        %v7566 = vlaneseq
        %v7567 = vshrl.u32 %v7566, 7
        %v7568 = vsub.s32 %v7565, %v7567
        %v7569 = vrot.slane %v7562, %v7568
        %v7570 = vcombine.low %v7553, %v7561
        %v7572 = vunpack.c.l.s4 1934713408
        %v7573 = vunpack.c.0.s8 %v7572
        %v7574 = vlaneseq
        %v7575 = vshrl.u32 %v7574, 7
        %v7576 = vsub.s32 %v7573, %v7575
        %v7577 = vrot.slane %v7570, %v7576
        %v7578 = vcombine.low %v7569, %v7577
        %v7579 = vcombine.low %v5371, %v5379
        %v7581 = vunpack.c.l.s4 1983009808
        %v7582 = vunpack.c.0.s8 %v7581
        %v7583 = vlaneseq
        %v7584 = vshrl.u32 %v7583, 7
        %v7585 = vsub.s32 %v7582, %v7584
        %v7586 = vrot.slane %v7579, %v7585
        %v7587 = vcombine.low %v5375, %v5383
        %v7589 = vunpack.c.l.s4 1983009808
        %v7590 = vunpack.c.0.s8 %v7589
        %v7591 = vlaneseq
        %v7592 = vshrl.u32 %v7591, 7
        %v7593 = vsub.s32 %v7590, %v7592
        %v7594 = vrot.slane %v7587, %v7593
        %v7595 = vcombine.low %v5387, %v5395
        %v7597 = vunpack.c.l.s4 1983009808
        %v7598 = vunpack.c.0.s8 %v7597
        %v7599 = vlaneseq
        %v7600 = vshrl.u32 %v7599, 7
        %v7601 = vsub.s32 %v7598, %v7600
        %v7602 = vrot.slane %v7595, %v7601
        %v7603 = vcombine.low %v5391, %v5399
        %v7605 = vunpack.c.l.s4 1983009808
        %v7606 = vunpack.c.0.s8 %v7605
        %v7607 = vlaneseq
        %v7608 = vshrl.u32 %v7607, 7
        %v7609 = vsub.s32 %v7606, %v7608
        %v7610 = vrot.slane %v7603, %v7609
        %v7611 = vcombine.low %v7586, %v7594
        %v7613 = vunpack.c.l.s4 1934713408
        %v7614 = vunpack.c.0.s8 %v7613
        %v7615 = vlaneseq
        %v7616 = vshrl.u32 %v7615, 7
        %v7617 = vsub.s32 %v7614, %v7616
        %v7618 = vrot.slane %v7611, %v7617
        %v7619 = vcombine.low %v7602, %v7610
        %v7621 = vunpack.c.l.s4 1934713408
        %v7622 = vunpack.c.0.s8 %v7621
        %v7623 = vlaneseq
        %v7624 = vshrl.u32 %v7623, 7
        %v7625 = vsub.s32 %v7622, %v7624
        %v7626 = vrot.slane %v7619, %v7625
        %v7627 = vcombine.low %v7618, %v7626
        %v7630 = vpack.i.b16 %v6157, %v6108
        %v7631 = vshrl.u32 %v6108, 16
        %v7632 = vshrl.u32 %v6157, 16
        %v7633 = vpack.i.b16 %v7632, %v7631
        %v7636 = vpack.i.b16 %v6255, %v6206
        %v7637 = vshrl.u32 %v6206, 16
        %v7638 = vshrl.u32 %v6255, 16
        %v7639 = vpack.i.b16 %v7638, %v7637
        %v7642 = vpack.i.b16 %v6353, %v6304
        %v7643 = vshrl.u32 %v6304, 16
        %v7644 = vshrl.u32 %v6353, 16
        %v7645 = vpack.i.b16 %v7644, %v7643
        %v7648 = vpack.i.b16 %v6451, %v6402
        %v7649 = vshrl.u32 %v6402, 16
        %v7650 = vshrl.u32 %v6451, 16
        %v7651 = vpack.i.b16 %v7650, %v7649
        %v7654 = vpack.i.b16 %v6549, %v6500
        %v7655 = vshrl.u32 %v6500, 16
        %v7656 = vshrl.u32 %v6549, 16
        %v7657 = vpack.i.b16 %v7656, %v7655
        %v7660 = vpack.i.b16 %v6647, %v6598
        %v7661 = vshrl.u32 %v6598, 16
        %v7662 = vshrl.u32 %v6647, 16
        %v7663 = vpack.i.b16 %v7662, %v7661
        %v7666 = vpack.i.b16 %v6745, %v6696
        %v7667 = vshrl.u32 %v6696, 16
        %v7668 = vshrl.u32 %v6745, 16
        %v7669 = vpack.i.b16 %v7668, %v7667
        %v7672 = vpack.i.b16 %v6843, %v6794
        %v7673 = vshrl.u32 %v6794, 16
        %v7674 = vshrl.u32 %v6843, 16
        %v7675 = vpack.i.b16 %v7674, %v7673
        %v7678 = vpack.i.b16 %v6941, %v6892
        %v7679 = vshrl.u32 %v6892, 16
        %v7680 = vshrl.u32 %v6941, 16
        %v7681 = vpack.i.b16 %v7680, %v7679
        %v7684 = vpack.i.b16 %v7039, %v6990
        %v7685 = vshrl.u32 %v6990, 16
        %v7686 = vshrl.u32 %v7039, 16
        %v7687 = vpack.i.b16 %v7686, %v7685
        %v7690 = vpack.i.b16 %v7137, %v7088
        %v7691 = vshrl.u32 %v7088, 16
        %v7692 = vshrl.u32 %v7137, 16
        %v7693 = vpack.i.b16 %v7692, %v7691
        %v7696 = vpack.i.b16 %v7235, %v7186
        %v7697 = vshrl.u32 %v7186, 16
        %v7698 = vshrl.u32 %v7235, 16
        %v7699 = vpack.i.b16 %v7698, %v7697
        %v7702 = vpack.i.b16 %v7333, %v7284
        %v7703 = vshrl.u32 %v7284, 16
        %v7704 = vshrl.u32 %v7333, 16
        %v7705 = vpack.i.b16 %v7704, %v7703
        %v7708 = vpack.i.b16 %v7431, %v7382
        %v7709 = vshrl.u32 %v7382, 16
        %v7710 = vshrl.u32 %v7431, 16
        %v7711 = vpack.i.b16 %v7710, %v7709
        %v7714 = vpack.i.b16 %v7529, %v7480
        %v7715 = vshrl.u32 %v7480, 16
        %v7716 = vshrl.u32 %v7529, 16
        %v7717 = vpack.i.b16 %v7716, %v7715
        %v7720 = vpack.i.b16 %v7627, %v7578
        %v7721 = vshrl.u32 %v7578, 16
        %v7722 = vshrl.u32 %v7627, 16
        %v7723 = vpack.i.b16 %v7722, %v7721
        %7724 = vrot.lane.b32.xlu0 %v7633, 23
        %v7725 = vpop.permute.xlu0 %7724
        %7726 = vrot.lane.b32.xlu0 %v7639, 23
        %v7727 = vpop.permute.xlu0 %7726
        %7728 = vrot.lane.b32.xlu0 %v7645, 23
        %v7729 = vpop.permute.xlu0 %7728
        %7730 = vrot.lane.b32.xlu0 %v7651, 23
        %v7731 = vpop.permute.xlu0 %7730
        %7732 = vrot.lane.b32.xlu0 %v7657, 23
        %v7733 = vpop.permute.xlu0 %7732
        %7734 = vrot.lane.b32.xlu0 %v7663, 23
        %v7735 = vpop.permute.xlu0 %7734
        %7736 = vrot.lane.b32.xlu0 %v7669, 23
        %v7737 = vpop.permute.xlu0 %7736
        %7738 = vrot.lane.b32.xlu0 %v7675, 23
        %v7739 = vpop.permute.xlu0 %7738
        %7740 = vrot.lane.b32.xlu0 %v7681, 23
        %v7741 = vpop.permute.xlu0 %7740
        %7742 = vrot.lane.b32.xlu0 %v7687, 23
        %v7743 = vpop.permute.xlu0 %7742
        %7744 = vrot.lane.b32.xlu0 %v7693, 23
        %v7745 = vpop.permute.xlu0 %7744
        %7746 = vrot.lane.b32.xlu0 %v7699, 23
        %v7747 = vpop.permute.xlu0 %7746
        %7748 = vrot.lane.b32.xlu0 %v7705, 23
        %v7749 = vpop.permute.xlu0 %7748
        %7750 = vrot.lane.b32.xlu0 %v7711, 23
        %v7751 = vpop.permute.xlu0 %7750
        %7752 = vrot.lane.b32.xlu0 %v7717, 23
        %v7753 = vpop.permute.xlu0 %7752
        %7754 = vrot.lane.b32.xlu0 %v7723, 23
        %v7755 = vpop.permute.xlu0 %7754
        %vm7756 = vcmask 187392
        %v7759 = vsel %vm7756, %v7630, %v7725
        %v7763 = vsel %vm7756, %v7636, %v7727
        %v7767 = vsel %vm7756, %v7642, %v7729
        %v7771 = vsel %vm7756, %v7648, %v7731
        %v7775 = vsel %vm7756, %v7654, %v7733
        %v7779 = vsel %vm7756, %v7660, %v7735
        %v7783 = vsel %vm7756, %v7666, %v7737
        %v7787 = vsel %vm7756, %v7672, %v7739
        %v7791 = vsel %vm7756, %v7678, %v7741
        %v7795 = vsel %vm7756, %v7684, %v7743
        %v7799 = vsel %vm7756, %v7690, %v7745
        %v7803 = vsel %vm7756, %v7696, %v7747
        %v7807 = vsel %vm7756, %v7702, %v7749
        %v7811 = vsel %vm7756, %v7708, %v7751
        %v7815 = vsel %vm7756, %v7714, %v7753
        %v7819 = vsel %vm7756, %v7720, %v7755
        %v7821 = vcombine.low %v5551, %v5559
        %v7823 = vunpack.c.l.s4 1983009808
        %v7824 = vunpack.c.0.s8 %v7823
        %v7825 = vlaneseq
        %v7826 = vshrl.u32 %v7825, 7
        %v7827 = vsub.s32 %v7824, %v7826
        %v7828 = vrot.slane %v7821, %v7827
        %v7829 = vcombine.low %v5555, %v5563
        %v7831 = vunpack.c.l.s4 1983009808
        %v7832 = vunpack.c.0.s8 %v7831
        %v7833 = vlaneseq
        %v7834 = vshrl.u32 %v7833, 7
        %v7835 = vsub.s32 %v7832, %v7834
        %v7836 = vrot.slane %v7829, %v7835
        %v7837 = vcombine.low %v5567, %v5575
        %v7839 = vunpack.c.l.s4 1983009808
        %v7840 = vunpack.c.0.s8 %v7839
        %v7841 = vlaneseq
        %v7842 = vshrl.u32 %v7841, 7
        %v7843 = vsub.s32 %v7840, %v7842
        %v7844 = vrot.slane %v7837, %v7843
        %v7845 = vcombine.low %v5571, %v5579
        %v7847 = vunpack.c.l.s4 1983009808
        %v7848 = vunpack.c.0.s8 %v7847
        %v7849 = vlaneseq
        %v7850 = vshrl.u32 %v7849, 7
        %v7851 = vsub.s32 %v7848, %v7850
        %v7852 = vrot.slane %v7845, %v7851
        %v7853 = vcombine.low %v7828, %v7836
        %v7855 = vunpack.c.l.s4 1934713408
        %v7856 = vunpack.c.0.s8 %v7855
        %v7857 = vlaneseq
        %v7858 = vshrl.u32 %v7857, 7
        %v7859 = vsub.s32 %v7856, %v7858
        %v7860 = vrot.slane %v7853, %v7859
        %v7861 = vcombine.low %v7844, %v7852
        %v7863 = vunpack.c.l.s4 1934713408
        %v7864 = vunpack.c.0.s8 %v7863
        %v7865 = vlaneseq
        %v7866 = vshrl.u32 %v7865, 7
        %v7867 = vsub.s32 %v7864, %v7866
        %v7868 = vrot.slane %v7861, %v7867
        %v7869 = vcombine.low %v7860, %v7868
        %v7870 = vcombine.high %v7860, %v7868
        %v7871 = vcombine.low %v5583, %v5591
        %v7873 = vunpack.c.l.s4 1983009808
        %v7874 = vunpack.c.0.s8 %v7873
        %v7875 = vlaneseq
        %v7876 = vshrl.u32 %v7875, 7
        %v7877 = vsub.s32 %v7874, %v7876
        %v7878 = vrot.slane %v7871, %v7877
        %v7879 = vcombine.low %v5587, %v5595
        %v7881 = vunpack.c.l.s4 1983009808
        %v7882 = vunpack.c.0.s8 %v7881
        %v7883 = vlaneseq
        %v7884 = vshrl.u32 %v7883, 7
        %v7885 = vsub.s32 %v7882, %v7884
        %v7886 = vrot.slane %v7879, %v7885
        %v7887 = vcombine.low %v5599, %v5607
        %v7889 = vunpack.c.l.s4 1983009808
        %v7890 = vunpack.c.0.s8 %v7889
        %v7891 = vlaneseq
        %v7892 = vshrl.u32 %v7891, 7
        %v7893 = vsub.s32 %v7890, %v7892
        %v7894 = vrot.slane %v7887, %v7893
        %v7895 = vcombine.low %v5603, %v5611
        %v7897 = vunpack.c.l.s4 1983009808
        %v7898 = vunpack.c.0.s8 %v7897
        %v7899 = vlaneseq
        %v7900 = vshrl.u32 %v7899, 7
        %v7901 = vsub.s32 %v7898, %v7900
        %v7902 = vrot.slane %v7895, %v7901
        %v7903 = vcombine.low %v7878, %v7886
        %v7905 = vunpack.c.l.s4 1934713408
        %v7906 = vunpack.c.0.s8 %v7905
        %v7907 = vlaneseq
        %v7908 = vshrl.u32 %v7907, 7
        %v7909 = vsub.s32 %v7906, %v7908
        %v7910 = vrot.slane %v7903, %v7909
        %v7911 = vcombine.low %v7894, %v7902
        %v7913 = vunpack.c.l.s4 1934713408
        %v7914 = vunpack.c.0.s8 %v7913
        %v7915 = vlaneseq
        %v7916 = vshrl.u32 %v7915, 7
        %v7917 = vsub.s32 %v7914, %v7916
        %v7918 = vrot.slane %v7911, %v7917
        %v7919 = vcombine.low %v7910, %v7918
        %v7920 = vcombine.high %v7910, %v7918
        %v7921 = vcombine.low %v5615, %v5623
        %v7923 = vunpack.c.l.s4 1983009808
        %v7924 = vunpack.c.0.s8 %v7923
        %v7925 = vlaneseq
        %v7926 = vshrl.u32 %v7925, 7
        %v7927 = vsub.s32 %v7924, %v7926
        %v7928 = vrot.slane %v7921, %v7927
        %v7929 = vcombine.low %v5619, %v5627
        %v7931 = vunpack.c.l.s4 1983009808
        %v7932 = vunpack.c.0.s8 %v7931
        %v7933 = vlaneseq
        %v7934 = vshrl.u32 %v7933, 7
        %v7935 = vsub.s32 %v7932, %v7934
        %v7936 = vrot.slane %v7929, %v7935
        %v7937 = vcombine.low %v5631, %v5639
        %v7939 = vunpack.c.l.s4 1983009808
        %v7940 = vunpack.c.0.s8 %v7939
        %v7941 = vlaneseq
        %v7942 = vshrl.u32 %v7941, 7
        %v7943 = vsub.s32 %v7940, %v7942
        %v7944 = vrot.slane %v7937, %v7943
        %v7945 = vcombine.low %v5635, %v5643
        %v7947 = vunpack.c.l.s4 1983009808
        %v7948 = vunpack.c.0.s8 %v7947
        %v7949 = vlaneseq
        %v7950 = vshrl.u32 %v7949, 7
        %v7951 = vsub.s32 %v7948, %v7950
        %v7952 = vrot.slane %v7945, %v7951
        %v7953 = vcombine.low %v7928, %v7936
        %v7955 = vunpack.c.l.s4 1934713408
        %v7956 = vunpack.c.0.s8 %v7955
        %v7957 = vlaneseq
        %v7958 = vshrl.u32 %v7957, 7
        %v7959 = vsub.s32 %v7956, %v7958
        %v7960 = vrot.slane %v7953, %v7959
        %v7961 = vcombine.low %v7944, %v7952
        %v7963 = vunpack.c.l.s4 1934713408
        %v7964 = vunpack.c.0.s8 %v7963
        %v7965 = vlaneseq
        %v7966 = vshrl.u32 %v7965, 7
        %v7967 = vsub.s32 %v7964, %v7966
        %v7968 = vrot.slane %v7961, %v7967
        %v7969 = vcombine.low %v7960, %v7968
        %v7970 = vcombine.high %v7960, %v7968
        %v7971 = vcombine.low %v5647, %v5655
        %v7973 = vunpack.c.l.s4 1983009808
        %v7974 = vunpack.c.0.s8 %v7973
        %v7975 = vlaneseq
        %v7976 = vshrl.u32 %v7975, 7
        %v7977 = vsub.s32 %v7974, %v7976
        %v7978 = vrot.slane %v7971, %v7977
        %v7979 = vcombine.low %v5651, %v5659
        %v7981 = vunpack.c.l.s4 1983009808
        %v7982 = vunpack.c.0.s8 %v7981
        %v7983 = vlaneseq
        %v7984 = vshrl.u32 %v7983, 7
        %v7985 = vsub.s32 %v7982, %v7984
        %v7986 = vrot.slane %v7979, %v7985
        %v7987 = vcombine.low %v5663, %v5671
        %v7989 = vunpack.c.l.s4 1983009808
        %v7990 = vunpack.c.0.s8 %v7989
        %v7991 = vlaneseq
        %v7992 = vshrl.u32 %v7991, 7
        %v7993 = vsub.s32 %v7990, %v7992
        %v7994 = vrot.slane %v7987, %v7993
        %v7995 = vcombine.low %v5667, %v5675
        %v7997 = vunpack.c.l.s4 1983009808
        %v7998 = vunpack.c.0.s8 %v7997
        %v7999 = vlaneseq
        %v8000 = vshrl.u32 %v7999, 7
        %v8001 = vsub.s32 %v7998, %v8000
        %v8002 = vrot.slane %v7995, %v8001
        %v8003 = vcombine.low %v7978, %v7986
        %v8005 = vunpack.c.l.s4 1934713408
        %v8006 = vunpack.c.0.s8 %v8005
        %v8007 = vlaneseq
        %v8008 = vshrl.u32 %v8007, 7
        %v8009 = vsub.s32 %v8006, %v8008
        %v8010 = vrot.slane %v8003, %v8009
        %v8011 = vcombine.low %v7994, %v8002
        %v8013 = vunpack.c.l.s4 1934713408
        %v8014 = vunpack.c.0.s8 %v8013
        %v8015 = vlaneseq
        %v8016 = vshrl.u32 %v8015, 7
        %v8017 = vsub.s32 %v8014, %v8016
        %v8018 = vrot.slane %v8011, %v8017
        %v8019 = vcombine.low %v8010, %v8018
        %v8020 = vcombine.high %v8010, %v8018
        %v8021 = vcombine.low %v5679, %v5687
        %v8023 = vunpack.c.l.s4 1983009808
        %v8024 = vunpack.c.0.s8 %v8023
        %v8025 = vlaneseq
        %v8026 = vshrl.u32 %v8025, 7
        %v8027 = vsub.s32 %v8024, %v8026
        %v8028 = vrot.slane %v8021, %v8027
        %v8029 = vcombine.low %v5683, %v5691
        %v8031 = vunpack.c.l.s4 1983009808
        %v8032 = vunpack.c.0.s8 %v8031
        %v8033 = vlaneseq
        %v8034 = vshrl.u32 %v8033, 7
        %v8035 = vsub.s32 %v8032, %v8034
        %v8036 = vrot.slane %v8029, %v8035
        %v8037 = vcombine.low %v5695, %v5703
        %v8039 = vunpack.c.l.s4 1983009808
        %v8040 = vunpack.c.0.s8 %v8039
        %v8041 = vlaneseq
        %v8042 = vshrl.u32 %v8041, 7
        %v8043 = vsub.s32 %v8040, %v8042
        %v8044 = vrot.slane %v8037, %v8043
        %v8045 = vcombine.low %v5699, %v5707
        %v8047 = vunpack.c.l.s4 1983009808
        %v8048 = vunpack.c.0.s8 %v8047
        %v8049 = vlaneseq
        %v8050 = vshrl.u32 %v8049, 7
        %v8051 = vsub.s32 %v8048, %v8050
        %v8052 = vrot.slane %v8045, %v8051
        %v8053 = vcombine.low %v8028, %v8036
        %v8055 = vunpack.c.l.s4 1934713408
        %v8056 = vunpack.c.0.s8 %v8055
        %v8057 = vlaneseq
        %v8058 = vshrl.u32 %v8057, 7
        %v8059 = vsub.s32 %v8056, %v8058
        %v8060 = vrot.slane %v8053, %v8059
        %v8061 = vcombine.low %v8044, %v8052
        %v8063 = vunpack.c.l.s4 1934713408
        %v8064 = vunpack.c.0.s8 %v8063
        %v8065 = vlaneseq
        %v8066 = vshrl.u32 %v8065, 7
        %v8067 = vsub.s32 %v8064, %v8066
        %v8068 = vrot.slane %v8061, %v8067
        %v8069 = vcombine.low %v8060, %v8068
        %v8070 = vcombine.high %v8060, %v8068
        %v8071 = vcombine.low %v5711, %v5719
        %v8073 = vunpack.c.l.s4 1983009808
        %v8074 = vunpack.c.0.s8 %v8073
        %v8075 = vlaneseq
        %v8076 = vshrl.u32 %v8075, 7
        %v8077 = vsub.s32 %v8074, %v8076
        %v8078 = vrot.slane %v8071, %v8077
        %v8079 = vcombine.low %v5715, %v5723
        %v8081 = vunpack.c.l.s4 1983009808
        %v8082 = vunpack.c.0.s8 %v8081
        %v8083 = vlaneseq
        %v8084 = vshrl.u32 %v8083, 7
        %v8085 = vsub.s32 %v8082, %v8084
        %v8086 = vrot.slane %v8079, %v8085
        %v8087 = vcombine.low %v5727, %v5735
        %v8089 = vunpack.c.l.s4 1983009808
        %v8090 = vunpack.c.0.s8 %v8089
        %v8091 = vlaneseq
        %v8092 = vshrl.u32 %v8091, 7
        %v8093 = vsub.s32 %v8090, %v8092
        %v8094 = vrot.slane %v8087, %v8093
        %v8095 = vcombine.low %v5731, %v5739
        %v8097 = vunpack.c.l.s4 1983009808
        %v8098 = vunpack.c.0.s8 %v8097
        %v8099 = vlaneseq
        %v8100 = vshrl.u32 %v8099, 7
        %v8101 = vsub.s32 %v8098, %v8100
        %v8102 = vrot.slane %v8095, %v8101
        %v8103 = vcombine.low %v8078, %v8086
        %v8105 = vunpack.c.l.s4 1934713408
        %v8106 = vunpack.c.0.s8 %v8105
        %v8107 = vlaneseq
        %v8108 = vshrl.u32 %v8107, 7
        %v8109 = vsub.s32 %v8106, %v8108
        %v8110 = vrot.slane %v8103, %v8109
        %v8111 = vcombine.low %v8094, %v8102
        %v8113 = vunpack.c.l.s4 1934713408
        %v8114 = vunpack.c.0.s8 %v8113
        %v8115 = vlaneseq
        %v8116 = vshrl.u32 %v8115, 7
        %v8117 = vsub.s32 %v8114, %v8116
        %v8118 = vrot.slane %v8111, %v8117
        %v8119 = vcombine.low %v8110, %v8118
        %v8120 = vcombine.high %v8110, %v8118
        %v8121 = vcombine.low %v5743, %v5751
        %v8123 = vunpack.c.l.s4 1983009808
        %v8124 = vunpack.c.0.s8 %v8123
        %v8125 = vlaneseq
        %v8126 = vshrl.u32 %v8125, 7
        %v8127 = vsub.s32 %v8124, %v8126
        %v8128 = vrot.slane %v8121, %v8127
        %v8129 = vcombine.low %v5747, %v5755
        %v8131 = vunpack.c.l.s4 1983009808
        %v8132 = vunpack.c.0.s8 %v8131
        %v8133 = vlaneseq
        %v8134 = vshrl.u32 %v8133, 7
        %v8135 = vsub.s32 %v8132, %v8134
        %v8136 = vrot.slane %v8129, %v8135
        %v8137 = vcombine.low %v5759, %v5767
        %v8139 = vunpack.c.l.s4 1983009808
        %v8140 = vunpack.c.0.s8 %v8139
        %v8141 = vlaneseq
        %v8142 = vshrl.u32 %v8141, 7
        %v8143 = vsub.s32 %v8140, %v8142
        %v8144 = vrot.slane %v8137, %v8143
        %v8145 = vcombine.low %v5763, %v5771
        %v8147 = vunpack.c.l.s4 1983009808
        %v8148 = vunpack.c.0.s8 %v8147
        %v8149 = vlaneseq
        %v8150 = vshrl.u32 %v8149, 7
        %v8151 = vsub.s32 %v8148, %v8150
        %v8152 = vrot.slane %v8145, %v8151
        %v8153 = vcombine.low %v8128, %v8136
        %v8155 = vunpack.c.l.s4 1934713408
        %v8156 = vunpack.c.0.s8 %v8155
        %v8157 = vlaneseq
        %v8158 = vshrl.u32 %v8157, 7
        %v8159 = vsub.s32 %v8156, %v8158
        %v8160 = vrot.slane %v8153, %v8159
        %v8161 = vcombine.low %v8144, %v8152
        %v8163 = vunpack.c.l.s4 1934713408
        %v8164 = vunpack.c.0.s8 %v8163
        %v8165 = vlaneseq
        %v8166 = vshrl.u32 %v8165, 7
        %v8167 = vsub.s32 %v8164, %v8166
        %v8168 = vrot.slane %v8161, %v8167
        %v8169 = vcombine.low %v8160, %v8168
        %v8170 = vcombine.high %v8160, %v8168
        %v8171 = vcombine.low %v5775, %v5783
        %v8173 = vunpack.c.l.s4 1983009808
        %v8174 = vunpack.c.0.s8 %v8173
        %v8175 = vlaneseq
        %v8176 = vshrl.u32 %v8175, 7
        %v8177 = vsub.s32 %v8174, %v8176
        %v8178 = vrot.slane %v8171, %v8177
        %v8179 = vcombine.low %v5779, %v5787
        %v8181 = vunpack.c.l.s4 1983009808
        %v8182 = vunpack.c.0.s8 %v8181
        %v8183 = vlaneseq
        %v8184 = vshrl.u32 %v8183, 7
        %v8185 = vsub.s32 %v8182, %v8184
        %v8186 = vrot.slane %v8179, %v8185
        %v8187 = vcombine.low %v5791, %v5799
        %v8189 = vunpack.c.l.s4 1983009808
        %v8190 = vunpack.c.0.s8 %v8189
        %v8191 = vlaneseq
        %v8192 = vshrl.u32 %v8191, 7
        %v8193 = vsub.s32 %v8190, %v8192
        %v8194 = vrot.slane %v8187, %v8193
        %v8195 = vcombine.low %v5795, %v5803
        %v8197 = vunpack.c.l.s4 1983009808
        %v8198 = vunpack.c.0.s8 %v8197
        %v8199 = vlaneseq
        %v8200 = vshrl.u32 %v8199, 7
        %v8201 = vsub.s32 %v8198, %v8200
        %v8202 = vrot.slane %v8195, %v8201
        %v8203 = vcombine.low %v8178, %v8186
        %v8205 = vunpack.c.l.s4 1934713408
        %v8206 = vunpack.c.0.s8 %v8205
        %v8207 = vlaneseq
        %v8208 = vshrl.u32 %v8207, 7
        %v8209 = vsub.s32 %v8206, %v8208
        %v8210 = vrot.slane %v8203, %v8209
        %v8211 = vcombine.low %v8194, %v8202
        %v8213 = vunpack.c.l.s4 1934713408
        %v8214 = vunpack.c.0.s8 %v8213
        %v8215 = vlaneseq
        %v8216 = vshrl.u32 %v8215, 7
        %v8217 = vsub.s32 %v8214, %v8216
        %v8218 = vrot.slane %v8211, %v8217
        %v8219 = vcombine.low %v8210, %v8218
        %v8220 = vcombine.high %v8210, %v8218
        %v8221 = vcombine.low %v5807, %v5815
        %v8223 = vunpack.c.l.s4 1983009808
        %v8224 = vunpack.c.0.s8 %v8223
        %v8225 = vlaneseq
        %v8226 = vshrl.u32 %v8225, 7
        %v8227 = vsub.s32 %v8224, %v8226
        %v8228 = vrot.slane %v8221, %v8227
        %v8229 = vcombine.low %v5811, %v5819
        %v8231 = vunpack.c.l.s4 1983009808
        %v8232 = vunpack.c.0.s8 %v8231
        %v8233 = vlaneseq
        %v8234 = vshrl.u32 %v8233, 7
        %v8235 = vsub.s32 %v8232, %v8234
        %v8236 = vrot.slane %v8229, %v8235
        %v8237 = vcombine.low %v5823, %v5831
        %v8239 = vunpack.c.l.s4 1983009808
        %v8240 = vunpack.c.0.s8 %v8239
        %v8241 = vlaneseq
        %v8242 = vshrl.u32 %v8241, 7
        %v8243 = vsub.s32 %v8240, %v8242
        %v8244 = vrot.slane %v8237, %v8243
        %v8245 = vcombine.low %v5827, %v5835
        %v8247 = vunpack.c.l.s4 1983009808
        %v8248 = vunpack.c.0.s8 %v8247
        %v8249 = vlaneseq
        %v8250 = vshrl.u32 %v8249, 7
        %v8251 = vsub.s32 %v8248, %v8250
        %v8252 = vrot.slane %v8245, %v8251
        %v8253 = vcombine.low %v8228, %v8236
        %v8255 = vunpack.c.l.s4 1934713408
        %v8256 = vunpack.c.0.s8 %v8255
        %v8257 = vlaneseq
        %v8258 = vshrl.u32 %v8257, 7
        %v8259 = vsub.s32 %v8256, %v8258
        %v8260 = vrot.slane %v8253, %v8259
        %v8261 = vcombine.low %v8244, %v8252
        %v8263 = vunpack.c.l.s4 1934713408
        %v8264 = vunpack.c.0.s8 %v8263
        %v8265 = vlaneseq
        %v8266 = vshrl.u32 %v8265, 7
        %v8267 = vsub.s32 %v8264, %v8266
        %v8268 = vrot.slane %v8261, %v8267
        %v8269 = vcombine.low %v8260, %v8268
        %v8270 = vcombine.high %v8260, %v8268
        %v8271 = vcombine.low %v5839, %v5847
        %v8273 = vunpack.c.l.s4 1983009808
        %v8274 = vunpack.c.0.s8 %v8273
        %v8275 = vlaneseq
        %v8276 = vshrl.u32 %v8275, 7
        %v8277 = vsub.s32 %v8274, %v8276
        %v8278 = vrot.slane %v8271, %v8277
        %v8279 = vcombine.low %v5843, %v5851
        %v8281 = vunpack.c.l.s4 1983009808
        %v8282 = vunpack.c.0.s8 %v8281
        %v8283 = vlaneseq
        %v8284 = vshrl.u32 %v8283, 7
        %v8285 = vsub.s32 %v8282, %v8284
        %v8286 = vrot.slane %v8279, %v8285
        %v8287 = vcombine.low %v5855, %v5863
        %v8289 = vunpack.c.l.s4 1983009808
        %v8290 = vunpack.c.0.s8 %v8289
        %v8291 = vlaneseq
        %v8292 = vshrl.u32 %v8291, 7
        %v8293 = vsub.s32 %v8290, %v8292
        %v8294 = vrot.slane %v8287, %v8293
        %v8295 = vcombine.low %v5859, %v5867
        %v8297 = vunpack.c.l.s4 1983009808
        %v8298 = vunpack.c.0.s8 %v8297
        %v8299 = vlaneseq
        %v8300 = vshrl.u32 %v8299, 7
        %v8301 = vsub.s32 %v8298, %v8300
        %v8302 = vrot.slane %v8295, %v8301
        %v8303 = vcombine.low %v8278, %v8286
        %v8305 = vunpack.c.l.s4 1934713408
        %v8306 = vunpack.c.0.s8 %v8305
        %v8307 = vlaneseq
        %v8308 = vshrl.u32 %v8307, 7
        %v8309 = vsub.s32 %v8306, %v8308
        %v8310 = vrot.slane %v8303, %v8309
        %v8311 = vcombine.low %v8294, %v8302
        %v8313 = vunpack.c.l.s4 1934713408
        %v8314 = vunpack.c.0.s8 %v8313
        %v8315 = vlaneseq
        %v8316 = vshrl.u32 %v8315, 7
        %v8317 = vsub.s32 %v8314, %v8316
        %v8318 = vrot.slane %v8311, %v8317
        %v8319 = vcombine.low %v8310, %v8318
        %v8320 = vcombine.high %v8310, %v8318
        %v8321 = vcombine.low %v5871, %v5879
        %v8323 = vunpack.c.l.s4 1983009808
        %v8324 = vunpack.c.0.s8 %v8323
        %v8325 = vlaneseq
        %v8326 = vshrl.u32 %v8325, 7
        %v8327 = vsub.s32 %v8324, %v8326
        %v8328 = vrot.slane %v8321, %v8327
        %v8329 = vcombine.low %v5875, %v5883
        %v8331 = vunpack.c.l.s4 1983009808
        %v8332 = vunpack.c.0.s8 %v8331
        %v8333 = vlaneseq
        %v8334 = vshrl.u32 %v8333, 7
        %v8335 = vsub.s32 %v8332, %v8334
        %v8336 = vrot.slane %v8329, %v8335
        %v8337 = vcombine.low %v5887, %v5895
        %v8339 = vunpack.c.l.s4 1983009808
        %v8340 = vunpack.c.0.s8 %v8339
        %v8341 = vlaneseq
        %v8342 = vshrl.u32 %v8341, 7
        %v8343 = vsub.s32 %v8340, %v8342
        %v8344 = vrot.slane %v8337, %v8343
        %v8345 = vcombine.low %v5891, %v5899
        %v8347 = vunpack.c.l.s4 1983009808
        %v8348 = vunpack.c.0.s8 %v8347
        %v8349 = vlaneseq
        %v8350 = vshrl.u32 %v8349, 7
        %v8351 = vsub.s32 %v8348, %v8350
        %v8352 = vrot.slane %v8345, %v8351
        %v8353 = vcombine.low %v8328, %v8336
        %v8355 = vunpack.c.l.s4 1934713408
        %v8356 = vunpack.c.0.s8 %v8355
        %v8357 = vlaneseq
        %v8358 = vshrl.u32 %v8357, 7
        %v8359 = vsub.s32 %v8356, %v8358
        %v8360 = vrot.slane %v8353, %v8359
        %v8361 = vcombine.low %v8344, %v8352
        %v8363 = vunpack.c.l.s4 1934713408
        %v8364 = vunpack.c.0.s8 %v8363
        %v8365 = vlaneseq
        %v8366 = vshrl.u32 %v8365, 7
        %v8367 = vsub.s32 %v8364, %v8366
        %v8368 = vrot.slane %v8361, %v8367
        %v8369 = vcombine.low %v8360, %v8368
        %v8370 = vcombine.high %v8360, %v8368
        %v8371 = vcombine.low %v5903, %v5911
        %v8373 = vunpack.c.l.s4 1983009808
        %v8374 = vunpack.c.0.s8 %v8373
        %v8375 = vlaneseq
        %v8376 = vshrl.u32 %v8375, 7
        %v8377 = vsub.s32 %v8374, %v8376
        %v8378 = vrot.slane %v8371, %v8377
        %v8379 = vcombine.low %v5907, %v5915
        %v8381 = vunpack.c.l.s4 1983009808
        %v8382 = vunpack.c.0.s8 %v8381
        %v8383 = vlaneseq
        %v8384 = vshrl.u32 %v8383, 7
        %v8385 = vsub.s32 %v8382, %v8384
        %v8386 = vrot.slane %v8379, %v8385
        %v8387 = vcombine.low %v5919, %v5927
        %v8389 = vunpack.c.l.s4 1983009808
        %v8390 = vunpack.c.0.s8 %v8389
        %v8391 = vlaneseq
        %v8392 = vshrl.u32 %v8391, 7
        %v8393 = vsub.s32 %v8390, %v8392
        %v8394 = vrot.slane %v8387, %v8393
        %v8395 = vcombine.low %v5923, %v5931
        %v8397 = vunpack.c.l.s4 1983009808
        %v8398 = vunpack.c.0.s8 %v8397
        %v8399 = vlaneseq
        %v8400 = vshrl.u32 %v8399, 7
        %v8401 = vsub.s32 %v8398, %v8400
        %v8402 = vrot.slane %v8395, %v8401
        %v8403 = vcombine.low %v8378, %v8386
        %v8405 = vunpack.c.l.s4 1934713408
        %v8406 = vunpack.c.0.s8 %v8405
        %v8407 = vlaneseq
        %v8408 = vshrl.u32 %v8407, 7
        %v8409 = vsub.s32 %v8406, %v8408
        %v8410 = vrot.slane %v8403, %v8409
        %v8411 = vcombine.low %v8394, %v8402
        %v8413 = vunpack.c.l.s4 1934713408
        %v8414 = vunpack.c.0.s8 %v8413
        %v8415 = vlaneseq
        %v8416 = vshrl.u32 %v8415, 7
        %v8417 = vsub.s32 %v8414, %v8416
        %v8418 = vrot.slane %v8411, %v8417
        %v8419 = vcombine.low %v8410, %v8418
        %v8420 = vcombine.high %v8410, %v8418
        %v8421 = vcombine.low %v5935, %v5943
        %v8423 = vunpack.c.l.s4 1983009808
        %v8424 = vunpack.c.0.s8 %v8423
        %v8425 = vlaneseq
        %v8426 = vshrl.u32 %v8425, 7
        %v8427 = vsub.s32 %v8424, %v8426
        %v8428 = vrot.slane %v8421, %v8427
        %v8429 = vcombine.low %v5939, %v5947
        %v8431 = vunpack.c.l.s4 1983009808
        %v8432 = vunpack.c.0.s8 %v8431
        %v8433 = vlaneseq
        %v8434 = vshrl.u32 %v8433, 7
        %v8435 = vsub.s32 %v8432, %v8434
        %v8436 = vrot.slane %v8429, %v8435
        %v8437 = vcombine.low %v5951, %v5959
        %v8439 = vunpack.c.l.s4 1983009808
        %v8440 = vunpack.c.0.s8 %v8439
        %v8441 = vlaneseq
        %v8442 = vshrl.u32 %v8441, 7
        %v8443 = vsub.s32 %v8440, %v8442
        %v8444 = vrot.slane %v8437, %v8443
        %v8445 = vcombine.low %v5955, %v5963
        %v8447 = vunpack.c.l.s4 1983009808
        %v8448 = vunpack.c.0.s8 %v8447
        %v8449 = vlaneseq
        %v8450 = vshrl.u32 %v8449, 7
        %v8451 = vsub.s32 %v8448, %v8450
        %v8452 = vrot.slane %v8445, %v8451
        %v8453 = vcombine.low %v8428, %v8436
        %v8455 = vunpack.c.l.s4 1934713408
        %v8456 = vunpack.c.0.s8 %v8455
        %v8457 = vlaneseq
        %v8458 = vshrl.u32 %v8457, 7
        %v8459 = vsub.s32 %v8456, %v8458
        %v8460 = vrot.slane %v8453, %v8459
        %v8461 = vcombine.low %v8444, %v8452
        %v8463 = vunpack.c.l.s4 1934713408
        %v8464 = vunpack.c.0.s8 %v8463
        %v8465 = vlaneseq
        %v8466 = vshrl.u32 %v8465, 7
        %v8467 = vsub.s32 %v8464, %v8466
        %v8468 = vrot.slane %v8461, %v8467
        %v8469 = vcombine.low %v8460, %v8468
        %v8470 = vcombine.high %v8460, %v8468
        %v8471 = vcombine.low %v5967, %v5975
        %v8473 = vunpack.c.l.s4 1983009808
        %v8474 = vunpack.c.0.s8 %v8473
        %v8475 = vlaneseq
        %v8476 = vshrl.u32 %v8475, 7
        %v8477 = vsub.s32 %v8474, %v8476
        %v8478 = vrot.slane %v8471, %v8477
        %v8479 = vcombine.low %v5971, %v5979
        %v8481 = vunpack.c.l.s4 1983009808
        %v8482 = vunpack.c.0.s8 %v8481
        %v8483 = vlaneseq
        %v8484 = vshrl.u32 %v8483, 7
        %v8485 = vsub.s32 %v8482, %v8484
        %v8486 = vrot.slane %v8479, %v8485
        %v8487 = vcombine.low %v5983, %v5991
        %v8489 = vunpack.c.l.s4 1983009808
        %v8490 = vunpack.c.0.s8 %v8489
        %v8491 = vlaneseq
        %v8492 = vshrl.u32 %v8491, 7
        %v8493 = vsub.s32 %v8490, %v8492
        %v8494 = vrot.slane %v8487, %v8493
        %v8495 = vcombine.low %v5987, %v5995
        %v8497 = vunpack.c.l.s4 1983009808
        %v8498 = vunpack.c.0.s8 %v8497
        %v8499 = vlaneseq
        %v8500 = vshrl.u32 %v8499, 7
        %v8501 = vsub.s32 %v8498, %v8500
        %v8502 = vrot.slane %v8495, %v8501
        %v8503 = vcombine.low %v8478, %v8486
        %v8505 = vunpack.c.l.s4 1934713408
        %v8506 = vunpack.c.0.s8 %v8505
        %v8507 = vlaneseq
        %v8508 = vshrl.u32 %v8507, 7
        %v8509 = vsub.s32 %v8506, %v8508
        %v8510 = vrot.slane %v8503, %v8509
        %v8511 = vcombine.low %v8494, %v8502
        %v8513 = vunpack.c.l.s4 1934713408
        %v8514 = vunpack.c.0.s8 %v8513
        %v8515 = vlaneseq
        %v8516 = vshrl.u32 %v8515, 7
        %v8517 = vsub.s32 %v8514, %v8516
        %v8518 = vrot.slane %v8511, %v8517
        %v8519 = vcombine.low %v8510, %v8518
        %v8520 = vcombine.high %v8510, %v8518
        %v8521 = vcombine.low %v5999, %v6007
        %v8523 = vunpack.c.l.s4 1983009808
        %v8524 = vunpack.c.0.s8 %v8523
        %v8525 = vlaneseq
        %v8526 = vshrl.u32 %v8525, 7
        %v8527 = vsub.s32 %v8524, %v8526
        %v8528 = vrot.slane %v8521, %v8527
        %v8529 = vcombine.low %v6003, %v6011
        %v8531 = vunpack.c.l.s4 1983009808
        %v8532 = vunpack.c.0.s8 %v8531
        %v8533 = vlaneseq
        %v8534 = vshrl.u32 %v8533, 7
        %v8535 = vsub.s32 %v8532, %v8534
        %v8536 = vrot.slane %v8529, %v8535
        %v8537 = vcombine.low %v6015, %v6023
        %v8539 = vunpack.c.l.s4 1983009808
        %v8540 = vunpack.c.0.s8 %v8539
        %v8541 = vlaneseq
        %v8542 = vshrl.u32 %v8541, 7
        %v8543 = vsub.s32 %v8540, %v8542
        %v8544 = vrot.slane %v8537, %v8543
        %v8545 = vcombine.low %v6019, %v6027
        %v8547 = vunpack.c.l.s4 1983009808
        %v8548 = vunpack.c.0.s8 %v8547
        %v8549 = vlaneseq
        %v8550 = vshrl.u32 %v8549, 7
        %v8551 = vsub.s32 %v8548, %v8550
        %v8552 = vrot.slane %v8545, %v8551
        %v8553 = vcombine.low %v8528, %v8536
        %v8555 = vunpack.c.l.s4 1934713408
        %v8556 = vunpack.c.0.s8 %v8555
        %v8557 = vlaneseq
        %v8558 = vshrl.u32 %v8557, 7
        %v8559 = vsub.s32 %v8556, %v8558
        %v8560 = vrot.slane %v8553, %v8559
        %v8561 = vcombine.low %v8544, %v8552
        %v8563 = vunpack.c.l.s4 1934713408
        %v8564 = vunpack.c.0.s8 %v8563
        %v8565 = vlaneseq
        %v8566 = vshrl.u32 %v8565, 7
        %v8567 = vsub.s32 %v8564, %v8566
        %v8568 = vrot.slane %v8561, %v8567
        %v8569 = vcombine.low %v8560, %v8568
        %v8570 = vcombine.high %v8560, %v8568
        %v8571 = vcombine.low %v6031, %v6039
        %v8573 = vunpack.c.l.s4 1983009808
        %v8574 = vunpack.c.0.s8 %v8573
        %v8575 = vlaneseq
        %v8576 = vshrl.u32 %v8575, 7
        %v8577 = vsub.s32 %v8574, %v8576
        %v8578 = vrot.slane %v8571, %v8577
        %v8579 = vcombine.low %v6035, %v6043
        %v8581 = vunpack.c.l.s4 1983009808
        %v8582 = vunpack.c.0.s8 %v8581
        %v8583 = vlaneseq
        %v8584 = vshrl.u32 %v8583, 7
        %v8585 = vsub.s32 %v8582, %v8584
        %v8586 = vrot.slane %v8579, %v8585
        %v8587 = vcombine.low %v6047, %v6055
        %v8589 = vunpack.c.l.s4 1983009808
        %v8590 = vunpack.c.0.s8 %v8589
        %v8591 = vlaneseq
        %v8592 = vshrl.u32 %v8591, 7
        %v8593 = vsub.s32 %v8590, %v8592
        %v8594 = vrot.slane %v8587, %v8593
        %v8595 = vcombine.low %v6051, %v6059
        %v8597 = vunpack.c.l.s4 1983009808
        %v8598 = vunpack.c.0.s8 %v8597
        %v8599 = vlaneseq
        %v8600 = vshrl.u32 %v8599, 7
        %v8601 = vsub.s32 %v8598, %v8600
        %v8602 = vrot.slane %v8595, %v8601
        %v8603 = vcombine.low %v8578, %v8586
        %v8605 = vunpack.c.l.s4 1934713408
        %v8606 = vunpack.c.0.s8 %v8605
        %v8607 = vlaneseq
        %v8608 = vshrl.u32 %v8607, 7
        %v8609 = vsub.s32 %v8606, %v8608
        %v8610 = vrot.slane %v8603, %v8609
        %v8611 = vcombine.low %v8594, %v8602
        %v8613 = vunpack.c.l.s4 1934713408
        %v8614 = vunpack.c.0.s8 %v8613
        %v8615 = vlaneseq
        %v8616 = vshrl.u32 %v8615, 7
        %v8617 = vsub.s32 %v8614, %v8616
        %v8618 = vrot.slane %v8611, %v8617
        %v8619 = vcombine.low %v8610, %v8618
        %v8620 = vcombine.high %v8610, %v8618
        %8637 = vrot.lane.b32.xlu0 %v7870, 23
        %v8638 = vpop.permute.xlu0 %8637
        %8639 = vrot.lane.b32.xlu0 %v7920, 23
        %v8640 = vpop.permute.xlu0 %8639
        %8641 = vrot.lane.b32.xlu0 %v7970, 23
        %v8642 = vpop.permute.xlu0 %8641
        %8643 = vrot.lane.b32.xlu0 %v8020, 23
        %v8644 = vpop.permute.xlu0 %8643
        %8645 = vrot.lane.b32.xlu0 %v8070, 23
        %v8646 = vpop.permute.xlu0 %8645
        %8647 = vrot.lane.b32.xlu0 %v8120, 23
        %v8648 = vpop.permute.xlu0 %8647
        %8649 = vrot.lane.b32.xlu0 %v8170, 23
        %v8650 = vpop.permute.xlu0 %8649
        %8651 = vrot.lane.b32.xlu0 %v8220, 23
        %v8652 = vpop.permute.xlu0 %8651
        %8653 = vrot.lane.b32.xlu0 %v8270, 23
        %v8654 = vpop.permute.xlu0 %8653
        %8655 = vrot.lane.b32.xlu0 %v8320, 23
        %v8656 = vpop.permute.xlu0 %8655
        %8657 = vrot.lane.b32.xlu0 %v8370, 23
        %v8658 = vpop.permute.xlu0 %8657
        %8659 = vrot.lane.b32.xlu0 %v8420, 23
        %v8660 = vpop.permute.xlu0 %8659
        %8661 = vrot.lane.b32.xlu0 %v8470, 23
        %v8662 = vpop.permute.xlu0 %8661
        %8663 = vrot.lane.b32.xlu0 %v8520, 23
        %v8664 = vpop.permute.xlu0 %8663
        %8665 = vrot.lane.b32.xlu0 %v8570, 23
        %v8666 = vpop.permute.xlu0 %8665
        %8667 = vrot.lane.b32.xlu0 %v8620, 23
        %v8668 = vpop.permute.xlu0 %8667
        %v8685 = vsel %vm7756, %v7869, %v8638
        %v8686 = vsel %vm7756, %v7919, %v8640
        %v8687 = vsel %vm7756, %v7969, %v8642
        %v8688 = vsel %vm7756, %v8019, %v8644
        %v8689 = vsel %vm7756, %v8069, %v8646
        %v8690 = vsel %vm7756, %v8119, %v8648
        %v8691 = vsel %vm7756, %v8169, %v8650
        %v8692 = vsel %vm7756, %v8219, %v8652
        %v8693 = vsel %vm7756, %v8269, %v8654
        %v8694 = vsel %vm7756, %v8319, %v8656
        %v8695 = vsel %vm7756, %v8369, %v8658
        %v8696 = vsel %vm7756, %v8419, %v8660
        %v8697 = vsel %vm7756, %v8469, %v8662
        %v8698 = vsel %vm7756, %v8519, %v8664
        %v8699 = vsel %vm7756, %v8569, %v8666
        %v8700 = vsel %vm7756, %v8619, %v8668
        %v8717 = vunpack.c.l.b16 %v5464
        %v8718 = vunpack.c.h.b16 %v5464
        %v8719 = vunpack.c.l.b16 %v5465
        %v8720 = vunpack.c.h.b16 %v5465
        %v8721 = vunpack.c.l.b16 %v5466
        %v8722 = vunpack.c.h.b16 %v5466
        %v8723 = vunpack.c.l.b16 %v5467
        %v8724 = vunpack.c.h.b16 %v5467
        %v8725 = vunpack.c.l.b16 %v5468
        %v8726 = vunpack.c.h.b16 %v5468
        %v8727 = vunpack.c.l.b16 %v5469
        %v8728 = vunpack.c.h.b16 %v5469
        %v8729 = vunpack.c.l.b16 %v5470
        %v8730 = vunpack.c.h.b16 %v5470
        %v8731 = vunpack.c.l.b16 %v5471
        %v8732 = vunpack.c.h.b16 %v5471
        %v8733 = vunpack.c.l.b16 %v5472
        %v8734 = vunpack.c.h.b16 %v5472
        %v8735 = vunpack.c.l.b16 %v5473
        %v8736 = vunpack.c.h.b16 %v5473
        %v8737 = vunpack.c.l.b16 %v5474
        %v8738 = vunpack.c.h.b16 %v5474
        %v8739 = vunpack.c.l.b16 %v5475
        %v8740 = vunpack.c.h.b16 %v5475
        %v8741 = vunpack.c.l.b16 %v5476
        %v8742 = vunpack.c.h.b16 %v5476
        %v8743 = vunpack.c.l.b16 %v5477
        %v8744 = vunpack.c.h.b16 %v5477
        %v8745 = vunpack.c.l.b16 %v5478
        %v8746 = vunpack.c.h.b16 %v5478
        %v8747 = vunpack.c.l.b16 %v5479
        %v8748 = vunpack.c.h.b16 %v5479
        %v8749 = vpack.c.b16 %v8719, %v8717
        %v8750 = vpack.c.b16 %v8720, %v8718
        %v8751 = vpack.c.b16 %v8723, %v8721
        %v8752 = vpack.c.b16 %v8724, %v8722
        %v8753 = vpack.c.b16 %v8727, %v8725
        %v8754 = vpack.c.b16 %v8728, %v8726
        %v8755 = vpack.c.b16 %v8731, %v8729
        %v8756 = vpack.c.b16 %v8732, %v8730
        %v8757 = vpack.c.b16 %v8735, %v8733
        %v8758 = vpack.c.b16 %v8736, %v8734
        %v8759 = vpack.c.b16 %v8739, %v8737
        %v8760 = vpack.c.b16 %v8740, %v8738
        %v8761 = vpack.c.b16 %v8743, %v8741
        %v8762 = vpack.c.b16 %v8744, %v8742
        %v8763 = vpack.c.b16 %v8747, %v8745
        %v8764 = vpack.c.b16 %v8748, %v8746
        %8781 = vmatprep.subr.bf16.mxu0 0
        %8782 = vmatpush1.bf16.msra.mxu0 %v7759
        %8783 = vmatprep.subr.bf16.mxu0 0
        %8784 = vmatpush1.bf16.msra.mxu0 %v7763
        %8785 = vmatprep.subr.bf16.mxu0 0
        %8786 = vmatpush1.bf16.msra.mxu0 %v7767
        %8787 = vmatprep.subr.bf16.mxu0 0
        %8788 = vmatpush1.bf16.msra.mxu0 %v7771
        %8789 = vmatprep.subr.bf16.mxu0 0
        %8790 = vmatpush1.bf16.msra.mxu0 %v7775
        %8791 = vmatprep.subr.bf16.mxu0 0
        %8792 = vmatpush1.bf16.msra.mxu0 %v7779
        %8793 = vmatprep.subr.bf16.mxu0 0
        %8794 = vmatpush1.bf16.msra.mxu0 %v7783
        %8795 = vmatprep.subr.bf16.mxu0 0
        %8796 = vmatpush1.bf16.msra.mxu0 %v7787
        %8797 = vmatprep.subr.bf16.mxu0 0
        %8798 = vmatpush1.bf16.msra.mxu0 %v7791
        %8799 = vmatprep.subr.bf16.mxu0 0
        %8800 = vmatpush1.bf16.msra.mxu0 %v7795
        %8801 = vmatprep.subr.bf16.mxu0 0
        %8802 = vmatpush1.bf16.msra.mxu0 %v7799
        %8803 = vmatprep.subr.bf16.mxu0 0
        %8804 = vmatpush1.bf16.msra.mxu0 %v7803
        %8805 = vmatprep.subr.bf16.mxu0 0
        %8806 = vmatpush1.bf16.msra.mxu0 %v7807
        %8807 = vmatprep.subr.bf16.mxu0 0
        %8808 = vmatpush1.bf16.msra.mxu0 %v7811
        %8809 = vmatprep.subr.bf16.mxu0 0
        %8810 = vmatpush1.bf16.msra.mxu0 %v7815
        %8811 = vmatprep.subr.bf16.mxu0 0
        %8812 = vmatpush1.bf16.msra.mxu0 %v7819
        %8813 = vmatprep.mubr.bf16.mxu0 %v8750
        %8814 = vmatmul.mubr.bf16.gmra.mrb[0].mxu0 %v8749
        %v8815 = vpop.f32.mrb[0].mxu0
        %v8816 = vadd.f32 %v8685, %v8815
        %v8817 = vpop.f32.mrb[0].mxu0
        %v8818 = vpop.f32.mrb[0].mxu0
        %v8819 = vadd.f32 %v8686, %v8818
        %v8820 = vpop.f32.mrb[0].mxu0
        %8821 = vmatprep.mubr.bf16.mxu0 %v8752
        %8822 = vmatmul.mubr.bf16.gmra.mrb[0].mxu0 %v8751
        %v8823 = vpop.f32.mrb[0].mxu0
        %v8824 = vadd.f32 %v8687, %v8823
        %v8825 = vpop.f32.mrb[0].mxu0
        %v8826 = vpop.f32.mrb[0].mxu0
        %v8827 = vadd.f32 %v8688, %v8826
        %v8828 = vpop.f32.mrb[0].mxu0
        %8829 = vmatprep.mubr.bf16.mxu0 %v8754
        %8830 = vmatmul.mubr.bf16.gmra.mrb[0].mxu0 %v8753
        %v8831 = vpop.f32.mrb[0].mxu0
        %v8832 = vadd.f32 %v8689, %v8831
        %v8833 = vpop.f32.mrb[0].mxu0
        %v8834 = vpop.f32.mrb[0].mxu0
        %v8835 = vadd.f32 %v8690, %v8834
        %v8836 = vpop.f32.mrb[0].mxu0
        %8837 = vmatprep.mubr.bf16.mxu0 %v8756
        %8838 = vmatmul.mubr.bf16.gmra.mrb[0].mxu0 %v8755
        %v8839 = vpop.f32.mrb[0].mxu0
        %v8840 = vadd.f32 %v8691, %v8839
        %v8841 = vpop.f32.mrb[0].mxu0
        %v8842 = vpop.f32.mrb[0].mxu0
        %v8843 = vadd.f32 %v8692, %v8842
        %v8844 = vpop.f32.mrb[0].mxu0
        %8845 = vmatprep.mubr.bf16.mxu0 %v8758
        %8846 = vmatmul.mubr.bf16.gmra.mrb[0].mxu0 %v8757
        %v8847 = vpop.f32.mrb[0].mxu0
        %v8848 = vadd.f32 %v8693, %v8847
        %v8849 = vpop.f32.mrb[0].mxu0
        %v8850 = vpop.f32.mrb[0].mxu0
        %v8851 = vadd.f32 %v8694, %v8850
        %v8852 = vpop.f32.mrb[0].mxu0
        %8853 = vmatprep.mubr.bf16.mxu0 %v8760
        %8854 = vmatmul.mubr.bf16.gmra.mrb[0].mxu0 %v8759
        %v8855 = vpop.f32.mrb[0].mxu0
        %v8856 = vadd.f32 %v8695, %v8855
        %v8857 = vpop.f32.mrb[0].mxu0
        %v8858 = vpop.f32.mrb[0].mxu0
        %v8859 = vadd.f32 %v8696, %v8858
        %v8860 = vpop.f32.mrb[0].mxu0
        %8861 = vmatprep.mubr.bf16.mxu0 %v8762
        %8862 = vmatmul.mubr.bf16.gmra.mrb[0].mxu0 %v8761
        %v8863 = vpop.f32.mrb[0].mxu0
        %v8864 = vadd.f32 %v8697, %v8863
        %v8865 = vpop.f32.mrb[0].mxu0
        %v8866 = vpop.f32.mrb[0].mxu0
        %v8867 = vadd.f32 %v8698, %v8866
        %v8868 = vpop.f32.mrb[0].mxu0
        %8869 = vmatprep.mubr.bf16.mxu0 %v8764
        %8870 = vmatmul.mubr.bf16.gmra.mrb[0].mxu0 %v8763
        %v8871 = vpop.f32.mrb[0].mxu0
        %v8872 = vadd.f32 %v8699, %v8871
        %v8873 = vpop.f32.mrb[0].mxu0
        %v8874 = vpop.f32.mrb[0].mxu0
        %v8875 = vadd.f32 %v8700, %v8874
        %v8876 = vpop.f32.mrb[0].mxu0
        %8877 = vdwg.mxu0
        %8894 = vrot.lane.b32.xlu0 %v8816, 105
        %v8895 = vpop.permute.xlu0 %8894
        %8896 = vrot.lane.b32.xlu0 %v8819, 105
        %v8897 = vpop.permute.xlu0 %8896
        %8898 = vrot.lane.b32.xlu0 %v8824, 105
        %v8899 = vpop.permute.xlu0 %8898
        %8900 = vrot.lane.b32.xlu0 %v8827, 105
        %v8901 = vpop.permute.xlu0 %8900
        %8902 = vrot.lane.b32.xlu0 %v8832, 105
        %v8903 = vpop.permute.xlu0 %8902
        %8904 = vrot.lane.b32.xlu0 %v8835, 105
        %v8905 = vpop.permute.xlu0 %8904
        %8906 = vrot.lane.b32.xlu0 %v8840, 105
        %v8907 = vpop.permute.xlu0 %8906
        %8908 = vrot.lane.b32.xlu0 %v8843, 105
        %v8909 = vpop.permute.xlu0 %8908
        %8910 = vrot.lane.b32.xlu0 %v8848, 105
        %v8911 = vpop.permute.xlu0 %8910
        %8912 = vrot.lane.b32.xlu0 %v8851, 105
        %v8913 = vpop.permute.xlu0 %8912
        %8914 = vrot.lane.b32.xlu0 %v8856, 105
        %v8915 = vpop.permute.xlu0 %8914
        %8916 = vrot.lane.b32.xlu0 %v8859, 105
        %v8917 = vpop.permute.xlu0 %8916
        %8918 = vrot.lane.b32.xlu0 %v8864, 105
        %v8919 = vpop.permute.xlu0 %8918
        %8920 = vrot.lane.b32.xlu0 %v8867, 105
        %v8921 = vpop.permute.xlu0 %8920
        %8922 = vrot.lane.b32.xlu0 %v8872, 105
        %v8923 = vpop.permute.xlu0 %8922
        %8924 = vrot.lane.b32.xlu0 %v8875, 105
        %v8925 = vpop.permute.xlu0 %8924
        %v8942 = vcombine.high %v8816, 0.0
        %v8944 = vunpack.c.l.s4 1983009808
        %v8945 = vunpack.c.0.s8 %v8944
        %v8946 = vlaneseq
        %v8947 = vshrl.u32 %v8946, 7
        %v8948 = vsub.s32 %v8945, %v8947
        %v8949 = vrot.slane %v8816, %v8948
        %v8951 = vunpack.c.l.s4 1983009808
        %v8952 = vunpack.c.0.s8 %v8951
        %v8953 = vlaneseq
        %v8954 = vshrl.u32 %v8953, 7
        %v8955 = vsub.s32 %v8952, %v8954
        %v8956 = vrot.slane %v8942, %v8955
        %v8957 = vcombine.high %v8895, 0.0
        %v8959 = vunpack.c.l.s4 1983009808
        %v8960 = vunpack.c.0.s8 %v8959
        %v8961 = vlaneseq
        %v8962 = vshrl.u32 %v8961, 7
        %v8963 = vsub.s32 %v8960, %v8962
        %v8964 = vrot.slane %v8895, %v8963
        %v8966 = vunpack.c.l.s4 1983009808
        %v8967 = vunpack.c.0.s8 %v8966
        %v8968 = vlaneseq
        %v8969 = vshrl.u32 %v8968, 7
        %v8970 = vsub.s32 %v8967, %v8969
        %v8971 = vrot.slane %v8957, %v8970
        %v8972 = vcombine.low %v8949, %v8964
        %v8973 = vcombine.high %v8949, %v8964
        %v8975 = vunpack.c.l.s4 1934713408
        %v8976 = vunpack.c.0.s8 %v8975
        %v8977 = vlaneseq
        %v8978 = vshrl.u32 %v8977, 7
        %v8979 = vsub.s32 %v8976, %v8978
        %v8980 = vrot.slane %v8972, %v8979
        %v8982 = vunpack.c.l.s4 1934713408
        %v8983 = vunpack.c.0.s8 %v8982
        %v8984 = vlaneseq
        %v8985 = vshrl.u32 %v8984, 7
        %v8986 = vsub.s32 %v8983, %v8985
        %v8987 = vrot.slane %v8973, %v8986
        %v8988 = vcombine.low %v8956, %v8971
        %v8989 = vcombine.high %v8956, %v8971
        %v8991 = vunpack.c.l.s4 1934713408
        %v8992 = vunpack.c.0.s8 %v8991
        %v8993 = vlaneseq
        %v8994 = vshrl.u32 %v8993, 7
        %v8995 = vsub.s32 %v8992, %v8994
        %v8996 = vrot.slane %v8988, %v8995
        %v8998 = vunpack.c.l.s4 1934713408
        %v8999 = vunpack.c.0.s8 %v8998
        %v9000 = vlaneseq
        %v9001 = vshrl.u32 %v9000, 7
        %v9002 = vsub.s32 %v8999, %v9001
        %v9003 = vrot.slane %v8989, %v9002
        %v9004 = vcombine.high %v8980, 0.0
        %v9005 = vcombine.high %v8987, 0.0
        %v9006 = vcombine.high %v8996, 0.0
        %v9007 = vcombine.high %v9003, 0.0
        %v9008 = vcombine.high %v8819, 0.0
        %v9010 = vunpack.c.l.s4 1983009808
        %v9011 = vunpack.c.0.s8 %v9010
        %v9012 = vlaneseq
        %v9013 = vshrl.u32 %v9012, 7
        %v9014 = vsub.s32 %v9011, %v9013
        %v9015 = vrot.slane %v8819, %v9014
        %v9017 = vunpack.c.l.s4 1983009808
        %v9018 = vunpack.c.0.s8 %v9017
        %v9019 = vlaneseq
        %v9020 = vshrl.u32 %v9019, 7
        %v9021 = vsub.s32 %v9018, %v9020
        %v9022 = vrot.slane %v9008, %v9021
        %v9023 = vcombine.high %v8897, 0.0
        %v9025 = vunpack.c.l.s4 1983009808
        %v9026 = vunpack.c.0.s8 %v9025
        %v9027 = vlaneseq
        %v9028 = vshrl.u32 %v9027, 7
        %v9029 = vsub.s32 %v9026, %v9028
        %v9030 = vrot.slane %v8897, %v9029
        %v9032 = vunpack.c.l.s4 1983009808
        %v9033 = vunpack.c.0.s8 %v9032
        %v9034 = vlaneseq
        %v9035 = vshrl.u32 %v9034, 7
        %v9036 = vsub.s32 %v9033, %v9035
        %v9037 = vrot.slane %v9023, %v9036
        %v9038 = vcombine.low %v9015, %v9030
        %v9039 = vcombine.high %v9015, %v9030
        %v9041 = vunpack.c.l.s4 1934713408
        %v9042 = vunpack.c.0.s8 %v9041
        %v9043 = vlaneseq
        %v9044 = vshrl.u32 %v9043, 7
        %v9045 = vsub.s32 %v9042, %v9044
        %v9046 = vrot.slane %v9038, %v9045
        %v9048 = vunpack.c.l.s4 1934713408
        %v9049 = vunpack.c.0.s8 %v9048
        %v9050 = vlaneseq
        %v9051 = vshrl.u32 %v9050, 7
        %v9052 = vsub.s32 %v9049, %v9051
        %v9053 = vrot.slane %v9039, %v9052
        %v9054 = vcombine.low %v9022, %v9037
        %v9055 = vcombine.high %v9022, %v9037
        %v9057 = vunpack.c.l.s4 1934713408
        %v9058 = vunpack.c.0.s8 %v9057
        %v9059 = vlaneseq
        %v9060 = vshrl.u32 %v9059, 7
        %v9061 = vsub.s32 %v9058, %v9060
        %v9062 = vrot.slane %v9054, %v9061
        %v9064 = vunpack.c.l.s4 1934713408
        %v9065 = vunpack.c.0.s8 %v9064
        %v9066 = vlaneseq
        %v9067 = vshrl.u32 %v9066, 7
        %v9068 = vsub.s32 %v9065, %v9067
        %v9069 = vrot.slane %v9055, %v9068
        %v9070 = vcombine.high %v9046, 0.0
        %v9071 = vcombine.high %v9053, 0.0
        %v9072 = vcombine.high %v9062, 0.0
        %v9073 = vcombine.high %v9069, 0.0
        %v9074 = vcombine.high %v8824, 0.0
        %v9076 = vunpack.c.l.s4 1983009808
        %v9077 = vunpack.c.0.s8 %v9076
        %v9078 = vlaneseq
        %v9079 = vshrl.u32 %v9078, 7
        %v9080 = vsub.s32 %v9077, %v9079
        %v9081 = vrot.slane %v8824, %v9080
        %v9083 = vunpack.c.l.s4 1983009808
        %v9084 = vunpack.c.0.s8 %v9083
        %v9085 = vlaneseq
        %v9086 = vshrl.u32 %v9085, 7
        %v9087 = vsub.s32 %v9084, %v9086
        %v9088 = vrot.slane %v9074, %v9087
        %v9089 = vcombine.high %v8899, 0.0
        %v9091 = vunpack.c.l.s4 1983009808
        %v9092 = vunpack.c.0.s8 %v9091
        %v9093 = vlaneseq
        %v9094 = vshrl.u32 %v9093, 7
        %v9095 = vsub.s32 %v9092, %v9094
        %v9096 = vrot.slane %v8899, %v9095
        %v9098 = vunpack.c.l.s4 1983009808
        %v9099 = vunpack.c.0.s8 %v9098
        %v9100 = vlaneseq
        %v9101 = vshrl.u32 %v9100, 7
        %v9102 = vsub.s32 %v9099, %v9101
        %v9103 = vrot.slane %v9089, %v9102
        %v9104 = vcombine.low %v9081, %v9096
        %v9105 = vcombine.high %v9081, %v9096
        %v9107 = vunpack.c.l.s4 1934713408
        %v9108 = vunpack.c.0.s8 %v9107
        %v9109 = vlaneseq
        %v9110 = vshrl.u32 %v9109, 7
        %v9111 = vsub.s32 %v9108, %v9110
        %v9112 = vrot.slane %v9104, %v9111
        %v9114 = vunpack.c.l.s4 1934713408
        %v9115 = vunpack.c.0.s8 %v9114
        %v9116 = vlaneseq
        %v9117 = vshrl.u32 %v9116, 7
        %v9118 = vsub.s32 %v9115, %v9117
        %v9119 = vrot.slane %v9105, %v9118
        %v9120 = vcombine.low %v9088, %v9103
        %v9121 = vcombine.high %v9088, %v9103
        %v9123 = vunpack.c.l.s4 1934713408
        %v9124 = vunpack.c.0.s8 %v9123
        %v9125 = vlaneseq
        %v9126 = vshrl.u32 %v9125, 7
        %v9127 = vsub.s32 %v9124, %v9126
        %v9128 = vrot.slane %v9120, %v9127
        %v9130 = vunpack.c.l.s4 1934713408
        %v9131 = vunpack.c.0.s8 %v9130
        %v9132 = vlaneseq
        %v9133 = vshrl.u32 %v9132, 7
        %v9134 = vsub.s32 %v9131, %v9133
        %v9135 = vrot.slane %v9121, %v9134
        %v9136 = vcombine.high %v9112, 0.0
        %v9137 = vcombine.high %v9119, 0.0
        %v9138 = vcombine.high %v9128, 0.0
        %v9139 = vcombine.high %v9135, 0.0
        %v9140 = vcombine.high %v8827, 0.0
        %v9142 = vunpack.c.l.s4 1983009808
        %v9143 = vunpack.c.0.s8 %v9142
        %v9144 = vlaneseq
        %v9145 = vshrl.u32 %v9144, 7
        %v9146 = vsub.s32 %v9143, %v9145
        %v9147 = vrot.slane %v8827, %v9146
        %v9149 = vunpack.c.l.s4 1983009808
        %v9150 = vunpack.c.0.s8 %v9149
        %v9151 = vlaneseq
        %v9152 = vshrl.u32 %v9151, 7
        %v9153 = vsub.s32 %v9150, %v9152
        %v9154 = vrot.slane %v9140, %v9153
        %v9155 = vcombine.high %v8901, 0.0
        %v9157 = vunpack.c.l.s4 1983009808
        %v9158 = vunpack.c.0.s8 %v9157
        %v9159 = vlaneseq
        %v9160 = vshrl.u32 %v9159, 7
        %v9161 = vsub.s32 %v9158, %v9160
        %v9162 = vrot.slane %v8901, %v9161
        %v9164 = vunpack.c.l.s4 1983009808
        %v9165 = vunpack.c.0.s8 %v9164
        %v9166 = vlaneseq
        %v9167 = vshrl.u32 %v9166, 7
        %v9168 = vsub.s32 %v9165, %v9167
        %v9169 = vrot.slane %v9155, %v9168
        %v9170 = vcombine.low %v9147, %v9162
        %v9171 = vcombine.high %v9147, %v9162
        %v9173 = vunpack.c.l.s4 1934713408
        %v9174 = vunpack.c.0.s8 %v9173
        %v9175 = vlaneseq
        %v9176 = vshrl.u32 %v9175, 7
        %v9177 = vsub.s32 %v9174, %v9176
        %v9178 = vrot.slane %v9170, %v9177
        %v9180 = vunpack.c.l.s4 1934713408
        %v9181 = vunpack.c.0.s8 %v9180
        %v9182 = vlaneseq
        %v9183 = vshrl.u32 %v9182, 7
        %v9184 = vsub.s32 %v9181, %v9183
        %v9185 = vrot.slane %v9171, %v9184
        %v9186 = vcombine.low %v9154, %v9169
        %v9187 = vcombine.high %v9154, %v9169
        %v9189 = vunpack.c.l.s4 1934713408
        %v9190 = vunpack.c.0.s8 %v9189
        %v9191 = vlaneseq
        %v9192 = vshrl.u32 %v9191, 7
        %v9193 = vsub.s32 %v9190, %v9192
        %v9194 = vrot.slane %v9186, %v9193
        %v9196 = vunpack.c.l.s4 1934713408
        %v9197 = vunpack.c.0.s8 %v9196
        %v9198 = vlaneseq
        %v9199 = vshrl.u32 %v9198, 7
        %v9200 = vsub.s32 %v9197, %v9199
        %v9201 = vrot.slane %v9187, %v9200
        %v9202 = vcombine.high %v9178, 0.0
        %v9203 = vcombine.high %v9185, 0.0
        %v9204 = vcombine.high %v9194, 0.0
        %v9205 = vcombine.high %v9201, 0.0
        %v9206 = vcombine.high %v8832, 0.0
        %v9208 = vunpack.c.l.s4 1983009808
        %v9209 = vunpack.c.0.s8 %v9208
        %v9210 = vlaneseq
        %v9211 = vshrl.u32 %v9210, 7
        %v9212 = vsub.s32 %v9209, %v9211
        %v9213 = vrot.slane %v8832, %v9212
        %v9215 = vunpack.c.l.s4 1983009808
        %v9216 = vunpack.c.0.s8 %v9215
        %v9217 = vlaneseq
        %v9218 = vshrl.u32 %v9217, 7
        %v9219 = vsub.s32 %v9216, %v9218
        %v9220 = vrot.slane %v9206, %v9219
        %v9221 = vcombine.high %v8903, 0.0
        %v9223 = vunpack.c.l.s4 1983009808
        %v9224 = vunpack.c.0.s8 %v9223
        %v9225 = vlaneseq
        %v9226 = vshrl.u32 %v9225, 7
        %v9227 = vsub.s32 %v9224, %v9226
        %v9228 = vrot.slane %v8903, %v9227
        %v9230 = vunpack.c.l.s4 1983009808
        %v9231 = vunpack.c.0.s8 %v9230
        %v9232 = vlaneseq
        %v9233 = vshrl.u32 %v9232, 7
        %v9234 = vsub.s32 %v9231, %v9233
        %v9235 = vrot.slane %v9221, %v9234
        %v9236 = vcombine.low %v9213, %v9228
        %v9237 = vcombine.high %v9213, %v9228
        %v9239 = vunpack.c.l.s4 1934713408
        %v9240 = vunpack.c.0.s8 %v9239
        %v9241 = vlaneseq
        %v9242 = vshrl.u32 %v9241, 7
        %v9243 = vsub.s32 %v9240, %v9242
        %v9244 = vrot.slane %v9236, %v9243
        %v9246 = vunpack.c.l.s4 1934713408
        %v9247 = vunpack.c.0.s8 %v9246
        %v9248 = vlaneseq
        %v9249 = vshrl.u32 %v9248, 7
        %v9250 = vsub.s32 %v9247, %v9249
        %v9251 = vrot.slane %v9237, %v9250
        %v9252 = vcombine.low %v9220, %v9235
        %v9253 = vcombine.high %v9220, %v9235
        %v9255 = vunpack.c.l.s4 1934713408
        %v9256 = vunpack.c.0.s8 %v9255
        %v9257 = vlaneseq
        %v9258 = vshrl.u32 %v9257, 7
        %v9259 = vsub.s32 %v9256, %v9258
        %v9260 = vrot.slane %v9252, %v9259
        %v9262 = vunpack.c.l.s4 1934713408
        %v9263 = vunpack.c.0.s8 %v9262
        %v9264 = vlaneseq
        %v9265 = vshrl.u32 %v9264, 7
        %v9266 = vsub.s32 %v9263, %v9265
        %v9267 = vrot.slane %v9253, %v9266
        %v9268 = vcombine.high %v9244, 0.0
        %v9269 = vcombine.high %v9251, 0.0
        %v9270 = vcombine.high %v9260, 0.0
        %v9271 = vcombine.high %v9267, 0.0
        %v9272 = vcombine.high %v8835, 0.0
        %v9274 = vunpack.c.l.s4 1983009808
        %v9275 = vunpack.c.0.s8 %v9274
        %v9276 = vlaneseq
        %v9277 = vshrl.u32 %v9276, 7
        %v9278 = vsub.s32 %v9275, %v9277
        %v9279 = vrot.slane %v8835, %v9278
        %v9281 = vunpack.c.l.s4 1983009808
        %v9282 = vunpack.c.0.s8 %v9281
        %v9283 = vlaneseq
        %v9284 = vshrl.u32 %v9283, 7
        %v9285 = vsub.s32 %v9282, %v9284
        %v9286 = vrot.slane %v9272, %v9285
        %v9287 = vcombine.high %v8905, 0.0
        %v9289 = vunpack.c.l.s4 1983009808
        %v9290 = vunpack.c.0.s8 %v9289
        %v9291 = vlaneseq
        %v9292 = vshrl.u32 %v9291, 7
        %v9293 = vsub.s32 %v9290, %v9292
        %v9294 = vrot.slane %v8905, %v9293
        %v9296 = vunpack.c.l.s4 1983009808
        %v9297 = vunpack.c.0.s8 %v9296
        %v9298 = vlaneseq
        %v9299 = vshrl.u32 %v9298, 7
        %v9300 = vsub.s32 %v9297, %v9299
        %v9301 = vrot.slane %v9287, %v9300
        %v9302 = vcombine.low %v9279, %v9294
        %v9303 = vcombine.high %v9279, %v9294
        %v9305 = vunpack.c.l.s4 1934713408
        %v9306 = vunpack.c.0.s8 %v9305
        %v9307 = vlaneseq
        %v9308 = vshrl.u32 %v9307, 7
        %v9309 = vsub.s32 %v9306, %v9308
        %v9310 = vrot.slane %v9302, %v9309
        %v9312 = vunpack.c.l.s4 1934713408
        %v9313 = vunpack.c.0.s8 %v9312
        %v9314 = vlaneseq
        %v9315 = vshrl.u32 %v9314, 7
        %v9316 = vsub.s32 %v9313, %v9315
        %v9317 = vrot.slane %v9303, %v9316
        %v9318 = vcombine.low %v9286, %v9301
        %v9319 = vcombine.high %v9286, %v9301
        %v9321 = vunpack.c.l.s4 1934713408
        %v9322 = vunpack.c.0.s8 %v9321
        %v9323 = vlaneseq
        %v9324 = vshrl.u32 %v9323, 7
        %v9325 = vsub.s32 %v9322, %v9324
        %v9326 = vrot.slane %v9318, %v9325
        %v9328 = vunpack.c.l.s4 1934713408
        %v9329 = vunpack.c.0.s8 %v9328
        %v9330 = vlaneseq
        %v9331 = vshrl.u32 %v9330, 7
        %v9332 = vsub.s32 %v9329, %v9331
        %v9333 = vrot.slane %v9319, %v9332
        %v9334 = vcombine.high %v9310, 0.0
        %v9335 = vcombine.high %v9317, 0.0
        %v9336 = vcombine.high %v9326, 0.0
        %v9337 = vcombine.high %v9333, 0.0
        %v9338 = vcombine.high %v8840, 0.0
        %v9340 = vunpack.c.l.s4 1983009808
        %v9341 = vunpack.c.0.s8 %v9340
        %v9342 = vlaneseq
        %v9343 = vshrl.u32 %v9342, 7
        %v9344 = vsub.s32 %v9341, %v9343
        %v9345 = vrot.slane %v8840, %v9344
        %v9347 = vunpack.c.l.s4 1983009808
        %v9348 = vunpack.c.0.s8 %v9347
        %v9349 = vlaneseq
        %v9350 = vshrl.u32 %v9349, 7
        %v9351 = vsub.s32 %v9348, %v9350
        %v9352 = vrot.slane %v9338, %v9351
        %v9353 = vcombine.high %v8907, 0.0
        %v9355 = vunpack.c.l.s4 1983009808
        %v9356 = vunpack.c.0.s8 %v9355
        %v9357 = vlaneseq
        %v9358 = vshrl.u32 %v9357, 7
        %v9359 = vsub.s32 %v9356, %v9358
        %v9360 = vrot.slane %v8907, %v9359
        %v9362 = vunpack.c.l.s4 1983009808
        %v9363 = vunpack.c.0.s8 %v9362
        %v9364 = vlaneseq
        %v9365 = vshrl.u32 %v9364, 7
        %v9366 = vsub.s32 %v9363, %v9365
        %v9367 = vrot.slane %v9353, %v9366
        %v9368 = vcombine.low %v9345, %v9360
        %v9369 = vcombine.high %v9345, %v9360
        %v9371 = vunpack.c.l.s4 1934713408
        %v9372 = vunpack.c.0.s8 %v9371
        %v9373 = vlaneseq
        %v9374 = vshrl.u32 %v9373, 7
        %v9375 = vsub.s32 %v9372, %v9374
        %v9376 = vrot.slane %v9368, %v9375
        %v9378 = vunpack.c.l.s4 1934713408
        %v9379 = vunpack.c.0.s8 %v9378
        %v9380 = vlaneseq
        %v9381 = vshrl.u32 %v9380, 7
        %v9382 = vsub.s32 %v9379, %v9381
        %v9383 = vrot.slane %v9369, %v9382
        %v9384 = vcombine.low %v9352, %v9367
        %v9385 = vcombine.high %v9352, %v9367
        %v9387 = vunpack.c.l.s4 1934713408
        %v9388 = vunpack.c.0.s8 %v9387
        %v9389 = vlaneseq
        %v9390 = vshrl.u32 %v9389, 7
        %v9391 = vsub.s32 %v9388, %v9390
        %v9392 = vrot.slane %v9384, %v9391
        %v9394 = vunpack.c.l.s4 1934713408
        %v9395 = vunpack.c.0.s8 %v9394
        %v9396 = vlaneseq
        %v9397 = vshrl.u32 %v9396, 7
        %v9398 = vsub.s32 %v9395, %v9397
        %v9399 = vrot.slane %v9385, %v9398
        %v9400 = vcombine.high %v9376, 0.0
        %v9401 = vcombine.high %v9383, 0.0
        %v9402 = vcombine.high %v9392, 0.0
        %v9403 = vcombine.high %v9399, 0.0
        %v9404 = vcombine.high %v8843, 0.0
        %v9406 = vunpack.c.l.s4 1983009808
        %v9407 = vunpack.c.0.s8 %v9406
        %v9408 = vlaneseq
        %v9409 = vshrl.u32 %v9408, 7
        %v9410 = vsub.s32 %v9407, %v9409
        %v9411 = vrot.slane %v8843, %v9410
        %v9413 = vunpack.c.l.s4 1983009808
        %v9414 = vunpack.c.0.s8 %v9413
        %v9415 = vlaneseq
        %v9416 = vshrl.u32 %v9415, 7
        %v9417 = vsub.s32 %v9414, %v9416
        %v9418 = vrot.slane %v9404, %v9417
        %v9419 = vcombine.high %v8909, 0.0
        %v9421 = vunpack.c.l.s4 1983009808
        %v9422 = vunpack.c.0.s8 %v9421
        %v9423 = vlaneseq
        %v9424 = vshrl.u32 %v9423, 7
        %v9425 = vsub.s32 %v9422, %v9424
        %v9426 = vrot.slane %v8909, %v9425
        %v9428 = vunpack.c.l.s4 1983009808
        %v9429 = vunpack.c.0.s8 %v9428
        %v9430 = vlaneseq
        %v9431 = vshrl.u32 %v9430, 7
        %v9432 = vsub.s32 %v9429, %v9431
        %v9433 = vrot.slane %v9419, %v9432
        %v9434 = vcombine.low %v9411, %v9426
        %v9435 = vcombine.high %v9411, %v9426
        %v9437 = vunpack.c.l.s4 1934713408
        %v9438 = vunpack.c.0.s8 %v9437
        %v9439 = vlaneseq
        %v9440 = vshrl.u32 %v9439, 7
        %v9441 = vsub.s32 %v9438, %v9440
        %v9442 = vrot.slane %v9434, %v9441
        %v9444 = vunpack.c.l.s4 1934713408
        %v9445 = vunpack.c.0.s8 %v9444
        %v9446 = vlaneseq
        %v9447 = vshrl.u32 %v9446, 7
        %v9448 = vsub.s32 %v9445, %v9447
        %v9449 = vrot.slane %v9435, %v9448
        %v9450 = vcombine.low %v9418, %v9433
        %v9451 = vcombine.high %v9418, %v9433
        %v9453 = vunpack.c.l.s4 1934713408
        %v9454 = vunpack.c.0.s8 %v9453
        %v9455 = vlaneseq
        %v9456 = vshrl.u32 %v9455, 7
        %v9457 = vsub.s32 %v9454, %v9456
        %v9458 = vrot.slane %v9450, %v9457
        %v9460 = vunpack.c.l.s4 1934713408
        %v9461 = vunpack.c.0.s8 %v9460
        %v9462 = vlaneseq
        %v9463 = vshrl.u32 %v9462, 7
        %v9464 = vsub.s32 %v9461, %v9463
        %v9465 = vrot.slane %v9451, %v9464
        %v9466 = vcombine.high %v9442, 0.0
        %v9467 = vcombine.high %v9449, 0.0
        %v9468 = vcombine.high %v9458, 0.0
        %v9469 = vcombine.high %v9465, 0.0
        %v9470 = vcombine.high %v8848, 0.0
        %v9472 = vunpack.c.l.s4 1983009808
        %v9473 = vunpack.c.0.s8 %v9472
        %v9474 = vlaneseq
        %v9475 = vshrl.u32 %v9474, 7
        %v9476 = vsub.s32 %v9473, %v9475
        %v9477 = vrot.slane %v8848, %v9476
        %v9479 = vunpack.c.l.s4 1983009808
        %v9480 = vunpack.c.0.s8 %v9479
        %v9481 = vlaneseq
        %v9482 = vshrl.u32 %v9481, 7
        %v9483 = vsub.s32 %v9480, %v9482
        %v9484 = vrot.slane %v9470, %v9483
        %v9485 = vcombine.high %v8911, 0.0
        %v9487 = vunpack.c.l.s4 1983009808
        %v9488 = vunpack.c.0.s8 %v9487
        %v9489 = vlaneseq
        %v9490 = vshrl.u32 %v9489, 7
        %v9491 = vsub.s32 %v9488, %v9490
        %v9492 = vrot.slane %v8911, %v9491
        %v9494 = vunpack.c.l.s4 1983009808
        %v9495 = vunpack.c.0.s8 %v9494
        %v9496 = vlaneseq
        %v9497 = vshrl.u32 %v9496, 7
        %v9498 = vsub.s32 %v9495, %v9497
        %v9499 = vrot.slane %v9485, %v9498
        %v9500 = vcombine.low %v9477, %v9492
        %v9501 = vcombine.high %v9477, %v9492
        %v9503 = vunpack.c.l.s4 1934713408
        %v9504 = vunpack.c.0.s8 %v9503
        %v9505 = vlaneseq
        %v9506 = vshrl.u32 %v9505, 7
        %v9507 = vsub.s32 %v9504, %v9506
        %v9508 = vrot.slane %v9500, %v9507
        %v9510 = vunpack.c.l.s4 1934713408
        %v9511 = vunpack.c.0.s8 %v9510
        %v9512 = vlaneseq
        %v9513 = vshrl.u32 %v9512, 7
        %v9514 = vsub.s32 %v9511, %v9513
        %v9515 = vrot.slane %v9501, %v9514
        %v9516 = vcombine.low %v9484, %v9499
        %v9517 = vcombine.high %v9484, %v9499
        %v9519 = vunpack.c.l.s4 1934713408
        %v9520 = vunpack.c.0.s8 %v9519
        %v9521 = vlaneseq
        %v9522 = vshrl.u32 %v9521, 7
        %v9523 = vsub.s32 %v9520, %v9522
        %v9524 = vrot.slane %v9516, %v9523
        %v9526 = vunpack.c.l.s4 1934713408
        %v9527 = vunpack.c.0.s8 %v9526
        %v9528 = vlaneseq
        %v9529 = vshrl.u32 %v9528, 7
        %v9530 = vsub.s32 %v9527, %v9529
        %v9531 = vrot.slane %v9517, %v9530
        %v9532 = vcombine.high %v9508, 0.0
        %v9533 = vcombine.high %v9515, 0.0
        %v9534 = vcombine.high %v9524, 0.0
        %v9535 = vcombine.high %v9531, 0.0
        %v9536 = vcombine.high %v8851, 0.0
        %v9538 = vunpack.c.l.s4 1983009808
        %v9539 = vunpack.c.0.s8 %v9538
        %v9540 = vlaneseq
        %v9541 = vshrl.u32 %v9540, 7
        %v9542 = vsub.s32 %v9539, %v9541
        %v9543 = vrot.slane %v8851, %v9542
        %v9545 = vunpack.c.l.s4 1983009808
        %v9546 = vunpack.c.0.s8 %v9545
        %v9547 = vlaneseq
        %v9548 = vshrl.u32 %v9547, 7
        %v9549 = vsub.s32 %v9546, %v9548
        %v9550 = vrot.slane %v9536, %v9549
        %v9551 = vcombine.high %v8913, 0.0
        %v9553 = vunpack.c.l.s4 1983009808
        %v9554 = vunpack.c.0.s8 %v9553
        %v9555 = vlaneseq
        %v9556 = vshrl.u32 %v9555, 7
        %v9557 = vsub.s32 %v9554, %v9556
        %v9558 = vrot.slane %v8913, %v9557
        %v9560 = vunpack.c.l.s4 1983009808
        %v9561 = vunpack.c.0.s8 %v9560
        %v9562 = vlaneseq
        %v9563 = vshrl.u32 %v9562, 7
        %v9564 = vsub.s32 %v9561, %v9563
        %v9565 = vrot.slane %v9551, %v9564
        %v9566 = vcombine.low %v9543, %v9558
        %v9567 = vcombine.high %v9543, %v9558
        %v9569 = vunpack.c.l.s4 1934713408
        %v9570 = vunpack.c.0.s8 %v9569
        %v9571 = vlaneseq
        %v9572 = vshrl.u32 %v9571, 7
        %v9573 = vsub.s32 %v9570, %v9572
        %v9574 = vrot.slane %v9566, %v9573
        %v9576 = vunpack.c.l.s4 1934713408
        %v9577 = vunpack.c.0.s8 %v9576
        %v9578 = vlaneseq
        %v9579 = vshrl.u32 %v9578, 7
        %v9580 = vsub.s32 %v9577, %v9579
        %v9581 = vrot.slane %v9567, %v9580
        %v9582 = vcombine.low %v9550, %v9565
        %v9583 = vcombine.high %v9550, %v9565
        %v9585 = vunpack.c.l.s4 1934713408
        %v9586 = vunpack.c.0.s8 %v9585
        %v9587 = vlaneseq
        %v9588 = vshrl.u32 %v9587, 7
        %v9589 = vsub.s32 %v9586, %v9588
        %v9590 = vrot.slane %v9582, %v9589
        %v9592 = vunpack.c.l.s4 1934713408
        %v9593 = vunpack.c.0.s8 %v9592
        %v9594 = vlaneseq
        %v9595 = vshrl.u32 %v9594, 7
        %v9596 = vsub.s32 %v9593, %v9595
        %v9597 = vrot.slane %v9583, %v9596
        %v9598 = vcombine.high %v9574, 0.0
        %v9599 = vcombine.high %v9581, 0.0
        %v9600 = vcombine.high %v9590, 0.0
        %v9601 = vcombine.high %v9597, 0.0
        %v9602 = vcombine.high %v8856, 0.0
        %v9604 = vunpack.c.l.s4 1983009808
        %v9605 = vunpack.c.0.s8 %v9604
        %v9606 = vlaneseq
        %v9607 = vshrl.u32 %v9606, 7
        %v9608 = vsub.s32 %v9605, %v9607
        %v9609 = vrot.slane %v8856, %v9608
        %v9611 = vunpack.c.l.s4 1983009808
        %v9612 = vunpack.c.0.s8 %v9611
        %v9613 = vlaneseq
        %v9614 = vshrl.u32 %v9613, 7
        %v9615 = vsub.s32 %v9612, %v9614
        %v9616 = vrot.slane %v9602, %v9615
        %v9617 = vcombine.high %v8915, 0.0
        %v9619 = vunpack.c.l.s4 1983009808
        %v9620 = vunpack.c.0.s8 %v9619
        %v9621 = vlaneseq
        %v9622 = vshrl.u32 %v9621, 7
        %v9623 = vsub.s32 %v9620, %v9622
        %v9624 = vrot.slane %v8915, %v9623
        %v9626 = vunpack.c.l.s4 1983009808
        %v9627 = vunpack.c.0.s8 %v9626
        %v9628 = vlaneseq
        %v9629 = vshrl.u32 %v9628, 7
        %v9630 = vsub.s32 %v9627, %v9629
        %v9631 = vrot.slane %v9617, %v9630
        %v9632 = vcombine.low %v9609, %v9624
        %v9633 = vcombine.high %v9609, %v9624
        %v9635 = vunpack.c.l.s4 1934713408
        %v9636 = vunpack.c.0.s8 %v9635
        %v9637 = vlaneseq
        %v9638 = vshrl.u32 %v9637, 7
        %v9639 = vsub.s32 %v9636, %v9638
        %v9640 = vrot.slane %v9632, %v9639
        %v9642 = vunpack.c.l.s4 1934713408
        %v9643 = vunpack.c.0.s8 %v9642
        %v9644 = vlaneseq
        %v9645 = vshrl.u32 %v9644, 7
        %v9646 = vsub.s32 %v9643, %v9645
        %v9647 = vrot.slane %v9633, %v9646
        %v9648 = vcombine.low %v9616, %v9631
        %v9649 = vcombine.high %v9616, %v9631
        %v9651 = vunpack.c.l.s4 1934713408
        %v9652 = vunpack.c.0.s8 %v9651
        %v9653 = vlaneseq
        %v9654 = vshrl.u32 %v9653, 7
        %v9655 = vsub.s32 %v9652, %v9654
        %v9656 = vrot.slane %v9648, %v9655
        %v9658 = vunpack.c.l.s4 1934713408
        %v9659 = vunpack.c.0.s8 %v9658
        %v9660 = vlaneseq
        %v9661 = vshrl.u32 %v9660, 7
        %v9662 = vsub.s32 %v9659, %v9661
        %v9663 = vrot.slane %v9649, %v9662
        %v9664 = vcombine.high %v9640, 0.0
        %v9665 = vcombine.high %v9647, 0.0
        %v9666 = vcombine.high %v9656, 0.0
        %v9667 = vcombine.high %v9663, 0.0
        %v9668 = vcombine.high %v8859, 0.0
        %v9670 = vunpack.c.l.s4 1983009808
        %v9671 = vunpack.c.0.s8 %v9670
        %v9672 = vlaneseq
        %v9673 = vshrl.u32 %v9672, 7
        %v9674 = vsub.s32 %v9671, %v9673
        %v9675 = vrot.slane %v8859, %v9674
        %v9677 = vunpack.c.l.s4 1983009808
        %v9678 = vunpack.c.0.s8 %v9677
        %v9679 = vlaneseq
        %v9680 = vshrl.u32 %v9679, 7
        %v9681 = vsub.s32 %v9678, %v9680
        %v9682 = vrot.slane %v9668, %v9681
        %v9683 = vcombine.high %v8917, 0.0
        %v9685 = vunpack.c.l.s4 1983009808
        %v9686 = vunpack.c.0.s8 %v9685
        %v9687 = vlaneseq
        %v9688 = vshrl.u32 %v9687, 7
        %v9689 = vsub.s32 %v9686, %v9688
        %v9690 = vrot.slane %v8917, %v9689
        %v9692 = vunpack.c.l.s4 1983009808
        %v9693 = vunpack.c.0.s8 %v9692
        %v9694 = vlaneseq
        %v9695 = vshrl.u32 %v9694, 7
        %v9696 = vsub.s32 %v9693, %v9695
        %v9697 = vrot.slane %v9683, %v9696
        %v9698 = vcombine.low %v9675, %v9690
        %v9699 = vcombine.high %v9675, %v9690
        %v9701 = vunpack.c.l.s4 1934713408
        %v9702 = vunpack.c.0.s8 %v9701
        %v9703 = vlaneseq
        %v9704 = vshrl.u32 %v9703, 7
        %v9705 = vsub.s32 %v9702, %v9704
        %v9706 = vrot.slane %v9698, %v9705
        %v9708 = vunpack.c.l.s4 1934713408
        %v9709 = vunpack.c.0.s8 %v9708
        %v9710 = vlaneseq
        %v9711 = vshrl.u32 %v9710, 7
        %v9712 = vsub.s32 %v9709, %v9711
        %v9713 = vrot.slane %v9699, %v9712
        %v9714 = vcombine.low %v9682, %v9697
        %v9715 = vcombine.high %v9682, %v9697
        %v9717 = vunpack.c.l.s4 1934713408
        %v9718 = vunpack.c.0.s8 %v9717
        %v9719 = vlaneseq
        %v9720 = vshrl.u32 %v9719, 7
        %v9721 = vsub.s32 %v9718, %v9720
        %v9722 = vrot.slane %v9714, %v9721
        %v9724 = vunpack.c.l.s4 1934713408
        %v9725 = vunpack.c.0.s8 %v9724
        %v9726 = vlaneseq
        %v9727 = vshrl.u32 %v9726, 7
        %v9728 = vsub.s32 %v9725, %v9727
        %v9729 = vrot.slane %v9715, %v9728
        %v9730 = vcombine.high %v9706, 0.0
        %v9731 = vcombine.high %v9713, 0.0
        %v9732 = vcombine.high %v9722, 0.0
        %v9733 = vcombine.high %v9729, 0.0
        %v9734 = vcombine.high %v8864, 0.0
        %v9736 = vunpack.c.l.s4 1983009808
        %v9737 = vunpack.c.0.s8 %v9736
        %v9738 = vlaneseq
        %v9739 = vshrl.u32 %v9738, 7
        %v9740 = vsub.s32 %v9737, %v9739
        %v9741 = vrot.slane %v8864, %v9740
        %v9743 = vunpack.c.l.s4 1983009808
        %v9744 = vunpack.c.0.s8 %v9743
        %v9745 = vlaneseq
        %v9746 = vshrl.u32 %v9745, 7
        %v9747 = vsub.s32 %v9744, %v9746
        %v9748 = vrot.slane %v9734, %v9747
        %v9749 = vcombine.high %v8919, 0.0
        %v9751 = vunpack.c.l.s4 1983009808
        %v9752 = vunpack.c.0.s8 %v9751
        %v9753 = vlaneseq
        %v9754 = vshrl.u32 %v9753, 7
        %v9755 = vsub.s32 %v9752, %v9754
        %v9756 = vrot.slane %v8919, %v9755
        %v9758 = vunpack.c.l.s4 1983009808
        %v9759 = vunpack.c.0.s8 %v9758
        %v9760 = vlaneseq
        %v9761 = vshrl.u32 %v9760, 7
        %v9762 = vsub.s32 %v9759, %v9761
        %v9763 = vrot.slane %v9749, %v9762
        %v9764 = vcombine.low %v9741, %v9756
        %v9765 = vcombine.high %v9741, %v9756
        %v9767 = vunpack.c.l.s4 1934713408
        %v9768 = vunpack.c.0.s8 %v9767
        %v9769 = vlaneseq
        %v9770 = vshrl.u32 %v9769, 7
        %v9771 = vsub.s32 %v9768, %v9770
        %v9772 = vrot.slane %v9764, %v9771
        %v9774 = vunpack.c.l.s4 1934713408
        %v9775 = vunpack.c.0.s8 %v9774
        %v9776 = vlaneseq
        %v9777 = vshrl.u32 %v9776, 7
        %v9778 = vsub.s32 %v9775, %v9777
        %v9779 = vrot.slane %v9765, %v9778
        %v9780 = vcombine.low %v9748, %v9763
        %v9781 = vcombine.high %v9748, %v9763
        %v9783 = vunpack.c.l.s4 1934713408
        %v9784 = vunpack.c.0.s8 %v9783
        %v9785 = vlaneseq
        %v9786 = vshrl.u32 %v9785, 7
        %v9787 = vsub.s32 %v9784, %v9786
        %v9788 = vrot.slane %v9780, %v9787
        %v9790 = vunpack.c.l.s4 1934713408
        %v9791 = vunpack.c.0.s8 %v9790
        %v9792 = vlaneseq
        %v9793 = vshrl.u32 %v9792, 7
        %v9794 = vsub.s32 %v9791, %v9793
        %v9795 = vrot.slane %v9781, %v9794
        %v9796 = vcombine.high %v9772, 0.0
        %v9797 = vcombine.high %v9779, 0.0
        %v9798 = vcombine.high %v9788, 0.0
        %v9799 = vcombine.high %v9795, 0.0
        %v9800 = vcombine.high %v8867, 0.0
        %v9802 = vunpack.c.l.s4 1983009808
        %v9803 = vunpack.c.0.s8 %v9802
        %v9804 = vlaneseq
        %v9805 = vshrl.u32 %v9804, 7
        %v9806 = vsub.s32 %v9803, %v9805
        %v9807 = vrot.slane %v8867, %v9806
        %v9809 = vunpack.c.l.s4 1983009808
        %v9810 = vunpack.c.0.s8 %v9809
        %v9811 = vlaneseq
        %v9812 = vshrl.u32 %v9811, 7
        %v9813 = vsub.s32 %v9810, %v9812
        %v9814 = vrot.slane %v9800, %v9813
        %v9815 = vcombine.high %v8921, 0.0
        %v9817 = vunpack.c.l.s4 1983009808
        %v9818 = vunpack.c.0.s8 %v9817
        %v9819 = vlaneseq
        %v9820 = vshrl.u32 %v9819, 7
        %v9821 = vsub.s32 %v9818, %v9820
        %v9822 = vrot.slane %v8921, %v9821
        %v9824 = vunpack.c.l.s4 1983009808
        %v9825 = vunpack.c.0.s8 %v9824
        %v9826 = vlaneseq
        %v9827 = vshrl.u32 %v9826, 7
        %v9828 = vsub.s32 %v9825, %v9827
        %v9829 = vrot.slane %v9815, %v9828
        %v9830 = vcombine.low %v9807, %v9822
        %v9831 = vcombine.high %v9807, %v9822
        %v9833 = vunpack.c.l.s4 1934713408
        %v9834 = vunpack.c.0.s8 %v9833
        %v9835 = vlaneseq
        %v9836 = vshrl.u32 %v9835, 7
        %v9837 = vsub.s32 %v9834, %v9836
        %v9838 = vrot.slane %v9830, %v9837
        %v9840 = vunpack.c.l.s4 1934713408
        %v9841 = vunpack.c.0.s8 %v9840
        %v9842 = vlaneseq
        %v9843 = vshrl.u32 %v9842, 7
        %v9844 = vsub.s32 %v9841, %v9843
        %v9845 = vrot.slane %v9831, %v9844
        %v9846 = vcombine.low %v9814, %v9829
        %v9847 = vcombine.high %v9814, %v9829
        %v9849 = vunpack.c.l.s4 1934713408
        %v9850 = vunpack.c.0.s8 %v9849
        %v9851 = vlaneseq
        %v9852 = vshrl.u32 %v9851, 7
        %v9853 = vsub.s32 %v9850, %v9852
        %v9854 = vrot.slane %v9846, %v9853
        %v9856 = vunpack.c.l.s4 1934713408
        %v9857 = vunpack.c.0.s8 %v9856
        %v9858 = vlaneseq
        %v9859 = vshrl.u32 %v9858, 7
        %v9860 = vsub.s32 %v9857, %v9859
        %v9861 = vrot.slane %v9847, %v9860
        %v9862 = vcombine.high %v9838, 0.0
        %v9863 = vcombine.high %v9845, 0.0
        %v9864 = vcombine.high %v9854, 0.0
        %v9865 = vcombine.high %v9861, 0.0
        %v9866 = vcombine.high %v8872, 0.0
        %v9868 = vunpack.c.l.s4 1983009808
        %v9869 = vunpack.c.0.s8 %v9868
        %v9870 = vlaneseq
        %v9871 = vshrl.u32 %v9870, 7
        %v9872 = vsub.s32 %v9869, %v9871
        %v9873 = vrot.slane %v8872, %v9872
        %v9875 = vunpack.c.l.s4 1983009808
        %v9876 = vunpack.c.0.s8 %v9875
        %v9877 = vlaneseq
        %v9878 = vshrl.u32 %v9877, 7
        %v9879 = vsub.s32 %v9876, %v9878
        %v9880 = vrot.slane %v9866, %v9879
        %v9881 = vcombine.high %v8923, 0.0
        %v9883 = vunpack.c.l.s4 1983009808
        %v9884 = vunpack.c.0.s8 %v9883
        %v9885 = vlaneseq
        %v9886 = vshrl.u32 %v9885, 7
        %v9887 = vsub.s32 %v9884, %v9886
        %v9888 = vrot.slane %v8923, %v9887
        %v9890 = vunpack.c.l.s4 1983009808
        %v9891 = vunpack.c.0.s8 %v9890
        %v9892 = vlaneseq
        %v9893 = vshrl.u32 %v9892, 7
        %v9894 = vsub.s32 %v9891, %v9893
        %v9895 = vrot.slane %v9881, %v9894
        %v9896 = vcombine.low %v9873, %v9888
        %v9897 = vcombine.high %v9873, %v9888
        %v9899 = vunpack.c.l.s4 1934713408
        %v9900 = vunpack.c.0.s8 %v9899
        %v9901 = vlaneseq
        %v9902 = vshrl.u32 %v9901, 7
        %v9903 = vsub.s32 %v9900, %v9902
        %v9904 = vrot.slane %v9896, %v9903
        %v9906 = vunpack.c.l.s4 1934713408
        %v9907 = vunpack.c.0.s8 %v9906
        %v9908 = vlaneseq
        %v9909 = vshrl.u32 %v9908, 7
        %v9910 = vsub.s32 %v9907, %v9909
        %v9911 = vrot.slane %v9897, %v9910
        %v9912 = vcombine.low %v9880, %v9895
        %v9913 = vcombine.high %v9880, %v9895
        %v9915 = vunpack.c.l.s4 1934713408
        %v9916 = vunpack.c.0.s8 %v9915
        %v9917 = vlaneseq
        %v9918 = vshrl.u32 %v9917, 7
        %v9919 = vsub.s32 %v9916, %v9918
        %v9920 = vrot.slane %v9912, %v9919
        %v9922 = vunpack.c.l.s4 1934713408
        %v9923 = vunpack.c.0.s8 %v9922
        %v9924 = vlaneseq
        %v9925 = vshrl.u32 %v9924, 7
        %v9926 = vsub.s32 %v9923, %v9925
        %v9927 = vrot.slane %v9913, %v9926
        %v9928 = vcombine.high %v9904, 0.0
        %v9929 = vcombine.high %v9911, 0.0
        %v9930 = vcombine.high %v9920, 0.0
        %v9931 = vcombine.high %v9927, 0.0
        %v9932 = vcombine.high %v8875, 0.0
        %v9934 = vunpack.c.l.s4 1983009808
        %v9935 = vunpack.c.0.s8 %v9934
        %v9936 = vlaneseq
        %v9937 = vshrl.u32 %v9936, 7
        %v9938 = vsub.s32 %v9935, %v9937
        %v9939 = vrot.slane %v8875, %v9938
        %v9941 = vunpack.c.l.s4 1983009808
        %v9942 = vunpack.c.0.s8 %v9941
        %v9943 = vlaneseq
        %v9944 = vshrl.u32 %v9943, 7
        %v9945 = vsub.s32 %v9942, %v9944
        %v9946 = vrot.slane %v9932, %v9945
        %v9947 = vcombine.high %v8925, 0.0
        %v9949 = vunpack.c.l.s4 1983009808
        %v9950 = vunpack.c.0.s8 %v9949
        %v9951 = vlaneseq
        %v9952 = vshrl.u32 %v9951, 7
        %v9953 = vsub.s32 %v9950, %v9952
        %v9954 = vrot.slane %v8925, %v9953
        %v9956 = vunpack.c.l.s4 1983009808
        %v9957 = vunpack.c.0.s8 %v9956
        %v9958 = vlaneseq
        %v9959 = vshrl.u32 %v9958, 7
        %v9960 = vsub.s32 %v9957, %v9959
        %v9961 = vrot.slane %v9947, %v9960
        %v9962 = vcombine.low %v9939, %v9954
        %v9963 = vcombine.high %v9939, %v9954
        %v9965 = vunpack.c.l.s4 1934713408
        %v9966 = vunpack.c.0.s8 %v9965
        %v9967 = vlaneseq
        %v9968 = vshrl.u32 %v9967, 7
        %v9969 = vsub.s32 %v9966, %v9968
        %v9970 = vrot.slane %v9962, %v9969
        %v9972 = vunpack.c.l.s4 1934713408
        %v9973 = vunpack.c.0.s8 %v9972
        %v9974 = vlaneseq
        %v9975 = vshrl.u32 %v9974, 7
        %v9976 = vsub.s32 %v9973, %v9975
        %v9977 = vrot.slane %v9963, %v9976
        %v9978 = vcombine.low %v9946, %v9961
        %v9979 = vcombine.high %v9946, %v9961
        %v9981 = vunpack.c.l.s4 1934713408
        %v9982 = vunpack.c.0.s8 %v9981
        %v9983 = vlaneseq
        %v9984 = vshrl.u32 %v9983, 7
        %v9985 = vsub.s32 %v9982, %v9984
        %v9986 = vrot.slane %v9978, %v9985
        %v9988 = vunpack.c.l.s4 1934713408
        %v9989 = vunpack.c.0.s8 %v9988
        %v9990 = vlaneseq
        %v9991 = vshrl.u32 %v9990, 7
        %v9992 = vsub.s32 %v9989, %v9991
        %v9993 = vrot.slane %v9979, %v9992
        %v9994 = vcombine.high %v9970, 0.0
        %v9995 = vcombine.high %v9977, 0.0
        %v9996 = vcombine.high %v9986, 0.0
        %v9997 = vcombine.high %v9993, 0.0
        %v9998 = vmax.f32 %v8980, 0.0
        %v9999 = vmax.f32 %v9004, 0.0
        %v10000 = vmax.f32 %v8987, 0.0
        %v10001 = vmax.f32 %v9005, 0.0
        %v10002 = vmax.f32 %v8996, 0.0
        %v10003 = vmax.f32 %v9006, 0.0
        %v10004 = vmax.f32 %v9003, 0.0
        %v10005 = vmax.f32 %v9007, 0.0
        %v10006 = vmax.f32 %v9046, 0.0
        %v10007 = vmax.f32 %v9070, 0.0
        %v10008 = vmax.f32 %v9053, 0.0
        %v10009 = vmax.f32 %v9071, 0.0
        %v10010 = vmax.f32 %v9062, 0.0
        %v10011 = vmax.f32 %v9072, 0.0
        %v10012 = vmax.f32 %v9069, 0.0
        %v10013 = vmax.f32 %v9073, 0.0
        %v10014 = vmax.f32 %v9112, 0.0
        %v10015 = vmax.f32 %v9136, 0.0
        %v10016 = vmax.f32 %v9119, 0.0
        %v10017 = vmax.f32 %v9137, 0.0
        %v10018 = vmax.f32 %v9128, 0.0
        %v10019 = vmax.f32 %v9138, 0.0
        %v10020 = vmax.f32 %v9135, 0.0
        %v10021 = vmax.f32 %v9139, 0.0
        %v10022 = vmax.f32 %v9178, 0.0
        %v10023 = vmax.f32 %v9202, 0.0
        %v10024 = vmax.f32 %v9185, 0.0
        %v10025 = vmax.f32 %v9203, 0.0
        %v10026 = vmax.f32 %v9194, 0.0
        %v10027 = vmax.f32 %v9204, 0.0
        %v10028 = vmax.f32 %v9201, 0.0
        %v10029 = vmax.f32 %v9205, 0.0
        %v10030 = vmax.f32 %v9244, 0.0
        %v10031 = vmax.f32 %v9268, 0.0
        %v10032 = vmax.f32 %v9251, 0.0
        %v10033 = vmax.f32 %v9269, 0.0
        %v10034 = vmax.f32 %v9260, 0.0
        %v10035 = vmax.f32 %v9270, 0.0
        %v10036 = vmax.f32 %v9267, 0.0
        %v10037 = vmax.f32 %v9271, 0.0
        %v10038 = vmax.f32 %v9310, 0.0
        %v10039 = vmax.f32 %v9334, 0.0
        %v10040 = vmax.f32 %v9317, 0.0
        %v10041 = vmax.f32 %v9335, 0.0
        %v10042 = vmax.f32 %v9326, 0.0
        %v10043 = vmax.f32 %v9336, 0.0
        %v10044 = vmax.f32 %v9333, 0.0
        %v10045 = vmax.f32 %v9337, 0.0
        %v10046 = vmax.f32 %v9376, 0.0
        %v10047 = vmax.f32 %v9400, 0.0
        %v10048 = vmax.f32 %v9383, 0.0
        %v10049 = vmax.f32 %v9401, 0.0
        %v10050 = vmax.f32 %v9392, 0.0
        %v10051 = vmax.f32 %v9402, 0.0
        %v10052 = vmax.f32 %v9399, 0.0
        %v10053 = vmax.f32 %v9403, 0.0
        %v10054 = vmax.f32 %v9442, 0.0
        %v10055 = vmax.f32 %v9466, 0.0
        %v10056 = vmax.f32 %v9449, 0.0
        %v10057 = vmax.f32 %v9467, 0.0
        %v10058 = vmax.f32 %v9458, 0.0
        %v10059 = vmax.f32 %v9468, 0.0
        %v10060 = vmax.f32 %v9465, 0.0
        %v10061 = vmax.f32 %v9469, 0.0
        %v10062 = vmax.f32 %v9508, 0.0
        %v10063 = vmax.f32 %v9532, 0.0
        %v10064 = vmax.f32 %v9515, 0.0
        %v10065 = vmax.f32 %v9533, 0.0
        %v10066 = vmax.f32 %v9524, 0.0
        %v10067 = vmax.f32 %v9534, 0.0
        %v10068 = vmax.f32 %v9531, 0.0
        %v10069 = vmax.f32 %v9535, 0.0
        %v10070 = vmax.f32 %v9574, 0.0
        %v10071 = vmax.f32 %v9598, 0.0
        %v10072 = vmax.f32 %v9581, 0.0
        %v10073 = vmax.f32 %v9599, 0.0
        %v10074 = vmax.f32 %v9590, 0.0
        %v10075 = vmax.f32 %v9600, 0.0
        %v10076 = vmax.f32 %v9597, 0.0
        %v10077 = vmax.f32 %v9601, 0.0
        %v10078 = vmax.f32 %v9640, 0.0
        %v10079 = vmax.f32 %v9664, 0.0
        %v10080 = vmax.f32 %v9647, 0.0
        %v10081 = vmax.f32 %v9665, 0.0
        %v10082 = vmax.f32 %v9656, 0.0
        %v10083 = vmax.f32 %v9666, 0.0
        %v10084 = vmax.f32 %v9663, 0.0
        %v10085 = vmax.f32 %v9667, 0.0
        %v10086 = vmax.f32 %v9706, 0.0
        %v10087 = vmax.f32 %v9730, 0.0
        %v10088 = vmax.f32 %v9713, 0.0
        %v10089 = vmax.f32 %v9731, 0.0
        %v10090 = vmax.f32 %v9722, 0.0
        %v10091 = vmax.f32 %v9732, 0.0
        %v10092 = vmax.f32 %v9729, 0.0
        %v10093 = vmax.f32 %v9733, 0.0
        %v10094 = vmax.f32 %v9772, 0.0
        %v10095 = vmax.f32 %v9796, 0.0
        %v10096 = vmax.f32 %v9779, 0.0
        %v10097 = vmax.f32 %v9797, 0.0
        %v10098 = vmax.f32 %v9788, 0.0
        %v10099 = vmax.f32 %v9798, 0.0
        %v10100 = vmax.f32 %v9795, 0.0
        %v10101 = vmax.f32 %v9799, 0.0
        %v10102 = vmax.f32 %v9838, 0.0
        %v10103 = vmax.f32 %v9862, 0.0
        %v10104 = vmax.f32 %v9845, 0.0
        %v10105 = vmax.f32 %v9863, 0.0
        %v10106 = vmax.f32 %v9854, 0.0
        %v10107 = vmax.f32 %v9864, 0.0
        %v10108 = vmax.f32 %v9861, 0.0
        %v10109 = vmax.f32 %v9865, 0.0
        %v10110 = vmax.f32 %v9904, 0.0
        %v10111 = vmax.f32 %v9928, 0.0
        %v10112 = vmax.f32 %v9911, 0.0
        %v10113 = vmax.f32 %v9929, 0.0
        %v10114 = vmax.f32 %v9920, 0.0
        %v10115 = vmax.f32 %v9930, 0.0
        %v10116 = vmax.f32 %v9927, 0.0
        %v10117 = vmax.f32 %v9931, 0.0
        %v10118 = vmax.f32 %v9970, 0.0
        %v10119 = vmax.f32 %v9994, 0.0
        %v10120 = vmax.f32 %v9977, 0.0
        %v10121 = vmax.f32 %v9995, 0.0
        %v10122 = vmax.f32 %v9986, 0.0
        %v10123 = vmax.f32 %v9996, 0.0
        %v10124 = vmax.f32 %v9993, 0.0
        %v10125 = vmax.f32 %v9997, 0.0
        %vm10126 = vcmask 181248
        %v10127 = vsel %vm10126, %v9998, -inf
        %10128 = vmax.xlane.f32.xlu0 %v10127
        %v10129 = vpop.xlane.xlu0 %10128
        %v10130 = vsel %vm10126, %v9999, -inf
        %10131 = vmax.xlane.f32.xlu0 %v10130
        %v10132 = vpop.xlane.xlu0 %10131
        %v10133 = vsel %vm10126, %v10000, -inf
        %10134 = vmax.xlane.f32.xlu0 %v10133
        %v10135 = vpop.xlane.xlu0 %10134
        %v10136 = vsel %vm10126, %v10001, -inf
        %10137 = vmax.xlane.f32.xlu0 %v10136
        %v10138 = vpop.xlane.xlu0 %10137
        %v10139 = vsel %vm10126, %v10002, -inf
        %10140 = vmax.xlane.f32.xlu0 %v10139
        %v10141 = vpop.xlane.xlu0 %10140
        %v10142 = vsel %vm10126, %v10003, -inf
        %10143 = vmax.xlane.f32.xlu0 %v10142
        %v10144 = vpop.xlane.xlu0 %10143
        %v10145 = vsel %vm10126, %v10004, -inf
        %10146 = vmax.xlane.f32.xlu0 %v10145
        %v10147 = vpop.xlane.xlu0 %10146
        %v10148 = vsel %vm10126, %v10005, -inf
        %10149 = vmax.xlane.f32.xlu0 %v10148
        %v10150 = vpop.xlane.xlu0 %10149
        %v10151 = vsel %vm10126, %v10006, -inf
        %10152 = vmax.xlane.f32.xlu0 %v10151
        %v10153 = vpop.xlane.xlu0 %10152
        %v10154 = vsel %vm10126, %v10007, -inf
        %10155 = vmax.xlane.f32.xlu0 %v10154
        %v10156 = vpop.xlane.xlu0 %10155
        %v10157 = vsel %vm10126, %v10008, -inf
        %10158 = vmax.xlane.f32.xlu0 %v10157
        %v10159 = vpop.xlane.xlu0 %10158
        %v10160 = vsel %vm10126, %v10009, -inf
        %10161 = vmax.xlane.f32.xlu0 %v10160
        %v10162 = vpop.xlane.xlu0 %10161
        %v10163 = vsel %vm10126, %v10010, -inf
        %10164 = vmax.xlane.f32.xlu0 %v10163
        %v10165 = vpop.xlane.xlu0 %10164
        %v10166 = vsel %vm10126, %v10011, -inf
        %10167 = vmax.xlane.f32.xlu0 %v10166
        %v10168 = vpop.xlane.xlu0 %10167
        %v10169 = vsel %vm10126, %v10012, -inf
        %10170 = vmax.xlane.f32.xlu0 %v10169
        %v10171 = vpop.xlane.xlu0 %10170
        %v10172 = vsel %vm10126, %v10013, -inf
        %10173 = vmax.xlane.f32.xlu0 %v10172
        %v10174 = vpop.xlane.xlu0 %10173
        %v10175 = vsel %vm10126, %v10014, -inf
        %10176 = vmax.xlane.f32.xlu0 %v10175
        %v10177 = vpop.xlane.xlu0 %10176
        %v10178 = vsel %vm10126, %v10015, -inf
        %10179 = vmax.xlane.f32.xlu0 %v10178
        %v10180 = vpop.xlane.xlu0 %10179
        %v10181 = vsel %vm10126, %v10016, -inf
        %10182 = vmax.xlane.f32.xlu0 %v10181
        %v10183 = vpop.xlane.xlu0 %10182
        %v10184 = vsel %vm10126, %v10017, -inf
        %10185 = vmax.xlane.f32.xlu0 %v10184
        %v10186 = vpop.xlane.xlu0 %10185
        %v10187 = vsel %vm10126, %v10018, -inf
        %10188 = vmax.xlane.f32.xlu0 %v10187
        %v10189 = vpop.xlane.xlu0 %10188
        %v10190 = vsel %vm10126, %v10019, -inf
        %10191 = vmax.xlane.f32.xlu0 %v10190
        %v10192 = vpop.xlane.xlu0 %10191
        %v10193 = vsel %vm10126, %v10020, -inf
        %10194 = vmax.xlane.f32.xlu0 %v10193
        %v10195 = vpop.xlane.xlu0 %10194
        %v10196 = vsel %vm10126, %v10021, -inf
        %10197 = vmax.xlane.f32.xlu0 %v10196
        %v10198 = vpop.xlane.xlu0 %10197
        %v10199 = vsel %vm10126, %v10022, -inf
        %10200 = vmax.xlane.f32.xlu0 %v10199
        %v10201 = vpop.xlane.xlu0 %10200
        %v10202 = vsel %vm10126, %v10023, -inf
        %10203 = vmax.xlane.f32.xlu0 %v10202
        %v10204 = vpop.xlane.xlu0 %10203
        %v10205 = vsel %vm10126, %v10024, -inf
        %10206 = vmax.xlane.f32.xlu0 %v10205
        %v10207 = vpop.xlane.xlu0 %10206
        %v10208 = vsel %vm10126, %v10025, -inf
        %10209 = vmax.xlane.f32.xlu0 %v10208
        %v10210 = vpop.xlane.xlu0 %10209
        %v10211 = vsel %vm10126, %v10026, -inf
        %10212 = vmax.xlane.f32.xlu0 %v10211
        %v10213 = vpop.xlane.xlu0 %10212
        %v10214 = vsel %vm10126, %v10027, -inf
        %10215 = vmax.xlane.f32.xlu0 %v10214
        %v10216 = vpop.xlane.xlu0 %10215
        %v10217 = vsel %vm10126, %v10028, -inf
        %10218 = vmax.xlane.f32.xlu0 %v10217
        %v10219 = vpop.xlane.xlu0 %10218
        %v10220 = vsel %vm10126, %v10029, -inf
        %10221 = vmax.xlane.f32.xlu0 %v10220
        %v10222 = vpop.xlane.xlu0 %10221
        %v10223 = vsel %vm10126, %v10030, -inf
        %10224 = vmax.xlane.f32.xlu0 %v10223
        %v10225 = vpop.xlane.xlu0 %10224
        %v10226 = vsel %vm10126, %v10031, -inf
        %10227 = vmax.xlane.f32.xlu0 %v10226
        %v10228 = vpop.xlane.xlu0 %10227
        %v10229 = vsel %vm10126, %v10032, -inf
        %10230 = vmax.xlane.f32.xlu0 %v10229
        %v10231 = vpop.xlane.xlu0 %10230
        %v10232 = vsel %vm10126, %v10033, -inf
        %10233 = vmax.xlane.f32.xlu0 %v10232
        %v10234 = vpop.xlane.xlu0 %10233
        %v10235 = vsel %vm10126, %v10034, -inf
        %10236 = vmax.xlane.f32.xlu0 %v10235
        %v10237 = vpop.xlane.xlu0 %10236
        %v10238 = vsel %vm10126, %v10035, -inf
        %10239 = vmax.xlane.f32.xlu0 %v10238
        %v10240 = vpop.xlane.xlu0 %10239
        %v10241 = vsel %vm10126, %v10036, -inf
        %10242 = vmax.xlane.f32.xlu0 %v10241
        %v10243 = vpop.xlane.xlu0 %10242
        %v10244 = vsel %vm10126, %v10037, -inf
        %10245 = vmax.xlane.f32.xlu0 %v10244
        %v10246 = vpop.xlane.xlu0 %10245
        %v10247 = vsel %vm10126, %v10038, -inf
        %10248 = vmax.xlane.f32.xlu0 %v10247
        %v10249 = vpop.xlane.xlu0 %10248
        %v10250 = vsel %vm10126, %v10039, -inf
        %10251 = vmax.xlane.f32.xlu0 %v10250
        %v10252 = vpop.xlane.xlu0 %10251
        %v10253 = vsel %vm10126, %v10040, -inf
        %10254 = vmax.xlane.f32.xlu0 %v10253
        %v10255 = vpop.xlane.xlu0 %10254
        %v10256 = vsel %vm10126, %v10041, -inf
        %10257 = vmax.xlane.f32.xlu0 %v10256
        %v10258 = vpop.xlane.xlu0 %10257
        %v10259 = vsel %vm10126, %v10042, -inf
        %10260 = vmax.xlane.f32.xlu0 %v10259
        %v10261 = vpop.xlane.xlu0 %10260
        %v10262 = vsel %vm10126, %v10043, -inf
        %10263 = vmax.xlane.f32.xlu0 %v10262
        %v10264 = vpop.xlane.xlu0 %10263
        %v10265 = vsel %vm10126, %v10044, -inf
        %10266 = vmax.xlane.f32.xlu0 %v10265
        %v10267 = vpop.xlane.xlu0 %10266
        %v10268 = vsel %vm10126, %v10045, -inf
        %10269 = vmax.xlane.f32.xlu0 %v10268
        %v10270 = vpop.xlane.xlu0 %10269
        %v10271 = vsel %vm10126, %v10046, -inf
        %10272 = vmax.xlane.f32.xlu0 %v10271
        %v10273 = vpop.xlane.xlu0 %10272
        %v10274 = vsel %vm10126, %v10047, -inf
        %10275 = vmax.xlane.f32.xlu0 %v10274
        %v10276 = vpop.xlane.xlu0 %10275
        %v10277 = vsel %vm10126, %v10048, -inf
        %10278 = vmax.xlane.f32.xlu0 %v10277
        %v10279 = vpop.xlane.xlu0 %10278
        %v10280 = vsel %vm10126, %v10049, -inf
        %10281 = vmax.xlane.f32.xlu0 %v10280
        %v10282 = vpop.xlane.xlu0 %10281
        %v10283 = vsel %vm10126, %v10050, -inf
        %10284 = vmax.xlane.f32.xlu0 %v10283
        %v10285 = vpop.xlane.xlu0 %10284
        %v10286 = vsel %vm10126, %v10051, -inf
        %10287 = vmax.xlane.f32.xlu0 %v10286
        %v10288 = vpop.xlane.xlu0 %10287
        %v10289 = vsel %vm10126, %v10052, -inf
        %10290 = vmax.xlane.f32.xlu0 %v10289
        %v10291 = vpop.xlane.xlu0 %10290
        %v10292 = vsel %vm10126, %v10053, -inf
        %10293 = vmax.xlane.f32.xlu0 %v10292
        %v10294 = vpop.xlane.xlu0 %10293
        %v10295 = vsel %vm10126, %v10054, -inf
        %10296 = vmax.xlane.f32.xlu0 %v10295
        %v10297 = vpop.xlane.xlu0 %10296
        %v10298 = vsel %vm10126, %v10055, -inf
        %10299 = vmax.xlane.f32.xlu0 %v10298
        %v10300 = vpop.xlane.xlu0 %10299
        %v10301 = vsel %vm10126, %v10056, -inf
        %10302 = vmax.xlane.f32.xlu0 %v10301
        %v10303 = vpop.xlane.xlu0 %10302
        %v10304 = vsel %vm10126, %v10057, -inf
        %10305 = vmax.xlane.f32.xlu0 %v10304
        %v10306 = vpop.xlane.xlu0 %10305
        %v10307 = vsel %vm10126, %v10058, -inf
        %10308 = vmax.xlane.f32.xlu0 %v10307
        %v10309 = vpop.xlane.xlu0 %10308
        %v10310 = vsel %vm10126, %v10059, -inf
        %10311 = vmax.xlane.f32.xlu0 %v10310
        %v10312 = vpop.xlane.xlu0 %10311
        %v10313 = vsel %vm10126, %v10060, -inf
        %10314 = vmax.xlane.f32.xlu0 %v10313
        %v10315 = vpop.xlane.xlu0 %10314
        %v10316 = vsel %vm10126, %v10061, -inf
        %10317 = vmax.xlane.f32.xlu0 %v10316
        %v10318 = vpop.xlane.xlu0 %10317
        %v10319 = vsel %vm10126, %v10062, -inf
        %10320 = vmax.xlane.f32.xlu0 %v10319
        %v10321 = vpop.xlane.xlu0 %10320
        %v10322 = vsel %vm10126, %v10063, -inf
        %10323 = vmax.xlane.f32.xlu0 %v10322
        %v10324 = vpop.xlane.xlu0 %10323
        %v10325 = vsel %vm10126, %v10064, -inf
        %10326 = vmax.xlane.f32.xlu0 %v10325
        %v10327 = vpop.xlane.xlu0 %10326
        %v10328 = vsel %vm10126, %v10065, -inf
        %10329 = vmax.xlane.f32.xlu0 %v10328
        %v10330 = vpop.xlane.xlu0 %10329
        %v10331 = vsel %vm10126, %v10066, -inf
        %10332 = vmax.xlane.f32.xlu0 %v10331
        %v10333 = vpop.xlane.xlu0 %10332
        %v10334 = vsel %vm10126, %v10067, -inf
        %10335 = vmax.xlane.f32.xlu0 %v10334
        %v10336 = vpop.xlane.xlu0 %10335
        %v10337 = vsel %vm10126, %v10068, -inf
        %10338 = vmax.xlane.f32.xlu0 %v10337
        %v10339 = vpop.xlane.xlu0 %10338
        %v10340 = vsel %vm10126, %v10069, -inf
        %10341 = vmax.xlane.f32.xlu0 %v10340
        %v10342 = vpop.xlane.xlu0 %10341
        %v10343 = vsel %vm10126, %v10070, -inf
        %10344 = vmax.xlane.f32.xlu0 %v10343
        %v10345 = vpop.xlane.xlu0 %10344
        %v10346 = vsel %vm10126, %v10071, -inf
        %10347 = vmax.xlane.f32.xlu0 %v10346
        %v10348 = vpop.xlane.xlu0 %10347
        %v10349 = vsel %vm10126, %v10072, -inf
        %10350 = vmax.xlane.f32.xlu0 %v10349
        %v10351 = vpop.xlane.xlu0 %10350
        %v10352 = vsel %vm10126, %v10073, -inf
        %10353 = vmax.xlane.f32.xlu0 %v10352
        %v10354 = vpop.xlane.xlu0 %10353
        %v10355 = vsel %vm10126, %v10074, -inf
        %10356 = vmax.xlane.f32.xlu0 %v10355
        %v10357 = vpop.xlane.xlu0 %10356
        %v10358 = vsel %vm10126, %v10075, -inf
        %10359 = vmax.xlane.f32.xlu0 %v10358
        %v10360 = vpop.xlane.xlu0 %10359
        %v10361 = vsel %vm10126, %v10076, -inf
        %10362 = vmax.xlane.f32.xlu0 %v10361
        %v10363 = vpop.xlane.xlu0 %10362
        %v10364 = vsel %vm10126, %v10077, -inf
        %10365 = vmax.xlane.f32.xlu0 %v10364
        %v10366 = vpop.xlane.xlu0 %10365
        %v10367 = vsel %vm10126, %v10078, -inf
        %10368 = vmax.xlane.f32.xlu0 %v10367
        %v10369 = vpop.xlane.xlu0 %10368
        %v10370 = vsel %vm10126, %v10079, -inf
        %10371 = vmax.xlane.f32.xlu0 %v10370
        %v10372 = vpop.xlane.xlu0 %10371
        %v10373 = vsel %vm10126, %v10080, -inf
        %10374 = vmax.xlane.f32.xlu0 %v10373
        %v10375 = vpop.xlane.xlu0 %10374
        %v10376 = vsel %vm10126, %v10081, -inf
        %10377 = vmax.xlane.f32.xlu0 %v10376
        %v10378 = vpop.xlane.xlu0 %10377
        %v10379 = vsel %vm10126, %v10082, -inf
        %10380 = vmax.xlane.f32.xlu0 %v10379
        %v10381 = vpop.xlane.xlu0 %10380
        %v10382 = vsel %vm10126, %v10083, -inf
        %10383 = vmax.xlane.f32.xlu0 %v10382
        %v10384 = vpop.xlane.xlu0 %10383
        %v10385 = vsel %vm10126, %v10084, -inf
        %10386 = vmax.xlane.f32.xlu0 %v10385
        %v10387 = vpop.xlane.xlu0 %10386
        %v10388 = vsel %vm10126, %v10085, -inf
        %10389 = vmax.xlane.f32.xlu0 %v10388
        %v10390 = vpop.xlane.xlu0 %10389
        %v10391 = vsel %vm10126, %v10086, -inf
        %10392 = vmax.xlane.f32.xlu0 %v10391
        %v10393 = vpop.xlane.xlu0 %10392
        %v10394 = vsel %vm10126, %v10087, -inf
        %10395 = vmax.xlane.f32.xlu0 %v10394
        %v10396 = vpop.xlane.xlu0 %10395
        %v10397 = vsel %vm10126, %v10088, -inf
        %10398 = vmax.xlane.f32.xlu0 %v10397
        %v10399 = vpop.xlane.xlu0 %10398
        %v10400 = vsel %vm10126, %v10089, -inf
        %10401 = vmax.xlane.f32.xlu0 %v10400
        %v10402 = vpop.xlane.xlu0 %10401
        %v10403 = vsel %vm10126, %v10090, -inf
        %10404 = vmax.xlane.f32.xlu0 %v10403
        %v10405 = vpop.xlane.xlu0 %10404
        %v10406 = vsel %vm10126, %v10091, -inf
        %10407 = vmax.xlane.f32.xlu0 %v10406
        %v10408 = vpop.xlane.xlu0 %10407
        %v10409 = vsel %vm10126, %v10092, -inf
        %10410 = vmax.xlane.f32.xlu0 %v10409
        %v10411 = vpop.xlane.xlu0 %10410
        %v10412 = vsel %vm10126, %v10093, -inf
        %10413 = vmax.xlane.f32.xlu0 %v10412
        %v10414 = vpop.xlane.xlu0 %10413
        %v10415 = vsel %vm10126, %v10094, -inf
        %10416 = vmax.xlane.f32.xlu0 %v10415
        %v10417 = vpop.xlane.xlu0 %10416
        %v10418 = vsel %vm10126, %v10095, -inf
        %10419 = vmax.xlane.f32.xlu0 %v10418
        %v10420 = vpop.xlane.xlu0 %10419
        %v10421 = vsel %vm10126, %v10096, -inf
        %10422 = vmax.xlane.f32.xlu0 %v10421
        %v10423 = vpop.xlane.xlu0 %10422
        %v10424 = vsel %vm10126, %v10097, -inf
        %10425 = vmax.xlane.f32.xlu0 %v10424
        %v10426 = vpop.xlane.xlu0 %10425
        %v10427 = vsel %vm10126, %v10098, -inf
        %10428 = vmax.xlane.f32.xlu0 %v10427
        %v10429 = vpop.xlane.xlu0 %10428
        %v10430 = vsel %vm10126, %v10099, -inf
        %10431 = vmax.xlane.f32.xlu0 %v10430
        %v10432 = vpop.xlane.xlu0 %10431
        %v10433 = vsel %vm10126, %v10100, -inf
        %10434 = vmax.xlane.f32.xlu0 %v10433
        %v10435 = vpop.xlane.xlu0 %10434
        %v10436 = vsel %vm10126, %v10101, -inf
        %10437 = vmax.xlane.f32.xlu0 %v10436
        %v10438 = vpop.xlane.xlu0 %10437
        %v10439 = vsel %vm10126, %v10102, -inf
        %10440 = vmax.xlane.f32.xlu0 %v10439
        %v10441 = vpop.xlane.xlu0 %10440
        %v10442 = vsel %vm10126, %v10103, -inf
        %10443 = vmax.xlane.f32.xlu0 %v10442
        %v10444 = vpop.xlane.xlu0 %10443
        %v10445 = vsel %vm10126, %v10104, -inf
        %10446 = vmax.xlane.f32.xlu0 %v10445
        %v10447 = vpop.xlane.xlu0 %10446
        %v10448 = vsel %vm10126, %v10105, -inf
        %10449 = vmax.xlane.f32.xlu0 %v10448
        %v10450 = vpop.xlane.xlu0 %10449
        %v10451 = vsel %vm10126, %v10106, -inf
        %10452 = vmax.xlane.f32.xlu0 %v10451
        %v10453 = vpop.xlane.xlu0 %10452
        %v10454 = vsel %vm10126, %v10107, -inf
        %10455 = vmax.xlane.f32.xlu0 %v10454
        %v10456 = vpop.xlane.xlu0 %10455
        %v10457 = vsel %vm10126, %v10108, -inf
        %10458 = vmax.xlane.f32.xlu0 %v10457
        %v10459 = vpop.xlane.xlu0 %10458
        %v10460 = vsel %vm10126, %v10109, -inf
        %10461 = vmax.xlane.f32.xlu0 %v10460
        %v10462 = vpop.xlane.xlu0 %10461
        %v10463 = vsel %vm10126, %v10110, -inf
        %10464 = vmax.xlane.f32.xlu0 %v10463
        %v10465 = vpop.xlane.xlu0 %10464
        %v10466 = vsel %vm10126, %v10111, -inf
        %10467 = vmax.xlane.f32.xlu0 %v10466
        %v10468 = vpop.xlane.xlu0 %10467
        %v10469 = vsel %vm10126, %v10112, -inf
        %10470 = vmax.xlane.f32.xlu0 %v10469
        %v10471 = vpop.xlane.xlu0 %10470
        %v10472 = vsel %vm10126, %v10113, -inf
        %10473 = vmax.xlane.f32.xlu0 %v10472
        %v10474 = vpop.xlane.xlu0 %10473
        %v10475 = vsel %vm10126, %v10114, -inf
        %10476 = vmax.xlane.f32.xlu0 %v10475
        %v10477 = vpop.xlane.xlu0 %10476
        %v10478 = vsel %vm10126, %v10115, -inf
        %10479 = vmax.xlane.f32.xlu0 %v10478
        %v10480 = vpop.xlane.xlu0 %10479
        %v10481 = vsel %vm10126, %v10116, -inf
        %10482 = vmax.xlane.f32.xlu0 %v10481
        %v10483 = vpop.xlane.xlu0 %10482
        %v10484 = vsel %vm10126, %v10117, -inf
        %10485 = vmax.xlane.f32.xlu0 %v10484
        %v10486 = vpop.xlane.xlu0 %10485
        %v10487 = vsel %vm10126, %v10118, -inf
        %10488 = vmax.xlane.f32.xlu0 %v10487
        %v10489 = vpop.xlane.xlu0 %10488
        %v10490 = vsel %vm10126, %v10119, -inf
        %10491 = vmax.xlane.f32.xlu0 %v10490
        %v10492 = vpop.xlane.xlu0 %10491
        %v10493 = vsel %vm10126, %v10120, -inf
        %10494 = vmax.xlane.f32.xlu0 %v10493
        %v10495 = vpop.xlane.xlu0 %10494
        %v10496 = vsel %vm10126, %v10121, -inf
        %10497 = vmax.xlane.f32.xlu0 %v10496
        %v10498 = vpop.xlane.xlu0 %10497
        %v10499 = vsel %vm10126, %v10122, -inf
        %10500 = vmax.xlane.f32.xlu0 %v10499
        %v10501 = vpop.xlane.xlu0 %10500
        %v10502 = vsel %vm10126, %v10123, -inf
        %10503 = vmax.xlane.f32.xlu0 %v10502
        %v10504 = vpop.xlane.xlu0 %10503
        %v10505 = vsel %vm10126, %v10124, -inf
        %10506 = vmax.xlane.f32.xlu0 %v10505
        %v10507 = vpop.xlane.xlu0 %10506
        %v10508 = vsel %vm10126, %v10125, -inf
        %10509 = vmax.xlane.f32.xlu0 %v10508
        %v10510 = vpop.xlane.xlu0 %10509
        %v10639 = vlaneseq
        %v10640 = vand.u32 %v10639, 127
        %v10641 = vlaneseq
        %v10642 = vshrl.u32 %v10641, 7
        %v10643 = vsub.s32 %v10640, %v10642
        %v10644 = vrot.slane %v10129, %v10643
        %v10645 = vlaneseq
        %v10646 = vshrl.u32 %v10645, 7
        %v10647 = vsub.s32 %v10640, %v10646
        %v10648 = vrot.slane %v10132, %v10647
        %v10649 = vlaneseq
        %v10650 = vshrl.u32 %v10649, 7
        %v10651 = vsub.s32 %v10640, %v10650
        %v10652 = vrot.slane %v10135, %v10651
        %v10653 = vlaneseq
        %v10654 = vshrl.u32 %v10653, 7
        %v10655 = vsub.s32 %v10640, %v10654
        %v10656 = vrot.slane %v10138, %v10655
        %v10657 = vlaneseq
        %v10658 = vshrl.u32 %v10657, 7
        %v10659 = vsub.s32 %v10640, %v10658
        %v10660 = vrot.slane %v10141, %v10659
        %v10661 = vlaneseq
        %v10662 = vshrl.u32 %v10661, 7
        %v10663 = vsub.s32 %v10640, %v10662
        %v10664 = vrot.slane %v10144, %v10663
        %v10665 = vlaneseq
        %v10666 = vshrl.u32 %v10665, 7
        %v10667 = vsub.s32 %v10640, %v10666
        %v10668 = vrot.slane %v10147, %v10667
        %v10669 = vlaneseq
        %v10670 = vshrl.u32 %v10669, 7
        %v10671 = vsub.s32 %v10640, %v10670
        %v10672 = vrot.slane %v10150, %v10671
        %v10673 = vlaneseq
        %v10674 = vshrl.u32 %v10673, 7
        %v10675 = vsub.s32 %v10640, %v10674
        %v10676 = vrot.slane %v10153, %v10675
        %v10677 = vlaneseq
        %v10678 = vshrl.u32 %v10677, 7
        %v10679 = vsub.s32 %v10640, %v10678
        %v10680 = vrot.slane %v10156, %v10679
        %v10681 = vlaneseq
        %v10682 = vshrl.u32 %v10681, 7
        %v10683 = vsub.s32 %v10640, %v10682
        %v10684 = vrot.slane %v10159, %v10683
        %v10685 = vlaneseq
        %v10686 = vshrl.u32 %v10685, 7
        %v10687 = vsub.s32 %v10640, %v10686
        %v10688 = vrot.slane %v10162, %v10687
        %v10689 = vlaneseq
        %v10690 = vshrl.u32 %v10689, 7
        %v10691 = vsub.s32 %v10640, %v10690
        %v10692 = vrot.slane %v10165, %v10691
        %v10693 = vlaneseq
        %v10694 = vshrl.u32 %v10693, 7
        %v10695 = vsub.s32 %v10640, %v10694
        %v10696 = vrot.slane %v10168, %v10695
        %v10697 = vlaneseq
        %v10698 = vshrl.u32 %v10697, 7
        %v10699 = vsub.s32 %v10640, %v10698
        %v10700 = vrot.slane %v10171, %v10699
        %v10701 = vlaneseq
        %v10702 = vshrl.u32 %v10701, 7
        %v10703 = vsub.s32 %v10640, %v10702
        %v10704 = vrot.slane %v10174, %v10703
        %v10705 = vlaneseq
        %v10706 = vshrl.u32 %v10705, 7
        %v10707 = vsub.s32 %v10640, %v10706
        %v10708 = vrot.slane %v10177, %v10707
        %v10709 = vlaneseq
        %v10710 = vshrl.u32 %v10709, 7
        %v10711 = vsub.s32 %v10640, %v10710
        %v10712 = vrot.slane %v10180, %v10711
        %v10713 = vlaneseq
        %v10714 = vshrl.u32 %v10713, 7
        %v10715 = vsub.s32 %v10640, %v10714
        %v10716 = vrot.slane %v10183, %v10715
        %v10717 = vlaneseq
        %v10718 = vshrl.u32 %v10717, 7
        %v10719 = vsub.s32 %v10640, %v10718
        %v10720 = vrot.slane %v10186, %v10719
        %v10721 = vlaneseq
        %v10722 = vshrl.u32 %v10721, 7
        %v10723 = vsub.s32 %v10640, %v10722
        %v10724 = vrot.slane %v10189, %v10723
        %v10725 = vlaneseq
        %v10726 = vshrl.u32 %v10725, 7
        %v10727 = vsub.s32 %v10640, %v10726
        %v10728 = vrot.slane %v10192, %v10727
        %v10729 = vlaneseq
        %v10730 = vshrl.u32 %v10729, 7
        %v10731 = vsub.s32 %v10640, %v10730
        %v10732 = vrot.slane %v10195, %v10731
        %v10733 = vlaneseq
        %v10734 = vshrl.u32 %v10733, 7
        %v10735 = vsub.s32 %v10640, %v10734
        %v10736 = vrot.slane %v10198, %v10735
        %v10737 = vlaneseq
        %v10738 = vshrl.u32 %v10737, 7
        %v10739 = vsub.s32 %v10640, %v10738
        %v10740 = vrot.slane %v10201, %v10739
        %v10741 = vlaneseq
        %v10742 = vshrl.u32 %v10741, 7
        %v10743 = vsub.s32 %v10640, %v10742
        %v10744 = vrot.slane %v10204, %v10743
        %v10745 = vlaneseq
        %v10746 = vshrl.u32 %v10745, 7
        %v10747 = vsub.s32 %v10640, %v10746
        %v10748 = vrot.slane %v10207, %v10747
        %v10749 = vlaneseq
        %v10750 = vshrl.u32 %v10749, 7
        %v10751 = vsub.s32 %v10640, %v10750
        %v10752 = vrot.slane %v10210, %v10751
        %v10753 = vlaneseq
        %v10754 = vshrl.u32 %v10753, 7
        %v10755 = vsub.s32 %v10640, %v10754
        %v10756 = vrot.slane %v10213, %v10755
        %v10757 = vlaneseq
        %v10758 = vshrl.u32 %v10757, 7
        %v10759 = vsub.s32 %v10640, %v10758
        %v10760 = vrot.slane %v10216, %v10759
        %v10761 = vlaneseq
        %v10762 = vshrl.u32 %v10761, 7
        %v10763 = vsub.s32 %v10640, %v10762
        %v10764 = vrot.slane %v10219, %v10763
        %v10765 = vlaneseq
        %v10766 = vshrl.u32 %v10765, 7
        %v10767 = vsub.s32 %v10640, %v10766
        %v10768 = vrot.slane %v10222, %v10767
        %v10769 = vlaneseq
        %v10770 = vshrl.u32 %v10769, 7
        %v10771 = vsub.s32 %v10640, %v10770
        %v10772 = vrot.slane %v10225, %v10771
        %v10773 = vlaneseq
        %v10774 = vshrl.u32 %v10773, 7
        %v10775 = vsub.s32 %v10640, %v10774
        %v10776 = vrot.slane %v10228, %v10775
        %v10777 = vlaneseq
        %v10778 = vshrl.u32 %v10777, 7
        %v10779 = vsub.s32 %v10640, %v10778
        %v10780 = vrot.slane %v10231, %v10779
        %v10781 = vlaneseq
        %v10782 = vshrl.u32 %v10781, 7
        %v10783 = vsub.s32 %v10640, %v10782
        %v10784 = vrot.slane %v10234, %v10783
        %v10785 = vlaneseq
        %v10786 = vshrl.u32 %v10785, 7
        %v10787 = vsub.s32 %v10640, %v10786
        %v10788 = vrot.slane %v10237, %v10787
        %v10789 = vlaneseq
        %v10790 = vshrl.u32 %v10789, 7
        %v10791 = vsub.s32 %v10640, %v10790
        %v10792 = vrot.slane %v10240, %v10791
        %v10793 = vlaneseq
        %v10794 = vshrl.u32 %v10793, 7
        %v10795 = vsub.s32 %v10640, %v10794
        %v10796 = vrot.slane %v10243, %v10795
        %v10797 = vlaneseq
        %v10798 = vshrl.u32 %v10797, 7
        %v10799 = vsub.s32 %v10640, %v10798
        %v10800 = vrot.slane %v10246, %v10799
        %v10801 = vlaneseq
        %v10802 = vshrl.u32 %v10801, 7
        %v10803 = vsub.s32 %v10640, %v10802
        %v10804 = vrot.slane %v10249, %v10803
        %v10805 = vlaneseq
        %v10806 = vshrl.u32 %v10805, 7
        %v10807 = vsub.s32 %v10640, %v10806
        %v10808 = vrot.slane %v10252, %v10807
        %v10809 = vlaneseq
        %v10810 = vshrl.u32 %v10809, 7
        %v10811 = vsub.s32 %v10640, %v10810
        %v10812 = vrot.slane %v10255, %v10811
        %v10813 = vlaneseq
        %v10814 = vshrl.u32 %v10813, 7
        %v10815 = vsub.s32 %v10640, %v10814
        %v10816 = vrot.slane %v10258, %v10815
        %v10817 = vlaneseq
        %v10818 = vshrl.u32 %v10817, 7
        %v10819 = vsub.s32 %v10640, %v10818
        %v10820 = vrot.slane %v10261, %v10819
        %v10821 = vlaneseq
        %v10822 = vshrl.u32 %v10821, 7
        %v10823 = vsub.s32 %v10640, %v10822
        %v10824 = vrot.slane %v10264, %v10823
        %v10825 = vlaneseq
        %v10826 = vshrl.u32 %v10825, 7
        %v10827 = vsub.s32 %v10640, %v10826
        %v10828 = vrot.slane %v10267, %v10827
        %v10829 = vlaneseq
        %v10830 = vshrl.u32 %v10829, 7
        %v10831 = vsub.s32 %v10640, %v10830
        %v10832 = vrot.slane %v10270, %v10831
        %v10833 = vlaneseq
        %v10834 = vshrl.u32 %v10833, 7
        %v10835 = vsub.s32 %v10640, %v10834
        %v10836 = vrot.slane %v10273, %v10835
        %v10837 = vlaneseq
        %v10838 = vshrl.u32 %v10837, 7
        %v10839 = vsub.s32 %v10640, %v10838
        %v10840 = vrot.slane %v10276, %v10839
        %v10841 = vlaneseq
        %v10842 = vshrl.u32 %v10841, 7
        %v10843 = vsub.s32 %v10640, %v10842
        %v10844 = vrot.slane %v10279, %v10843
        %v10845 = vlaneseq
        %v10846 = vshrl.u32 %v10845, 7
        %v10847 = vsub.s32 %v10640, %v10846
        %v10848 = vrot.slane %v10282, %v10847
        %v10849 = vlaneseq
        %v10850 = vshrl.u32 %v10849, 7
        %v10851 = vsub.s32 %v10640, %v10850
        %v10852 = vrot.slane %v10285, %v10851
        %v10853 = vlaneseq
        %v10854 = vshrl.u32 %v10853, 7
        %v10855 = vsub.s32 %v10640, %v10854
        %v10856 = vrot.slane %v10288, %v10855
        %v10857 = vlaneseq
        %v10858 = vshrl.u32 %v10857, 7
        %v10859 = vsub.s32 %v10640, %v10858
        %v10860 = vrot.slane %v10291, %v10859
        %v10861 = vlaneseq
        %v10862 = vshrl.u32 %v10861, 7
        %v10863 = vsub.s32 %v10640, %v10862
        %v10864 = vrot.slane %v10294, %v10863
        %v10865 = vlaneseq
        %v10866 = vshrl.u32 %v10865, 7
        %v10867 = vsub.s32 %v10640, %v10866
        %v10868 = vrot.slane %v10297, %v10867
        %v10869 = vlaneseq
        %v10870 = vshrl.u32 %v10869, 7
        %v10871 = vsub.s32 %v10640, %v10870
        %v10872 = vrot.slane %v10300, %v10871
        %v10873 = vlaneseq
        %v10874 = vshrl.u32 %v10873, 7
        %v10875 = vsub.s32 %v10640, %v10874
        %v10876 = vrot.slane %v10303, %v10875
        %v10877 = vlaneseq
        %v10878 = vshrl.u32 %v10877, 7
        %v10879 = vsub.s32 %v10640, %v10878
        %v10880 = vrot.slane %v10306, %v10879
        %v10881 = vlaneseq
        %v10882 = vshrl.u32 %v10881, 7
        %v10883 = vsub.s32 %v10640, %v10882
        %v10884 = vrot.slane %v10309, %v10883
        %v10885 = vlaneseq
        %v10886 = vshrl.u32 %v10885, 7
        %v10887 = vsub.s32 %v10640, %v10886
        %v10888 = vrot.slane %v10312, %v10887
        %v10889 = vlaneseq
        %v10890 = vshrl.u32 %v10889, 7
        %v10891 = vsub.s32 %v10640, %v10890
        %v10892 = vrot.slane %v10315, %v10891
        %v10893 = vlaneseq
        %v10894 = vshrl.u32 %v10893, 7
        %v10895 = vsub.s32 %v10640, %v10894
        %v10896 = vrot.slane %v10318, %v10895
        %v10897 = vlaneseq
        %v10898 = vshrl.u32 %v10897, 7
        %v10899 = vsub.s32 %v10640, %v10898
        %v10900 = vrot.slane %v10321, %v10899
        %v10901 = vlaneseq
        %v10902 = vshrl.u32 %v10901, 7
        %v10903 = vsub.s32 %v10640, %v10902
        %v10904 = vrot.slane %v10324, %v10903
        %v10905 = vlaneseq
        %v10906 = vshrl.u32 %v10905, 7
        %v10907 = vsub.s32 %v10640, %v10906
        %v10908 = vrot.slane %v10327, %v10907
        %v10909 = vlaneseq
        %v10910 = vshrl.u32 %v10909, 7
        %v10911 = vsub.s32 %v10640, %v10910
        %v10912 = vrot.slane %v10330, %v10911
        %v10913 = vlaneseq
        %v10914 = vshrl.u32 %v10913, 7
        %v10915 = vsub.s32 %v10640, %v10914
        %v10916 = vrot.slane %v10333, %v10915
        %v10917 = vlaneseq
        %v10918 = vshrl.u32 %v10917, 7
        %v10919 = vsub.s32 %v10640, %v10918
        %v10920 = vrot.slane %v10336, %v10919
        %v10921 = vlaneseq
        %v10922 = vshrl.u32 %v10921, 7
        %v10923 = vsub.s32 %v10640, %v10922
        %v10924 = vrot.slane %v10339, %v10923
        %v10925 = vlaneseq
        %v10926 = vshrl.u32 %v10925, 7
        %v10927 = vsub.s32 %v10640, %v10926
        %v10928 = vrot.slane %v10342, %v10927
        %v10929 = vlaneseq
        %v10930 = vshrl.u32 %v10929, 7
        %v10931 = vsub.s32 %v10640, %v10930
        %v10932 = vrot.slane %v10345, %v10931
        %v10933 = vlaneseq
        %v10934 = vshrl.u32 %v10933, 7
        %v10935 = vsub.s32 %v10640, %v10934
        %v10936 = vrot.slane %v10348, %v10935
        %v10937 = vlaneseq
        %v10938 = vshrl.u32 %v10937, 7
        %v10939 = vsub.s32 %v10640, %v10938
        %v10940 = vrot.slane %v10351, %v10939
        %v10941 = vlaneseq
        %v10942 = vshrl.u32 %v10941, 7
        %v10943 = vsub.s32 %v10640, %v10942
        %v10944 = vrot.slane %v10354, %v10943
        %v10945 = vlaneseq
        %v10946 = vshrl.u32 %v10945, 7
        %v10947 = vsub.s32 %v10640, %v10946
        %v10948 = vrot.slane %v10357, %v10947
        %v10949 = vlaneseq
        %v10950 = vshrl.u32 %v10949, 7
        %v10951 = vsub.s32 %v10640, %v10950
        %v10952 = vrot.slane %v10360, %v10951
        %v10953 = vlaneseq
        %v10954 = vshrl.u32 %v10953, 7
        %v10955 = vsub.s32 %v10640, %v10954
        %v10956 = vrot.slane %v10363, %v10955
        %v10957 = vlaneseq
        %v10958 = vshrl.u32 %v10957, 7
        %v10959 = vsub.s32 %v10640, %v10958
        %v10960 = vrot.slane %v10366, %v10959
        %v10961 = vlaneseq
        %v10962 = vshrl.u32 %v10961, 7
        %v10963 = vsub.s32 %v10640, %v10962
        %v10964 = vrot.slane %v10369, %v10963
        %v10965 = vlaneseq
        %v10966 = vshrl.u32 %v10965, 7
        %v10967 = vsub.s32 %v10640, %v10966
        %v10968 = vrot.slane %v10372, %v10967
        %v10969 = vlaneseq
        %v10970 = vshrl.u32 %v10969, 7
        %v10971 = vsub.s32 %v10640, %v10970
        %v10972 = vrot.slane %v10375, %v10971
        %v10973 = vlaneseq
        %v10974 = vshrl.u32 %v10973, 7
        %v10975 = vsub.s32 %v10640, %v10974
        %v10976 = vrot.slane %v10378, %v10975
        %v10977 = vlaneseq
        %v10978 = vshrl.u32 %v10977, 7
        %v10979 = vsub.s32 %v10640, %v10978
        %v10980 = vrot.slane %v10381, %v10979
        %v10981 = vlaneseq
        %v10982 = vshrl.u32 %v10981, 7
        %v10983 = vsub.s32 %v10640, %v10982
        %v10984 = vrot.slane %v10384, %v10983
        %v10985 = vlaneseq
        %v10986 = vshrl.u32 %v10985, 7
        %v10987 = vsub.s32 %v10640, %v10986
        %v10988 = vrot.slane %v10387, %v10987
        %v10989 = vlaneseq
        %v10990 = vshrl.u32 %v10989, 7
        %v10991 = vsub.s32 %v10640, %v10990
        %v10992 = vrot.slane %v10390, %v10991
        %v10993 = vlaneseq
        %v10994 = vshrl.u32 %v10993, 7
        %v10995 = vsub.s32 %v10640, %v10994
        %v10996 = vrot.slane %v10393, %v10995
        %v10997 = vlaneseq
        %v10998 = vshrl.u32 %v10997, 7
        %v10999 = vsub.s32 %v10640, %v10998
        %v11000 = vrot.slane %v10396, %v10999
        %v11001 = vlaneseq
        %v11002 = vshrl.u32 %v11001, 7
        %v11003 = vsub.s32 %v10640, %v11002
        %v11004 = vrot.slane %v10399, %v11003
        %v11005 = vlaneseq
        %v11006 = vshrl.u32 %v11005, 7
        %v11007 = vsub.s32 %v10640, %v11006
        %v11008 = vrot.slane %v10402, %v11007
        %v11009 = vlaneseq
        %v11010 = vshrl.u32 %v11009, 7
        %v11011 = vsub.s32 %v10640, %v11010
        %v11012 = vrot.slane %v10405, %v11011
        %v11013 = vlaneseq
        %v11014 = vshrl.u32 %v11013, 7
        %v11015 = vsub.s32 %v10640, %v11014
        %v11016 = vrot.slane %v10408, %v11015
        %v11017 = vlaneseq
        %v11018 = vshrl.u32 %v11017, 7
        %v11019 = vsub.s32 %v10640, %v11018
        %v11020 = vrot.slane %v10411, %v11019
        %v11021 = vlaneseq
        %v11022 = vshrl.u32 %v11021, 7
        %v11023 = vsub.s32 %v10640, %v11022
        %v11024 = vrot.slane %v10414, %v11023
        %v11025 = vlaneseq
        %v11026 = vshrl.u32 %v11025, 7
        %v11027 = vsub.s32 %v10640, %v11026
        %v11028 = vrot.slane %v10417, %v11027
        %v11029 = vlaneseq
        %v11030 = vshrl.u32 %v11029, 7
        %v11031 = vsub.s32 %v10640, %v11030
        %v11032 = vrot.slane %v10420, %v11031
        %v11033 = vlaneseq
        %v11034 = vshrl.u32 %v11033, 7
        %v11035 = vsub.s32 %v10640, %v11034
        %v11036 = vrot.slane %v10423, %v11035
        %v11037 = vlaneseq
        %v11038 = vshrl.u32 %v11037, 7
        %v11039 = vsub.s32 %v10640, %v11038
        %v11040 = vrot.slane %v10426, %v11039
        %v11041 = vlaneseq
        %v11042 = vshrl.u32 %v11041, 7
        %v11043 = vsub.s32 %v10640, %v11042
        %v11044 = vrot.slane %v10429, %v11043
        %v11045 = vlaneseq
        %v11046 = vshrl.u32 %v11045, 7
        %v11047 = vsub.s32 %v10640, %v11046
        %v11048 = vrot.slane %v10432, %v11047
        %v11049 = vlaneseq
        %v11050 = vshrl.u32 %v11049, 7
        %v11051 = vsub.s32 %v10640, %v11050
        %v11052 = vrot.slane %v10435, %v11051
        %v11053 = vlaneseq
        %v11054 = vshrl.u32 %v11053, 7
        %v11055 = vsub.s32 %v10640, %v11054
        %v11056 = vrot.slane %v10438, %v11055
        %v11057 = vlaneseq
        %v11058 = vshrl.u32 %v11057, 7
        %v11059 = vsub.s32 %v10640, %v11058
        %v11060 = vrot.slane %v10441, %v11059
        %v11061 = vlaneseq
        %v11062 = vshrl.u32 %v11061, 7
        %v11063 = vsub.s32 %v10640, %v11062
        %v11064 = vrot.slane %v10444, %v11063
        %v11065 = vlaneseq
        %v11066 = vshrl.u32 %v11065, 7
        %v11067 = vsub.s32 %v10640, %v11066
        %v11068 = vrot.slane %v10447, %v11067
        %v11069 = vlaneseq
        %v11070 = vshrl.u32 %v11069, 7
        %v11071 = vsub.s32 %v10640, %v11070
        %v11072 = vrot.slane %v10450, %v11071
        %v11073 = vlaneseq
        %v11074 = vshrl.u32 %v11073, 7
        %v11075 = vsub.s32 %v10640, %v11074
        %v11076 = vrot.slane %v10453, %v11075
        %v11077 = vlaneseq
        %v11078 = vshrl.u32 %v11077, 7
        %v11079 = vsub.s32 %v10640, %v11078
        %v11080 = vrot.slane %v10456, %v11079
        %v11081 = vlaneseq
        %v11082 = vshrl.u32 %v11081, 7
        %v11083 = vsub.s32 %v10640, %v11082
        %v11084 = vrot.slane %v10459, %v11083
        %v11085 = vlaneseq
        %v11086 = vshrl.u32 %v11085, 7
        %v11087 = vsub.s32 %v10640, %v11086
        %v11088 = vrot.slane %v10462, %v11087
        %v11089 = vlaneseq
        %v11090 = vshrl.u32 %v11089, 7
        %v11091 = vsub.s32 %v10640, %v11090
        %v11092 = vrot.slane %v10465, %v11091
        %v11093 = vlaneseq
        %v11094 = vshrl.u32 %v11093, 7
        %v11095 = vsub.s32 %v10640, %v11094
        %v11096 = vrot.slane %v10468, %v11095
        %v11097 = vlaneseq
        %v11098 = vshrl.u32 %v11097, 7
        %v11099 = vsub.s32 %v10640, %v11098
        %v11100 = vrot.slane %v10471, %v11099
        %v11101 = vlaneseq
        %v11102 = vshrl.u32 %v11101, 7
        %v11103 = vsub.s32 %v10640, %v11102
        %v11104 = vrot.slane %v10474, %v11103
        %v11105 = vlaneseq
        %v11106 = vshrl.u32 %v11105, 7
        %v11107 = vsub.s32 %v10640, %v11106
        %v11108 = vrot.slane %v10477, %v11107
        %v11109 = vlaneseq
        %v11110 = vshrl.u32 %v11109, 7
        %v11111 = vsub.s32 %v10640, %v11110
        %v11112 = vrot.slane %v10480, %v11111
        %v11113 = vlaneseq
        %v11114 = vshrl.u32 %v11113, 7
        %v11115 = vsub.s32 %v10640, %v11114
        %v11116 = vrot.slane %v10483, %v11115
        %v11117 = vlaneseq
        %v11118 = vshrl.u32 %v11117, 7
        %v11119 = vsub.s32 %v10640, %v11118
        %v11120 = vrot.slane %v10486, %v11119
        %v11121 = vlaneseq
        %v11122 = vshrl.u32 %v11121, 7
        %v11123 = vsub.s32 %v10640, %v11122
        %v11124 = vrot.slane %v10489, %v11123
        %v11125 = vlaneseq
        %v11126 = vshrl.u32 %v11125, 7
        %v11127 = vsub.s32 %v10640, %v11126
        %v11128 = vrot.slane %v10492, %v11127
        %v11129 = vlaneseq
        %v11130 = vshrl.u32 %v11129, 7
        %v11131 = vsub.s32 %v10640, %v11130
        %v11132 = vrot.slane %v10495, %v11131
        %v11133 = vlaneseq
        %v11134 = vshrl.u32 %v11133, 7
        %v11135 = vsub.s32 %v10640, %v11134
        %v11136 = vrot.slane %v10498, %v11135
        %v11137 = vlaneseq
        %v11138 = vshrl.u32 %v11137, 7
        %v11139 = vsub.s32 %v10640, %v11138
        %v11140 = vrot.slane %v10501, %v11139
        %v11141 = vlaneseq
        %v11142 = vshrl.u32 %v11141, 7
        %v11143 = vsub.s32 %v10640, %v11142
        %v11144 = vrot.slane %v10504, %v11143
        %v11145 = vlaneseq
        %v11146 = vshrl.u32 %v11145, 7
        %v11147 = vsub.s32 %v10640, %v11146
        %v11148 = vrot.slane %v10507, %v11147
        %v11149 = vlaneseq
        %v11150 = vshrl.u32 %v11149, 7
        %v11151 = vsub.s32 %v10640, %v11150
        %v11152 = vrot.slane %v10510, %v11151
        %vm11153 = vcmask 1041409
        %v11154 = vsel %vm11153, %v10648, %v10644
        %vm11155 = vcmask 1042434
        %v11156 = vsel %vm11155, %v10652, %v11154
        %vm11157 = vcmask 1043459
        %v11158 = vsel %vm11157, %v10656, %v11156
        %vm11159 = vcmask 1044484
        %v11160 = vsel %vm11159, %v10660, %v11158
        %vm11161 = vcmask 1045509
        %v11162 = vsel %vm11161, %v10664, %v11160
        %vm11163 = vcmask 1046534
        %v11164 = vsel %vm11163, %v10668, %v11162
        %vm11165 = vcmask 1047559
        %v11166 = vsel %vm11165, %v10672, %v11164
        %v11167 = vsel %vm11153, %v10680, %v10676
        %v11168 = vsel %vm11155, %v10684, %v11167
        %v11169 = vsel %vm11157, %v10688, %v11168
        %v11170 = vsel %vm11159, %v10692, %v11169
        %v11171 = vsel %vm11161, %v10696, %v11170
        %v11172 = vsel %vm11163, %v10700, %v11171
        %v11173 = vsel %vm11165, %v10704, %v11172
        %v11174 = vsel %vm11153, %v10712, %v10708
        %v11175 = vsel %vm11155, %v10716, %v11174
        %v11176 = vsel %vm11157, %v10720, %v11175
        %v11177 = vsel %vm11159, %v10724, %v11176
        %v11178 = vsel %vm11161, %v10728, %v11177
        %v11179 = vsel %vm11163, %v10732, %v11178
        %v11180 = vsel %vm11165, %v10736, %v11179
        %v11181 = vsel %vm11153, %v10744, %v10740
        %v11182 = vsel %vm11155, %v10748, %v11181
        %v11183 = vsel %vm11157, %v10752, %v11182
        %v11184 = vsel %vm11159, %v10756, %v11183
        %v11185 = vsel %vm11161, %v10760, %v11184
        %v11186 = vsel %vm11163, %v10764, %v11185
        %v11187 = vsel %vm11165, %v10768, %v11186
        %v11188 = vsel %vm11153, %v10776, %v10772
        %v11189 = vsel %vm11155, %v10780, %v11188
        %v11190 = vsel %vm11157, %v10784, %v11189
        %v11191 = vsel %vm11159, %v10788, %v11190
        %v11192 = vsel %vm11161, %v10792, %v11191
        %v11193 = vsel %vm11163, %v10796, %v11192
        %v11194 = vsel %vm11165, %v10800, %v11193
        %v11195 = vsel %vm11153, %v10808, %v10804
        %v11196 = vsel %vm11155, %v10812, %v11195
        %v11197 = vsel %vm11157, %v10816, %v11196
        %v11198 = vsel %vm11159, %v10820, %v11197
        %v11199 = vsel %vm11161, %v10824, %v11198
        %v11200 = vsel %vm11163, %v10828, %v11199
        %v11201 = vsel %vm11165, %v10832, %v11200
        %v11202 = vsel %vm11153, %v10840, %v10836
        %v11203 = vsel %vm11155, %v10844, %v11202
        %v11204 = vsel %vm11157, %v10848, %v11203
        %v11205 = vsel %vm11159, %v10852, %v11204
        %v11206 = vsel %vm11161, %v10856, %v11205
        %v11207 = vsel %vm11163, %v10860, %v11206
        %v11208 = vsel %vm11165, %v10864, %v11207
        %v11209 = vsel %vm11153, %v10872, %v10868
        %v11210 = vsel %vm11155, %v10876, %v11209
        %v11211 = vsel %vm11157, %v10880, %v11210
        %v11212 = vsel %vm11159, %v10884, %v11211
        %v11213 = vsel %vm11161, %v10888, %v11212
        %v11214 = vsel %vm11163, %v10892, %v11213
        %v11215 = vsel %vm11165, %v10896, %v11214
        %v11216 = vsel %vm11153, %v10904, %v10900
        %v11217 = vsel %vm11155, %v10908, %v11216
        %v11218 = vsel %vm11157, %v10912, %v11217
        %v11219 = vsel %vm11159, %v10916, %v11218
        %v11220 = vsel %vm11161, %v10920, %v11219
        %v11221 = vsel %vm11163, %v10924, %v11220
        %v11222 = vsel %vm11165, %v10928, %v11221
        %v11223 = vsel %vm11153, %v10936, %v10932
        %v11224 = vsel %vm11155, %v10940, %v11223
        %v11225 = vsel %vm11157, %v10944, %v11224
        %v11226 = vsel %vm11159, %v10948, %v11225
        %v11227 = vsel %vm11161, %v10952, %v11226
        %v11228 = vsel %vm11163, %v10956, %v11227
        %v11229 = vsel %vm11165, %v10960, %v11228
        %v11230 = vsel %vm11153, %v10968, %v10964
        %v11231 = vsel %vm11155, %v10972, %v11230
        %v11232 = vsel %vm11157, %v10976, %v11231
        %v11233 = vsel %vm11159, %v10980, %v11232
        %v11234 = vsel %vm11161, %v10984, %v11233
        %v11235 = vsel %vm11163, %v10988, %v11234
        %v11236 = vsel %vm11165, %v10992, %v11235
        %v11237 = vsel %vm11153, %v11000, %v10996
        %v11238 = vsel %vm11155, %v11004, %v11237
        %v11239 = vsel %vm11157, %v11008, %v11238
        %v11240 = vsel %vm11159, %v11012, %v11239
        %v11241 = vsel %vm11161, %v11016, %v11240
        %v11242 = vsel %vm11163, %v11020, %v11241
        %v11243 = vsel %vm11165, %v11024, %v11242
        %v11244 = vsel %vm11153, %v11032, %v11028
        %v11245 = vsel %vm11155, %v11036, %v11244
        %v11246 = vsel %vm11157, %v11040, %v11245
        %v11247 = vsel %vm11159, %v11044, %v11246
        %v11248 = vsel %vm11161, %v11048, %v11247
        %v11249 = vsel %vm11163, %v11052, %v11248
        %v11250 = vsel %vm11165, %v11056, %v11249
        %v11251 = vsel %vm11153, %v11064, %v11060
        %v11252 = vsel %vm11155, %v11068, %v11251
        %v11253 = vsel %vm11157, %v11072, %v11252
        %v11254 = vsel %vm11159, %v11076, %v11253
        %v11255 = vsel %vm11161, %v11080, %v11254
        %v11256 = vsel %vm11163, %v11084, %v11255
        %v11257 = vsel %vm11165, %v11088, %v11256
        %v11258 = vsel %vm11153, %v11096, %v11092
        %v11259 = vsel %vm11155, %v11100, %v11258
        %v11260 = vsel %vm11157, %v11104, %v11259
        %v11261 = vsel %vm11159, %v11108, %v11260
        %v11262 = vsel %vm11161, %v11112, %v11261
        %v11263 = vsel %vm11163, %v11116, %v11262
        %v11264 = vsel %vm11165, %v11120, %v11263
        %v11265 = vsel %vm11153, %v11128, %v11124
        %v11266 = vsel %vm11155, %v11132, %v11265
        %v11267 = vsel %vm11157, %v11136, %v11266
        %v11268 = vsel %vm11159, %v11140, %v11267
        %v11269 = vsel %vm11161, %v11144, %v11268
        %v11270 = vsel %vm11163, %v11148, %v11269
        %v11271 = vsel %vm11165, %v11152, %v11270
        %11288 = vxpose.xlu0.b32.start [1/16] %v11166, 128
        %11289 = vxpose.xlu0.b32.cont [2/16] %v11173, 128
        %11290 = vxpose.xlu0.b32.cont [3/16] %v11180, 128
        %11291 = vxpose.xlu0.b32.cont [4/16] %v11187, 128
        %11292 = vxpose.xlu0.b32.cont [5/16] %v11194, 128
        %11293 = vxpose.xlu0.b32.cont [6/16] %v11201, 128
        %11294 = vxpose.xlu0.b32.cont [7/16] %v11208, 128
        %11295 = vxpose.xlu0.b32.cont [8/16] %v11215, 128
        %11296 = vxpose.xlu0.b32.cont [9/16] %v11222, 128
        %11297 = vxpose.xlu0.b32.cont [10/16] %v11229, 128
        %11298 = vxpose.xlu0.b32.cont [11/16] %v11236, 128
        %11299 = vxpose.xlu0.b32.cont [12/16] %v11243, 128
        %11300 = vxpose.xlu0.b32.cont [13/16] %v11250, 128
        %11301 = vxpose.xlu0.b32.cont [14/16] %v11257, 128
        %11302 = vxpose.xlu0.b32.cont [15/16] %v11264, 128
        %11303 = vxpose.xlu0.b32.end [16/16] %v11271, 128
        %v11304 = vpop.trf.xlu0
        %v11305 = vpop.trf.xlu0
        %v11306 = vpop.trf.xlu0
        %v11307 = vpop.trf.xlu0
        %v11308 = vpop.trf.xlu0
        %v11309 = vpop.trf.xlu0
        %v11310 = vpop.trf.xlu0
        %v11311 = vpop.trf.xlu0
        %v11312 = vpop.trf.xlu0
        %v11313 = vpop.trf.xlu0
        %v11314 = vpop.trf.xlu0
        %v11315 = vpop.trf.xlu0
        %v11316 = vpop.trf.xlu0
        %v11317 = vpop.trf.xlu0
        %v11318 = vpop.trf.xlu0
        %v11319 = vpop.trf.xlu0
        %11320 = vst [vmem:[%s347] sm:$0x3] %v11304
        %s11321 = sand.u32 %s211, 1
        %s11322 = scalar_lea.sflag [#allocation3], %s11321
        %s11323 = sand.u32 %s211, 1
        %s11324 = smul.addr %s11323, 2
        %s11325 = scalar_lea.vmem [#allocation2], %s11324
        // Predicated region
        $region49: #{_fused_forward.1} parent=47 // pred_check
          %p11326 = pneg %p221
        $region50: #{_fused_forward.1} parent=47 // pred_check_branch
          %11328 = sbr.rel (%p11326) target = $region52
        $region51: #{_fused_forward.1} parent=47 // pred_region
          %s11330 = ssub.s32 32, 32
          %11331 = vsyncadd %s11322, %s11330
          %s11332 = smul.addr %s21, 32
          %s11333 = scalar_lea.hbm %s7, %s11332
          %s11335 = sshll.u32 %s11325, 4
          %s11336 = int_to_ptr.vmem [resolvable:$true] %s11335
          %11338 = dma.vmem_to_hbm [thread:$0]  %s11336, 32, %s11333, %s11322
        $region52: #{_fused_forward.1} parent=47 // pred_fallthru
          _
      $region48: #{_fused_forward.1} parent=5 // pred_fallthru
        _
      %p11339 = scmp.le.s32.totalorder 2, %s16
      // Predicated region
      $region53: #{_fused_forward.1} parent=5 // pred_check
        %p11340 = pneg %p11339
      $region54: #{_fused_forward.1} parent=5 // pred_check_branch
        %11342 = sbr.rel (%p11340) target = $region56
      $region55: #{_fused_forward.1} parent=5 // pred_region
        %s11343 = ssub.s32 %s16, 2
        // Predicated region
        $region57: #{_fused_forward.1} parent=55 // pred_check
          %p11344 = pneg %p227
        $region58: #{_fused_forward.1} parent=55 // pred_check_branch
          %11346 = sbr.rel (%p11344) target = $region60
        $region59: #{_fused_forward.1} parent=55 // pred_region
          %s11347 = sand.u32 %s212, 1
          %s11348 = scalar_lea.sflag [#allocation3], %s11347
          %s11349 = sand.u32 %s212, 1
          %s11350 = smul.addr %s11349, 2
          %s11351 = scalar_lea.vmem [#allocation2], %s11350
          %11352 = dma.done %s11348, 32
        $region60: #{_fused_forward.1} parent=55 // pred_fallthru
          _
      $region56: #{_fused_forward.1} parent=5 // pred_fallthru
        _
    $region6: #{_fused_forward.1} parent=1 // loop_footer
      %s20 = sadd.s32 1, %s16
    $region7: #{_fused_forward.1} parent=1 // loop_footer_branch
      %15 = sbr.rel target = $region3
    $region8: #{_fused_forward.1} parent=1 // loop_exit
      _
    %11353 = vsyncpa [#allocation3], 1
    %s11354 = scalar_lea.sflag [#allocation3], 1
    %11355 = vsyncpa %s11354, 1

</llo_original>
